<compile_context>
chip_gen: v6e
topology: v6e:2x2x1
jax: 0.10.0
libtpu: 0.0.40
codegen_flags: <defaults>
</compile_context>

<pallas_src>
import math
import functools

import jax
import jax.numpy as jnp
from jax.experimental import pallas as pl
from jax.experimental.pallas import tpu as pltpu

_EPS = 1e-5


# ------------------------------ fused Pallas kernel -------------------------------

def _tfspos_kernel(order, dims, xc_ref, yc_ref, xt_ref, *refs):
    """Whole TFSpos forward for one batch element (grid axis = batch)."""
    dim_x, dim_yc, dim_yt, dim_h, nhead, nlayers = dims
    o_ref = refs[-1]
    w = dict(zip(order, refs[:-1]))

    f32 = jnp.float32
    e_blk = dim_x + dim_h
    dh_blk = e_blk // nhead
    dh_cr = dim_h // nhead
    scale_blk = 1.0 / math.sqrt(dh_blk)
    scale_cr = 1.0 / math.sqrt(dh_cr)

    xc = xc_ref[0]        # (Nc, dim_x)
    yc = yc_ref[0]        # (Nc, dim_yc)
    xt = xt_ref[0]        # (Nt, dim_x)
    n_c = xc.shape[0]
    n_t = xt.shape[0]

    def dot(a, b):
        return jnp.dot(a, b, preferred_element_type=f32)

    def dot_nt(a, b):     # a @ b.T without materializing the transpose
        return jax.lax.dot_general(a, b, (((1,), (1,)), ((), ())),
                                   preferred_element_type=f32)

    def softmax(s):
        m = jnp.max(s, axis=-1, keepdims=True)
        p = jnp.exp(s - m)
        return p * pl.reciprocal(jnp.sum(p, axis=-1, keepdims=True), approx=True)

    # ---- encoder: Net([dim_x + dim_yc, dim_h, dim_h, dim_h]) on cat(xc, yc) ----
    h = dot(xc, w["enc0_wx"][...]) + dot(yc, w["enc0_wy"][...]) + w["enc0_b"][...]
    h = jnp.maximum(h, 0.0)
    h = jnp.maximum(dot(h, w["enc1_w"][...]) + w["enc1_b"][...], 0.0)
    latents0 = dot(h, w["enc2_w"][...]) + w["enc2_b"][...]               # (Nc, dim_h)

    # ---- shared TFSEncoderPosLayer applied nlayers times (weights stay in VMEM) ----
    def layer(_, latents):
        # x = cat(xc, latents) is held implicitly as its two parts (xc, latents).
        attn_x = jnp.zeros((n_c, dim_x), f32)
        attn_l = jnp.zeros((n_c, dim_h), f32)
        for hh in range(nhead):
            qh = (dot(xc, w["blk_wq_x"][hh]) + dot(latents, w["blk_wq_l"][hh])
                  + w["blk_bq"][hh])
            kh = (dot(xc, w["blk_wk_x"][hh]) + dot(latents, w["blk_wk_l"][hh])
                  + w["blk_bk"][hh])
            vh = (dot(xc, w["blk_wv_x"][hh]) + dot(latents, w["blk_wv_l"][hh])
                  + w["blk_bv"][hh])
            p = softmax(dot_nt(qh, kh) * scale_blk)                      # (Nc, Nc)
            oh = dot(p, vh)                                              # (Nc, Dh)
            # head merge == per-head out-projection accumulation (no concat needed)
            attn_x = attn_x + dot(oh, w["blk_wo_x"][hh])
            attn_l = attn_l + dot(oh, w["blk_wo_l"][hh])
        # residual + LayerNorm over the (implicitly concatenated) width e_blk
        r_x = xc + attn_x + w["blk_bo_x"][...]
        r_l = latents + attn_l + w["blk_bo_l"][...]
        mu = (jnp.sum(r_x, axis=-1, keepdims=True)
              + jnp.sum(r_l, axis=-1, keepdims=True)) / e_blk
        dx = r_x - mu
        dl = r_l - mu
        var = (jnp.sum(dx * dx, axis=-1, keepdims=True)
               + jnp.sum(dl * dl, axis=-1, keepdims=True)) / e_blk
        inv = jax.lax.rsqrt(var + _EPS)
        n_x = dx * inv * w["blk_ln1_gx"][...] + w["blk_ln1_bx"][...]
        n_l = dl * inv * w["blk_ln1_gl"][...] + w["blk_ln1_bl"][...]
        # linear1 (e_blk -> dim_h) followed by LayerNorm(dim_h)
        h1 = (dot(n_x, w["blk_l1_wx"][...]) + dot(n_l, w["blk_l1_wl"][...])
              + w["blk_l1_b"][...])
        mu2 = jnp.mean(h1, axis=-1, keepdims=True)
        d2 = h1 - mu2
        var2 = jnp.mean(d2 * d2, axis=-1, keepdims=True)
        return (d2 * jax.lax.rsqrt(var2 + _EPS) * w["blk_ln2_g"][...]
                + w["blk_ln2_b"][...])

    latents = jax.lax.fori_loop(0, nlayers, layer, latents0)

    # ---- q_encoder: Net([dim_x, dim_h, dim_h, dim_h]) on xt --------------------
    q = jnp.maximum(dot(xt, w["qenc0_w"][...]) + w["qenc0_b"][...], 0.0)
    q = jnp.maximum(dot(q, w["qenc1_w"][...]) + w["qenc1_b"][...], 0.0)
    q = dot(q, w["qenc2_w"][...]) + w["qenc2_b"][...]                    # (Nt, dim_h)

    # ---- cross attention: q attends to latents ---------------------------------
    cross = jnp.zeros((n_t, dim_h), f32)
    for hh in range(nhead):
        qh = dot(q, w["cr_wq"][hh]) + w["cr_bq"][hh]
        kh = dot(latents, w["cr_wk"][hh]) + w["cr_bk"][hh]
        vh = dot(latents, w["cr_wv"][hh]) + w["cr_bv"][hh]
        p = softmax(dot_nt(qh, kh) * scale_cr)                           # (Nt, Nc)
        cross = cross + dot(dot(p, vh), w["cr_wo"][hh])
    z = q + cross + w["cr_bo"][...]

    # ---- decoder: Net([dim_h, dim_h, dim_h, dim_yt]) ---------------------------
    d = jnp.maximum(dot(z, w["dec0_w"][...]) + w["dec0_b"][...], 0.0)
    d = jnp.maximum(dot(d, w["dec1_w"][...]) + w["dec1_b"][...], 0.0)
    o_ref[0] = dot(d, w["dec2_w"][...]) + w["dec2_b"][...]


# ----------------------- host-side weight repacking (pure JAX) ---------------------

def _split_heads_w(wf, nhead):
    """(din, E) -> (H, din, E//H): per-head split of the output columns."""
    din, e = wf.shape
    dh = e // nhead
    return wf.reshape(din, nhead, dh).transpose(1, 0, 2)


def _split_heads_b(b, nhead):
    """(E,) -> (H, 1, E//H)."""
    return b.reshape(nhead, 1, b.shape[0] // nhead)


def _split_out_w(wo, nhead):
    """(E, dout) -> (H, E//H, dout): per-head split of the out-proj input rows."""
    e, dout = wo.shape
    return wo.reshape(nhead, e // nhead, dout)


def prepare_kernel_params(params, dim_x, nhead):
    """Repack natural (PyTorch-like) params into the per-head / concat-split layout
    consumed by the fused kernel (done once on the host, outside the kernel)."""
    p = {}
    (w0, b0), (w1, b1), (w2, b2) = params["encoder"]
    p["enc0_wx"], p["enc0_wy"], p["enc0_b"] = w0[:dim_x], w0[dim_x:], b0[None, :]
    p["enc1_w"], p["enc1_b"] = w1, b1[None, :]
    p["enc2_w"], p["enc2_b"] = w2, b2[None, :]

    blk = params["block"]
    a = blk["attn"]
    for nm in ("q", "k", "v"):
        wf, bf = a["w" + nm], a["b" + nm]
        p[f"blk_w{nm}_x"] = _split_heads_w(wf[:dim_x], nhead)
        p[f"blk_w{nm}_l"] = _split_heads_w(wf[dim_x:], nhead)
        p[f"blk_b{nm}"] = _split_heads_b(bf, nhead)
    wo3 = _split_out_w(a["wo"], nhead)
    p["blk_wo_x"], p["blk_wo_l"] = wo3[:, :, :dim_x], wo3[:, :, dim_x:]
    p["blk_bo_x"], p["blk_bo_l"] = a["bo"][None, :dim_x], a["bo"][None, dim_x:]
    p["blk_ln1_gx"], p["blk_ln1_gl"] = blk["ln1_g"][None, :dim_x], blk["ln1_g"][None, dim_x:]
    p["blk_ln1_bx"], p["blk_ln1_bl"] = blk["ln1_b"][None, :dim_x], blk["ln1_b"][None, dim_x:]
    p["blk_l1_wx"], p["blk_l1_wl"] = blk["w_lin1"][:dim_x], blk["w_lin1"][dim_x:]
    p["blk_l1_b"] = blk["b_lin1"][None, :]
    p["blk_ln2_g"], p["blk_ln2_b"] = blk["ln2_g"][None, :], blk["ln2_b"][None, :]

    for i, (wi, bi) in enumerate(params["q_encoder"]):
        p[f"qenc{i}_w"], p[f"qenc{i}_b"] = wi, bi[None, :]
    c = params["cross"]
    for nm in ("q", "k", "v"):
        p[f"cr_w{nm}"] = _split_heads_w(c["w" + nm], nhead)
        p[f"cr_b{nm}"] = _split_heads_b(c["b" + nm], nhead)
    p["cr_wo"], p["cr_bo"] = _split_out_w(c["wo"], nhead), c["bo"][None, :]
    for i, (wi, bi) in enumerate(params["decoder"]):
        p[f"dec{i}_w"], p[f"dec{i}_b"] = wi, bi[None, :]
    return p


def tfspos_forward(params, xc, yc, xt, *, nhead, nlayers):
    B, Nc, dim_x = xc.shape
    dim_yc = yc.shape[-1]
    Nt = xt.shape[1]
    dim_h = params["encoder"][-1][1].shape[0]
    dim_yt = params["decoder"][-1][1].shape[0]

    kp = prepare_kernel_params(params, dim_x, nhead)
    order = tuple(sorted(kp.keys()))
    flat = [kp[k] for k in order]

    def const_spec(arr):
        nd = arr.ndim
        return pl.BlockSpec(arr.shape, lambda b, _nd=nd: (0,) * _nd)

    dims = (dim_x, dim_yc, dim_yt, dim_h, nhead, nlayers)
    kernel = functools.partial(_tfspos_kernel, order, dims)

    return pl.pallas_call(
        kernel,
        out_shape=jax.ShapeDtypeStruct((B, Nt, dim_yt), jnp.float32),
        grid=(B,),
        in_specs=([pl.BlockSpec((1, Nc, dim_x), lambda b: (b, 0, 0)),
                   pl.BlockSpec((1, Nc, dim_yc), lambda b: (b, 0, 0)),
                   pl.BlockSpec((1, Nt, dim_x), lambda b: (b, 0, 0))]
                  + [const_spec(a) for a in flat]),
        out_specs=pl.BlockSpec((1, Nt, dim_yt), lambda b: (b, 0, 0)),
        compiler_params=pltpu.CompilerParams(
            dimension_semantics=("parallel",)),
    )(xc, yc, xt, *flat)


# --------------------------------- parameters ---------------------------------------

def init_params(key, dim_x, dim_yc, dim_yt, dim_h, nhead):
    keys = iter(jax.random.split(key, 64))

    def lin(din, dout):
        s = 1.0 / math.sqrt(din)
        w = jax.random.uniform(next(keys), (din, dout), jnp.float32, -s, s)
        b = jax.random.uniform(next(keys), (dout,), jnp.float32, -s, s)
        return (w, b)

    def net(dims):
        return [lin(dims[i], dims[i + 1]) for i in range(len(dims) - 1)]

    def mha(e):
        (wq, bq), (wk, bk), (wv, bv), (wo, bo) = lin(e, e), lin(e, e), lin(e, e), lin(e, e)
        return dict(wq=wq, bq=bq, wk=wk, bk=bk, wv=wv, bv=bv, wo=wo, bo=bo)

    def ln(dim):
        g = 1.0 + 0.1 * jax.random.uniform(next(keys), (dim,), jnp.float32, -1.0, 1.0)
        b = 0.1 * jax.random.uniform(next(keys), (dim,), jnp.float32, -1.0, 1.0)
        return g, b

    e_blk = dim_h + dim_x
    g1, b1 = ln(e_blk)
    g2, b2 = ln(dim_h)
    wl1, bl1 = lin(e_blk, dim_h)
    block = dict(attn=mha(e_blk), ln1_g=g1, ln1_b=b1,
                 w_lin1=wl1, b_lin1=bl1, ln2_g=g2, ln2_b=b2)
    return dict(
        encoder=net([dim_x + dim_yc, dim_h, dim_h, dim_h]),
        decoder=net([dim_h, dim_h, dim_h, dim_yt]),
        q_encoder=net([dim_x, dim_h, dim_h, dim_h]),
        block=block,
        cross=mha(dim_h),
    )


# ------------------------------- pure-JAX reference ----------------------------------

def ref_forward(params, xc, yc, xt, nhead, nlayers):
    HI = jax.lax.Precision.HIGHEST

    def linear(x, w, b):
        return jnp.einsum("bnd,de->bne", x, w, precision=HI) + b

    def net(x, layers):
        for i, (w, b) in enumerate(layers):
            x = linear(x, w, b)
            if i < len(layers) - 1:
                x = jnp.maximum(x, 0.0)
        return x

    def mha(q, kv, p):
        B, Nq, E = q.shape
        Nk = kv.shape[1]
        dh = E // nhead
        qp = linear(q, p["wq"], p["bq"]).reshape(B, Nq, nhead, dh).transpose(0, 2, 1, 3)
        kp = linear(kv, p["wk"], p["bk"]).reshape(B, Nk, nhead, dh).transpose(0, 2, 1, 3)
        vp = linear(kv, p["wv"], p["bv"]).reshape(B, Nk, nhead, dh).transpose(0, 2, 1, 3)
        s = jnp.einsum("bhqd,bhkd->bhqk", qp, kp, precision=HI) / math.sqrt(dh)
        a = jax.nn.softmax(s, axis=-1)
        o = jnp.einsum("bhqk,bhkd->bhqd", a, vp, precision=HI)
        o = o.transpose(0, 2, 1, 3).reshape(B, Nq, E)
        return linear(o, p["wo"], p["bo"])

    def ln(x, g, b):
        mu = x.mean(-1, keepdims=True)
        var = ((x - mu) ** 2).mean(-1, keepdims=True)
        return (x - mu) / jnp.sqrt(var + _EPS) * g + b

    latents = net(jnp.concatenate([xc, yc], axis=-1), params["encoder"])
    blk = params["block"]
    for _ in range(nlayers):
        x = jnp.concatenate([xc, latents], axis=-1)
        x = ln(x + mha(x, x, blk["attn"]), blk["ln1_g"], blk["ln1_b"])
        latents = ln(jnp.einsum("bnd,de->bne", x, blk["w_lin1"], precision=HI)
                     + blk["b_lin1"], blk["ln2_g"], blk["ln2_b"])
    q = net(xt, params["q_encoder"])
    z = q + mha(q, latents, params["cross"])
    return net(z, params["decoder"])


# -------------------------------------- main -----------------------------------------

if __name__ == "__main__":
    # nhead must divide both dim_h (cross-attn) and dim_h + dim_x (block attn): 32 & 36.
    dim_x, dim_yc, dim_yt, dim_h, nhead, nlayers = 4, 3, 2, 32, 4, 2
    B, Nc, Nt = 2, 16, 8

    key = jax.random.PRNGKey(0)
    kparams, kx1, kx2, kx3 = jax.random.split(key, 4)
    params = init_params(kparams, dim_x, dim_yc, dim_yt, dim_h, nhead)

    xc = jax.random.normal(kx1, (B, Nc, dim_x), jnp.float32)
    yc = jax.random.normal(kx2, (B, Nc, dim_yc), jnp.float32)
    xt = jax.random.normal(kx3, (B, Nt, dim_x), jnp.float32)

    fwd = jax.jit(functools.partial(tfspos_forward, nhead=nhead, nlayers=nlayers))
    out = jax.block_until_ready(fwd(params, xc, yc, xt))
    assert out.shape == (B, Nt, dim_yt)

    ref = ref_forward(params, xc, yc, xt, nhead, nlayers)
    err = float(jnp.max(jnp.abs(out - ref)))
    if not (err < 5e-2):
        raise AssertionError(f"Pallas vs reference mismatch: max abs err = {err}")

    print("KERNEL_OK")
</pallas_src>

<mosaic_0001>
module attributes {stable_mosaic.version = 11 : i64} {
  func.func @_tfspos_kernel(%arg0: i32, %arg1: memref<1x16x4xf32, #tpu.memory_space<vmem>>, %arg2: memref<1x16x3xf32, #tpu.memory_space<vmem>>, %arg3: memref<1x8x4xf32, #tpu.memory_space<vmem>>, %arg4: memref<4x1x9xf32, #tpu.memory_space<vmem>>, %arg5: memref<1x32xf32, #tpu.memory_space<vmem>>, %arg6: memref<1x4xf32, #tpu.memory_space<vmem>>, %arg7: memref<4x1x9xf32, #tpu.memory_space<vmem>>, %arg8: memref<4x1x9xf32, #tpu.memory_space<vmem>>, %arg9: memref<1x32xf32, #tpu.memory_space<vmem>>, %arg10: memref<32x32xf32, #tpu.memory_space<vmem>>, %arg11: memref<4x32xf32, #tpu.memory_space<vmem>>, %arg12: memref<1x32xf32, #tpu.memory_space<vmem>>, %arg13: memref<1x4xf32, #tpu.memory_space<vmem>>, %arg14: memref<1x32xf32, #tpu.memory_space<vmem>>, %arg15: memref<1x4xf32, #tpu.memory_space<vmem>>, %arg16: memref<1x32xf32, #tpu.memory_space<vmem>>, %arg17: memref<1x32xf32, #tpu.memory_space<vmem>>, %arg18: memref<4x32x9xf32, #tpu.memory_space<vmem>>, %arg19: memref<4x4x9xf32, #tpu.memory_space<vmem>>, %arg20: memref<4x9x32xf32, #tpu.memory_space<vmem>>, %arg21: memref<4x9x4xf32, #tpu.memory_space<vmem>>, %arg22: memref<4x32x9xf32, #tpu.memory_space<vmem>>, %arg23: memref<4x4x9xf32, #tpu.memory_space<vmem>>, %arg24: memref<4x32x9xf32, #tpu.memory_space<vmem>>, %arg25: memref<4x4x9xf32, #tpu.memory_space<vmem>>, %arg26: memref<4x1x8xf32, #tpu.memory_space<vmem>>, %arg27: memref<1x32xf32, #tpu.memory_space<vmem>>, %arg28: memref<4x1x8xf32, #tpu.memory_space<vmem>>, %arg29: memref<4x1x8xf32, #tpu.memory_space<vmem>>, %arg30: memref<4x32x8xf32, #tpu.memory_space<vmem>>, %arg31: memref<4x8x32xf32, #tpu.memory_space<vmem>>, %arg32: memref<4x32x8xf32, #tpu.memory_space<vmem>>, %arg33: memref<4x32x8xf32, #tpu.memory_space<vmem>>, %arg34: memref<1x32xf32, #tpu.memory_space<vmem>>, %arg35: memref<32x32xf32, #tpu.memory_space<vmem>>, %arg36: memref<1x32xf32, #tpu.memory_space<vmem>>, %arg37: memref<32x32xf32, #tpu.memory_space<vmem>>, %arg38: memref<1x2xf32, #tpu.memory_space<vmem>>, %arg39: memref<32x2xf32, #tpu.memory_space<vmem>>, %arg40: memref<1x32xf32, #tpu.memory_space<vmem>>, %arg41: memref<4x32xf32, #tpu.memory_space<vmem>>, %arg42: memref<3x32xf32, #tpu.memory_space<vmem>>, %arg43: memref<1x32xf32, #tpu.memory_space<vmem>>, %arg44: memref<32x32xf32, #tpu.memory_space<vmem>>, %arg45: memref<1x32xf32, #tpu.memory_space<vmem>>, %arg46: memref<32x32xf32, #tpu.memory_space<vmem>>, %arg47: memref<1x32xf32, #tpu.memory_space<vmem>>, %arg48: memref<4x32xf32, #tpu.memory_space<vmem>>, %arg49: memref<1x32xf32, #tpu.memory_space<vmem>>, %arg50: memref<32x32xf32, #tpu.memory_space<vmem>>, %arg51: memref<1x32xf32, #tpu.memory_space<vmem>>, %arg52: memref<32x32xf32, #tpu.memory_space<vmem>>, %arg53: memref<1x8x2xf32, #tpu.memory_space<vmem>>) attributes {dimension_semantics = [#tpu.dimension_semantics<parallel>], iteration_bounds = array<i64: 2>, scalar_prefetch = 0 : i64, scratch_operands = 0 : i64, tpu.core_type = #tpu.core_type<tc>, window_params = [{transform_indices = @transform_0, window_bounds = array<i64: 1, 16, 4>}, {transform_indices = @transform_1, window_bounds = array<i64: 1, 16, 3>}, {transform_indices = @transform_2, window_bounds = array<i64: 1, 8, 4>}, {pipeline_mode = #tpu.pipeline_mode<synchronous>, transform_indices = @transform_3, window_bounds = array<i64: 4, 1, 9>}, {pipeline_mode = #tpu.pipeline_mode<synchronous>, transform_indices = @transform_4, window_bounds = array<i64: 1, 32>}, {pipeline_mode = #tpu.pipeline_mode<synchronous>, transform_indices = @transform_5, window_bounds = array<i64: 1, 4>}, {pipeline_mode = #tpu.pipeline_mode<synchronous>, transform_indices = @transform_6, window_bounds = array<i64: 4, 1, 9>}, {pipeline_mode = #tpu.pipeline_mode<synchronous>, transform_indices = @transform_7, window_bounds = array<i64: 4, 1, 9>}, {pipeline_mode = #tpu.pipeline_mode<synchronous>, transform_indices = @transform_8, window_bounds = array<i64: 1, 32>}, {pipeline_mode = #tpu.pipeline_mode<synchronous>, transform_indices = @transform_9, window_bounds = array<i64: 32, 32>}, {pipeline_mode = #tpu.pipeline_mode<synchronous>, transform_indices = @transform_10, window_bounds = array<i64: 4, 32>}, {pipeline_mode = #tpu.pipeline_mode<synchronous>, transform_indices = @transform_11, window_bounds = array<i64: 1, 32>}, {pipeline_mode = #tpu.pipeline_mode<synchronous>, transform_indices = @transform_12, window_bounds = array<i64: 1, 4>}, {pipeline_mode = #tpu.pipeline_mode<synchronous>, transform_indices = @transform_13, window_bounds = array<i64: 1, 32>}, {pipeline_mode = #tpu.pipeline_mode<synchronous>, transform_indices = @transform_14, window_bounds = array<i64: 1, 4>}, {pipeline_mode = #tpu.pipeline_mode<synchronous>, transform_indices = @transform_15, window_bounds = array<i64: 1, 32>}, {pipeline_mode = #tpu.pipeline_mode<synchronous>, transform_indices = @transform_16, window_bounds = array<i64: 1, 32>}, {pipeline_mode = #tpu.pipeline_mode<synchronous>, transform_indices = @transform_17, window_bounds = array<i64: 4, 32, 9>}, {pipeline_mode = #tpu.pipeline_mode<synchronous>, transform_indices = @transform_18, window_bounds = array<i64: 4, 4, 9>}, {pipeline_mode = #tpu.pipeline_mode<synchronous>, transform_indices = @transform_19, window_bounds = array<i64: 4, 9, 32>}, {pipeline_mode = #tpu.pipeline_mode<synchronous>, transform_indices = @transform_20, window_bounds = array<i64: 4, 9, 4>}, {pipeline_mode = #tpu.pipeline_mode<synchronous>, transform_indices = @transform_21, window_bounds = array<i64: 4, 32, 9>}, {pipeline_mode = #tpu.pipeline_mode<synchronous>, transform_indices = @transform_22, window_bounds = array<i64: 4, 4, 9>}, {pipeline_mode = #tpu.pipeline_mode<synchronous>, transform_indices = @transform_23, window_bounds = array<i64: 4, 32, 9>}, {pipeline_mode = #tpu.pipeline_mode<synchronous>, transform_indices = @transform_24, window_bounds = array<i64: 4, 4, 9>}, {pipeline_mode = #tpu.pipeline_mode<synchronous>, transform_indices = @transform_25, window_bounds = array<i64: 4, 1, 8>}, {pipeline_mode = #tpu.pipeline_mode<synchronous>, transform_indices = @transform_26, window_bounds = array<i64: 1, 32>}, {pipeline_mode = #tpu.pipeline_mode<synchronous>, transform_indices = @transform_27, window_bounds = array<i64: 4, 1, 8>}, {pipeline_mode = #tpu.pipeline_mode<synchronous>, transform_indices = @transform_28, window_bounds = array<i64: 4, 1, 8>}, {pipeline_mode = #tpu.pipeline_mode<synchronous>, transform_indices = @transform_29, window_bounds = array<i64: 4, 32, 8>}, {pipeline_mode = #tpu.pipeline_mode<synchronous>, transform_indices = @transform_30, window_bounds = array<i64: 4, 8, 32>}, {pipeline_mode = #tpu.pipeline_mode<synchronous>, transform_indices = @transform_31, window_bounds = array<i64: 4, 32, 8>}, {pipeline_mode = #tpu.pipeline_mode<synchronous>, transform_indices = @transform_32, window_bounds = array<i64: 4, 32, 8>}, {pipeline_mode = #tpu.pipeline_mode<synchronous>, transform_indices = @transform_33, window_bounds = array<i64: 1, 32>}, {pipeline_mode = #tpu.pipeline_mode<synchronous>, transform_indices = @transform_34, window_bounds = array<i64: 32, 32>}, {pipeline_mode = #tpu.pipeline_mode<synchronous>, transform_indices = @transform_35, window_bounds = array<i64: 1, 32>}, {pipeline_mode = #tpu.pipeline_mode<synchronous>, transform_indices = @transform_36, window_bounds = array<i64: 32, 32>}, {pipeline_mode = #tpu.pipeline_mode<synchronous>, transform_indices = @transform_37, window_bounds = array<i64: 1, 2>}, {pipeline_mode = #tpu.pipeline_mode<synchronous>, transform_indices = @transform_38, window_bounds = array<i64: 32, 2>}, {pipeline_mode = #tpu.pipeline_mode<synchronous>, transform_indices = @transform_39, window_bounds = array<i64: 1, 32>}, {pipeline_mode = #tpu.pipeline_mode<synchronous>, transform_indices = @transform_40, window_bounds = array<i64: 4, 32>}, {pipeline_mode = #tpu.pipeline_mode<synchronous>, transform_indices = @transform_41, window_bounds = array<i64: 3, 32>}, {pipeline_mode = #tpu.pipeline_mode<synchronous>, transform_indices = @transform_42, window_bounds = array<i64: 1, 32>}, {pipeline_mode = #tpu.pipeline_mode<synchronous>, transform_indices = @transform_43, window_bounds = array<i64: 32, 32>}, {pipeline_mode = #tpu.pipeline_mode<synchronous>, transform_indices = @transform_44, window_bounds = array<i64: 1, 32>}, {pipeline_mode = #tpu.pipeline_mode<synchronous>, transform_indices = @transform_45, window_bounds = array<i64: 32, 32>}, {pipeline_mode = #tpu.pipeline_mode<synchronous>, transform_indices = @transform_46, window_bounds = array<i64: 1, 32>}, {pipeline_mode = #tpu.pipeline_mode<synchronous>, transform_indices = @transform_47, window_bounds = array<i64: 4, 32>}, {pipeline_mode = #tpu.pipeline_mode<synchronous>, transform_indices = @transform_48, window_bounds = array<i64: 1, 32>}, {pipeline_mode = #tpu.pipeline_mode<synchronous>, transform_indices = @transform_49, window_bounds = array<i64: 32, 32>}, {pipeline_mode = #tpu.pipeline_mode<synchronous>, transform_indices = @transform_50, window_bounds = array<i64: 1, 32>}, {pipeline_mode = #tpu.pipeline_mode<synchronous>, transform_indices = @transform_51, window_bounds = array<i64: 32, 32>}, {transform_indices = @transform_52, window_bounds = array<i64: 1, 8, 2>}]} {
    %c0 = arith.constant 0 : index
    %c0_0 = arith.constant 0 : index
    %c0_1 = arith.constant 0 : index
    %0 = vector.load %arg1[%c0, %c0_0, %c0_1] : memref<1x16x4xf32, #tpu.memory_space<vmem>>, vector<1x16x4xf32>
    %1 = vector.shape_cast %0 : vector<1x16x4xf32> to vector<16x4xf32>
    %c0_2 = arith.constant 0 : index
    %c0_3 = arith.constant 0 : index
    %c0_4 = arith.constant 0 : index
    %2 = vector.load %arg2[%c0_2, %c0_3, %c0_4] : memref<1x16x3xf32, #tpu.memory_space<vmem>>, vector<1x16x3xf32>
    %3 = vector.shape_cast %2 : vector<1x16x3xf32> to vector<16x3xf32>
    %c0_5 = arith.constant 0 : index
    %c0_6 = arith.constant 0 : index
    %c0_7 = arith.constant 0 : index
    %4 = vector.load %arg3[%c0_5, %c0_6, %c0_7] : memref<1x8x4xf32, #tpu.memory_space<vmem>>, vector<1x8x4xf32>
    %5 = vector.shape_cast %4 : vector<1x8x4xf32> to vector<8x4xf32>
    %c0_8 = arith.constant 0 : index
    %c0_9 = arith.constant 0 : index
    %6 = vector.load %arg41[%c0_8, %c0_9] : memref<4x32xf32, #tpu.memory_space<vmem>>, vector<4x32xf32>
    %cst = arith.constant dense<0.000000e+00> : vector<16x32xf32>
    %7 = tpu.matmul %1, %6, %cst {dimension_numbers = #tpu.dot_dimension_numbers<[1], [0], [0], [1], [0, 0, 1, 1], [], []>} : vector<16x4xf32>, vector<4x32xf32>, vector<16x32xf32> -> vector<16x32xf32>
    %c0_10 = arith.constant 0 : index
    %c0_11 = arith.constant 0 : index
    %8 = vector.load %arg42[%c0_10, %c0_11] : memref<3x32xf32, #tpu.memory_space<vmem>>, vector<3x32xf32>
    %cst_12 = arith.constant dense<0.000000e+00> : vector<16x32xf32>
    %9 = tpu.matmul %3, %8, %cst_12 {dimension_numbers = #tpu.dot_dimension_numbers<[1], [0], [0], [1], [0, 0, 1, 1], [], []>} : vector<16x3xf32>, vector<3x32xf32>, vector<16x32xf32> -> vector<16x32xf32>
    %10 = arith.addf %7, %9 : vector<16x32xf32>
    %c0_13 = arith.constant 0 : index
    %c0_14 = arith.constant 0 : index
    %11 = vector.load %arg40[%c0_13, %c0_14] : memref<1x32xf32, #tpu.memory_space<vmem>>, vector<1x32xf32>
    %12 = vector.broadcast %11 : vector<1x32xf32> to vector<16x32xf32>
    %13 = arith.addf %10, %12 : vector<16x32xf32>
    %cst_15 = arith.constant 0.000000e+00 : f32
    %14 = vector.broadcast %cst_15 : f32 to vector<16x32xf32>
    %15 = arith.maximumf %13, %14 : vector<16x32xf32>
    %c0_16 = arith.constant 0 : index
    %c0_17 = arith.constant 0 : index
    %16 = vector.load %arg44[%c0_16, %c0_17] : memref<32x32xf32, #tpu.memory_space<vmem>>, vector<32x32xf32>
    %cst_18 = arith.constant dense<0.000000e+00> : vector<16x32xf32>
    %17 = tpu.matmul %15, %16, %cst_18 {dimension_numbers = #tpu.dot_dimension_numbers<[1], [0], [0], [1], [0, 0, 1, 1], [], []>} : vector<16x32xf32>, vector<32x32xf32>, vector<16x32xf32> -> vector<16x32xf32>
    %c0_19 = arith.constant 0 : index
    %c0_20 = arith.constant 0 : index
    %18 = vector.load %arg43[%c0_19, %c0_20] : memref<1x32xf32, #tpu.memory_space<vmem>>, vector<1x32xf32>
    %19 = vector.broadcast %18 : vector<1x32xf32> to vector<16x32xf32>
    %20 = arith.addf %17, %19 : vector<16x32xf32>
    %cst_21 = arith.constant 0.000000e+00 : f32
    %21 = vector.broadcast %cst_21 : f32 to vector<16x32xf32>
    %22 = arith.maximumf %20, %21 : vector<16x32xf32>
    %c0_22 = arith.constant 0 : index
    %c0_23 = arith.constant 0 : index
    %23 = vector.load %arg46[%c0_22, %c0_23] : memref<32x32xf32, #tpu.memory_space<vmem>>, vector<32x32xf32>
    %cst_24 = arith.constant dense<0.000000e+00> : vector<16x32xf32>
    %24 = tpu.matmul %22, %23, %cst_24 {dimension_numbers = #tpu.dot_dimension_numbers<[1], [0], [0], [1], [0, 0, 1, 1], [], []>} : vector<16x32xf32>, vector<32x32xf32>, vector<16x32xf32> -> vector<16x32xf32>
    %c0_25 = arith.constant 0 : index
    %c0_26 = arith.constant 0 : index
    %25 = vector.load %arg45[%c0_25, %c0_26] : memref<1x32xf32, #tpu.memory_space<vmem>>, vector<1x32xf32>
    %26 = vector.broadcast %25 : vector<1x32xf32> to vector<16x32xf32>
    %27 = arith.addf %24, %26 : vector<16x32xf32>
    %c0_i32 = arith.constant 0 : i32
    %c2_i32 = arith.constant 2 : i32
    %28 = arith.addi %c0_i32, %c2_i32 : i32
    %c1_i32 = arith.constant 1 : i32
    %29 = scf.for %arg54 = %c0_i32 to %28 step %c1_i32 iter_args(%arg55 = %27) -> (vector<16x32xf32>)  : i32 {
      %cst_184 = arith.constant 0.000000e+00 : f32
      %232 = vector.broadcast %cst_184 : f32 to vector<16x4xf32>
      %cst_185 = arith.constant 0.000000e+00 : f32
      %233 = vector.broadcast %cst_185 : f32 to vector<16x32xf32>
      %c0_186 = arith.constant 0 : index
      %c0_187 = arith.constant 0 : index
      %c0_188 = arith.constant 0 : index
      %234 = vector.load %arg23[%c0_186, %c0_187, %c0_188] : memref<4x4x9xf32, #tpu.memory_space<vmem>>, vector<1x4x9xf32>
      %235 = vector.shape_cast %234 : vector<1x4x9xf32> to vector<4x9xf32>
      %cst_189 = arith.constant dense<0.000000e+00> : vector<16x9xf32>
      %236 = tpu.matmul %1, %235, %cst_189 {dimension_numbers = #tpu.dot_dimension_numbers<[1], [0], [0], [1], [0, 0, 1, 1], [], []>} : vector<16x4xf32>, vector<4x9xf32>, vector<16x9xf32> -> vector<16x9xf32>
      %c0_190 = arith.constant 0 : index
      %c0_191 = arith.constant 0 : index
      %c0_192 = arith.constant 0 : index
      %237 = vector.load %arg22[%c0_190, %c0_191, %c0_192] : memref<4x32x9xf32, #tpu.memory_space<vmem>>, vector<1x32x9xf32>
      %238 = vector.shape_cast %237 : vector<1x32x9xf32> to vector<32x9xf32>
      %cst_193 = arith.constant dense<0.000000e+00> : vector<16x9xf32>
      %239 = tpu.matmul %arg55, %238, %cst_193 {dimension_numbers = #tpu.dot_dimension_numbers<[1], [0], [0], [1], [0, 0, 1, 1], [], []>} : vector<16x32xf32>, vector<32x9xf32>, vector<16x9xf32> -> vector<16x9xf32>
      %240 = arith.addf %236, %239 : vector<16x9xf32>
      %c0_194 = arith.constant 0 : index
      %c0_195 = arith.constant 0 : index
      %c0_196 = arith.constant 0 : index
      %241 = vector.load %arg7[%c0_194, %c0_195, %c0_196] : memref<4x1x9xf32, #tpu.memory_space<vmem>>, vector<1x1x9xf32>
      %242 = vector.shape_cast %241 : vector<1x1x9xf32> to vector<1x9xf32>
      %243 = vector.broadcast %242 : vector<1x9xf32> to vector<16x9xf32>
      %244 = arith.addf %240, %243 : vector<16x9xf32>
      %c0_197 = arith.constant 0 : index
      %c0_198 = arith.constant 0 : index
      %c0_199 = arith.constant 0 : index
      %245 = vector.load %arg19[%c0_197, %c0_198, %c0_199] : memref<4x4x9xf32, #tpu.memory_space<vmem>>, vector<1x4x9xf32>
      %246 = vector.shape_cast %245 : vector<1x4x9xf32> to vector<4x9xf32>
      %cst_200 = arith.constant dense<0.000000e+00> : vector<16x9xf32>
      %247 = tpu.matmul %1, %246, %cst_200 {dimension_numbers = #tpu.dot_dimension_numbers<[1], [0], [0], [1], [0, 0, 1, 1], [], []>} : vector<16x4xf32>, vector<4x9xf32>, vector<16x9xf32> -> vector<16x9xf32>
      %c0_201 = arith.constant 0 : index
      %c0_202 = arith.constant 0 : index
      %c0_203 = arith.constant 0 : index
      %248 = vector.load %arg18[%c0_201, %c0_202, %c0_203] : memref<4x32x9xf32, #tpu.memory_space<vmem>>, vector<1x32x9xf32>
      %249 = vector.shape_cast %248 : vector<1x32x9xf32> to vector<32x9xf32>
      %cst_204 = arith.constant dense<0.000000e+00> : vector<16x9xf32>
      %250 = tpu.matmul %arg55, %249, %cst_204 {dimension_numbers = #tpu.dot_dimension_numbers<[1], [0], [0], [1], [0, 0, 1, 1], [], []>} : vector<16x32xf32>, vector<32x9xf32>, vector<16x9xf32> -> vector<16x9xf32>
      %251 = arith.addf %247, %250 : vector<16x9xf32>
      %c0_205 = arith.constant 0 : index
      %c0_206 = arith.constant 0 : index
      %c0_207 = arith.constant 0 : index
      %252 = vector.load %arg4[%c0_205, %c0_206, %c0_207] : memref<4x1x9xf32, #tpu.memory_space<vmem>>, vector<1x1x9xf32>
      %253 = vector.shape_cast %252 : vector<1x1x9xf32> to vector<1x9xf32>
      %254 = vector.broadcast %253 : vector<1x9xf32> to vector<16x9xf32>
      %255 = arith.addf %251, %254 : vector<16x9xf32>
      %c0_208 = arith.constant 0 : index
      %c0_209 = arith.constant 0 : index
      %c0_210 = arith.constant 0 : index
      %256 = vector.load %arg25[%c0_208, %c0_209, %c0_210] : memref<4x4x9xf32, #tpu.memory_space<vmem>>, vector<1x4x9xf32>
      %257 = vector.shape_cast %256 : vector<1x4x9xf32> to vector<4x9xf32>
      %cst_211 = arith.constant dense<0.000000e+00> : vector<16x9xf32>
      %258 = tpu.matmul %1, %257, %cst_211 {dimension_numbers = #tpu.dot_dimension_numbers<[1], [0], [0], [1], [0, 0, 1, 1], [], []>} : vector<16x4xf32>, vector<4x9xf32>, vector<16x9xf32> -> vector<16x9xf32>
      %c0_212 = arith.constant 0 : index
      %c0_213 = arith.constant 0 : index
      %c0_214 = arith.constant 0 : index
      %259 = vector.load %arg24[%c0_212, %c0_213, %c0_214] : memref<4x32x9xf32, #tpu.memory_space<vmem>>, vector<1x32x9xf32>
      %260 = vector.shape_cast %259 : vector<1x32x9xf32> to vector<32x9xf32>
      %cst_215 = arith.constant dense<0.000000e+00> : vector<16x9xf32>
      %261 = tpu.matmul %arg55, %260, %cst_215 {dimension_numbers = #tpu.dot_dimension_numbers<[1], [0], [0], [1], [0, 0, 1, 1], [], []>} : vector<16x32xf32>, vector<32x9xf32>, vector<16x9xf32> -> vector<16x9xf32>
      %262 = arith.addf %258, %261 : vector<16x9xf32>
      %c0_216 = arith.constant 0 : index
      %c0_217 = arith.constant 0 : index
      %c0_218 = arith.constant 0 : index
      %263 = vector.load %arg8[%c0_216, %c0_217, %c0_218] : memref<4x1x9xf32, #tpu.memory_space<vmem>>, vector<1x1x9xf32>
      %264 = vector.shape_cast %263 : vector<1x1x9xf32> to vector<1x9xf32>
      %265 = vector.broadcast %264 : vector<1x9xf32> to vector<16x9xf32>
      %266 = arith.addf %262, %265 : vector<16x9xf32>
      %cst_219 = arith.constant dense<0.000000e+00> : vector<16x16xf32>
      %267 = tpu.matmul %244, %255, %cst_219 {dimension_numbers = #tpu.dot_dimension_numbers<[1], [1], [0], [0], [0, 0, 1, 0], [], []>} : vector<16x9xf32>, vector<16x9xf32>, vector<16x16xf32> -> vector<16x16xf32>
      %cst_220 = arith.constant 0.333333343 : f32
      %268 = vector.broadcast %cst_220 : f32 to vector<16x16xf32>
      %269 = arith.mulf %267, %268 : vector<16x16xf32>
      %cst_221 = arith.constant dense<0xFF800000> : vector<16xf32>
      %270 = vector.multi_reduction <maximumf>, %269, %cst_221 [1] : vector<16x16xf32> to vector<16xf32>
      %271 = vector.shape_cast %270 : vector<16xf32> to vector<16x1xf32>
      %272 = vector.broadcast %271 : vector<16x1xf32> to vector<16x16xf32>
      %273 = arith.subf %269, %272 : vector<16x16xf32>
      %274 = math.exp %273 : vector<16x16xf32>
      %cst_222 = arith.constant dense<0.000000e+00> : vector<16xf32>
      %275 = vector.multi_reduction <add>, %274, %cst_222 [1] : vector<16x16xf32> to vector<16xf32>
      %276 = vector.shape_cast %275 : vector<16xf32> to vector<16x1xf32>
      %277 = tpu.reciprocal %276 {approx = true} : vector<16x1xf32> -> vector<16x1xf32>
      %278 = vector.broadcast %277 : vector<16x1xf32> to vector<16x16xf32>
      %279 = arith.mulf %274, %278 : vector<16x16xf32>
      %cst_223 = arith.constant dense<0.000000e+00> : vector<16x9xf32>
      %280 = tpu.matmul %279, %266, %cst_223 {dimension_numbers = #tpu.dot_dimension_numbers<[1], [0], [0], [1], [0, 0, 1, 1], [], []>} : vector<16x16xf32>, vector<16x9xf32>, vector<16x9xf32> -> vector<16x9xf32>
      %c0_224 = arith.constant 0 : index
      %c0_225 = arith.constant 0 : index
      %c0_226 = arith.constant 0 : index
      %281 = vector.load %arg21[%c0_224, %c0_225, %c0_226] : memref<4x9x4xf32, #tpu.memory_space<vmem>>, vector<1x9x4xf32>
      %282 = vector.shape_cast %281 : vector<1x9x4xf32> to vector<9x4xf32>
      %cst_227 = arith.constant dense<0.000000e+00> : vector<16x4xf32>
      %283 = tpu.matmul %280, %282, %cst_227 {dimension_numbers = #tpu.dot_dimension_numbers<[1], [0], [0], [1], [0, 0, 1, 1], [], []>} : vector<16x9xf32>, vector<9x4xf32>, vector<16x4xf32> -> vector<16x4xf32>
      %284 = arith.addf %232, %283 : vector<16x4xf32>
      %c0_228 = arith.constant 0 : index
      %c0_229 = arith.constant 0 : index
      %c0_230 = arith.constant 0 : index
      %285 = vector.load %arg20[%c0_228, %c0_229, %c0_230] : memref<4x9x32xf32, #tpu.memory_space<vmem>>, vector<1x9x32xf32>
      %286 = vector.shape_cast %285 : vector<1x9x32xf32> to vector<9x32xf32>
      %cst_231 = arith.constant dense<0.000000e+00> : vector<16x32xf32>
      %287 = tpu.matmul %280, %286, %cst_231 {dimension_numbers = #tpu.dot_dimension_numbers<[1], [0], [0], [1], [0, 0, 1, 1], [], []>} : vector<16x9xf32>, vector<9x32xf32>, vector<16x32xf32> -> vector<16x32xf32>
      %288 = arith.addf %233, %287 : vector<16x32xf32>
      %c1_232 = arith.constant 1 : index
      %c0_233 = arith.constant 0 : index
      %c0_234 = arith.constant 0 : index
      %289 = vector.load %arg23[%c1_232, %c0_233, %c0_234] : memref<4x4x9xf32, #tpu.memory_space<vmem>>, vector<1x4x9xf32>
      %290 = vector.shape_cast %289 : vector<1x4x9xf32> to vector<4x9xf32>
      %cst_235 = arith.constant dense<0.000000e+00> : vector<16x9xf32>
      %291 = tpu.matmul %1, %290, %cst_235 {dimension_numbers = #tpu.dot_dimension_numbers<[1], [0], [0], [1], [0, 0, 1, 1], [], []>} : vector<16x4xf32>, vector<4x9xf32>, vector<16x9xf32> -> vector<16x9xf32>
      %c1_236 = arith.constant 1 : index
      %c0_237 = arith.constant 0 : index
      %c0_238 = arith.constant 0 : index
      %292 = vector.load %arg22[%c1_236, %c0_237, %c0_238] : memref<4x32x9xf32, #tpu.memory_space<vmem>>, vector<1x32x9xf32>
      %293 = vector.shape_cast %292 : vector<1x32x9xf32> to vector<32x9xf32>
      %cst_239 = arith.constant dense<0.000000e+00> : vector<16x9xf32>
      %294 = tpu.matmul %arg55, %293, %cst_239 {dimension_numbers = #tpu.dot_dimension_numbers<[1], [0], [0], [1], [0, 0, 1, 1], [], []>} : vector<16x32xf32>, vector<32x9xf32>, vector<16x9xf32> -> vector<16x9xf32>
      %295 = arith.addf %291, %294 : vector<16x9xf32>
      %c1_240 = arith.constant 1 : index
      %c0_241 = arith.constant 0 : index
      %c0_242 = arith.constant 0 : index
      %296 = vector.load %arg7[%c1_240, %c0_241, %c0_242] : memref<4x1x9xf32, #tpu.memory_space<vmem>>, vector<1x1x9xf32>
      %297 = vector.shape_cast %296 : vector<1x1x9xf32> to vector<1x9xf32>
      %298 = vector.broadcast %297 : vector<1x9xf32> to vector<16x9xf32>
      %299 = arith.addf %295, %298 : vector<16x9xf32>
      %c1_243 = arith.constant 1 : index
      %c0_244 = arith.constant 0 : index
      %c0_245 = arith.constant 0 : index
      %300 = vector.load %arg19[%c1_243, %c0_244, %c0_245] : memref<4x4x9xf32, #tpu.memory_space<vmem>>, vector<1x4x9xf32>
      %301 = vector.shape_cast %300 : vector<1x4x9xf32> to vector<4x9xf32>
      %cst_246 = arith.constant dense<0.000000e+00> : vector<16x9xf32>
      %302 = tpu.matmul %1, %301, %cst_246 {dimension_numbers = #tpu.dot_dimension_numbers<[1], [0], [0], [1], [0, 0, 1, 1], [], []>} : vector<16x4xf32>, vector<4x9xf32>, vector<16x9xf32> -> vector<16x9xf32>
      %c1_247 = arith.constant 1 : index
      %c0_248 = arith.constant 0 : index
      %c0_249 = arith.constant 0 : index
      %303 = vector.load %arg18[%c1_247, %c0_248, %c0_249] : memref<4x32x9xf32, #tpu.memory_space<vmem>>, vector<1x32x9xf32>
      %304 = vector.shape_cast %303 : vector<1x32x9xf32> to vector<32x9xf32>
      %cst_250 = arith.constant dense<0.000000e+00> : vector<16x9xf32>
      %305 = tpu.matmul %arg55, %304, %cst_250 {dimension_numbers = #tpu.dot_dimension_numbers<[1], [0], [0], [1], [0, 0, 1, 1], [], []>} : vector<16x32xf32>, vector<32x9xf32>, vector<16x9xf32> -> vector<16x9xf32>
      %306 = arith.addf %302, %305 : vector<16x9xf32>
      %c1_251 = arith.constant 1 : index
      %c0_252 = arith.constant 0 : index
      %c0_253 = arith.constant 0 : index
      %307 = vector.load %arg4[%c1_251, %c0_252, %c0_253] : memref<4x1x9xf32, #tpu.memory_space<vmem>>, vector<1x1x9xf32>
      %308 = vector.shape_cast %307 : vector<1x1x9xf32> to vector<1x9xf32>
      %309 = vector.broadcast %308 : vector<1x9xf32> to vector<16x9xf32>
      %310 = arith.addf %306, %309 : vector<16x9xf32>
      %c1_254 = arith.constant 1 : index
      %c0_255 = arith.constant 0 : index
      %c0_256 = arith.constant 0 : index
      %311 = vector.load %arg25[%c1_254, %c0_255, %c0_256] : memref<4x4x9xf32, #tpu.memory_space<vmem>>, vector<1x4x9xf32>
      %312 = vector.shape_cast %311 : vector<1x4x9xf32> to vector<4x9xf32>
      %cst_257 = arith.constant dense<0.000000e+00> : vector<16x9xf32>
      %313 = tpu.matmul %1, %312, %cst_257 {dimension_numbers = #tpu.dot_dimension_numbers<[1], [0], [0], [1], [0, 0, 1, 1], [], []>} : vector<16x4xf32>, vector<4x9xf32>, vector<16x9xf32> -> vector<16x9xf32>
      %c1_258 = arith.constant 1 : index
      %c0_259 = arith.constant 0 : index
      %c0_260 = arith.constant 0 : index
      %314 = vector.load %arg24[%c1_258, %c0_259, %c0_260] : memref<4x32x9xf32, #tpu.memory_space<vmem>>, vector<1x32x9xf32>
      %315 = vector.shape_cast %314 : vector<1x32x9xf32> to vector<32x9xf32>
      %cst_261 = arith.constant dense<0.000000e+00> : vector<16x9xf32>
      %316 = tpu.matmul %arg55, %315, %cst_261 {dimension_numbers = #tpu.dot_dimension_numbers<[1], [0], [0], [1], [0, 0, 1, 1], [], []>} : vector<16x32xf32>, vector<32x9xf32>, vector<16x9xf32> -> vector<16x9xf32>
      %317 = arith.addf %313, %316 : vector<16x9xf32>
      %c1_262 = arith.constant 1 : index
      %c0_263 = arith.constant 0 : index
      %c0_264 = arith.constant 0 : index
      %318 = vector.load %arg8[%c1_262, %c0_263, %c0_264] : memref<4x1x9xf32, #tpu.memory_space<vmem>>, vector<1x1x9xf32>
      %319 = vector.shape_cast %318 : vector<1x1x9xf32> to vector<1x9xf32>
      %320 = vector.broadcast %319 : vector<1x9xf32> to vector<16x9xf32>
      %321 = arith.addf %317, %320 : vector<16x9xf32>
      %cst_265 = arith.constant dense<0.000000e+00> : vector<16x16xf32>
      %322 = tpu.matmul %299, %310, %cst_265 {dimension_numbers = #tpu.dot_dimension_numbers<[1], [1], [0], [0], [0, 0, 1, 0], [], []>} : vector<16x9xf32>, vector<16x9xf32>, vector<16x16xf32> -> vector<16x16xf32>
      %cst_266 = arith.constant 0.333333343 : f32
      %323 = vector.broadcast %cst_266 : f32 to vector<16x16xf32>
      %324 = arith.mulf %322, %323 : vector<16x16xf32>
      %cst_267 = arith.constant dense<0xFF800000> : vector<16xf32>
      %325 = vector.multi_reduction <maximumf>, %324, %cst_267 [1] : vector<16x16xf32> to vector<16xf32>
      %326 = vector.shape_cast %325 : vector<16xf32> to vector<16x1xf32>
      %327 = vector.broadcast %326 : vector<16x1xf32> to vector<16x16xf32>
      %328 = arith.subf %324, %327 : vector<16x16xf32>
      %329 = math.exp %328 : vector<16x16xf32>
      %cst_268 = arith.constant dense<0.000000e+00> : vector<16xf32>
      %330 = vector.multi_reduction <add>, %329, %cst_268 [1] : vector<16x16xf32> to vector<16xf32>
      %331 = vector.shape_cast %330 : vector<16xf32> to vector<16x1xf32>
      %332 = tpu.reciprocal %331 {approx = true} : vector<16x1xf32> -> vector<16x1xf32>
      %333 = vector.broadcast %332 : vector<16x1xf32> to vector<16x16xf32>
      %334 = arith.mulf %329, %333 : vector<16x16xf32>
      %cst_269 = arith.constant dense<0.000000e+00> : vector<16x9xf32>
      %335 = tpu.matmul %334, %321, %cst_269 {dimension_numbers = #tpu.dot_dimension_numbers<[1], [0], [0], [1], [0, 0, 1, 1], [], []>} : vector<16x16xf32>, vector<16x9xf32>, vector<16x9xf32> -> vector<16x9xf32>
      %c1_270 = arith.constant 1 : index
      %c0_271 = arith.constant 0 : index
      %c0_272 = arith.constant 0 : index
      %336 = vector.load %arg21[%c1_270, %c0_271, %c0_272] : memref<4x9x4xf32, #tpu.memory_space<vmem>>, vector<1x9x4xf32>
      %337 = vector.shape_cast %336 : vector<1x9x4xf32> to vector<9x4xf32>
      %cst_273 = arith.constant dense<0.000000e+00> : vector<16x4xf32>
      %338 = tpu.matmul %335, %337, %cst_273 {dimension_numbers = #tpu.dot_dimension_numbers<[1], [0], [0], [1], [0, 0, 1, 1], [], []>} : vector<16x9xf32>, vector<9x4xf32>, vector<16x4xf32> -> vector<16x4xf32>
      %339 = arith.addf %284, %338 : vector<16x4xf32>
      %c1_274 = arith.constant 1 : index
      %c0_275 = arith.constant 0 : index
      %c0_276 = arith.constant 0 : index
      %340 = vector.load %arg20[%c1_274, %c0_275, %c0_276] : memref<4x9x32xf32, #tpu.memory_space<vmem>>, vector<1x9x32xf32>
      %341 = vector.shape_cast %340 : vector<1x9x32xf32> to vector<9x32xf32>
      %cst_277 = arith.constant dense<0.000000e+00> : vector<16x32xf32>
      %342 = tpu.matmul %335, %341, %cst_277 {dimension_numbers = #tpu.dot_dimension_numbers<[1], [0], [0], [1], [0, 0, 1, 1], [], []>} : vector<16x9xf32>, vector<9x32xf32>, vector<16x32xf32> -> vector<16x32xf32>
      %343 = arith.addf %288, %342 : vector<16x32xf32>
      %c2_278 = arith.constant 2 : index
      %c0_279 = arith.constant 0 : index
      %c0_280 = arith.constant 0 : index
      %344 = vector.load %arg23[%c2_278, %c0_279, %c0_280] : memref<4x4x9xf32, #tpu.memory_space<vmem>>, vector<1x4x9xf32>
      %345 = vector.shape_cast %344 : vector<1x4x9xf32> to vector<4x9xf32>
      %cst_281 = arith.constant dense<0.000000e+00> : vector<16x9xf32>
      %346 = tpu.matmul %1, %345, %cst_281 {dimension_numbers = #tpu.dot_dimension_numbers<[1], [0], [0], [1], [0, 0, 1, 1], [], []>} : vector<16x4xf32>, vector<4x9xf32>, vector<16x9xf32> -> vector<16x9xf32>
      %c2_282 = arith.constant 2 : index
      %c0_283 = arith.constant 0 : index
      %c0_284 = arith.constant 0 : index
      %347 = vector.load %arg22[%c2_282, %c0_283, %c0_284] : memref<4x32x9xf32, #tpu.memory_space<vmem>>, vector<1x32x9xf32>
      %348 = vector.shape_cast %347 : vector<1x32x9xf32> to vector<32x9xf32>
      %cst_285 = arith.constant dense<0.000000e+00> : vector<16x9xf32>
      %349 = tpu.matmul %arg55, %348, %cst_285 {dimension_numbers = #tpu.dot_dimension_numbers<[1], [0], [0], [1], [0, 0, 1, 1], [], []>} : vector<16x32xf32>, vector<32x9xf32>, vector<16x9xf32> -> vector<16x9xf32>
      %350 = arith.addf %346, %349 : vector<16x9xf32>
      %c2_286 = arith.constant 2 : index
      %c0_287 = arith.constant 0 : index
      %c0_288 = arith.constant 0 : index
      %351 = vector.load %arg7[%c2_286, %c0_287, %c0_288] : memref<4x1x9xf32, #tpu.memory_space<vmem>>, vector<1x1x9xf32>
      %352 = vector.shape_cast %351 : vector<1x1x9xf32> to vector<1x9xf32>
      %353 = vector.broadcast %352 : vector<1x9xf32> to vector<16x9xf32>
      %354 = arith.addf %350, %353 : vector<16x9xf32>
      %c2_289 = arith.constant 2 : index
      %c0_290 = arith.constant 0 : index
      %c0_291 = arith.constant 0 : index
      %355 = vector.load %arg19[%c2_289, %c0_290, %c0_291] : memref<4x4x9xf32, #tpu.memory_space<vmem>>, vector<1x4x9xf32>
      %356 = vector.shape_cast %355 : vector<1x4x9xf32> to vector<4x9xf32>
      %cst_292 = arith.constant dense<0.000000e+00> : vector<16x9xf32>
      %357 = tpu.matmul %1, %356, %cst_292 {dimension_numbers = #tpu.dot_dimension_numbers<[1], [0], [0], [1], [0, 0, 1, 1], [], []>} : vector<16x4xf32>, vector<4x9xf32>, vector<16x9xf32> -> vector<16x9xf32>
      %c2_293 = arith.constant 2 : index
      %c0_294 = arith.constant 0 : index
      %c0_295 = arith.constant 0 : index
      %358 = vector.load %arg18[%c2_293, %c0_294, %c0_295] : memref<4x32x9xf32, #tpu.memory_space<vmem>>, vector<1x32x9xf32>
      %359 = vector.shape_cast %358 : vector<1x32x9xf32> to vector<32x9xf32>
      %cst_296 = arith.constant dense<0.000000e+00> : vector<16x9xf32>
      %360 = tpu.matmul %arg55, %359, %cst_296 {dimension_numbers = #tpu.dot_dimension_numbers<[1], [0], [0], [1], [0, 0, 1, 1], [], []>} : vector<16x32xf32>, vector<32x9xf32>, vector<16x9xf32> -> vector<16x9xf32>
      %361 = arith.addf %357, %360 : vector<16x9xf32>
      %c2_297 = arith.constant 2 : index
      %c0_298 = arith.constant 0 : index
      %c0_299 = arith.constant 0 : index
      %362 = vector.load %arg4[%c2_297, %c0_298, %c0_299] : memref<4x1x9xf32, #tpu.memory_space<vmem>>, vector<1x1x9xf32>
      %363 = vector.shape_cast %362 : vector<1x1x9xf32> to vector<1x9xf32>
      %364 = vector.broadcast %363 : vector<1x9xf32> to vector<16x9xf32>
      %365 = arith.addf %361, %364 : vector<16x9xf32>
      %c2_300 = arith.constant 2 : index
      %c0_301 = arith.constant 0 : index
      %c0_302 = arith.constant 0 : index
      %366 = vector.load %arg25[%c2_300, %c0_301, %c0_302] : memref<4x4x9xf32, #tpu.memory_space<vmem>>, vector<1x4x9xf32>
      %367 = vector.shape_cast %366 : vector<1x4x9xf32> to vector<4x9xf32>
      %cst_303 = arith.constant dense<0.000000e+00> : vector<16x9xf32>
      %368 = tpu.matmul %1, %367, %cst_303 {dimension_numbers = #tpu.dot_dimension_numbers<[1], [0], [0], [1], [0, 0, 1, 1], [], []>} : vector<16x4xf32>, vector<4x9xf32>, vector<16x9xf32> -> vector<16x9xf32>
      %c2_304 = arith.constant 2 : index
      %c0_305 = arith.constant 0 : index
      %c0_306 = arith.constant 0 : index
      %369 = vector.load %arg24[%c2_304, %c0_305, %c0_306] : memref<4x32x9xf32, #tpu.memory_space<vmem>>, vector<1x32x9xf32>
      %370 = vector.shape_cast %369 : vector<1x32x9xf32> to vector<32x9xf32>
      %cst_307 = arith.constant dense<0.000000e+00> : vector<16x9xf32>
      %371 = tpu.matmul %arg55, %370, %cst_307 {dimension_numbers = #tpu.dot_dimension_numbers<[1], [0], [0], [1], [0, 0, 1, 1], [], []>} : vector<16x32xf32>, vector<32x9xf32>, vector<16x9xf32> -> vector<16x9xf32>
      %372 = arith.addf %368, %371 : vector<16x9xf32>
      %c2_308 = arith.constant 2 : index
      %c0_309 = arith.constant 0 : index
      %c0_310 = arith.constant 0 : index
      %373 = vector.load %arg8[%c2_308, %c0_309, %c0_310] : memref<4x1x9xf32, #tpu.memory_space<vmem>>, vector<1x1x9xf32>
      %374 = vector.shape_cast %373 : vector<1x1x9xf32> to vector<1x9xf32>
      %375 = vector.broadcast %374 : vector<1x9xf32> to vector<16x9xf32>
      %376 = arith.addf %372, %375 : vector<16x9xf32>
      %cst_311 = arith.constant dense<0.000000e+00> : vector<16x16xf32>
      %377 = tpu.matmul %354, %365, %cst_311 {dimension_numbers = #tpu.dot_dimension_numbers<[1], [1], [0], [0], [0, 0, 1, 0], [], []>} : vector<16x9xf32>, vector<16x9xf32>, vector<16x16xf32> -> vector<16x16xf32>
      %cst_312 = arith.constant 0.333333343 : f32
      %378 = vector.broadcast %cst_312 : f32 to vector<16x16xf32>
      %379 = arith.mulf %377, %378 : vector<16x16xf32>
      %cst_313 = arith.constant dense<0xFF800000> : vector<16xf32>
      %380 = vector.multi_reduction <maximumf>, %379, %cst_313 [1] : vector<16x16xf32> to vector<16xf32>
      %381 = vector.shape_cast %380 : vector<16xf32> to vector<16x1xf32>
      %382 = vector.broadcast %381 : vector<16x1xf32> to vector<16x16xf32>
      %383 = arith.subf %379, %382 : vector<16x16xf32>
      %384 = math.exp %383 : vector<16x16xf32>
      %cst_314 = arith.constant dense<0.000000e+00> : vector<16xf32>
      %385 = vector.multi_reduction <add>, %384, %cst_314 [1] : vector<16x16xf32> to vector<16xf32>
      %386 = vector.shape_cast %385 : vector<16xf32> to vector<16x1xf32>
      %387 = tpu.reciprocal %386 {approx = true} : vector<16x1xf32> -> vector<16x1xf32>
      %388 = vector.broadcast %387 : vector<16x1xf32> to vector<16x16xf32>
      %389 = arith.mulf %384, %388 : vector<16x16xf32>
      %cst_315 = arith.constant dense<0.000000e+00> : vector<16x9xf32>
      %390 = tpu.matmul %389, %376, %cst_315 {dimension_numbers = #tpu.dot_dimension_numbers<[1], [0], [0], [1], [0, 0, 1, 1], [], []>} : vector<16x16xf32>, vector<16x9xf32>, vector<16x9xf32> -> vector<16x9xf32>
      %c2_316 = arith.constant 2 : index
      %c0_317 = arith.constant 0 : index
      %c0_318 = arith.constant 0 : index
      %391 = vector.load %arg21[%c2_316, %c0_317, %c0_318] : memref<4x9x4xf32, #tpu.memory_space<vmem>>, vector<1x9x4xf32>
      %392 = vector.shape_cast %391 : vector<1x9x4xf32> to vector<9x4xf32>
      %cst_319 = arith.constant dense<0.000000e+00> : vector<16x4xf32>
      %393 = tpu.matmul %390, %392, %cst_319 {dimension_numbers = #tpu.dot_dimension_numbers<[1], [0], [0], [1], [0, 0, 1, 1], [], []>} : vector<16x9xf32>, vector<9x4xf32>, vector<16x4xf32> -> vector<16x4xf32>
      %394 = arith.addf %339, %393 : vector<16x4xf32>
      %c2_320 = arith.constant 2 : index
      %c0_321 = arith.constant 0 : index
      %c0_322 = arith.constant 0 : index
      %395 = vector.load %arg20[%c2_320, %c0_321, %c0_322] : memref<4x9x32xf32, #tpu.memory_space<vmem>>, vector<1x9x32xf32>
      %396 = vector.shape_cast %395 : vector<1x9x32xf32> to vector<9x32xf32>
      %cst_323 = arith.constant dense<0.000000e+00> : vector<16x32xf32>
      %397 = tpu.matmul %390, %396, %cst_323 {dimension_numbers = #tpu.dot_dimension_numbers<[1], [0], [0], [1], [0, 0, 1, 1], [], []>} : vector<16x9xf32>, vector<9x32xf32>, vector<16x32xf32> -> vector<16x32xf32>
      %398 = arith.addf %343, %397 : vector<16x32xf32>
      %c3_324 = arith.constant 3 : index
      %c0_325 = arith.constant 0 : index
      %c0_326 = arith.constant 0 : index
      %399 = vector.load %arg23[%c3_324, %c0_325, %c0_326] : memref<4x4x9xf32, #tpu.memory_space<vmem>>, vector<1x4x9xf32>
      %400 = vector.shape_cast %399 : vector<1x4x9xf32> to vector<4x9xf32>
      %cst_327 = arith.constant dense<0.000000e+00> : vector<16x9xf32>
      %401 = tpu.matmul %1, %400, %cst_327 {dimension_numbers = #tpu.dot_dimension_numbers<[1], [0], [0], [1], [0, 0, 1, 1], [], []>} : vector<16x4xf32>, vector<4x9xf32>, vector<16x9xf32> -> vector<16x9xf32>
      %c3_328 = arith.constant 3 : index
      %c0_329 = arith.constant 0 : index
      %c0_330 = arith.constant 0 : index
      %402 = vector.load %arg22[%c3_328, %c0_329, %c0_330] : memref<4x32x9xf32, #tpu.memory_space<vmem>>, vector<1x32x9xf32>
      %403 = vector.shape_cast %402 : vector<1x32x9xf32> to vector<32x9xf32>
      %cst_331 = arith.constant dense<0.000000e+00> : vector<16x9xf32>
      %404 = tpu.matmul %arg55, %403, %cst_331 {dimension_numbers = #tpu.dot_dimension_numbers<[1], [0], [0], [1], [0, 0, 1, 1], [], []>} : vector<16x32xf32>, vector<32x9xf32>, vector<16x9xf32> -> vector<16x9xf32>
      %405 = arith.addf %401, %404 : vector<16x9xf32>
      %c3_332 = arith.constant 3 : index
      %c0_333 = arith.constant 0 : index
      %c0_334 = arith.constant 0 : index
      %406 = vector.load %arg7[%c3_332, %c0_333, %c0_334] : memref<4x1x9xf32, #tpu.memory_space<vmem>>, vector<1x1x9xf32>
      %407 = vector.shape_cast %406 : vector<1x1x9xf32> to vector<1x9xf32>
      %408 = vector.broadcast %407 : vector<1x9xf32> to vector<16x9xf32>
      %409 = arith.addf %405, %408 : vector<16x9xf32>
      %c3_335 = arith.constant 3 : index
      %c0_336 = arith.constant 0 : index
      %c0_337 = arith.constant 0 : index
      %410 = vector.load %arg19[%c3_335, %c0_336, %c0_337] : memref<4x4x9xf32, #tpu.memory_space<vmem>>, vector<1x4x9xf32>
      %411 = vector.shape_cast %410 : vector<1x4x9xf32> to vector<4x9xf32>
      %cst_338 = arith.constant dense<0.000000e+00> : vector<16x9xf32>
      %412 = tpu.matmul %1, %411, %cst_338 {dimension_numbers = #tpu.dot_dimension_numbers<[1], [0], [0], [1], [0, 0, 1, 1], [], []>} : vector<16x4xf32>, vector<4x9xf32>, vector<16x9xf32> -> vector<16x9xf32>
      %c3_339 = arith.constant 3 : index
      %c0_340 = arith.constant 0 : index
      %c0_341 = arith.constant 0 : index
      %413 = vector.load %arg18[%c3_339, %c0_340, %c0_341] : memref<4x32x9xf32, #tpu.memory_space<vmem>>, vector<1x32x9xf32>
      %414 = vector.shape_cast %413 : vector<1x32x9xf32> to vector<32x9xf32>
      %cst_342 = arith.constant dense<0.000000e+00> : vector<16x9xf32>
      %415 = tpu.matmul %arg55, %414, %cst_342 {dimension_numbers = #tpu.dot_dimension_numbers<[1], [0], [0], [1], [0, 0, 1, 1], [], []>} : vector<16x32xf32>, vector<32x9xf32>, vector<16x9xf32> -> vector<16x9xf32>
      %416 = arith.addf %412, %415 : vector<16x9xf32>
      %c3_343 = arith.constant 3 : index
      %c0_344 = arith.constant 0 : index
      %c0_345 = arith.constant 0 : index
      %417 = vector.load %arg4[%c3_343, %c0_344, %c0_345] : memref<4x1x9xf32, #tpu.memory_space<vmem>>, vector<1x1x9xf32>
      %418 = vector.shape_cast %417 : vector<1x1x9xf32> to vector<1x9xf32>
      %419 = vector.broadcast %418 : vector<1x9xf32> to vector<16x9xf32>
      %420 = arith.addf %416, %419 : vector<16x9xf32>
      %c3_346 = arith.constant 3 : index
      %c0_347 = arith.constant 0 : index
      %c0_348 = arith.constant 0 : index
      %421 = vector.load %arg25[%c3_346, %c0_347, %c0_348] : memref<4x4x9xf32, #tpu.memory_space<vmem>>, vector<1x4x9xf32>
      %422 = vector.shape_cast %421 : vector<1x4x9xf32> to vector<4x9xf32>
      %cst_349 = arith.constant dense<0.000000e+00> : vector<16x9xf32>
      %423 = tpu.matmul %1, %422, %cst_349 {dimension_numbers = #tpu.dot_dimension_numbers<[1], [0], [0], [1], [0, 0, 1, 1], [], []>} : vector<16x4xf32>, vector<4x9xf32>, vector<16x9xf32> -> vector<16x9xf32>
      %c3_350 = arith.constant 3 : index
      %c0_351 = arith.constant 0 : index
      %c0_352 = arith.constant 0 : index
      %424 = vector.load %arg24[%c3_350, %c0_351, %c0_352] : memref<4x32x9xf32, #tpu.memory_space<vmem>>, vector<1x32x9xf32>
      %425 = vector.shape_cast %424 : vector<1x32x9xf32> to vector<32x9xf32>
      %cst_353 = arith.constant dense<0.000000e+00> : vector<16x9xf32>
      %426 = tpu.matmul %arg55, %425, %cst_353 {dimension_numbers = #tpu.dot_dimension_numbers<[1], [0], [0], [1], [0, 0, 1, 1], [], []>} : vector<16x32xf32>, vector<32x9xf32>, vector<16x9xf32> -> vector<16x9xf32>
      %427 = arith.addf %423, %426 : vector<16x9xf32>
      %c3_354 = arith.constant 3 : index
      %c0_355 = arith.constant 0 : index
      %c0_356 = arith.constant 0 : index
      %428 = vector.load %arg8[%c3_354, %c0_355, %c0_356] : memref<4x1x9xf32, #tpu.memory_space<vmem>>, vector<1x1x9xf32>
      %429 = vector.shape_cast %428 : vector<1x1x9xf32> to vector<1x9xf32>
      %430 = vector.broadcast %429 : vector<1x9xf32> to vector<16x9xf32>
      %431 = arith.addf %427, %430 : vector<16x9xf32>
      %cst_357 = arith.constant dense<0.000000e+00> : vector<16x16xf32>
      %432 = tpu.matmul %409, %420, %cst_357 {dimension_numbers = #tpu.dot_dimension_numbers<[1], [1], [0], [0], [0, 0, 1, 0], [], []>} : vector<16x9xf32>, vector<16x9xf32>, vector<16x16xf32> -> vector<16x16xf32>
      %cst_358 = arith.constant 0.333333343 : f32
      %433 = vector.broadcast %cst_358 : f32 to vector<16x16xf32>
      %434 = arith.mulf %432, %433 : vector<16x16xf32>
      %cst_359 = arith.constant dense<0xFF800000> : vector<16xf32>
      %435 = vector.multi_reduction <maximumf>, %434, %cst_359 [1] : vector<16x16xf32> to vector<16xf32>
      %436 = vector.shape_cast %435 : vector<16xf32> to vector<16x1xf32>
      %437 = vector.broadcast %436 : vector<16x1xf32> to vector<16x16xf32>
      %438 = arith.subf %434, %437 : vector<16x16xf32>
      %439 = math.exp %438 : vector<16x16xf32>
      %cst_360 = arith.constant dense<0.000000e+00> : vector<16xf32>
      %440 = vector.multi_reduction <add>, %439, %cst_360 [1] : vector<16x16xf32> to vector<16xf32>
      %441 = vector.shape_cast %440 : vector<16xf32> to vector<16x1xf32>
      %442 = tpu.reciprocal %441 {approx = true} : vector<16x1xf32> -> vector<16x1xf32>
      %443 = vector.broadcast %442 : vector<16x1xf32> to vector<16x16xf32>
      %444 = arith.mulf %439, %443 : vector<16x16xf32>
      %cst_361 = arith.constant dense<0.000000e+00> : vector<16x9xf32>
      %445 = tpu.matmul %444, %431, %cst_361 {dimension_numbers = #tpu.dot_dimension_numbers<[1], [0], [0], [1], [0, 0, 1, 1], [], []>} : vector<16x16xf32>, vector<16x9xf32>, vector<16x9xf32> -> vector<16x9xf32>
      %c3_362 = arith.constant 3 : index
      %c0_363 = arith.constant 0 : index
      %c0_364 = arith.constant 0 : index
      %446 = vector.load %arg21[%c3_362, %c0_363, %c0_364] : memref<4x9x4xf32, #tpu.memory_space<vmem>>, vector<1x9x4xf32>
      %447 = vector.shape_cast %446 : vector<1x9x4xf32> to vector<9x4xf32>
      %cst_365 = arith.constant dense<0.000000e+00> : vector<16x4xf32>
      %448 = tpu.matmul %445, %447, %cst_365 {dimension_numbers = #tpu.dot_dimension_numbers<[1], [0], [0], [1], [0, 0, 1, 1], [], []>} : vector<16x9xf32>, vector<9x4xf32>, vector<16x4xf32> -> vector<16x4xf32>
      %449 = arith.addf %394, %448 : vector<16x4xf32>
      %c3_366 = arith.constant 3 : index
      %c0_367 = arith.constant 0 : index
      %c0_368 = arith.constant 0 : index
      %450 = vector.load %arg20[%c3_366, %c0_367, %c0_368] : memref<4x9x32xf32, #tpu.memory_space<vmem>>, vector<1x9x32xf32>
      %451 = vector.shape_cast %450 : vector<1x9x32xf32> to vector<9x32xf32>
      %cst_369 = arith.constant dense<0.000000e+00> : vector<16x32xf32>
      %452 = tpu.matmul %445, %451, %cst_369 {dimension_numbers = #tpu.dot_dimension_numbers<[1], [0], [0], [1], [0, 0, 1, 1], [], []>} : vector<16x9xf32>, vector<9x32xf32>, vector<16x32xf32> -> vector<16x32xf32>
      %453 = arith.addf %398, %452 : vector<16x32xf32>
      %454 = arith.addf %1, %449 : vector<16x4xf32>
      %c0_370 = arith.constant 0 : index
      %c0_371 = arith.constant 0 : index
      %455 = vector.load %arg6[%c0_370, %c0_371] : memref<1x4xf32, #tpu.memory_space<vmem>>, vector<1x4xf32>
      %456 = vector.broadcast %455 : vector<1x4xf32> to vector<16x4xf32>
      %457 = arith.addf %454, %456 : vector<16x4xf32>
      %458 = arith.addf %arg55, %453 : vector<16x32xf32>
      %c0_372 = arith.constant 0 : index
      %c0_373 = arith.constant 0 : index
      %459 = vector.load %arg5[%c0_372, %c0_373] : memref<1x32xf32, #tpu.memory_space<vmem>>, vector<1x32xf32>
      %460 = vector.broadcast %459 : vector<1x32xf32> to vector<16x32xf32>
      %461 = arith.addf %458, %460 : vector<16x32xf32>
      %cst_374 = arith.constant dense<0.000000e+00> : vector<16xf32>
      %462 = vector.multi_reduction <add>, %457, %cst_374 [1] : vector<16x4xf32> to vector<16xf32>
      %463 = vector.shape_cast %462 : vector<16xf32> to vector<16x1xf32>
      %cst_375 = arith.constant dense<0.000000e+00> : vector<16xf32>
      %464 = vector.multi_reduction <add>, %461, %cst_375 [1] : vector<16x32xf32> to vector<16xf32>
      %465 = vector.shape_cast %464 : vector<16xf32> to vector<16x1xf32>
      %466 = arith.addf %463, %465 : vector<16x1xf32>
      %cst_376 = arith.constant 3.600000e+01 : f32
      %467 = vector.broadcast %cst_376 : f32 to vector<16x1xf32>
      %468 = arith.divf %466, %467 : vector<16x1xf32>
      %469 = vector.broadcast %468 : vector<16x1xf32> to vector<16x4xf32>
      %470 = arith.subf %457, %469 : vector<16x4xf32>
      %471 = vector.broadcast %468 : vector<16x1xf32> to vector<16x32xf32>
      %472 = arith.subf %461, %471 : vector<16x32xf32>
      %473 = arith.mulf %470, %470 : vector<16x4xf32>
      %cst_377 = arith.constant dense<0.000000e+00> : vector<16xf32>
      %474 = vector.multi_reduction <add>, %473, %cst_377 [1] : vector<16x4xf32> to vector<16xf32>
      %475 = vector.shape_cast %474 : vector<16xf32> to vector<16x1xf32>
      %476 = arith.mulf %472, %472 : vector<16x32xf32>
      %cst_378 = arith.constant dense<0.000000e+00> : vector<16xf32>
      %477 = vector.multi_reduction <add>, %476, %cst_378 [1] : vector<16x32xf32> to vector<16xf32>
      %478 = vector.shape_cast %477 : vector<16xf32> to vector<16x1xf32>
      %479 = arith.addf %475, %478 : vector<16x1xf32>
      %cst_379 = arith.constant 3.600000e+01 : f32
      %480 = vector.broadcast %cst_379 : f32 to vector<16x1xf32>
      %481 = arith.divf %479, %480 : vector<16x1xf32>
      %cst_380 = arith.constant 9.99999974E-6 : f32
      %482 = vector.broadcast %cst_380 : f32 to vector<16x1xf32>
      %483 = arith.addf %481, %482 : vector<16x1xf32>
      %484 = math.rsqrt %483 : vector<16x1xf32>
      %485 = vector.broadcast %484 : vector<16x1xf32> to vector<16x4xf32>
      %486 = arith.mulf %470, %485 : vector<16x4xf32>
      %c0_381 = arith.constant 0 : index
      %c0_382 = arith.constant 0 : index
      %487 = vector.load %arg15[%c0_381, %c0_382] : memref<1x4xf32, #tpu.memory_space<vmem>>, vector<1x4xf32>
      %488 = vector.broadcast %487 : vector<1x4xf32> to vector<16x4xf32>
      %489 = arith.mulf %486, %488 : vector<16x4xf32>
      %c0_383 = arith.constant 0 : index
      %c0_384 = arith.constant 0 : index
      %490 = vector.load %arg13[%c0_383, %c0_384] : memref<1x4xf32, #tpu.memory_space<vmem>>, vector<1x4xf32>
      %491 = vector.broadcast %490 : vector<1x4xf32> to vector<16x4xf32>
      %492 = arith.addf %489, %491 : vector<16x4xf32>
      %493 = vector.broadcast %484 : vector<16x1xf32> to vector<16x32xf32>
      %494 = arith.mulf %472, %493 : vector<16x32xf32>
      %c0_385 = arith.constant 0 : index
      %c0_386 = arith.constant 0 : index
      %495 = vector.load %arg14[%c0_385, %c0_386] : memref<1x32xf32, #tpu.memory_space<vmem>>, vector<1x32xf32>
      %496 = vector.broadcast %495 : vector<1x32xf32> to vector<16x32xf32>
      %497 = arith.mulf %494, %496 : vector<16x32xf32>
      %c0_387 = arith.constant 0 : index
      %c0_388 = arith.constant 0 : index
      %498 = vector.load %arg12[%c0_387, %c0_388] : memref<1x32xf32, #tpu.memory_space<vmem>>, vector<1x32xf32>
      %499 = vector.broadcast %498 : vector<1x32xf32> to vector<16x32xf32>
      %500 = arith.addf %497, %499 : vector<16x32xf32>
      %c0_389 = arith.constant 0 : index
      %c0_390 = arith.constant 0 : index
      %501 = vector.load %arg11[%c0_389, %c0_390] : memref<4x32xf32, #tpu.memory_space<vmem>>, vector<4x32xf32>
      %cst_391 = arith.constant dense<0.000000e+00> : vector<16x32xf32>
      %502 = tpu.matmul %492, %501, %cst_391 {dimension_numbers = #tpu.dot_dimension_numbers<[1], [0], [0], [1], [0, 0, 1, 1], [], []>} : vector<16x4xf32>, vector<4x32xf32>, vector<16x32xf32> -> vector<16x32xf32>
      %c0_392 = arith.constant 0 : index
      %c0_393 = arith.constant 0 : index
      %503 = vector.load %arg10[%c0_392, %c0_393] : memref<32x32xf32, #tpu.memory_space<vmem>>, vector<32x32xf32>
      %cst_394 = arith.constant dense<0.000000e+00> : vector<16x32xf32>
      %504 = tpu.matmul %500, %503, %cst_394 {dimension_numbers = #tpu.dot_dimension_numbers<[1], [0], [0], [1], [0, 0, 1, 1], [], []>} : vector<16x32xf32>, vector<32x32xf32>, vector<16x32xf32> -> vector<16x32xf32>
      %505 = arith.addf %502, %504 : vector<16x32xf32>
      %c0_395 = arith.constant 0 : index
      %c0_396 = arith.constant 0 : index
      %506 = vector.load %arg9[%c0_395, %c0_396] : memref<1x32xf32, #tpu.memory_space<vmem>>, vector<1x32xf32>
      %507 = vector.broadcast %506 : vector<1x32xf32> to vector<16x32xf32>
      %508 = arith.addf %505, %507 : vector<16x32xf32>
      %cst_397 = arith.constant dense<0.000000e+00> : vector<16xf32>
      %509 = vector.multi_reduction <add>, %508, %cst_397 [1] : vector<16x32xf32> to vector<16xf32>
      %510 = vector.shape_cast %509 : vector<16xf32> to vector<16x1xf32>
      %cst_398 = arith.constant 3.200000e+01 : f32
      %511 = vector.broadcast %cst_398 : f32 to vector<16x1xf32>
      %512 = arith.divf %510, %511 : vector<16x1xf32>
      %513 = vector.broadcast %512 : vector<16x1xf32> to vector<16x32xf32>
      %514 = arith.subf %508, %513 : vector<16x32xf32>
      %515 = arith.mulf %514, %514 : vector<16x32xf32>
      %cst_399 = arith.constant dense<0.000000e+00> : vector<16xf32>
      %516 = vector.multi_reduction <add>, %515, %cst_399 [1] : vector<16x32xf32> to vector<16xf32>
      %517 = vector.shape_cast %516 : vector<16xf32> to vector<16x1xf32>
      %cst_400 = arith.constant 3.200000e+01 : f32
      %518 = vector.broadcast %cst_400 : f32 to vector<16x1xf32>
      %519 = arith.divf %517, %518 : vector<16x1xf32>
      %cst_401 = arith.constant 9.99999974E-6 : f32
      %520 = vector.broadcast %cst_401 : f32 to vector<16x1xf32>
      %521 = arith.addf %519, %520 : vector<16x1xf32>
      %522 = math.rsqrt %521 : vector<16x1xf32>
      %523 = vector.broadcast %522 : vector<16x1xf32> to vector<16x32xf32>
      %524 = arith.mulf %514, %523 : vector<16x32xf32>
      %c0_402 = arith.constant 0 : index
      %c0_403 = arith.constant 0 : index
      %525 = vector.load %arg17[%c0_402, %c0_403] : memref<1x32xf32, #tpu.memory_space<vmem>>, vector<1x32xf32>
      %526 = vector.broadcast %525 : vector<1x32xf32> to vector<16x32xf32>
      %527 = arith.mulf %524, %526 : vector<16x32xf32>
      %c0_404 = arith.constant 0 : index
      %c0_405 = arith.constant 0 : index
      %528 = vector.load %arg16[%c0_404, %c0_405] : memref<1x32xf32, #tpu.memory_space<vmem>>, vector<1x32xf32>
      %529 = vector.broadcast %528 : vector<1x32xf32> to vector<16x32xf32>
      %530 = arith.addf %527, %529 : vector<16x32xf32>
      scf.yield %530 : vector<16x32xf32>
    }
    %c0_27 = arith.constant 0 : index
    %c0_28 = arith.constant 0 : index
    %30 = vector.load %arg48[%c0_27, %c0_28] : memref<4x32xf32, #tpu.memory_space<vmem>>, vector<4x32xf32>
    %cst_29 = arith.constant dense<0.000000e+00> : vector<8x32xf32>
    %31 = tpu.matmul %5, %30, %cst_29 {dimension_numbers = #tpu.dot_dimension_numbers<[1], [0], [0], [1], [0, 0, 1, 1], [], []>} : vector<8x4xf32>, vector<4x32xf32>, vector<8x32xf32> -> vector<8x32xf32>
    %c0_30 = arith.constant 0 : index
    %c0_31 = arith.constant 0 : index
    %32 = vector.load %arg47[%c0_30, %c0_31] : memref<1x32xf32, #tpu.memory_space<vmem>>, vector<1x32xf32>
    %33 = vector.broadcast %32 : vector<1x32xf32> to vector<8x32xf32>
    %34 = arith.addf %31, %33 : vector<8x32xf32>
    %cst_32 = arith.constant 0.000000e+00 : f32
    %35 = vector.broadcast %cst_32 : f32 to vector<8x32xf32>
    %36 = arith.maximumf %34, %35 : vector<8x32xf32>
    %c0_33 = arith.constant 0 : index
    %c0_34 = arith.constant 0 : index
    %37 = vector.load %arg50[%c0_33, %c0_34] : memref<32x32xf32, #tpu.memory_space<vmem>>, vector<32x32xf32>
    %cst_35 = arith.constant dense<0.000000e+00> : vector<8x32xf32>
    %38 = tpu.matmul %36, %37, %cst_35 {dimension_numbers = #tpu.dot_dimension_numbers<[1], [0], [0], [1], [0, 0, 1, 1], [], []>} : vector<8x32xf32>, vector<32x32xf32>, vector<8x32xf32> -> vector<8x32xf32>
    %c0_36 = arith.constant 0 : index
    %c0_37 = arith.constant 0 : index
    %39 = vector.load %arg49[%c0_36, %c0_37] : memref<1x32xf32, #tpu.memory_space<vmem>>, vector<1x32xf32>
    %40 = vector.broadcast %39 : vector<1x32xf32> to vector<8x32xf32>
    %41 = arith.addf %38, %40 : vector<8x32xf32>
    %cst_38 = arith.constant 0.000000e+00 : f32
    %42 = vector.broadcast %cst_38 : f32 to vector<8x32xf32>
    %43 = arith.maximumf %41, %42 : vector<8x32xf32>
    %c0_39 = arith.constant 0 : index
    %c0_40 = arith.constant 0 : index
    %44 = vector.load %arg52[%c0_39, %c0_40] : memref<32x32xf32, #tpu.memory_space<vmem>>, vector<32x32xf32>
    %cst_41 = arith.constant dense<0.000000e+00> : vector<8x32xf32>
    %45 = tpu.matmul %43, %44, %cst_41 {dimension_numbers = #tpu.dot_dimension_numbers<[1], [0], [0], [1], [0, 0, 1, 1], [], []>} : vector<8x32xf32>, vector<32x32xf32>, vector<8x32xf32> -> vector<8x32xf32>
    %c0_42 = arith.constant 0 : index
    %c0_43 = arith.constant 0 : index
    %46 = vector.load %arg51[%c0_42, %c0_43] : memref<1x32xf32, #tpu.memory_space<vmem>>, vector<1x32xf32>
    %47 = vector.broadcast %46 : vector<1x32xf32> to vector<8x32xf32>
    %48 = arith.addf %45, %47 : vector<8x32xf32>
    %cst_44 = arith.constant 0.000000e+00 : f32
    %49 = vector.broadcast %cst_44 : f32 to vector<8x32xf32>
    %c0_45 = arith.constant 0 : index
    %c0_46 = arith.constant 0 : index
    %c0_47 = arith.constant 0 : index
    %50 = vector.load %arg32[%c0_45, %c0_46, %c0_47] : memref<4x32x8xf32, #tpu.memory_space<vmem>>, vector<1x32x8xf32>
    %51 = vector.shape_cast %50 : vector<1x32x8xf32> to vector<32x8xf32>
    %cst_48 = arith.constant dense<0.000000e+00> : vector<8x8xf32>
    %52 = tpu.matmul %48, %51, %cst_48 {dimension_numbers = #tpu.dot_dimension_numbers<[1], [0], [0], [1], [0, 0, 1, 1], [], []>} : vector<8x32xf32>, vector<32x8xf32>, vector<8x8xf32> -> vector<8x8xf32>
    %c0_49 = arith.constant 0 : index
    %c0_50 = arith.constant 0 : index
    %c0_51 = arith.constant 0 : index
    %53 = vector.load %arg28[%c0_49, %c0_50, %c0_51] : memref<4x1x8xf32, #tpu.memory_space<vmem>>, vector<1x1x8xf32>
    %54 = vector.shape_cast %53 : vector<1x1x8xf32> to vector<1x8xf32>
    %55 = vector.broadcast %54 : vector<1x8xf32> to vector<8x8xf32>
    %56 = arith.addf %52, %55 : vector<8x8xf32>
    %c0_52 = arith.constant 0 : index
    %c0_53 = arith.constant 0 : index
    %c0_54 = arith.constant 0 : index
    %57 = vector.load %arg30[%c0_52, %c0_53, %c0_54] : memref<4x32x8xf32, #tpu.memory_space<vmem>>, vector<1x32x8xf32>
    %58 = vector.shape_cast %57 : vector<1x32x8xf32> to vector<32x8xf32>
    %cst_55 = arith.constant dense<0.000000e+00> : vector<16x8xf32>
    %59 = tpu.matmul %29, %58, %cst_55 {dimension_numbers = #tpu.dot_dimension_numbers<[1], [0], [0], [1], [0, 0, 1, 1], [], []>} : vector<16x32xf32>, vector<32x8xf32>, vector<16x8xf32> -> vector<16x8xf32>
    %c0_56 = arith.constant 0 : index
    %c0_57 = arith.constant 0 : index
    %c0_58 = arith.constant 0 : index
    %60 = vector.load %arg26[%c0_56, %c0_57, %c0_58] : memref<4x1x8xf32, #tpu.memory_space<vmem>>, vector<1x1x8xf32>
    %61 = vector.shape_cast %60 : vector<1x1x8xf32> to vector<1x8xf32>
    %62 = vector.broadcast %61 : vector<1x8xf32> to vector<16x8xf32>
    %63 = arith.addf %59, %62 : vector<16x8xf32>
    %c0_59 = arith.constant 0 : index
    %c0_60 = arith.constant 0 : index
    %c0_61 = arith.constant 0 : index
    %64 = vector.load %arg33[%c0_59, %c0_60, %c0_61] : memref<4x32x8xf32, #tpu.memory_space<vmem>>, vector<1x32x8xf32>
    %65 = vector.shape_cast %64 : vector<1x32x8xf32> to vector<32x8xf32>
    %cst_62 = arith.constant dense<0.000000e+00> : vector<16x8xf32>
    %66 = tpu.matmul %29, %65, %cst_62 {dimension_numbers = #tpu.dot_dimension_numbers<[1], [0], [0], [1], [0, 0, 1, 1], [], []>} : vector<16x32xf32>, vector<32x8xf32>, vector<16x8xf32> -> vector<16x8xf32>
    %c0_63 = arith.constant 0 : index
    %c0_64 = arith.constant 0 : index
    %c0_65 = arith.constant 0 : index
    %67 = vector.load %arg29[%c0_63, %c0_64, %c0_65] : memref<4x1x8xf32, #tpu.memory_space<vmem>>, vector<1x1x8xf32>
    %68 = vector.shape_cast %67 : vector<1x1x8xf32> to vector<1x8xf32>
    %69 = vector.broadcast %68 : vector<1x8xf32> to vector<16x8xf32>
    %70 = arith.addf %66, %69 : vector<16x8xf32>
    %cst_66 = arith.constant dense<0.000000e+00> : vector<8x16xf32>
    %71 = tpu.matmul %56, %63, %cst_66 {dimension_numbers = #tpu.dot_dimension_numbers<[1], [1], [0], [0], [0, 0, 1, 0], [], []>} : vector<8x8xf32>, vector<16x8xf32>, vector<8x16xf32> -> vector<8x16xf32>
    %cst_67 = arith.constant 0.353553385 : f32
    %72 = vector.broadcast %cst_67 : f32 to vector<8x16xf32>
    %73 = arith.mulf %71, %72 : vector<8x16xf32>
    %cst_68 = arith.constant dense<0xFF800000> : vector<8xf32>
    %74 = vector.multi_reduction <maximumf>, %73, %cst_68 [1] : vector<8x16xf32> to vector<8xf32>
    %75 = vector.shape_cast %74 : vector<8xf32> to vector<8x1xf32>
    %76 = vector.broadcast %75 : vector<8x1xf32> to vector<8x16xf32>
    %77 = arith.subf %73, %76 : vector<8x16xf32>
    %78 = math.exp %77 : vector<8x16xf32>
    %cst_69 = arith.constant dense<0.000000e+00> : vector<8xf32>
    %79 = vector.multi_reduction <add>, %78, %cst_69 [1] : vector<8x16xf32> to vector<8xf32>
    %80 = vector.shape_cast %79 : vector<8xf32> to vector<8x1xf32>
    %81 = tpu.reciprocal %80 {approx = true} : vector<8x1xf32> -> vector<8x1xf32>
    %82 = vector.broadcast %81 : vector<8x1xf32> to vector<8x16xf32>
    %83 = arith.mulf %78, %82 : vector<8x16xf32>
    %cst_70 = arith.constant dense<0.000000e+00> : vector<8x8xf32>
    %84 = tpu.matmul %83, %70, %cst_70 {dimension_numbers = #tpu.dot_dimension_numbers<[1], [0], [0], [1], [0, 0, 1, 1], [], []>} : vector<8x16xf32>, vector<16x8xf32>, vector<8x8xf32> -> vector<8x8xf32>
    %c0_71 = arith.constant 0 : index
    %c0_72 = arith.constant 0 : index
    %c0_73 = arith.constant 0 : index
    %85 = vector.load %arg31[%c0_71, %c0_72, %c0_73] : memref<4x8x32xf32, #tpu.memory_space<vmem>>, vector<1x8x32xf32>
    %86 = vector.shape_cast %85 : vector<1x8x32xf32> to vector<8x32xf32>
    %cst_74 = arith.constant dense<0.000000e+00> : vector<8x32xf32>
    %87 = tpu.matmul %84, %86, %cst_74 {dimension_numbers = #tpu.dot_dimension_numbers<[1], [0], [0], [1], [0, 0, 1, 1], [], []>} : vector<8x8xf32>, vector<8x32xf32>, vector<8x32xf32> -> vector<8x32xf32>
    %88 = arith.addf %49, %87 : vector<8x32xf32>
    %c1 = arith.constant 1 : index
    %c0_75 = arith.constant 0 : index
    %c0_76 = arith.constant 0 : index
    %89 = vector.load %arg32[%c1, %c0_75, %c0_76] : memref<4x32x8xf32, #tpu.memory_space<vmem>>, vector<1x32x8xf32>
    %90 = vector.shape_cast %89 : vector<1x32x8xf32> to vector<32x8xf32>
    %cst_77 = arith.constant dense<0.000000e+00> : vector<8x8xf32>
    %91 = tpu.matmul %48, %90, %cst_77 {dimension_numbers = #tpu.dot_dimension_numbers<[1], [0], [0], [1], [0, 0, 1, 1], [], []>} : vector<8x32xf32>, vector<32x8xf32>, vector<8x8xf32> -> vector<8x8xf32>
    %c1_78 = arith.constant 1 : index
    %c0_79 = arith.constant 0 : index
    %c0_80 = arith.constant 0 : index
    %92 = vector.load %arg28[%c1_78, %c0_79, %c0_80] : memref<4x1x8xf32, #tpu.memory_space<vmem>>, vector<1x1x8xf32>
    %93 = vector.shape_cast %92 : vector<1x1x8xf32> to vector<1x8xf32>
    %94 = vector.broadcast %93 : vector<1x8xf32> to vector<8x8xf32>
    %95 = arith.addf %91, %94 : vector<8x8xf32>
    %c1_81 = arith.constant 1 : index
    %c0_82 = arith.constant 0 : index
    %c0_83 = arith.constant 0 : index
    %96 = vector.load %arg30[%c1_81, %c0_82, %c0_83] : memref<4x32x8xf32, #tpu.memory_space<vmem>>, vector<1x32x8xf32>
    %97 = vector.shape_cast %96 : vector<1x32x8xf32> to vector<32x8xf32>
    %cst_84 = arith.constant dense<0.000000e+00> : vector<16x8xf32>
    %98 = tpu.matmul %29, %97, %cst_84 {dimension_numbers = #tpu.dot_dimension_numbers<[1], [0], [0], [1], [0, 0, 1, 1], [], []>} : vector<16x32xf32>, vector<32x8xf32>, vector<16x8xf32> -> vector<16x8xf32>
    %c1_85 = arith.constant 1 : index
    %c0_86 = arith.constant 0 : index
    %c0_87 = arith.constant 0 : index
    %99 = vector.load %arg26[%c1_85, %c0_86, %c0_87] : memref<4x1x8xf32, #tpu.memory_space<vmem>>, vector<1x1x8xf32>
    %100 = vector.shape_cast %99 : vector<1x1x8xf32> to vector<1x8xf32>
    %101 = vector.broadcast %100 : vector<1x8xf32> to vector<16x8xf32>
    %102 = arith.addf %98, %101 : vector<16x8xf32>
    %c1_88 = arith.constant 1 : index
    %c0_89 = arith.constant 0 : index
    %c0_90 = arith.constant 0 : index
    %103 = vector.load %arg33[%c1_88, %c0_89, %c0_90] : memref<4x32x8xf32, #tpu.memory_space<vmem>>, vector<1x32x8xf32>
    %104 = vector.shape_cast %103 : vector<1x32x8xf32> to vector<32x8xf32>
    %cst_91 = arith.constant dense<0.000000e+00> : vector<16x8xf32>
    %105 = tpu.matmul %29, %104, %cst_91 {dimension_numbers = #tpu.dot_dimension_numbers<[1], [0], [0], [1], [0, 0, 1, 1], [], []>} : vector<16x32xf32>, vector<32x8xf32>, vector<16x8xf32> -> vector<16x8xf32>
    %c1_92 = arith.constant 1 : index
    %c0_93 = arith.constant 0 : index
    %c0_94 = arith.constant 0 : index
    %106 = vector.load %arg29[%c1_92, %c0_93, %c0_94] : memref<4x1x8xf32, #tpu.memory_space<vmem>>, vector<1x1x8xf32>
    %107 = vector.shape_cast %106 : vector<1x1x8xf32> to vector<1x8xf32>
    %108 = vector.broadcast %107 : vector<1x8xf32> to vector<16x8xf32>
    %109 = arith.addf %105, %108 : vector<16x8xf32>
    %cst_95 = arith.constant dense<0.000000e+00> : vector<8x16xf32>
    %110 = tpu.matmul %95, %102, %cst_95 {dimension_numbers = #tpu.dot_dimension_numbers<[1], [1], [0], [0], [0, 0, 1, 0], [], []>} : vector<8x8xf32>, vector<16x8xf32>, vector<8x16xf32> -> vector<8x16xf32>
    %cst_96 = arith.constant 0.353553385 : f32
    %111 = vector.broadcast %cst_96 : f32 to vector<8x16xf32>
    %112 = arith.mulf %110, %111 : vector<8x16xf32>
    %cst_97 = arith.constant dense<0xFF800000> : vector<8xf32>
    %113 = vector.multi_reduction <maximumf>, %112, %cst_97 [1] : vector<8x16xf32> to vector<8xf32>
    %114 = vector.shape_cast %113 : vector<8xf32> to vector<8x1xf32>
    %115 = vector.broadcast %114 : vector<8x1xf32> to vector<8x16xf32>
    %116 = arith.subf %112, %115 : vector<8x16xf32>
    %117 = math.exp %116 : vector<8x16xf32>
    %cst_98 = arith.constant dense<0.000000e+00> : vector<8xf32>
    %118 = vector.multi_reduction <add>, %117, %cst_98 [1] : vector<8x16xf32> to vector<8xf32>
    %119 = vector.shape_cast %118 : vector<8xf32> to vector<8x1xf32>
    %120 = tpu.reciprocal %119 {approx = true} : vector<8x1xf32> -> vector<8x1xf32>
    %121 = vector.broadcast %120 : vector<8x1xf32> to vector<8x16xf32>
    %122 = arith.mulf %117, %121 : vector<8x16xf32>
    %cst_99 = arith.constant dense<0.000000e+00> : vector<8x8xf32>
    %123 = tpu.matmul %122, %109, %cst_99 {dimension_numbers = #tpu.dot_dimension_numbers<[1], [0], [0], [1], [0, 0, 1, 1], [], []>} : vector<8x16xf32>, vector<16x8xf32>, vector<8x8xf32> -> vector<8x8xf32>
    %c1_100 = arith.constant 1 : index
    %c0_101 = arith.constant 0 : index
    %c0_102 = arith.constant 0 : index
    %124 = vector.load %arg31[%c1_100, %c0_101, %c0_102] : memref<4x8x32xf32, #tpu.memory_space<vmem>>, vector<1x8x32xf32>
    %125 = vector.shape_cast %124 : vector<1x8x32xf32> to vector<8x32xf32>
    %cst_103 = arith.constant dense<0.000000e+00> : vector<8x32xf32>
    %126 = tpu.matmul %123, %125, %cst_103 {dimension_numbers = #tpu.dot_dimension_numbers<[1], [0], [0], [1], [0, 0, 1, 1], [], []>} : vector<8x8xf32>, vector<8x32xf32>, vector<8x32xf32> -> vector<8x32xf32>
    %127 = arith.addf %88, %126 : vector<8x32xf32>
    %c2 = arith.constant 2 : index
    %c0_104 = arith.constant 0 : index
    %c0_105 = arith.constant 0 : index
    %128 = vector.load %arg32[%c2, %c0_104, %c0_105] : memref<4x32x8xf32, #tpu.memory_space<vmem>>, vector<1x32x8xf32>
    %129 = vector.shape_cast %128 : vector<1x32x8xf32> to vector<32x8xf32>
    %cst_106 = arith.constant dense<0.000000e+00> : vector<8x8xf32>
    %130 = tpu.matmul %48, %129, %cst_106 {dimension_numbers = #tpu.dot_dimension_numbers<[1], [0], [0], [1], [0, 0, 1, 1], [], []>} : vector<8x32xf32>, vector<32x8xf32>, vector<8x8xf32> -> vector<8x8xf32>
    %c2_107 = arith.constant 2 : index
    %c0_108 = arith.constant 0 : index
    %c0_109 = arith.constant 0 : index
    %131 = vector.load %arg28[%c2_107, %c0_108, %c0_109] : memref<4x1x8xf32, #tpu.memory_space<vmem>>, vector<1x1x8xf32>
    %132 = vector.shape_cast %131 : vector<1x1x8xf32> to vector<1x8xf32>
    %133 = vector.broadcast %132 : vector<1x8xf32> to vector<8x8xf32>
    %134 = arith.addf %130, %133 : vector<8x8xf32>
    %c2_110 = arith.constant 2 : index
    %c0_111 = arith.constant 0 : index
    %c0_112 = arith.constant 0 : index
    %135 = vector.load %arg30[%c2_110, %c0_111, %c0_112] : memref<4x32x8xf32, #tpu.memory_space<vmem>>, vector<1x32x8xf32>
    %136 = vector.shape_cast %135 : vector<1x32x8xf32> to vector<32x8xf32>
    %cst_113 = arith.constant dense<0.000000e+00> : vector<16x8xf32>
    %137 = tpu.matmul %29, %136, %cst_113 {dimension_numbers = #tpu.dot_dimension_numbers<[1], [0], [0], [1], [0, 0, 1, 1], [], []>} : vector<16x32xf32>, vector<32x8xf32>, vector<16x8xf32> -> vector<16x8xf32>
    %c2_114 = arith.constant 2 : index
    %c0_115 = arith.constant 0 : index
    %c0_116 = arith.constant 0 : index
    %138 = vector.load %arg26[%c2_114, %c0_115, %c0_116] : memref<4x1x8xf32, #tpu.memory_space<vmem>>, vector<1x1x8xf32>
    %139 = vector.shape_cast %138 : vector<1x1x8xf32> to vector<1x8xf32>
    %140 = vector.broadcast %139 : vector<1x8xf32> to vector<16x8xf32>
    %141 = arith.addf %137, %140 : vector<16x8xf32>
    %c2_117 = arith.constant 2 : index
    %c0_118 = arith.constant 0 : index
    %c0_119 = arith.constant 0 : index
    %142 = vector.load %arg33[%c2_117, %c0_118, %c0_119] : memref<4x32x8xf32, #tpu.memory_space<vmem>>, vector<1x32x8xf32>
    %143 = vector.shape_cast %142 : vector<1x32x8xf32> to vector<32x8xf32>
    %cst_120 = arith.constant dense<0.000000e+00> : vector<16x8xf32>
    %144 = tpu.matmul %29, %143, %cst_120 {dimension_numbers = #tpu.dot_dimension_numbers<[1], [0], [0], [1], [0, 0, 1, 1], [], []>} : vector<16x32xf32>, vector<32x8xf32>, vector<16x8xf32> -> vector<16x8xf32>
    %c2_121 = arith.constant 2 : index
    %c0_122 = arith.constant 0 : index
    %c0_123 = arith.constant 0 : index
    %145 = vector.load %arg29[%c2_121, %c0_122, %c0_123] : memref<4x1x8xf32, #tpu.memory_space<vmem>>, vector<1x1x8xf32>
    %146 = vector.shape_cast %145 : vector<1x1x8xf32> to vector<1x8xf32>
    %147 = vector.broadcast %146 : vector<1x8xf32> to vector<16x8xf32>
    %148 = arith.addf %144, %147 : vector<16x8xf32>
    %cst_124 = arith.constant dense<0.000000e+00> : vector<8x16xf32>
    %149 = tpu.matmul %134, %141, %cst_124 {dimension_numbers = #tpu.dot_dimension_numbers<[1], [1], [0], [0], [0, 0, 1, 0], [], []>} : vector<8x8xf32>, vector<16x8xf32>, vector<8x16xf32> -> vector<8x16xf32>
    %cst_125 = arith.constant 0.353553385 : f32
    %150 = vector.broadcast %cst_125 : f32 to vector<8x16xf32>
    %151 = arith.mulf %149, %150 : vector<8x16xf32>
    %cst_126 = arith.constant dense<0xFF800000> : vector<8xf32>
    %152 = vector.multi_reduction <maximumf>, %151, %cst_126 [1] : vector<8x16xf32> to vector<8xf32>
    %153 = vector.shape_cast %152 : vector<8xf32> to vector<8x1xf32>
    %154 = vector.broadcast %153 : vector<8x1xf32> to vector<8x16xf32>
    %155 = arith.subf %151, %154 : vector<8x16xf32>
    %156 = math.exp %155 : vector<8x16xf32>
    %cst_127 = arith.constant dense<0.000000e+00> : vector<8xf32>
    %157 = vector.multi_reduction <add>, %156, %cst_127 [1] : vector<8x16xf32> to vector<8xf32>
    %158 = vector.shape_cast %157 : vector<8xf32> to vector<8x1xf32>
    %159 = tpu.reciprocal %158 {approx = true} : vector<8x1xf32> -> vector<8x1xf32>
    %160 = vector.broadcast %159 : vector<8x1xf32> to vector<8x16xf32>
    %161 = arith.mulf %156, %160 : vector<8x16xf32>
    %cst_128 = arith.constant dense<0.000000e+00> : vector<8x8xf32>
    %162 = tpu.matmul %161, %148, %cst_128 {dimension_numbers = #tpu.dot_dimension_numbers<[1], [0], [0], [1], [0, 0, 1, 1], [], []>} : vector<8x16xf32>, vector<16x8xf32>, vector<8x8xf32> -> vector<8x8xf32>
    %c2_129 = arith.constant 2 : index
    %c0_130 = arith.constant 0 : index
    %c0_131 = arith.constant 0 : index
    %163 = vector.load %arg31[%c2_129, %c0_130, %c0_131] : memref<4x8x32xf32, #tpu.memory_space<vmem>>, vector<1x8x32xf32>
    %164 = vector.shape_cast %163 : vector<1x8x32xf32> to vector<8x32xf32>
    %cst_132 = arith.constant dense<0.000000e+00> : vector<8x32xf32>
    %165 = tpu.matmul %162, %164, %cst_132 {dimension_numbers = #tpu.dot_dimension_numbers<[1], [0], [0], [1], [0, 0, 1, 1], [], []>} : vector<8x8xf32>, vector<8x32xf32>, vector<8x32xf32> -> vector<8x32xf32>
    %166 = arith.addf %127, %165 : vector<8x32xf32>
    %c3 = arith.constant 3 : index
    %c0_133 = arith.constant 0 : index
    %c0_134 = arith.constant 0 : index
    %167 = vector.load %arg32[%c3, %c0_133, %c0_134] : memref<4x32x8xf32, #tpu.memory_space<vmem>>, vector<1x32x8xf32>
    %168 = vector.shape_cast %167 : vector<1x32x8xf32> to vector<32x8xf32>
    %cst_135 = arith.constant dense<0.000000e+00> : vector<8x8xf32>
    %169 = tpu.matmul %48, %168, %cst_135 {dimension_numbers = #tpu.dot_dimension_numbers<[1], [0], [0], [1], [0, 0, 1, 1], [], []>} : vector<8x32xf32>, vector<32x8xf32>, vector<8x8xf32> -> vector<8x8xf32>
    %c3_136 = arith.constant 3 : index
    %c0_137 = arith.constant 0 : index
    %c0_138 = arith.constant 0 : index
    %170 = vector.load %arg28[%c3_136, %c0_137, %c0_138] : memref<4x1x8xf32, #tpu.memory_space<vmem>>, vector<1x1x8xf32>
    %171 = vector.shape_cast %170 : vector<1x1x8xf32> to vector<1x8xf32>
    %172 = vector.broadcast %171 : vector<1x8xf32> to vector<8x8xf32>
    %173 = arith.addf %169, %172 : vector<8x8xf32>
    %c3_139 = arith.constant 3 : index
    %c0_140 = arith.constant 0 : index
    %c0_141 = arith.constant 0 : index
    %174 = vector.load %arg30[%c3_139, %c0_140, %c0_141] : memref<4x32x8xf32, #tpu.memory_space<vmem>>, vector<1x32x8xf32>
    %175 = vector.shape_cast %174 : vector<1x32x8xf32> to vector<32x8xf32>
    %cst_142 = arith.constant dense<0.000000e+00> : vector<16x8xf32>
    %176 = tpu.matmul %29, %175, %cst_142 {dimension_numbers = #tpu.dot_dimension_numbers<[1], [0], [0], [1], [0, 0, 1, 1], [], []>} : vector<16x32xf32>, vector<32x8xf32>, vector<16x8xf32> -> vector<16x8xf32>
    %c3_143 = arith.constant 3 : index
    %c0_144 = arith.constant 0 : index
    %c0_145 = arith.constant 0 : index
    %177 = vector.load %arg26[%c3_143, %c0_144, %c0_145] : memref<4x1x8xf32, #tpu.memory_space<vmem>>, vector<1x1x8xf32>
    %178 = vector.shape_cast %177 : vector<1x1x8xf32> to vector<1x8xf32>
    %179 = vector.broadcast %178 : vector<1x8xf32> to vector<16x8xf32>
    %180 = arith.addf %176, %179 : vector<16x8xf32>
    %c3_146 = arith.constant 3 : index
    %c0_147 = arith.constant 0 : index
    %c0_148 = arith.constant 0 : index
    %181 = vector.load %arg33[%c3_146, %c0_147, %c0_148] : memref<4x32x8xf32, #tpu.memory_space<vmem>>, vector<1x32x8xf32>
    %182 = vector.shape_cast %181 : vector<1x32x8xf32> to vector<32x8xf32>
    %cst_149 = arith.constant dense<0.000000e+00> : vector<16x8xf32>
    %183 = tpu.matmul %29, %182, %cst_149 {dimension_numbers = #tpu.dot_dimension_numbers<[1], [0], [0], [1], [0, 0, 1, 1], [], []>} : vector<16x32xf32>, vector<32x8xf32>, vector<16x8xf32> -> vector<16x8xf32>
    %c3_150 = arith.constant 3 : index
    %c0_151 = arith.constant 0 : index
    %c0_152 = arith.constant 0 : index
    %184 = vector.load %arg29[%c3_150, %c0_151, %c0_152] : memref<4x1x8xf32, #tpu.memory_space<vmem>>, vector<1x1x8xf32>
    %185 = vector.shape_cast %184 : vector<1x1x8xf32> to vector<1x8xf32>
    %186 = vector.broadcast %185 : vector<1x8xf32> to vector<16x8xf32>
    %187 = arith.addf %183, %186 : vector<16x8xf32>
    %cst_153 = arith.constant dense<0.000000e+00> : vector<8x16xf32>
    %188 = tpu.matmul %173, %180, %cst_153 {dimension_numbers = #tpu.dot_dimension_numbers<[1], [1], [0], [0], [0, 0, 1, 0], [], []>} : vector<8x8xf32>, vector<16x8xf32>, vector<8x16xf32> -> vector<8x16xf32>
    %cst_154 = arith.constant 0.353553385 : f32
    %189 = vector.broadcast %cst_154 : f32 to vector<8x16xf32>
    %190 = arith.mulf %188, %189 : vector<8x16xf32>
    %cst_155 = arith.constant dense<0xFF800000> : vector<8xf32>
    %191 = vector.multi_reduction <maximumf>, %190, %cst_155 [1] : vector<8x16xf32> to vector<8xf32>
    %192 = vector.shape_cast %191 : vector<8xf32> to vector<8x1xf32>
    %193 = vector.broadcast %192 : vector<8x1xf32> to vector<8x16xf32>
    %194 = arith.subf %190, %193 : vector<8x16xf32>
    %195 = math.exp %194 : vector<8x16xf32>
    %cst_156 = arith.constant dense<0.000000e+00> : vector<8xf32>
    %196 = vector.multi_reduction <add>, %195, %cst_156 [1] : vector<8x16xf32> to vector<8xf32>
    %197 = vector.shape_cast %196 : vector<8xf32> to vector<8x1xf32>
    %198 = tpu.reciprocal %197 {approx = true} : vector<8x1xf32> -> vector<8x1xf32>
    %199 = vector.broadcast %198 : vector<8x1xf32> to vector<8x16xf32>
    %200 = arith.mulf %195, %199 : vector<8x16xf32>
    %cst_157 = arith.constant dense<0.000000e+00> : vector<8x8xf32>
    %201 = tpu.matmul %200, %187, %cst_157 {dimension_numbers = #tpu.dot_dimension_numbers<[1], [0], [0], [1], [0, 0, 1, 1], [], []>} : vector<8x16xf32>, vector<16x8xf32>, vector<8x8xf32> -> vector<8x8xf32>
    %c3_158 = arith.constant 3 : index
    %c0_159 = arith.constant 0 : index
    %c0_160 = arith.constant 0 : index
    %202 = vector.load %arg31[%c3_158, %c0_159, %c0_160] : memref<4x8x32xf32, #tpu.memory_space<vmem>>, vector<1x8x32xf32>
    %203 = vector.shape_cast %202 : vector<1x8x32xf32> to vector<8x32xf32>
    %cst_161 = arith.constant dense<0.000000e+00> : vector<8x32xf32>
    %204 = tpu.matmul %201, %203, %cst_161 {dimension_numbers = #tpu.dot_dimension_numbers<[1], [0], [0], [1], [0, 0, 1, 1], [], []>} : vector<8x8xf32>, vector<8x32xf32>, vector<8x32xf32> -> vector<8x32xf32>
    %205 = arith.addf %166, %204 : vector<8x32xf32>
    %206 = arith.addf %48, %205 : vector<8x32xf32>
    %c0_162 = arith.constant 0 : index
    %c0_163 = arith.constant 0 : index
    %207 = vector.load %arg27[%c0_162, %c0_163] : memref<1x32xf32, #tpu.memory_space<vmem>>, vector<1x32xf32>
    %208 = vector.broadcast %207 : vector<1x32xf32> to vector<8x32xf32>
    %209 = arith.addf %206, %208 : vector<8x32xf32>
    %c0_164 = arith.constant 0 : index
    %c0_165 = arith.constant 0 : index
    %210 = vector.load %arg35[%c0_164, %c0_165] : memref<32x32xf32, #tpu.memory_space<vmem>>, vector<32x32xf32>
    %cst_166 = arith.constant dense<0.000000e+00> : vector<8x32xf32>
    %211 = tpu.matmul %209, %210, %cst_166 {dimension_numbers = #tpu.dot_dimension_numbers<[1], [0], [0], [1], [0, 0, 1, 1], [], []>} : vector<8x32xf32>, vector<32x32xf32>, vector<8x32xf32> -> vector<8x32xf32>
    %c0_167 = arith.constant 0 : index
    %c0_168 = arith.constant 0 : index
    %212 = vector.load %arg34[%c0_167, %c0_168] : memref<1x32xf32, #tpu.memory_space<vmem>>, vector<1x32xf32>
    %213 = vector.broadcast %212 : vector<1x32xf32> to vector<8x32xf32>
    %214 = arith.addf %211, %213 : vector<8x32xf32>
    %cst_169 = arith.constant 0.000000e+00 : f32
    %215 = vector.broadcast %cst_169 : f32 to vector<8x32xf32>
    %216 = arith.maximumf %214, %215 : vector<8x32xf32>
    %c0_170 = arith.constant 0 : index
    %c0_171 = arith.constant 0 : index
    %217 = vector.load %arg37[%c0_170, %c0_171] : memref<32x32xf32, #tpu.memory_space<vmem>>, vector<32x32xf32>
    %cst_172 = arith.constant dense<0.000000e+00> : vector<8x32xf32>
    %218 = tpu.matmul %216, %217, %cst_172 {dimension_numbers = #tpu.dot_dimension_numbers<[1], [0], [0], [1], [0, 0, 1, 1], [], []>} : vector<8x32xf32>, vector<32x32xf32>, vector<8x32xf32> -> vector<8x32xf32>
    %c0_173 = arith.constant 0 : index
    %c0_174 = arith.constant 0 : index
    %219 = vector.load %arg36[%c0_173, %c0_174] : memref<1x32xf32, #tpu.memory_space<vmem>>, vector<1x32xf32>
    %220 = vector.broadcast %219 : vector<1x32xf32> to vector<8x32xf32>
    %221 = arith.addf %218, %220 : vector<8x32xf32>
    %cst_175 = arith.constant 0.000000e+00 : f32
    %222 = vector.broadcast %cst_175 : f32 to vector<8x32xf32>
    %223 = arith.maximumf %221, %222 : vector<8x32xf32>
    %c0_176 = arith.constant 0 : index
    %c0_177 = arith.constant 0 : index
    %224 = vector.load %arg39[%c0_176, %c0_177] : memref<32x2xf32, #tpu.memory_space<vmem>>, vector<32x2xf32>
    %cst_178 = arith.constant dense<0.000000e+00> : vector<8x2xf32>
    %225 = tpu.matmul %223, %224, %cst_178 {dimension_numbers = #tpu.dot_dimension_numbers<[1], [0], [0], [1], [0, 0, 1, 1], [], []>} : vector<8x32xf32>, vector<32x2xf32>, vector<8x2xf32> -> vector<8x2xf32>
    %c0_179 = arith.constant 0 : index
    %c0_180 = arith.constant 0 : index
    %226 = vector.load %arg38[%c0_179, %c0_180] : memref<1x2xf32, #tpu.memory_space<vmem>>, vector<1x2xf32>
    %227 = vector.broadcast %226 : vector<1x2xf32> to vector<8x2xf32>
    %228 = arith.addf %225, %227 : vector<8x2xf32>
    %c0_181 = arith.constant 0 : index
    %c0_182 = arith.constant 0 : index
    %c0_183 = arith.constant 0 : index
    %229 = vector.load %arg53[%c0_181, %c0_182, %c0_183] : memref<1x8x2xf32, #tpu.memory_space<vmem>>, vector<1x8x2xf32>
    %230 = vector.shape_cast %229 : vector<1x8x2xf32> to vector<8x2xf32>
    %231 = vector.shape_cast %228 : vector<8x2xf32> to vector<1x8x2xf32>
    tpu.vector_store %arg53[%c0_181, %c0_182, %c0_183], %231 {strides = array<i32>} : memref<1x8x2xf32, #tpu.memory_space<vmem>>, vector<1x8x2xf32>,
    return
  }
  func.func @transform_0(%arg0: i32) -> (i32, i32, i32) {
    %c0_i32 = arith.constant 0 : i32
    %c0_i32_0 = arith.constant 0 : i32
    %c0_i32_1 = arith.constant 0 : i32
    return %arg0, %c0_i32, %c0_i32_0 : i32, i32, i32
  }
  func.func @transform_1(%arg0: i32) -> (i32, i32, i32) {
    %c0_i32 = arith.constant 0 : i32
    %c0_i32_0 = arith.constant 0 : i32
    %c0_i32_1 = arith.constant 0 : i32
    return %arg0, %c0_i32, %c0_i32_0 : i32, i32, i32
  }
  func.func @transform_2(%arg0: i32) -> (i32, i32, i32) {
    %c0_i32 = arith.constant 0 : i32
    %c0_i32_0 = arith.constant 0 : i32
    %c0_i32_1 = arith.constant 0 : i32
    return %arg0, %c0_i32, %c0_i32_0 : i32, i32, i32
  }
  func.func @transform_3(%arg0: i32) -> (i32, i32, i32) {
    %c0_i32 = arith.constant 0 : i32
    %c0_i32_0 = arith.constant 0 : i32
    %c0_i32_1 = arith.constant 0 : i32
    %c0_i32_2 = arith.constant 0 : i32
    return %c0_i32, %c0_i32_0, %c0_i32_1 : i32, i32, i32
  }
  func.func @transform_4(%arg0: i32) -> (i32, i32) {
    %c0_i32 = arith.constant 0 : i32
    %c0_i32_0 = arith.constant 0 : i32
    %c0_i32_1 = arith.constant 0 : i32
    return %c0_i32, %c0_i32_0 : i32, i32
  }
  func.func @transform_5(%arg0: i32) -> (i32, i32) {
    %c0_i32 = arith.constant 0 : i32
    %c0_i32_0 = arith.constant 0 : i32
    %c0_i32_1 = arith.constant 0 : i32
    return %c0_i32, %c0_i32_0 : i32, i32
  }
  func.func @transform_6(%arg0: i32) -> (i32, i32, i32) {
    %c0_i32 = arith.constant 0 : i32
    %c0_i32_0 = arith.constant 0 : i32
    %c0_i32_1 = arith.constant 0 : i32
    %c0_i32_2 = arith.constant 0 : i32
    return %c0_i32, %c0_i32_0, %c0_i32_1 : i32, i32, i32
  }
  func.func @transform_7(%arg0: i32) -> (i32, i32, i32) {
    %c0_i32 = arith.constant 0 : i32
    %c0_i32_0 = arith.constant 0 : i32
    %c0_i32_1 = arith.constant 0 : i32
    %c0_i32_2 = arith.constant 0 : i32
    return %c0_i32, %c0_i32_0, %c0_i32_1 : i32, i32, i32
  }
  func.func @transform_8(%arg0: i32) -> (i32, i32) {
    %c0_i32 = arith.constant 0 : i32
    %c0_i32_0 = arith.constant 0 : i32
    %c0_i32_1 = arith.constant 0 : i32
    return %c0_i32, %c0_i32_0 : i32, i32
  }
  func.func @transform_9(%arg0: i32) -> (i32, i32) {
    %c0_i32 = arith.constant 0 : i32
    %c0_i32_0 = arith.constant 0 : i32
    %c0_i32_1 = arith.constant 0 : i32
    return %c0_i32, %c0_i32_0 : i32, i32
  }
  func.func @transform_10(%arg0: i32) -> (i32, i32) {
    %c0_i32 = arith.constant 0 : i32
    %c0_i32_0 = arith.constant 0 : i32
    %c0_i32_1 = arith.constant 0 : i32
    return %c0_i32, %c0_i32_0 : i32, i32
  }
  func.func @transform_11(%arg0: i32) -> (i32, i32) {
    %c0_i32 = arith.constant 0 : i32
    %c0_i32_0 = arith.constant 0 : i32
    %c0_i32_1 = arith.constant 0 : i32
    return %c0_i32, %c0_i32_0 : i32, i32
  }
  func.func @transform_12(%arg0: i32) -> (i32, i32) {
    %c0_i32 = arith.constant 0 : i32
    %c0_i32_0 = arith.constant 0 : i32
    %c0_i32_1 = arith.constant 0 : i32
    return %c0_i32, %c0_i32_0 : i32, i32
  }
  func.func @transform_13(%arg0: i32) -> (i32, i32) {
    %c0_i32 = arith.constant 0 : i32
    %c0_i32_0 = arith.constant 0 : i32
    %c0_i32_1 = arith.constant 0 : i32
    return %c0_i32, %c0_i32_0 : i32, i32
  }
  func.func @transform_14(%arg0: i32) -> (i32, i32) {
    %c0_i32 = arith.constant 0 : i32
    %c0_i32_0 = arith.constant 0 : i32
    %c0_i32_1 = arith.constant 0 : i32
    return %c0_i32, %c0_i32_0 : i32, i32
  }
  func.func @transform_15(%arg0: i32) -> (i32, i32) {
    %c0_i32 = arith.constant 0 : i32
    %c0_i32_0 = arith.constant 0 : i32
    %c0_i32_1 = arith.constant 0 : i32
    return %c0_i32, %c0_i32_0 : i32, i32
  }
  func.func @transform_16(%arg0: i32) -> (i32, i32) {
    %c0_i32 = arith.constant 0 : i32
    %c0_i32_0 = arith.constant 0 : i32
    %c0_i32_1 = arith.constant 0 : i32
    return %c0_i32, %c0_i32_0 : i32, i32
  }
  func.func @transform_17(%arg0: i32) -> (i32, i32, i32) {
    %c0_i32 = arith.constant 0 : i32
    %c0_i32_0 = arith.constant 0 : i32
    %c0_i32_1 = arith.constant 0 : i32
    %c0_i32_2 = arith.constant 0 : i32
    return %c0_i32, %c0_i32_0, %c0_i32_1 : i32, i32, i32
  }
  func.func @transform_18(%arg0: i32) -> (i32, i32, i32) {
    %c0_i32 = arith.constant 0 : i32
    %c0_i32_0 = arith.constant 0 : i32
    %c0_i32_1 = arith.constant 0 : i32
    %c0_i32_2 = arith.constant 0 : i32
    return %c0_i32, %c0_i32_0, %c0_i32_1 : i32, i32, i32
  }
  func.func @transform_19(%arg0: i32) -> (i32, i32, i32) {
    %c0_i32 = arith.constant 0 : i32
    %c0_i32_0 = arith.constant 0 : i32
    %c0_i32_1 = arith.constant 0 : i32
    %c0_i32_2 = arith.constant 0 : i32
    return %c0_i32, %c0_i32_0, %c0_i32_1 : i32, i32, i32
  }
  func.func @transform_20(%arg0: i32) -> (i32, i32, i32) {
    %c0_i32 = arith.constant 0 : i32
    %c0_i32_0 = arith.constant 0 : i32
    %c0_i32_1 = arith.constant 0 : i32
    %c0_i32_2 = arith.constant 0 : i32
    return %c0_i32, %c0_i32_0, %c0_i32_1 : i32, i32, i32
  }
  func.func @transform_21(%arg0: i32) -> (i32, i32, i32) {
    %c0_i32 = arith.constant 0 : i32
    %c0_i32_0 = arith.constant 0 : i32
    %c0_i32_1 = arith.constant 0 : i32
    %c0_i32_2 = arith.constant 0 : i32
    return %c0_i32, %c0_i32_0, %c0_i32_1 : i32, i32, i32
  }
  func.func @transform_22(%arg0: i32) -> (i32, i32, i32) {
    %c0_i32 = arith.constant 0 : i32
    %c0_i32_0 = arith.constant 0 : i32
    %c0_i32_1 = arith.constant 0 : i32
    %c0_i32_2 = arith.constant 0 : i32
    return %c0_i32, %c0_i32_0, %c0_i32_1 : i32, i32, i32
  }
  func.func @transform_23(%arg0: i32) -> (i32, i32, i32) {
    %c0_i32 = arith.constant 0 : i32
    %c0_i32_0 = arith.constant 0 : i32
    %c0_i32_1 = arith.constant 0 : i32
    %c0_i32_2 = arith.constant 0 : i32
    return %c0_i32, %c0_i32_0, %c0_i32_1 : i32, i32, i32
  }
  func.func @transform_24(%arg0: i32) -> (i32, i32, i32) {
    %c0_i32 = arith.constant 0 : i32
    %c0_i32_0 = arith.constant 0 : i32
    %c0_i32_1 = arith.constant 0 : i32
    %c0_i32_2 = arith.constant 0 : i32
    return %c0_i32, %c0_i32_0, %c0_i32_1 : i32, i32, i32
  }
  func.func @transform_25(%arg0: i32) -> (i32, i32, i32) {
    %c0_i32 = arith.constant 0 : i32
    %c0_i32_0 = arith.constant 0 : i32
    %c0_i32_1 = arith.constant 0 : i32
    %c0_i32_2 = arith.constant 0 : i32
    return %c0_i32, %c0_i32_0, %c0_i32_1 : i32, i32, i32
  }
  func.func @transform_26(%arg0: i32) -> (i32, i32) {
    %c0_i32 = arith.constant 0 : i32
    %c0_i32_0 = arith.constant 0 : i32
    %c0_i32_1 = arith.constant 0 : i32
    return %c0_i32, %c0_i32_0 : i32, i32
  }
  func.func @transform_27(%arg0: i32) -> (i32, i32, i32) {
    %c0_i32 = arith.constant 0 : i32
    %c0_i32_0 = arith.constant 0 : i32
    %c0_i32_1 = arith.constant 0 : i32
    %c0_i32_2 = arith.constant 0 : i32
    return %c0_i32, %c0_i32_0, %c0_i32_1 : i32, i32, i32
  }
  func.func @transform_28(%arg0: i32) -> (i32, i32, i32) {
    %c0_i32 = arith.constant 0 : i32
    %c0_i32_0 = arith.constant 0 : i32
    %c0_i32_1 = arith.constant 0 : i32
    %c0_i32_2 = arith.constant 0 : i32
    return %c0_i32, %c0_i32_0, %c0_i32_1 : i32, i32, i32
  }
  func.func @transform_29(%arg0: i32) -> (i32, i32, i32) {
    %c0_i32 = arith.constant 0 : i32
    %c0_i32_0 = arith.constant 0 : i32
    %c0_i32_1 = arith.constant 0 : i32
    %c0_i32_2 = arith.constant 0 : i32
    return %c0_i32, %c0_i32_0, %c0_i32_1 : i32, i32, i32
  }
  func.func @transform_30(%arg0: i32) -> (i32, i32, i32) {
    %c0_i32 = arith.constant 0 : i32
    %c0_i32_0 = arith.constant 0 : i32
    %c0_i32_1 = arith.constant 0 : i32
    %c0_i32_2 = arith.constant 0 : i32
    return %c0_i32, %c0_i32_0, %c0_i32_1 : i32, i32, i32
  }
  func.func @transform_31(%arg0: i32) -> (i32, i32, i32) {
    %c0_i32 = arith.constant 0 : i32
    %c0_i32_0 = arith.constant 0 : i32
    %c0_i32_1 = arith.constant 0 : i32
    %c0_i32_2 = arith.constant 0 : i32
    return %c0_i32, %c0_i32_0, %c0_i32_1 : i32, i32, i32
  }
  func.func @transform_32(%arg0: i32) -> (i32, i32, i32) {
    %c0_i32 = arith.constant 0 : i32
    %c0_i32_0 = arith.constant 0 : i32
    %c0_i32_1 = arith.constant 0 : i32
    %c0_i32_2 = arith.constant 0 : i32
    return %c0_i32, %c0_i32_0, %c0_i32_1 : i32, i32, i32
  }
  func.func @transform_33(%arg0: i32) -> (i32, i32) {
    %c0_i32 = arith.constant 0 : i32
    %c0_i32_0 = arith.constant 0 : i32
    %c0_i32_1 = arith.constant 0 : i32
    return %c0_i32, %c0_i32_0 : i32, i32
  }
  func.func @transform_34(%arg0: i32) -> (i32, i32) {
    %c0_i32 = arith.constant 0 : i32
    %c0_i32_0 = arith.constant 0 : i32
    %c0_i32_1 = arith.constant 0 : i32
    return %c0_i32, %c0_i32_0 : i32, i32
  }
  func.func @transform_35(%arg0: i32) -> (i32, i32) {
    %c0_i32 = arith.constant 0 : i32
    %c0_i32_0 = arith.constant 0 : i32
    %c0_i32_1 = arith.constant 0 : i32
    return %c0_i32, %c0_i32_0 : i32, i32
  }
  func.func @transform_36(%arg0: i32) -> (i32, i32) {
    %c0_i32 = arith.constant 0 : i32
    %c0_i32_0 = arith.constant 0 : i32
    %c0_i32_1 = arith.constant 0 : i32
    return %c0_i32, %c0_i32_0 : i32, i32
  }
  func.func @transform_37(%arg0: i32) -> (i32, i32) {
    %c0_i32 = arith.constant 0 : i32
    %c0_i32_0 = arith.constant 0 : i32
    %c0_i32_1 = arith.constant 0 : i32
    return %c0_i32, %c0_i32_0 : i32, i32
  }
  func.func @transform_38(%arg0: i32) -> (i32, i32) {
    %c0_i32 = arith.constant 0 : i32
    %c0_i32_0 = arith.constant 0 : i32
    %c0_i32_1 = arith.constant 0 : i32
    return %c0_i32, %c0_i32_0 : i32, i32
  }
  func.func @transform_39(%arg0: i32) -> (i32, i32) {
    %c0_i32 = arith.constant 0 : i32
    %c0_i32_0 = arith.constant 0 : i32
    %c0_i32_1 = arith.constant 0 : i32
    return %c0_i32, %c0_i32_0 : i32, i32
  }
  func.func @transform_40(%arg0: i32) -> (i32, i32) {
    %c0_i32 = arith.constant 0 : i32
    %c0_i32_0 = arith.constant 0 : i32
    %c0_i32_1 = arith.constant 0 : i32
    return %c0_i32, %c0_i32_0 : i32, i32
  }
  func.func @transform_41(%arg0: i32) -> (i32, i32) {
    %c0_i32 = arith.constant 0 : i32
    %c0_i32_0 = arith.constant 0 : i32
    %c0_i32_1 = arith.constant 0 : i32
    return %c0_i32, %c0_i32_0 : i32, i32
  }
  func.func @transform_42(%arg0: i32) -> (i32, i32) {
    %c0_i32 = arith.constant 0 : i32
    %c0_i32_0 = arith.constant 0 : i32
    %c0_i32_1 = arith.constant 0 : i32
    return %c0_i32, %c0_i32_0 : i32, i32
  }
  func.func @transform_43(%arg0: i32) -> (i32, i32) {
    %c0_i32 = arith.constant 0 : i32
    %c0_i32_0 = arith.constant 0 : i32
    %c0_i32_1 = arith.constant 0 : i32
    return %c0_i32, %c0_i32_0 : i32, i32
  }
  func.func @transform_44(%arg0: i32) -> (i32, i32) {
    %c0_i32 = arith.constant 0 : i32
    %c0_i32_0 = arith.constant 0 : i32
    %c0_i32_1 = arith.constant 0 : i32
    return %c0_i32, %c0_i32_0 : i32, i32
  }
  func.func @transform_45(%arg0: i32) -> (i32, i32) {
    %c0_i32 = arith.constant 0 : i32
    %c0_i32_0 = arith.constant 0 : i32
    %c0_i32_1 = arith.constant 0 : i32
    return %c0_i32, %c0_i32_0 : i32, i32
  }
  func.func @transform_46(%arg0: i32) -> (i32, i32) {
    %c0_i32 = arith.constant 0 : i32
    %c0_i32_0 = arith.constant 0 : i32
    %c0_i32_1 = arith.constant 0 : i32
    return %c0_i32, %c0_i32_0 : i32, i32
  }
  func.func @transform_47(%arg0: i32) -> (i32, i32) {
    %c0_i32 = arith.constant 0 : i32
    %c0_i32_0 = arith.constant 0 : i32
    %c0_i32_1 = arith.constant 0 : i32
    return %c0_i32, %c0_i32_0 : i32, i32
  }
  func.func @transform_48(%arg0: i32) -> (i32, i32) {
    %c0_i32 = arith.constant 0 : i32
    %c0_i32_0 = arith.constant 0 : i32
    %c0_i32_1 = arith.constant 0 : i32
    return %c0_i32, %c0_i32_0 : i32, i32
  }
  func.func @transform_49(%arg0: i32) -> (i32, i32) {
    %c0_i32 = arith.constant 0 : i32
    %c0_i32_0 = arith.constant 0 : i32
    %c0_i32_1 = arith.constant 0 : i32
    return %c0_i32, %c0_i32_0 : i32, i32
  }
  func.func @transform_50(%arg0: i32) -> (i32, i32) {
    %c0_i32 = arith.constant 0 : i32
    %c0_i32_0 = arith.constant 0 : i32
    %c0_i32_1 = arith.constant 0 : i32
    return %c0_i32, %c0_i32_0 : i32, i32
  }
  func.func @transform_51(%arg0: i32) -> (i32, i32) {
    %c0_i32 = arith.constant 0 : i32
    %c0_i32_0 = arith.constant 0 : i32
    %c0_i32_1 = arith.constant 0 : i32
    return %c0_i32, %c0_i32_0 : i32, i32
  }
  func.func @transform_52(%arg0: i32) -> (i32, i32, i32) {
    %c0_i32 = arith.constant 0 : i32
    %c0_i32_0 = arith.constant 0 : i32
    %c0_i32_1 = arith.constant 0 : i32
    return %arg0, %c0_i32, %c0_i32_0 : i32, i32, i32
  }
}

</mosaic_0001>

<llo_original>
// kernel: tfspos_forward.1
$region0: #{tfspos_forward.1}
  #allocation0 [shape = 'u32[]', space=smem, size = 0x4, offset = 0x4, fixed_abs, tag = 'smem constant byte address 0x4 - core index']
  #allocation1 [shape = 'u32[144,128]{1,0:T(1,128)}', space=vmem, size = 0x12000, scoped, tag = 'internal scratch']
  %s0 = inlined_call_operand.smem [shape: u32[53], index: -1, kind: input, shape index: {}]
  %s1 = sld [smem:[%s0]]
  %s2 = scalar_lea.smem %s0, 1
  %s3 = sld [smem:[%s2]]
  %s4 = scalar_lea.smem %s0, 2
  %s5 = sld [smem:[%s4]]
  %s6 = scalar_lea.smem %s0, 3
  %s7 = sld [smem:[%s6]]
  %s8 = scalar_lea.smem %s0, 4
  %s9 = sld [smem:[%s8]]
  %s10 = scalar_lea.smem %s0, 5
  %s11 = sld [smem:[%s10]]
  %s12 = scalar_lea.smem %s0, 6
  %s13 = sld [smem:[%s12]]
  %s14 = scalar_lea.smem %s0, 7
  %s15 = sld [smem:[%s14]]
  %s16 = scalar_lea.smem %s0, 8
  %s17 = sld [smem:[%s16]]
  %s18 = scalar_lea.smem %s0, 9
  %s19 = sld [smem:[%s18]]
  %s20 = scalar_lea.smem %s0, 10
  %s21 = sld [smem:[%s20]]
  %s22 = scalar_lea.smem %s0, 11
  %s23 = sld [smem:[%s22]]
  %s24 = scalar_lea.smem %s0, 12
  %s25 = sld [smem:[%s24]]
  %s26 = scalar_lea.smem %s0, 13
  %s27 = sld [smem:[%s26]]
  %s28 = scalar_lea.smem %s0, 14
  %s29 = sld [smem:[%s28]]
  %s30 = scalar_lea.smem %s0, 15
  %s31 = sld [smem:[%s30]]
  %s32 = scalar_lea.smem %s0, 16
  %s33 = sld [smem:[%s32]]
  %s34 = scalar_lea.smem %s0, 17
  %s35 = sld [smem:[%s34]]
  %s36 = scalar_lea.smem %s0, 18
  %s37 = sld [smem:[%s36]]
  %s38 = scalar_lea.smem %s0, 19
  %s39 = sld [smem:[%s38]]
  %s40 = scalar_lea.smem %s0, 20
  %s41 = sld [smem:[%s40]]
  %s42 = scalar_lea.smem %s0, 21
  %s43 = sld [smem:[%s42]]
  %s44 = scalar_lea.smem %s0, 22
  %s45 = sld [smem:[%s44]]
  %s46 = scalar_lea.smem %s0, 23
  %s47 = sld [smem:[%s46]]
  %s48 = scalar_lea.smem %s0, 24
  %s49 = sld [smem:[%s48]]
  %s50 = scalar_lea.smem %s0, 25
  %s51 = sld [smem:[%s50]]
  %s52 = scalar_lea.smem %s0, 26
  %s53 = sld [smem:[%s52]]
  %s54 = scalar_lea.smem %s0, 27
  %s55 = sld [smem:[%s54]]
  %s56 = scalar_lea.smem %s0, 28
  %s57 = sld [smem:[%s56]]
  %s58 = scalar_lea.smem %s0, 29
  %s59 = sld [smem:[%s58]]
  %s60 = scalar_lea.smem %s0, 30
  %s61 = sld [smem:[%s60]]
  %s62 = scalar_lea.smem %s0, 31
  %s63 = sld [smem:[%s62]]
  %s64 = scalar_lea.smem %s0, 32
  %s65 = sld [smem:[%s64]]
  %s66 = scalar_lea.smem %s0, 33
  %s67 = sld [smem:[%s66]]
  %s68 = scalar_lea.smem %s0, 34
  %s69 = sld [smem:[%s68]]
  %s70 = scalar_lea.smem %s0, 35
  %s71 = sld [smem:[%s70]]
  %s72 = scalar_lea.smem %s0, 36
  %s73 = sld [smem:[%s72]]
  %s74 = scalar_lea.smem %s0, 37
  %s75 = sld [smem:[%s74]]
  %s76 = scalar_lea.smem %s0, 38
  %s77 = sld [smem:[%s76]]
  %s78 = scalar_lea.smem %s0, 39
  %s79 = sld [smem:[%s78]]
  %s80 = scalar_lea.smem %s0, 40
  %s81 = sld [smem:[%s80]]
  %s82 = scalar_lea.smem %s0, 41
  %s83 = sld [smem:[%s82]]
  %s84 = scalar_lea.smem %s0, 42
  %s85 = sld [smem:[%s84]]
  %s86 = scalar_lea.smem %s0, 43
  %s87 = sld [smem:[%s86]]
  %s88 = scalar_lea.smem %s0, 44
  %s89 = sld [smem:[%s88]]
  %s90 = scalar_lea.smem %s0, 45
  %s91 = sld [smem:[%s90]]
  %s92 = scalar_lea.smem %s0, 46
  %s93 = sld [smem:[%s92]]
  %s94 = scalar_lea.smem %s0, 47
  %s95 = sld [smem:[%s94]]
  %s96 = scalar_lea.smem %s0, 48
  %s97 = sld [smem:[%s96]]
  %s98 = scalar_lea.smem %s0, 49
  %s99 = sld [smem:[%s98]]
  %s100 = scalar_lea.smem %s0, 50
  %s101 = sld [smem:[%s100]]
  %s102 = scalar_lea.smem %s0, 51
  %s103 = sld [smem:[%s102]]
  %s104 = scalar_lea.smem %s0, 52
  %s105 = sld [smem:[%s104]]
  %s106 = sld [smem:[#allocation0]]
  $region248: #{tfspos_forward.1} parent=0
    _
  %s108 = ssub.s32 1, %s106
  %s109 = scalar_select 0, %s108, %s106
  loop: start=0, step=1, limit=4
  $region2: #{tfspos_forward.1} parent=0 // loop_pre_header
    _
  $region3: #{tfspos_forward.1} parent=0 // loop_header
    %s111 = sphi 0, %s115
    %p112 = scmp.ge.s32.totalorder %s111, 4
    %s121 = sphi 0, %s123
    %s124 = sphi 0, %s121
    %s125 = sphi 0, %s124
    %s141 = sphi 0, %s125
    %s147 = sphi 0, %s149
    %s150 = sphi 0, %s147
    %s151 = sphi 0, %s150
    %s167 = sphi 0, %s151
    %s173 = sphi 0, %s175
    %s176 = sphi 0, %s173
    %s177 = sphi 0, %s176
    %s193 = sphi 0, %s177
    %s197 = sphi 0, %s197
    %s199 = sphi 0, %s197
    %s200 = sphi 0, %s199
    %s214 = sphi 0, %s200
    %s218 = sphi 0, %s218
    %s220 = sphi 0, %s218
    %s221 = sphi 0, %s220
    %s235 = sphi 0, %s221
    %s239 = sphi 0, %s239
    %s241 = sphi 0, %s239
    %s242 = sphi 0, %s241
    %s256 = sphi 0, %s242
    %s260 = sphi 0, %s260
    %s262 = sphi 0, %s260
    %s263 = sphi 0, %s262
    %s277 = sphi 0, %s263
    %s281 = sphi 0, %s281
    %s283 = sphi 0, %s281
    %s284 = sphi 0, %s283
    %s298 = sphi 0, %s284
    %s302 = sphi 0, %s302
    %s304 = sphi 0, %s302
    %s305 = sphi 0, %s304
    %s319 = sphi 0, %s305
    %s323 = sphi 0, %s323
    %s325 = sphi 0, %s323
    %s326 = sphi 0, %s325
    %s340 = sphi 0, %s326
    %s344 = sphi 0, %s344
    %s346 = sphi 0, %s344
    %s347 = sphi 0, %s346
    %s361 = sphi 0, %s347
    %s365 = sphi 0, %s365
    %s367 = sphi 0, %s365
    %s368 = sphi 0, %s367
    %s382 = sphi 0, %s368
    %s386 = sphi 0, %s386
    %s388 = sphi 0, %s386
    %s389 = sphi 0, %s388
    %s403 = sphi 0, %s389
    %s407 = sphi 0, %s407
    %s409 = sphi 0, %s407
    %s410 = sphi 0, %s409
    %s424 = sphi 0, %s410
    %s428 = sphi 0, %s428
    %s430 = sphi 0, %s428
    %s431 = sphi 0, %s430
    %s445 = sphi 0, %s431
    %s449 = sphi 0, %s449
    %s451 = sphi 0, %s449
    %s452 = sphi 0, %s451
    %s466 = sphi 0, %s452
    %s470 = sphi 0, %s470
    %s472 = sphi 0, %s470
    %s473 = sphi 0, %s472
    %s487 = sphi 0, %s473
    %s491 = sphi 0, %s491
    %s493 = sphi 0, %s491
    %s494 = sphi 0, %s493
    %s508 = sphi 0, %s494
    %s512 = sphi 0, %s512
    %s514 = sphi 0, %s512
    %s515 = sphi 0, %s514
    %s529 = sphi 0, %s515
    %s533 = sphi 0, %s533
    %s535 = sphi 0, %s533
    %s536 = sphi 0, %s535
    %s550 = sphi 0, %s536
    %s554 = sphi 0, %s554
    %s556 = sphi 0, %s554
    %s557 = sphi 0, %s556
    %s571 = sphi 0, %s557
    %s575 = sphi 0, %s575
    %s577 = sphi 0, %s575
    %s578 = sphi 0, %s577
    %s592 = sphi 0, %s578
    %s596 = sphi 0, %s596
    %s598 = sphi 0, %s596
    %s599 = sphi 0, %s598
    %s613 = sphi 0, %s599
    %s617 = sphi 0, %s617
    %s619 = sphi 0, %s617
    %s620 = sphi 0, %s619
    %s634 = sphi 0, %s620
    %s638 = sphi 0, %s638
    %s640 = sphi 0, %s638
    %s641 = sphi 0, %s640
    %s655 = sphi 0, %s641
    %s659 = sphi 0, %s659
    %s661 = sphi 0, %s659
    %s662 = sphi 0, %s661
    %s676 = sphi 0, %s662
    %s680 = sphi 0, %s680
    %s682 = sphi 0, %s680
    %s683 = sphi 0, %s682
    %s697 = sphi 0, %s683
    %s701 = sphi 0, %s701
    %s703 = sphi 0, %s701
    %s704 = sphi 0, %s703
    %s718 = sphi 0, %s704
    %s722 = sphi 0, %s722
    %s724 = sphi 0, %s722
    %s725 = sphi 0, %s724
    %s739 = sphi 0, %s725
    %s743 = sphi 0, %s743
    %s745 = sphi 0, %s743
    %s746 = sphi 0, %s745
    %s760 = sphi 0, %s746
    %s764 = sphi 0, %s764
    %s766 = sphi 0, %s764
    %s767 = sphi 0, %s766
    %s781 = sphi 0, %s767
    %s785 = sphi 0, %s785
    %s787 = sphi 0, %s785
    %s788 = sphi 0, %s787
    %s802 = sphi 0, %s788
    %s806 = sphi 0, %s806
    %s808 = sphi 0, %s806
    %s809 = sphi 0, %s808
    %s823 = sphi 0, %s809
    %s827 = sphi 0, %s827
    %s829 = sphi 0, %s827
    %s830 = sphi 0, %s829
    %s844 = sphi 0, %s830
    %s848 = sphi 0, %s848
    %s850 = sphi 0, %s848
    %s851 = sphi 0, %s850
    %s865 = sphi 0, %s851
    %s869 = sphi 0, %s869
    %s871 = sphi 0, %s869
    %s872 = sphi 0, %s871
    %s886 = sphi 0, %s872
    %s890 = sphi 0, %s890
    %s892 = sphi 0, %s890
    %s893 = sphi 0, %s892
    %s907 = sphi 0, %s893
    %s911 = sphi 0, %s911
    %s913 = sphi 0, %s911
    %s914 = sphi 0, %s913
    %s928 = sphi 0, %s914
    %s932 = sphi 0, %s932
    %s934 = sphi 0, %s932
    %s935 = sphi 0, %s934
    %s949 = sphi 0, %s935
    %s953 = sphi 0, %s953
    %s955 = sphi 0, %s953
    %s956 = sphi 0, %s955
    %s970 = sphi 0, %s956
    %s974 = sphi 0, %s974
    %s976 = sphi 0, %s974
    %s977 = sphi 0, %s976
    %s991 = sphi 0, %s977
    %s995 = sphi 0, %s995
    %s997 = sphi 0, %s995
    %s998 = sphi 0, %s997
    %s1012 = sphi 0, %s998
    %s1016 = sphi 0, %s1016
    %s1018 = sphi 0, %s1016
    %s1019 = sphi 0, %s1018
    %s1033 = sphi 0, %s1019
    %s1037 = sphi 0, %s1037
    %s1039 = sphi 0, %s1037
    %s1040 = sphi 0, %s1039
    %s1054 = sphi 0, %s1040
    %s1058 = sphi 0, %s1058
    %s1060 = sphi 0, %s1058
    %s1061 = sphi 0, %s1060
    %s1075 = sphi 0, %s1061
    %s1079 = sphi 0, %s1079
    %s1081 = sphi 0, %s1079
    %s1082 = sphi 0, %s1081
    %s1096 = sphi 0, %s1082
    %s1100 = sphi 0, %s1100
    %s1102 = sphi 0, %s1100
    %s1103 = sphi 0, %s1102
    %s1117 = sphi 0, %s1103
    %s1121 = sphi 0, %s1121
    %s1123 = sphi 0, %s1121
    %s1124 = sphi 0, %s1123
    %s1138 = sphi 0, %s1124
    %s1142 = sphi 0, %s1142
    %s1144 = sphi 0, %s1142
    %s1145 = sphi 0, %s1144
    %s1159 = sphi 0, %s1145
    %s1163 = sphi 0, %s1163
    %s1165 = sphi 0, %s1163
    %s1166 = sphi 0, %s1165
    %s1180 = sphi 0, %s1166
    %s1184 = sphi 0, %s1184
    %s1186 = sphi 0, %s1184
    %s1187 = sphi 0, %s1186
    %s1201 = sphi 0, %s1187
    %s1205 = sphi 0, %s1205
    %s1207 = sphi 0, %s1205
    %s1208 = sphi 0, %s1207
    %s1222 = sphi 0, %s1208
    %s1228 = sphi 0, %s1230
    %s1231 = sphi 0, %s1228
    %s1232 = sphi 0, %s1231
    %s1248 = sphi 0, %s1232
  $region4: #{tfspos_forward.1} parent=0 // loop_header_branch
    %114 = sbr.rel (%p112) target = $region8
  $region5: #{tfspos_forward.1} parent=0 // loop_body
    %s116 = ssub.s32 %s111, 1
    %s117 = ssub.s32 %s111, 2
    %s118 = sadd.s32 %s111, 1
    %s119 = ssub.s32 %s111, %s118
    %p120 = scmp.eq.s32.totalorder %s119, 0
    %s122 = sadd.s32 %s121, 1
    %s123 = scalar_select %p120, %s121, %s122
    %p126 = pneg %p120
    %p127 = scmp.eq.s32.totalorder %s111, 1
    %p128 = por %p126, %p127
    %p129 = scmp.ne.s32.totalorder %s121, %s124
    %p130 = scmp.eq.s32.totalorder %s111, 0
    %p131 = por %p129, %p130
    %p132 = scmp.ne.s32.totalorder %s121, %s124
    %p133 = scmp.eq.s32.totalorder %s116, 1
    %p134 = por %p132, %p133
    %p135 = scmp.ne.s32.totalorder %s124, %s125
    %p136 = scmp.eq.s32.totalorder %s116, 0
    %p137 = por %p135, %p136
    %p138 = scmp.ne.s32.totalorder %s124, %s125
    %p139 = scmp.eq.s32.totalorder %s117, 1
    %p140 = por %p138, %p139
    %p142 = scmp.ne.s32.totalorder %s125, %s141
    %p143 = scmp.eq.s32.totalorder %s117, 0
    %p144 = por %p142, %p143
    %s145 = ssub.s32 %s111, %s118
    %p146 = scmp.eq.s32.totalorder %s145, 0
    %s148 = sadd.s32 %s147, 1
    %s149 = scalar_select %p146, %s147, %s148
    %p152 = pneg %p146
    %p153 = scmp.eq.s32.totalorder %s111, 1
    %p154 = por %p152, %p153
    %p155 = scmp.ne.s32.totalorder %s147, %s150
    %p156 = scmp.eq.s32.totalorder %s111, 0
    %p157 = por %p155, %p156
    %p158 = scmp.ne.s32.totalorder %s147, %s150
    %p159 = scmp.eq.s32.totalorder %s116, 1
    %p160 = por %p158, %p159
    %p161 = scmp.ne.s32.totalorder %s150, %s151
    %p162 = scmp.eq.s32.totalorder %s116, 0
    %p163 = por %p161, %p162
    %p164 = scmp.ne.s32.totalorder %s150, %s151
    %p165 = scmp.eq.s32.totalorder %s117, 1
    %p166 = por %p164, %p165
    %p168 = scmp.ne.s32.totalorder %s151, %s167
    %p169 = scmp.eq.s32.totalorder %s117, 0
    %p170 = por %p168, %p169
    %s171 = ssub.s32 %s111, %s118
    %p172 = scmp.eq.s32.totalorder %s171, 0
    %s174 = sadd.s32 %s173, 1
    %s175 = scalar_select %p172, %s173, %s174
    %p178 = pneg %p172
    %p179 = scmp.eq.s32.totalorder %s111, 1
    %p180 = por %p178, %p179
    %p181 = scmp.ne.s32.totalorder %s173, %s176
    %p182 = scmp.eq.s32.totalorder %s111, 0
    %p183 = por %p181, %p182
    %p184 = scmp.ne.s32.totalorder %s173, %s176
    %p185 = scmp.eq.s32.totalorder %s116, 1
    %p186 = por %p184, %p185
    %p187 = scmp.ne.s32.totalorder %s176, %s177
    %p188 = scmp.eq.s32.totalorder %s116, 0
    %p189 = por %p187, %p188
    %p190 = scmp.ne.s32.totalorder %s176, %s177
    %p191 = scmp.eq.s32.totalorder %s117, 1
    %p192 = por %p190, %p191
    %p194 = scmp.ne.s32.totalorder %s177, %s193
    %p195 = scmp.eq.s32.totalorder %s117, 0
    %p196 = por %p194, %p195
    %s198 = sadd.s32 %s197, 1
    %p201 = scmp.eq.s32.totalorder %s111, 1
    %p202 = scmp.ne.s32.totalorder %s197, %s199
    %p203 = scmp.eq.s32.totalorder %s111, 0
    %p204 = por %p202, %p203
    %p205 = scmp.ne.s32.totalorder %s197, %s199
    %p206 = scmp.eq.s32.totalorder %s116, 1
    %p207 = por %p205, %p206
    %p208 = scmp.ne.s32.totalorder %s199, %s200
    %p209 = scmp.eq.s32.totalorder %s116, 0
    %p210 = por %p208, %p209
    %p211 = scmp.ne.s32.totalorder %s199, %s200
    %p212 = scmp.eq.s32.totalorder %s117, 1
    %p213 = por %p211, %p212
    %p215 = scmp.ne.s32.totalorder %s200, %s214
    %p216 = scmp.eq.s32.totalorder %s117, 0
    %p217 = por %p215, %p216
    %s219 = sadd.s32 %s218, 1
    %p222 = scmp.eq.s32.totalorder %s111, 1
    %p223 = scmp.ne.s32.totalorder %s218, %s220
    %p224 = scmp.eq.s32.totalorder %s111, 0
    %p225 = por %p223, %p224
    %p226 = scmp.ne.s32.totalorder %s218, %s220
    %p227 = scmp.eq.s32.totalorder %s116, 1
    %p228 = por %p226, %p227
    %p229 = scmp.ne.s32.totalorder %s220, %s221
    %p230 = scmp.eq.s32.totalorder %s116, 0
    %p231 = por %p229, %p230
    %p232 = scmp.ne.s32.totalorder %s220, %s221
    %p233 = scmp.eq.s32.totalorder %s117, 1
    %p234 = por %p232, %p233
    %p236 = scmp.ne.s32.totalorder %s221, %s235
    %p237 = scmp.eq.s32.totalorder %s117, 0
    %p238 = por %p236, %p237
    %s240 = sadd.s32 %s239, 1
    %p243 = scmp.eq.s32.totalorder %s111, 1
    %p244 = scmp.ne.s32.totalorder %s239, %s241
    %p245 = scmp.eq.s32.totalorder %s111, 0
    %p246 = por %p244, %p245
    %p247 = scmp.ne.s32.totalorder %s239, %s241
    %p248 = scmp.eq.s32.totalorder %s116, 1
    %p249 = por %p247, %p248
    %p250 = scmp.ne.s32.totalorder %s241, %s242
    %p251 = scmp.eq.s32.totalorder %s116, 0
    %p252 = por %p250, %p251
    %p253 = scmp.ne.s32.totalorder %s241, %s242
    %p254 = scmp.eq.s32.totalorder %s117, 1
    %p255 = por %p253, %p254
    %p257 = scmp.ne.s32.totalorder %s242, %s256
    %p258 = scmp.eq.s32.totalorder %s117, 0
    %p259 = por %p257, %p258
    %s261 = sadd.s32 %s260, 1
    %p264 = scmp.eq.s32.totalorder %s111, 1
    %p265 = scmp.ne.s32.totalorder %s260, %s262
    %p266 = scmp.eq.s32.totalorder %s111, 0
    %p267 = por %p265, %p266
    %p268 = scmp.ne.s32.totalorder %s260, %s262
    %p269 = scmp.eq.s32.totalorder %s116, 1
    %p270 = por %p268, %p269
    %p271 = scmp.ne.s32.totalorder %s262, %s263
    %p272 = scmp.eq.s32.totalorder %s116, 0
    %p273 = por %p271, %p272
    %p274 = scmp.ne.s32.totalorder %s262, %s263
    %p275 = scmp.eq.s32.totalorder %s117, 1
    %p276 = por %p274, %p275
    %p278 = scmp.ne.s32.totalorder %s263, %s277
    %p279 = scmp.eq.s32.totalorder %s117, 0
    %p280 = por %p278, %p279
    %s282 = sadd.s32 %s281, 1
    %p285 = scmp.eq.s32.totalorder %s111, 1
    %p286 = scmp.ne.s32.totalorder %s281, %s283
    %p287 = scmp.eq.s32.totalorder %s111, 0
    %p288 = por %p286, %p287
    %p289 = scmp.ne.s32.totalorder %s281, %s283
    %p290 = scmp.eq.s32.totalorder %s116, 1
    %p291 = por %p289, %p290
    %p292 = scmp.ne.s32.totalorder %s283, %s284
    %p293 = scmp.eq.s32.totalorder %s116, 0
    %p294 = por %p292, %p293
    %p295 = scmp.ne.s32.totalorder %s283, %s284
    %p296 = scmp.eq.s32.totalorder %s117, 1
    %p297 = por %p295, %p296
    %p299 = scmp.ne.s32.totalorder %s284, %s298
    %p300 = scmp.eq.s32.totalorder %s117, 0
    %p301 = por %p299, %p300
    %s303 = sadd.s32 %s302, 1
    %p306 = scmp.eq.s32.totalorder %s111, 1
    %p307 = scmp.ne.s32.totalorder %s302, %s304
    %p308 = scmp.eq.s32.totalorder %s111, 0
    %p309 = por %p307, %p308
    %p310 = scmp.ne.s32.totalorder %s302, %s304
    %p311 = scmp.eq.s32.totalorder %s116, 1
    %p312 = por %p310, %p311
    %p313 = scmp.ne.s32.totalorder %s304, %s305
    %p314 = scmp.eq.s32.totalorder %s116, 0
    %p315 = por %p313, %p314
    %p316 = scmp.ne.s32.totalorder %s304, %s305
    %p317 = scmp.eq.s32.totalorder %s117, 1
    %p318 = por %p316, %p317
    %p320 = scmp.ne.s32.totalorder %s305, %s319
    %p321 = scmp.eq.s32.totalorder %s117, 0
    %p322 = por %p320, %p321
    %s324 = sadd.s32 %s323, 1
    %p327 = scmp.eq.s32.totalorder %s111, 1
    %p328 = scmp.ne.s32.totalorder %s323, %s325
    %p329 = scmp.eq.s32.totalorder %s111, 0
    %p330 = por %p328, %p329
    %p331 = scmp.ne.s32.totalorder %s323, %s325
    %p332 = scmp.eq.s32.totalorder %s116, 1
    %p333 = por %p331, %p332
    %p334 = scmp.ne.s32.totalorder %s325, %s326
    %p335 = scmp.eq.s32.totalorder %s116, 0
    %p336 = por %p334, %p335
    %p337 = scmp.ne.s32.totalorder %s325, %s326
    %p338 = scmp.eq.s32.totalorder %s117, 1
    %p339 = por %p337, %p338
    %p341 = scmp.ne.s32.totalorder %s326, %s340
    %p342 = scmp.eq.s32.totalorder %s117, 0
    %p343 = por %p341, %p342
    %s345 = sadd.s32 %s344, 1
    %p348 = scmp.eq.s32.totalorder %s111, 1
    %p349 = scmp.ne.s32.totalorder %s344, %s346
    %p350 = scmp.eq.s32.totalorder %s111, 0
    %p351 = por %p349, %p350
    %p352 = scmp.ne.s32.totalorder %s344, %s346
    %p353 = scmp.eq.s32.totalorder %s116, 1
    %p354 = por %p352, %p353
    %p355 = scmp.ne.s32.totalorder %s346, %s347
    %p356 = scmp.eq.s32.totalorder %s116, 0
    %p357 = por %p355, %p356
    %p358 = scmp.ne.s32.totalorder %s346, %s347
    %p359 = scmp.eq.s32.totalorder %s117, 1
    %p360 = por %p358, %p359
    %p362 = scmp.ne.s32.totalorder %s347, %s361
    %p363 = scmp.eq.s32.totalorder %s117, 0
    %p364 = por %p362, %p363
    %s366 = sadd.s32 %s365, 1
    %p369 = scmp.eq.s32.totalorder %s111, 1
    %p370 = scmp.ne.s32.totalorder %s365, %s367
    %p371 = scmp.eq.s32.totalorder %s111, 0
    %p372 = por %p370, %p371
    %p373 = scmp.ne.s32.totalorder %s365, %s367
    %p374 = scmp.eq.s32.totalorder %s116, 1
    %p375 = por %p373, %p374
    %p376 = scmp.ne.s32.totalorder %s367, %s368
    %p377 = scmp.eq.s32.totalorder %s116, 0
    %p378 = por %p376, %p377
    %p379 = scmp.ne.s32.totalorder %s367, %s368
    %p380 = scmp.eq.s32.totalorder %s117, 1
    %p381 = por %p379, %p380
    %p383 = scmp.ne.s32.totalorder %s368, %s382
    %p384 = scmp.eq.s32.totalorder %s117, 0
    %p385 = por %p383, %p384
    %s387 = sadd.s32 %s386, 1
    %p390 = scmp.eq.s32.totalorder %s111, 1
    %p391 = scmp.ne.s32.totalorder %s386, %s388
    %p392 = scmp.eq.s32.totalorder %s111, 0
    %p393 = por %p391, %p392
    %p394 = scmp.ne.s32.totalorder %s386, %s388
    %p395 = scmp.eq.s32.totalorder %s116, 1
    %p396 = por %p394, %p395
    %p397 = scmp.ne.s32.totalorder %s388, %s389
    %p398 = scmp.eq.s32.totalorder %s116, 0
    %p399 = por %p397, %p398
    %p400 = scmp.ne.s32.totalorder %s388, %s389
    %p401 = scmp.eq.s32.totalorder %s117, 1
    %p402 = por %p400, %p401
    %p404 = scmp.ne.s32.totalorder %s389, %s403
    %p405 = scmp.eq.s32.totalorder %s117, 0
    %p406 = por %p404, %p405
    %s408 = sadd.s32 %s407, 1
    %p411 = scmp.eq.s32.totalorder %s111, 1
    %p412 = scmp.ne.s32.totalorder %s407, %s409
    %p413 = scmp.eq.s32.totalorder %s111, 0
    %p414 = por %p412, %p413
    %p415 = scmp.ne.s32.totalorder %s407, %s409
    %p416 = scmp.eq.s32.totalorder %s116, 1
    %p417 = por %p415, %p416
    %p418 = scmp.ne.s32.totalorder %s409, %s410
    %p419 = scmp.eq.s32.totalorder %s116, 0
    %p420 = por %p418, %p419
    %p421 = scmp.ne.s32.totalorder %s409, %s410
    %p422 = scmp.eq.s32.totalorder %s117, 1
    %p423 = por %p421, %p422
    %p425 = scmp.ne.s32.totalorder %s410, %s424
    %p426 = scmp.eq.s32.totalorder %s117, 0
    %p427 = por %p425, %p426
    %s429 = sadd.s32 %s428, 1
    %p432 = scmp.eq.s32.totalorder %s111, 1
    %p433 = scmp.ne.s32.totalorder %s428, %s430
    %p434 = scmp.eq.s32.totalorder %s111, 0
    %p435 = por %p433, %p434
    %p436 = scmp.ne.s32.totalorder %s428, %s430
    %p437 = scmp.eq.s32.totalorder %s116, 1
    %p438 = por %p436, %p437
    %p439 = scmp.ne.s32.totalorder %s430, %s431
    %p440 = scmp.eq.s32.totalorder %s116, 0
    %p441 = por %p439, %p440
    %p442 = scmp.ne.s32.totalorder %s430, %s431
    %p443 = scmp.eq.s32.totalorder %s117, 1
    %p444 = por %p442, %p443
    %p446 = scmp.ne.s32.totalorder %s431, %s445
    %p447 = scmp.eq.s32.totalorder %s117, 0
    %p448 = por %p446, %p447
    %s450 = sadd.s32 %s449, 1
    %p453 = scmp.eq.s32.totalorder %s111, 1
    %p454 = scmp.ne.s32.totalorder %s449, %s451
    %p455 = scmp.eq.s32.totalorder %s111, 0
    %p456 = por %p454, %p455
    %p457 = scmp.ne.s32.totalorder %s449, %s451
    %p458 = scmp.eq.s32.totalorder %s116, 1
    %p459 = por %p457, %p458
    %p460 = scmp.ne.s32.totalorder %s451, %s452
    %p461 = scmp.eq.s32.totalorder %s116, 0
    %p462 = por %p460, %p461
    %p463 = scmp.ne.s32.totalorder %s451, %s452
    %p464 = scmp.eq.s32.totalorder %s117, 1
    %p465 = por %p463, %p464
    %p467 = scmp.ne.s32.totalorder %s452, %s466
    %p468 = scmp.eq.s32.totalorder %s117, 0
    %p469 = por %p467, %p468
    %s471 = sadd.s32 %s470, 1
    %p474 = scmp.eq.s32.totalorder %s111, 1
    %p475 = scmp.ne.s32.totalorder %s470, %s472
    %p476 = scmp.eq.s32.totalorder %s111, 0
    %p477 = por %p475, %p476
    %p478 = scmp.ne.s32.totalorder %s470, %s472
    %p479 = scmp.eq.s32.totalorder %s116, 1
    %p480 = por %p478, %p479
    %p481 = scmp.ne.s32.totalorder %s472, %s473
    %p482 = scmp.eq.s32.totalorder %s116, 0
    %p483 = por %p481, %p482
    %p484 = scmp.ne.s32.totalorder %s472, %s473
    %p485 = scmp.eq.s32.totalorder %s117, 1
    %p486 = por %p484, %p485
    %p488 = scmp.ne.s32.totalorder %s473, %s487
    %p489 = scmp.eq.s32.totalorder %s117, 0
    %p490 = por %p488, %p489
    %s492 = sadd.s32 %s491, 1
    %p495 = scmp.eq.s32.totalorder %s111, 1
    %p496 = scmp.ne.s32.totalorder %s491, %s493
    %p497 = scmp.eq.s32.totalorder %s111, 0
    %p498 = por %p496, %p497
    %p499 = scmp.ne.s32.totalorder %s491, %s493
    %p500 = scmp.eq.s32.totalorder %s116, 1
    %p501 = por %p499, %p500
    %p502 = scmp.ne.s32.totalorder %s493, %s494
    %p503 = scmp.eq.s32.totalorder %s116, 0
    %p504 = por %p502, %p503
    %p505 = scmp.ne.s32.totalorder %s493, %s494
    %p506 = scmp.eq.s32.totalorder %s117, 1
    %p507 = por %p505, %p506
    %p509 = scmp.ne.s32.totalorder %s494, %s508
    %p510 = scmp.eq.s32.totalorder %s117, 0
    %p511 = por %p509, %p510
    %s513 = sadd.s32 %s512, 1
    %p516 = scmp.eq.s32.totalorder %s111, 1
    %p517 = scmp.ne.s32.totalorder %s512, %s514
    %p518 = scmp.eq.s32.totalorder %s111, 0
    %p519 = por %p517, %p518
    %p520 = scmp.ne.s32.totalorder %s512, %s514
    %p521 = scmp.eq.s32.totalorder %s116, 1
    %p522 = por %p520, %p521
    %p523 = scmp.ne.s32.totalorder %s514, %s515
    %p524 = scmp.eq.s32.totalorder %s116, 0
    %p525 = por %p523, %p524
    %p526 = scmp.ne.s32.totalorder %s514, %s515
    %p527 = scmp.eq.s32.totalorder %s117, 1
    %p528 = por %p526, %p527
    %p530 = scmp.ne.s32.totalorder %s515, %s529
    %p531 = scmp.eq.s32.totalorder %s117, 0
    %p532 = por %p530, %p531
    %s534 = sadd.s32 %s533, 1
    %p537 = scmp.eq.s32.totalorder %s111, 1
    %p538 = scmp.ne.s32.totalorder %s533, %s535
    %p539 = scmp.eq.s32.totalorder %s111, 0
    %p540 = por %p538, %p539
    %p541 = scmp.ne.s32.totalorder %s533, %s535
    %p542 = scmp.eq.s32.totalorder %s116, 1
    %p543 = por %p541, %p542
    %p544 = scmp.ne.s32.totalorder %s535, %s536
    %p545 = scmp.eq.s32.totalorder %s116, 0
    %p546 = por %p544, %p545
    %p547 = scmp.ne.s32.totalorder %s535, %s536
    %p548 = scmp.eq.s32.totalorder %s117, 1
    %p549 = por %p547, %p548
    %p551 = scmp.ne.s32.totalorder %s536, %s550
    %p552 = scmp.eq.s32.totalorder %s117, 0
    %p553 = por %p551, %p552
    %s555 = sadd.s32 %s554, 1
    %p558 = scmp.eq.s32.totalorder %s111, 1
    %p559 = scmp.ne.s32.totalorder %s554, %s556
    %p560 = scmp.eq.s32.totalorder %s111, 0
    %p561 = por %p559, %p560
    %p562 = scmp.ne.s32.totalorder %s554, %s556
    %p563 = scmp.eq.s32.totalorder %s116, 1
    %p564 = por %p562, %p563
    %p565 = scmp.ne.s32.totalorder %s556, %s557
    %p566 = scmp.eq.s32.totalorder %s116, 0
    %p567 = por %p565, %p566
    %p568 = scmp.ne.s32.totalorder %s556, %s557
    %p569 = scmp.eq.s32.totalorder %s117, 1
    %p570 = por %p568, %p569
    %p572 = scmp.ne.s32.totalorder %s557, %s571
    %p573 = scmp.eq.s32.totalorder %s117, 0
    %p574 = por %p572, %p573
    %s576 = sadd.s32 %s575, 1
    %p579 = scmp.eq.s32.totalorder %s111, 1
    %p580 = scmp.ne.s32.totalorder %s575, %s577
    %p581 = scmp.eq.s32.totalorder %s111, 0
    %p582 = por %p580, %p581
    %p583 = scmp.ne.s32.totalorder %s575, %s577
    %p584 = scmp.eq.s32.totalorder %s116, 1
    %p585 = por %p583, %p584
    %p586 = scmp.ne.s32.totalorder %s577, %s578
    %p587 = scmp.eq.s32.totalorder %s116, 0
    %p588 = por %p586, %p587
    %p589 = scmp.ne.s32.totalorder %s577, %s578
    %p590 = scmp.eq.s32.totalorder %s117, 1
    %p591 = por %p589, %p590
    %p593 = scmp.ne.s32.totalorder %s578, %s592
    %p594 = scmp.eq.s32.totalorder %s117, 0
    %p595 = por %p593, %p594
    %s597 = sadd.s32 %s596, 1
    %p600 = scmp.eq.s32.totalorder %s111, 1
    %p601 = scmp.ne.s32.totalorder %s596, %s598
    %p602 = scmp.eq.s32.totalorder %s111, 0
    %p603 = por %p601, %p602
    %p604 = scmp.ne.s32.totalorder %s596, %s598
    %p605 = scmp.eq.s32.totalorder %s116, 1
    %p606 = por %p604, %p605
    %p607 = scmp.ne.s32.totalorder %s598, %s599
    %p608 = scmp.eq.s32.totalorder %s116, 0
    %p609 = por %p607, %p608
    %p610 = scmp.ne.s32.totalorder %s598, %s599
    %p611 = scmp.eq.s32.totalorder %s117, 1
    %p612 = por %p610, %p611
    %p614 = scmp.ne.s32.totalorder %s599, %s613
    %p615 = scmp.eq.s32.totalorder %s117, 0
    %p616 = por %p614, %p615
    %s618 = sadd.s32 %s617, 1
    %p621 = scmp.eq.s32.totalorder %s111, 1
    %p622 = scmp.ne.s32.totalorder %s617, %s619
    %p623 = scmp.eq.s32.totalorder %s111, 0
    %p624 = por %p622, %p623
    %p625 = scmp.ne.s32.totalorder %s617, %s619
    %p626 = scmp.eq.s32.totalorder %s116, 1
    %p627 = por %p625, %p626
    %p628 = scmp.ne.s32.totalorder %s619, %s620
    %p629 = scmp.eq.s32.totalorder %s116, 0
    %p630 = por %p628, %p629
    %p631 = scmp.ne.s32.totalorder %s619, %s620
    %p632 = scmp.eq.s32.totalorder %s117, 1
    %p633 = por %p631, %p632
    %p635 = scmp.ne.s32.totalorder %s620, %s634
    %p636 = scmp.eq.s32.totalorder %s117, 0
    %p637 = por %p635, %p636
    %s639 = sadd.s32 %s638, 1
    %p642 = scmp.eq.s32.totalorder %s111, 1
    %p643 = scmp.ne.s32.totalorder %s638, %s640
    %p644 = scmp.eq.s32.totalorder %s111, 0
    %p645 = por %p643, %p644
    %p646 = scmp.ne.s32.totalorder %s638, %s640
    %p647 = scmp.eq.s32.totalorder %s116, 1
    %p648 = por %p646, %p647
    %p649 = scmp.ne.s32.totalorder %s640, %s641
    %p650 = scmp.eq.s32.totalorder %s116, 0
    %p651 = por %p649, %p650
    %p652 = scmp.ne.s32.totalorder %s640, %s641
    %p653 = scmp.eq.s32.totalorder %s117, 1
    %p654 = por %p652, %p653
    %p656 = scmp.ne.s32.totalorder %s641, %s655
    %p657 = scmp.eq.s32.totalorder %s117, 0
    %p658 = por %p656, %p657
    %s660 = sadd.s32 %s659, 1
    %p663 = scmp.eq.s32.totalorder %s111, 1
    %p664 = scmp.ne.s32.totalorder %s659, %s661
    %p665 = scmp.eq.s32.totalorder %s111, 0
    %p666 = por %p664, %p665
    %p667 = scmp.ne.s32.totalorder %s659, %s661
    %p668 = scmp.eq.s32.totalorder %s116, 1
    %p669 = por %p667, %p668
    %p670 = scmp.ne.s32.totalorder %s661, %s662
    %p671 = scmp.eq.s32.totalorder %s116, 0
    %p672 = por %p670, %p671
    %p673 = scmp.ne.s32.totalorder %s661, %s662
    %p674 = scmp.eq.s32.totalorder %s117, 1
    %p675 = por %p673, %p674
    %p677 = scmp.ne.s32.totalorder %s662, %s676
    %p678 = scmp.eq.s32.totalorder %s117, 0
    %p679 = por %p677, %p678
    %s681 = sadd.s32 %s680, 1
    %p684 = scmp.eq.s32.totalorder %s111, 1
    %p685 = scmp.ne.s32.totalorder %s680, %s682
    %p686 = scmp.eq.s32.totalorder %s111, 0
    %p687 = por %p685, %p686
    %p688 = scmp.ne.s32.totalorder %s680, %s682
    %p689 = scmp.eq.s32.totalorder %s116, 1
    %p690 = por %p688, %p689
    %p691 = scmp.ne.s32.totalorder %s682, %s683
    %p692 = scmp.eq.s32.totalorder %s116, 0
    %p693 = por %p691, %p692
    %p694 = scmp.ne.s32.totalorder %s682, %s683
    %p695 = scmp.eq.s32.totalorder %s117, 1
    %p696 = por %p694, %p695
    %p698 = scmp.ne.s32.totalorder %s683, %s697
    %p699 = scmp.eq.s32.totalorder %s117, 0
    %p700 = por %p698, %p699
    %s702 = sadd.s32 %s701, 1
    %p705 = scmp.eq.s32.totalorder %s111, 1
    %p706 = scmp.ne.s32.totalorder %s701, %s703
    %p707 = scmp.eq.s32.totalorder %s111, 0
    %p708 = por %p706, %p707
    %p709 = scmp.ne.s32.totalorder %s701, %s703
    %p710 = scmp.eq.s32.totalorder %s116, 1
    %p711 = por %p709, %p710
    %p712 = scmp.ne.s32.totalorder %s703, %s704
    %p713 = scmp.eq.s32.totalorder %s116, 0
    %p714 = por %p712, %p713
    %p715 = scmp.ne.s32.totalorder %s703, %s704
    %p716 = scmp.eq.s32.totalorder %s117, 1
    %p717 = por %p715, %p716
    %p719 = scmp.ne.s32.totalorder %s704, %s718
    %p720 = scmp.eq.s32.totalorder %s117, 0
    %p721 = por %p719, %p720
    %s723 = sadd.s32 %s722, 1
    %p726 = scmp.eq.s32.totalorder %s111, 1
    %p727 = scmp.ne.s32.totalorder %s722, %s724
    %p728 = scmp.eq.s32.totalorder %s111, 0
    %p729 = por %p727, %p728
    %p730 = scmp.ne.s32.totalorder %s722, %s724
    %p731 = scmp.eq.s32.totalorder %s116, 1
    %p732 = por %p730, %p731
    %p733 = scmp.ne.s32.totalorder %s724, %s725
    %p734 = scmp.eq.s32.totalorder %s116, 0
    %p735 = por %p733, %p734
    %p736 = scmp.ne.s32.totalorder %s724, %s725
    %p737 = scmp.eq.s32.totalorder %s117, 1
    %p738 = por %p736, %p737
    %p740 = scmp.ne.s32.totalorder %s725, %s739
    %p741 = scmp.eq.s32.totalorder %s117, 0
    %p742 = por %p740, %p741
    %s744 = sadd.s32 %s743, 1
    %p747 = scmp.eq.s32.totalorder %s111, 1
    %p748 = scmp.ne.s32.totalorder %s743, %s745
    %p749 = scmp.eq.s32.totalorder %s111, 0
    %p750 = por %p748, %p749
    %p751 = scmp.ne.s32.totalorder %s743, %s745
    %p752 = scmp.eq.s32.totalorder %s116, 1
    %p753 = por %p751, %p752
    %p754 = scmp.ne.s32.totalorder %s745, %s746
    %p755 = scmp.eq.s32.totalorder %s116, 0
    %p756 = por %p754, %p755
    %p757 = scmp.ne.s32.totalorder %s745, %s746
    %p758 = scmp.eq.s32.totalorder %s117, 1
    %p759 = por %p757, %p758
    %p761 = scmp.ne.s32.totalorder %s746, %s760
    %p762 = scmp.eq.s32.totalorder %s117, 0
    %p763 = por %p761, %p762
    %s765 = sadd.s32 %s764, 1
    %p768 = scmp.eq.s32.totalorder %s111, 1
    %p769 = scmp.ne.s32.totalorder %s764, %s766
    %p770 = scmp.eq.s32.totalorder %s111, 0
    %p771 = por %p769, %p770
    %p772 = scmp.ne.s32.totalorder %s764, %s766
    %p773 = scmp.eq.s32.totalorder %s116, 1
    %p774 = por %p772, %p773
    %p775 = scmp.ne.s32.totalorder %s766, %s767
    %p776 = scmp.eq.s32.totalorder %s116, 0
    %p777 = por %p775, %p776
    %p778 = scmp.ne.s32.totalorder %s766, %s767
    %p779 = scmp.eq.s32.totalorder %s117, 1
    %p780 = por %p778, %p779
    %p782 = scmp.ne.s32.totalorder %s767, %s781
    %p783 = scmp.eq.s32.totalorder %s117, 0
    %p784 = por %p782, %p783
    %s786 = sadd.s32 %s785, 1
    %p789 = scmp.eq.s32.totalorder %s111, 1
    %p790 = scmp.ne.s32.totalorder %s785, %s787
    %p791 = scmp.eq.s32.totalorder %s111, 0
    %p792 = por %p790, %p791
    %p793 = scmp.ne.s32.totalorder %s785, %s787
    %p794 = scmp.eq.s32.totalorder %s116, 1
    %p795 = por %p793, %p794
    %p796 = scmp.ne.s32.totalorder %s787, %s788
    %p797 = scmp.eq.s32.totalorder %s116, 0
    %p798 = por %p796, %p797
    %p799 = scmp.ne.s32.totalorder %s787, %s788
    %p800 = scmp.eq.s32.totalorder %s117, 1
    %p801 = por %p799, %p800
    %p803 = scmp.ne.s32.totalorder %s788, %s802
    %p804 = scmp.eq.s32.totalorder %s117, 0
    %p805 = por %p803, %p804
    %s807 = sadd.s32 %s806, 1
    %p810 = scmp.eq.s32.totalorder %s111, 1
    %p811 = scmp.ne.s32.totalorder %s806, %s808
    %p812 = scmp.eq.s32.totalorder %s111, 0
    %p813 = por %p811, %p812
    %p814 = scmp.ne.s32.totalorder %s806, %s808
    %p815 = scmp.eq.s32.totalorder %s116, 1
    %p816 = por %p814, %p815
    %p817 = scmp.ne.s32.totalorder %s808, %s809
    %p818 = scmp.eq.s32.totalorder %s116, 0
    %p819 = por %p817, %p818
    %p820 = scmp.ne.s32.totalorder %s808, %s809
    %p821 = scmp.eq.s32.totalorder %s117, 1
    %p822 = por %p820, %p821
    %p824 = scmp.ne.s32.totalorder %s809, %s823
    %p825 = scmp.eq.s32.totalorder %s117, 0
    %p826 = por %p824, %p825
    %s828 = sadd.s32 %s827, 1
    %p831 = scmp.eq.s32.totalorder %s111, 1
    %p832 = scmp.ne.s32.totalorder %s827, %s829
    %p833 = scmp.eq.s32.totalorder %s111, 0
    %p834 = por %p832, %p833
    %p835 = scmp.ne.s32.totalorder %s827, %s829
    %p836 = scmp.eq.s32.totalorder %s116, 1
    %p837 = por %p835, %p836
    %p838 = scmp.ne.s32.totalorder %s829, %s830
    %p839 = scmp.eq.s32.totalorder %s116, 0
    %p840 = por %p838, %p839
    %p841 = scmp.ne.s32.totalorder %s829, %s830
    %p842 = scmp.eq.s32.totalorder %s117, 1
    %p843 = por %p841, %p842
    %p845 = scmp.ne.s32.totalorder %s830, %s844
    %p846 = scmp.eq.s32.totalorder %s117, 0
    %p847 = por %p845, %p846
    %s849 = sadd.s32 %s848, 1
    %p852 = scmp.eq.s32.totalorder %s111, 1
    %p853 = scmp.ne.s32.totalorder %s848, %s850
    %p854 = scmp.eq.s32.totalorder %s111, 0
    %p855 = por %p853, %p854
    %p856 = scmp.ne.s32.totalorder %s848, %s850
    %p857 = scmp.eq.s32.totalorder %s116, 1
    %p858 = por %p856, %p857
    %p859 = scmp.ne.s32.totalorder %s850, %s851
    %p860 = scmp.eq.s32.totalorder %s116, 0
    %p861 = por %p859, %p860
    %p862 = scmp.ne.s32.totalorder %s850, %s851
    %p863 = scmp.eq.s32.totalorder %s117, 1
    %p864 = por %p862, %p863
    %p866 = scmp.ne.s32.totalorder %s851, %s865
    %p867 = scmp.eq.s32.totalorder %s117, 0
    %p868 = por %p866, %p867
    %s870 = sadd.s32 %s869, 1
    %p873 = scmp.eq.s32.totalorder %s111, 1
    %p874 = scmp.ne.s32.totalorder %s869, %s871
    %p875 = scmp.eq.s32.totalorder %s111, 0
    %p876 = por %p874, %p875
    %p877 = scmp.ne.s32.totalorder %s869, %s871
    %p878 = scmp.eq.s32.totalorder %s116, 1
    %p879 = por %p877, %p878
    %p880 = scmp.ne.s32.totalorder %s871, %s872
    %p881 = scmp.eq.s32.totalorder %s116, 0
    %p882 = por %p880, %p881
    %p883 = scmp.ne.s32.totalorder %s871, %s872
    %p884 = scmp.eq.s32.totalorder %s117, 1
    %p885 = por %p883, %p884
    %p887 = scmp.ne.s32.totalorder %s872, %s886
    %p888 = scmp.eq.s32.totalorder %s117, 0
    %p889 = por %p887, %p888
    %s891 = sadd.s32 %s890, 1
    %p894 = scmp.eq.s32.totalorder %s111, 1
    %p895 = scmp.ne.s32.totalorder %s890, %s892
    %p896 = scmp.eq.s32.totalorder %s111, 0
    %p897 = por %p895, %p896
    %p898 = scmp.ne.s32.totalorder %s890, %s892
    %p899 = scmp.eq.s32.totalorder %s116, 1
    %p900 = por %p898, %p899
    %p901 = scmp.ne.s32.totalorder %s892, %s893
    %p902 = scmp.eq.s32.totalorder %s116, 0
    %p903 = por %p901, %p902
    %p904 = scmp.ne.s32.totalorder %s892, %s893
    %p905 = scmp.eq.s32.totalorder %s117, 1
    %p906 = por %p904, %p905
    %p908 = scmp.ne.s32.totalorder %s893, %s907
    %p909 = scmp.eq.s32.totalorder %s117, 0
    %p910 = por %p908, %p909
    %s912 = sadd.s32 %s911, 1
    %p915 = scmp.eq.s32.totalorder %s111, 1
    %p916 = scmp.ne.s32.totalorder %s911, %s913
    %p917 = scmp.eq.s32.totalorder %s111, 0
    %p918 = por %p916, %p917
    %p919 = scmp.ne.s32.totalorder %s911, %s913
    %p920 = scmp.eq.s32.totalorder %s116, 1
    %p921 = por %p919, %p920
    %p922 = scmp.ne.s32.totalorder %s913, %s914
    %p923 = scmp.eq.s32.totalorder %s116, 0
    %p924 = por %p922, %p923
    %p925 = scmp.ne.s32.totalorder %s913, %s914
    %p926 = scmp.eq.s32.totalorder %s117, 1
    %p927 = por %p925, %p926
    %p929 = scmp.ne.s32.totalorder %s914, %s928
    %p930 = scmp.eq.s32.totalorder %s117, 0
    %p931 = por %p929, %p930
    %s933 = sadd.s32 %s932, 1
    %p936 = scmp.eq.s32.totalorder %s111, 1
    %p937 = scmp.ne.s32.totalorder %s932, %s934
    %p938 = scmp.eq.s32.totalorder %s111, 0
    %p939 = por %p937, %p938
    %p940 = scmp.ne.s32.totalorder %s932, %s934
    %p941 = scmp.eq.s32.totalorder %s116, 1
    %p942 = por %p940, %p941
    %p943 = scmp.ne.s32.totalorder %s934, %s935
    %p944 = scmp.eq.s32.totalorder %s116, 0
    %p945 = por %p943, %p944
    %p946 = scmp.ne.s32.totalorder %s934, %s935
    %p947 = scmp.eq.s32.totalorder %s117, 1
    %p948 = por %p946, %p947
    %p950 = scmp.ne.s32.totalorder %s935, %s949
    %p951 = scmp.eq.s32.totalorder %s117, 0
    %p952 = por %p950, %p951
    %s954 = sadd.s32 %s953, 1
    %p957 = scmp.eq.s32.totalorder %s111, 1
    %p958 = scmp.ne.s32.totalorder %s953, %s955
    %p959 = scmp.eq.s32.totalorder %s111, 0
    %p960 = por %p958, %p959
    %p961 = scmp.ne.s32.totalorder %s953, %s955
    %p962 = scmp.eq.s32.totalorder %s116, 1
    %p963 = por %p961, %p962
    %p964 = scmp.ne.s32.totalorder %s955, %s956
    %p965 = scmp.eq.s32.totalorder %s116, 0
    %p966 = por %p964, %p965
    %p967 = scmp.ne.s32.totalorder %s955, %s956
    %p968 = scmp.eq.s32.totalorder %s117, 1
    %p969 = por %p967, %p968
    %p971 = scmp.ne.s32.totalorder %s956, %s970
    %p972 = scmp.eq.s32.totalorder %s117, 0
    %p973 = por %p971, %p972
    %s975 = sadd.s32 %s974, 1
    %p978 = scmp.eq.s32.totalorder %s111, 1
    %p979 = scmp.ne.s32.totalorder %s974, %s976
    %p980 = scmp.eq.s32.totalorder %s111, 0
    %p981 = por %p979, %p980
    %p982 = scmp.ne.s32.totalorder %s974, %s976
    %p983 = scmp.eq.s32.totalorder %s116, 1
    %p984 = por %p982, %p983
    %p985 = scmp.ne.s32.totalorder %s976, %s977
    %p986 = scmp.eq.s32.totalorder %s116, 0
    %p987 = por %p985, %p986
    %p988 = scmp.ne.s32.totalorder %s976, %s977
    %p989 = scmp.eq.s32.totalorder %s117, 1
    %p990 = por %p988, %p989
    %p992 = scmp.ne.s32.totalorder %s977, %s991
    %p993 = scmp.eq.s32.totalorder %s117, 0
    %p994 = por %p992, %p993
    %s996 = sadd.s32 %s995, 1
    %p999 = scmp.eq.s32.totalorder %s111, 1
    %p1000 = scmp.ne.s32.totalorder %s995, %s997
    %p1001 = scmp.eq.s32.totalorder %s111, 0
    %p1002 = por %p1000, %p1001
    %p1003 = scmp.ne.s32.totalorder %s995, %s997
    %p1004 = scmp.eq.s32.totalorder %s116, 1
    %p1005 = por %p1003, %p1004
    %p1006 = scmp.ne.s32.totalorder %s997, %s998
    %p1007 = scmp.eq.s32.totalorder %s116, 0
    %p1008 = por %p1006, %p1007
    %p1009 = scmp.ne.s32.totalorder %s997, %s998
    %p1010 = scmp.eq.s32.totalorder %s117, 1
    %p1011 = por %p1009, %p1010
    %p1013 = scmp.ne.s32.totalorder %s998, %s1012
    %p1014 = scmp.eq.s32.totalorder %s117, 0
    %p1015 = por %p1013, %p1014
    %s1017 = sadd.s32 %s1016, 1
    %p1020 = scmp.eq.s32.totalorder %s111, 1
    %p1021 = scmp.ne.s32.totalorder %s1016, %s1018
    %p1022 = scmp.eq.s32.totalorder %s111, 0
    %p1023 = por %p1021, %p1022
    %p1024 = scmp.ne.s32.totalorder %s1016, %s1018
    %p1025 = scmp.eq.s32.totalorder %s116, 1
    %p1026 = por %p1024, %p1025
    %p1027 = scmp.ne.s32.totalorder %s1018, %s1019
    %p1028 = scmp.eq.s32.totalorder %s116, 0
    %p1029 = por %p1027, %p1028
    %p1030 = scmp.ne.s32.totalorder %s1018, %s1019
    %p1031 = scmp.eq.s32.totalorder %s117, 1
    %p1032 = por %p1030, %p1031
    %p1034 = scmp.ne.s32.totalorder %s1019, %s1033
    %p1035 = scmp.eq.s32.totalorder %s117, 0
    %p1036 = por %p1034, %p1035
    %s1038 = sadd.s32 %s1037, 1
    %p1041 = scmp.eq.s32.totalorder %s111, 1
    %p1042 = scmp.ne.s32.totalorder %s1037, %s1039
    %p1043 = scmp.eq.s32.totalorder %s111, 0
    %p1044 = por %p1042, %p1043
    %p1045 = scmp.ne.s32.totalorder %s1037, %s1039
    %p1046 = scmp.eq.s32.totalorder %s116, 1
    %p1047 = por %p1045, %p1046
    %p1048 = scmp.ne.s32.totalorder %s1039, %s1040
    %p1049 = scmp.eq.s32.totalorder %s116, 0
    %p1050 = por %p1048, %p1049
    %p1051 = scmp.ne.s32.totalorder %s1039, %s1040
    %p1052 = scmp.eq.s32.totalorder %s117, 1
    %p1053 = por %p1051, %p1052
    %p1055 = scmp.ne.s32.totalorder %s1040, %s1054
    %p1056 = scmp.eq.s32.totalorder %s117, 0
    %p1057 = por %p1055, %p1056
    %s1059 = sadd.s32 %s1058, 1
    %p1062 = scmp.eq.s32.totalorder %s111, 1
    %p1063 = scmp.ne.s32.totalorder %s1058, %s1060
    %p1064 = scmp.eq.s32.totalorder %s111, 0
    %p1065 = por %p1063, %p1064
    %p1066 = scmp.ne.s32.totalorder %s1058, %s1060
    %p1067 = scmp.eq.s32.totalorder %s116, 1
    %p1068 = por %p1066, %p1067
    %p1069 = scmp.ne.s32.totalorder %s1060, %s1061
    %p1070 = scmp.eq.s32.totalorder %s116, 0
    %p1071 = por %p1069, %p1070
    %p1072 = scmp.ne.s32.totalorder %s1060, %s1061
    %p1073 = scmp.eq.s32.totalorder %s117, 1
    %p1074 = por %p1072, %p1073
    %p1076 = scmp.ne.s32.totalorder %s1061, %s1075
    %p1077 = scmp.eq.s32.totalorder %s117, 0
    %p1078 = por %p1076, %p1077
    %s1080 = sadd.s32 %s1079, 1
    %p1083 = scmp.eq.s32.totalorder %s111, 1
    %p1084 = scmp.ne.s32.totalorder %s1079, %s1081
    %p1085 = scmp.eq.s32.totalorder %s111, 0
    %p1086 = por %p1084, %p1085
    %p1087 = scmp.ne.s32.totalorder %s1079, %s1081
    %p1088 = scmp.eq.s32.totalorder %s116, 1
    %p1089 = por %p1087, %p1088
    %p1090 = scmp.ne.s32.totalorder %s1081, %s1082
    %p1091 = scmp.eq.s32.totalorder %s116, 0
    %p1092 = por %p1090, %p1091
    %p1093 = scmp.ne.s32.totalorder %s1081, %s1082
    %p1094 = scmp.eq.s32.totalorder %s117, 1
    %p1095 = por %p1093, %p1094
    %p1097 = scmp.ne.s32.totalorder %s1082, %s1096
    %p1098 = scmp.eq.s32.totalorder %s117, 0
    %p1099 = por %p1097, %p1098
    %s1101 = sadd.s32 %s1100, 1
    %p1104 = scmp.eq.s32.totalorder %s111, 1
    %p1105 = scmp.ne.s32.totalorder %s1100, %s1102
    %p1106 = scmp.eq.s32.totalorder %s111, 0
    %p1107 = por %p1105, %p1106
    %p1108 = scmp.ne.s32.totalorder %s1100, %s1102
    %p1109 = scmp.eq.s32.totalorder %s116, 1
    %p1110 = por %p1108, %p1109
    %p1111 = scmp.ne.s32.totalorder %s1102, %s1103
    %p1112 = scmp.eq.s32.totalorder %s116, 0
    %p1113 = por %p1111, %p1112
    %p1114 = scmp.ne.s32.totalorder %s1102, %s1103
    %p1115 = scmp.eq.s32.totalorder %s117, 1
    %p1116 = por %p1114, %p1115
    %p1118 = scmp.ne.s32.totalorder %s1103, %s1117
    %p1119 = scmp.eq.s32.totalorder %s117, 0
    %p1120 = por %p1118, %p1119
    %s1122 = sadd.s32 %s1121, 1
    %p1125 = scmp.eq.s32.totalorder %s111, 1
    %p1126 = scmp.ne.s32.totalorder %s1121, %s1123
    %p1127 = scmp.eq.s32.totalorder %s111, 0
    %p1128 = por %p1126, %p1127
    %p1129 = scmp.ne.s32.totalorder %s1121, %s1123
    %p1130 = scmp.eq.s32.totalorder %s116, 1
    %p1131 = por %p1129, %p1130
    %p1132 = scmp.ne.s32.totalorder %s1123, %s1124
    %p1133 = scmp.eq.s32.totalorder %s116, 0
    %p1134 = por %p1132, %p1133
    %p1135 = scmp.ne.s32.totalorder %s1123, %s1124
    %p1136 = scmp.eq.s32.totalorder %s117, 1
    %p1137 = por %p1135, %p1136
    %p1139 = scmp.ne.s32.totalorder %s1124, %s1138
    %p1140 = scmp.eq.s32.totalorder %s117, 0
    %p1141 = por %p1139, %p1140
    %s1143 = sadd.s32 %s1142, 1
    %p1146 = scmp.eq.s32.totalorder %s111, 1
    %p1147 = scmp.ne.s32.totalorder %s1142, %s1144
    %p1148 = scmp.eq.s32.totalorder %s111, 0
    %p1149 = por %p1147, %p1148
    %p1150 = scmp.ne.s32.totalorder %s1142, %s1144
    %p1151 = scmp.eq.s32.totalorder %s116, 1
    %p1152 = por %p1150, %p1151
    %p1153 = scmp.ne.s32.totalorder %s1144, %s1145
    %p1154 = scmp.eq.s32.totalorder %s116, 0
    %p1155 = por %p1153, %p1154
    %p1156 = scmp.ne.s32.totalorder %s1144, %s1145
    %p1157 = scmp.eq.s32.totalorder %s117, 1
    %p1158 = por %p1156, %p1157
    %p1160 = scmp.ne.s32.totalorder %s1145, %s1159
    %p1161 = scmp.eq.s32.totalorder %s117, 0
    %p1162 = por %p1160, %p1161
    %s1164 = sadd.s32 %s1163, 1
    %p1167 = scmp.eq.s32.totalorder %s111, 1
    %p1168 = scmp.ne.s32.totalorder %s1163, %s1165
    %p1169 = scmp.eq.s32.totalorder %s111, 0
    %p1170 = por %p1168, %p1169
    %p1171 = scmp.ne.s32.totalorder %s1163, %s1165
    %p1172 = scmp.eq.s32.totalorder %s116, 1
    %p1173 = por %p1171, %p1172
    %p1174 = scmp.ne.s32.totalorder %s1165, %s1166
    %p1175 = scmp.eq.s32.totalorder %s116, 0
    %p1176 = por %p1174, %p1175
    %p1177 = scmp.ne.s32.totalorder %s1165, %s1166
    %p1178 = scmp.eq.s32.totalorder %s117, 1
    %p1179 = por %p1177, %p1178
    %p1181 = scmp.ne.s32.totalorder %s1166, %s1180
    %p1182 = scmp.eq.s32.totalorder %s117, 0
    %p1183 = por %p1181, %p1182
    %s1185 = sadd.s32 %s1184, 1
    %p1188 = scmp.eq.s32.totalorder %s111, 1
    %p1189 = scmp.ne.s32.totalorder %s1184, %s1186
    %p1190 = scmp.eq.s32.totalorder %s111, 0
    %p1191 = por %p1189, %p1190
    %p1192 = scmp.ne.s32.totalorder %s1184, %s1186
    %p1193 = scmp.eq.s32.totalorder %s116, 1
    %p1194 = por %p1192, %p1193
    %p1195 = scmp.ne.s32.totalorder %s1186, %s1187
    %p1196 = scmp.eq.s32.totalorder %s116, 0
    %p1197 = por %p1195, %p1196
    %p1198 = scmp.ne.s32.totalorder %s1186, %s1187
    %p1199 = scmp.eq.s32.totalorder %s117, 1
    %p1200 = por %p1198, %p1199
    %p1202 = scmp.ne.s32.totalorder %s1187, %s1201
    %p1203 = scmp.eq.s32.totalorder %s117, 0
    %p1204 = por %p1202, %p1203
    %s1206 = sadd.s32 %s1205, 1
    %p1209 = scmp.eq.s32.totalorder %s111, 1
    %p1210 = scmp.ne.s32.totalorder %s1205, %s1207
    %p1211 = scmp.eq.s32.totalorder %s111, 0
    %p1212 = por %p1210, %p1211
    %p1213 = scmp.ne.s32.totalorder %s1205, %s1207
    %p1214 = scmp.eq.s32.totalorder %s116, 1
    %p1215 = por %p1213, %p1214
    %p1216 = scmp.ne.s32.totalorder %s1207, %s1208
    %p1217 = scmp.eq.s32.totalorder %s116, 0
    %p1218 = por %p1216, %p1217
    %p1219 = scmp.ne.s32.totalorder %s1207, %s1208
    %p1220 = scmp.eq.s32.totalorder %s117, 1
    %p1221 = por %p1219, %p1220
    %p1223 = scmp.ne.s32.totalorder %s1208, %s1222
    %p1224 = scmp.eq.s32.totalorder %s117, 0
    %p1225 = por %p1223, %p1224
    %s1226 = ssub.s32 %s111, %s118
    %p1227 = scmp.eq.s32.totalorder %s1226, 0
    %s1229 = sadd.s32 %s1228, 1
    %s1230 = scalar_select %p1227, %s1228, %s1229
    %p1233 = pneg %p1227
    %p1234 = scmp.eq.s32.totalorder %s111, 1
    %p1235 = por %p1233, %p1234
    %p1236 = scmp.ne.s32.totalorder %s1228, %s1231
    %p1237 = scmp.eq.s32.totalorder %s111, 0
    %p1238 = por %p1236, %p1237
    %p1239 = scmp.ne.s32.totalorder %s1228, %s1231
    %p1240 = scmp.eq.s32.totalorder %s116, 1
    %p1241 = por %p1239, %p1240
    %p1242 = scmp.ne.s32.totalorder %s1231, %s1232
    %p1243 = scmp.eq.s32.totalorder %s116, 0
    %p1244 = por %p1242, %p1243
    %p1245 = scmp.ne.s32.totalorder %s1231, %s1232
    %p1246 = scmp.eq.s32.totalorder %s117, 1
    %p1247 = por %p1245, %p1246
    %p1249 = scmp.ne.s32.totalorder %s1232, %s1248
    %p1250 = scmp.eq.s32.totalorder %s117, 0
    %p1251 = por %p1249, %p1250
    %p1252 = scmp.le.s32.totalorder 1, %s111
    %p1253 = scmp.lt.s32.totalorder %s111, 3
    %p1254 = pnand %p1252, %p1253
    %p1255 = pneg %p1254
    // Predicated region
    $region9: #{tfspos_forward.1} parent=5 // pred_check
      _
    $region10: #{tfspos_forward.1} parent=5 // pred_check_branch
      %1257 = sbr.rel (%p1254) target = $region12
    $region11: #{tfspos_forward.1} parent=5 // pred_region
      %s1258 = ssub.s32 %s111, 1
      // Predicated region
      $region13: #{tfspos_forward.1} parent=11 // pred_check
        %p1259 = pneg %p210
      $region14: #{tfspos_forward.1} parent=11 // pred_check_branch
        %1261 = sbr.rel (%p1259) target = $region16
      $region15: #{tfspos_forward.1} parent=11 // pred_region
        _
      $region16: #{tfspos_forward.1} parent=11 // pred_fallthru
        _
      // Predicated region
      $region17: #{tfspos_forward.1} parent=11 // pred_check
        %p1262 = pneg %p231
      $region18: #{tfspos_forward.1} parent=11 // pred_check_branch
        %1264 = sbr.rel (%p1262) target = $region20
      $region19: #{tfspos_forward.1} parent=11 // pred_region
        _
      $region20: #{tfspos_forward.1} parent=11 // pred_fallthru
        _
      // Predicated region
      $region21: #{tfspos_forward.1} parent=11 // pred_check
        %p1265 = pneg %p252
      $region22: #{tfspos_forward.1} parent=11 // pred_check_branch
        %1267 = sbr.rel (%p1265) target = $region24
      $region23: #{tfspos_forward.1} parent=11 // pred_region
        _
      $region24: #{tfspos_forward.1} parent=11 // pred_fallthru
        _
      // Predicated region
      $region25: #{tfspos_forward.1} parent=11 // pred_check
        %p1268 = pneg %p273
      $region26: #{tfspos_forward.1} parent=11 // pred_check_branch
        %1270 = sbr.rel (%p1268) target = $region28
      $region27: #{tfspos_forward.1} parent=11 // pred_region
        _
      $region28: #{tfspos_forward.1} parent=11 // pred_fallthru
        _
      // Predicated region
      $region29: #{tfspos_forward.1} parent=11 // pred_check
        %p1271 = pneg %p294
      $region30: #{tfspos_forward.1} parent=11 // pred_check_branch
        %1273 = sbr.rel (%p1271) target = $region32
      $region31: #{tfspos_forward.1} parent=11 // pred_region
        _
      $region32: #{tfspos_forward.1} parent=11 // pred_fallthru
        _
      // Predicated region
      $region33: #{tfspos_forward.1} parent=11 // pred_check
        %p1274 = pneg %p315
      $region34: #{tfspos_forward.1} parent=11 // pred_check_branch
        %1276 = sbr.rel (%p1274) target = $region36
      $region35: #{tfspos_forward.1} parent=11 // pred_region
        _
      $region36: #{tfspos_forward.1} parent=11 // pred_fallthru
        _
      // Predicated region
      $region37: #{tfspos_forward.1} parent=11 // pred_check
        %p1277 = pneg %p336
      $region38: #{tfspos_forward.1} parent=11 // pred_check_branch
        %1279 = sbr.rel (%p1277) target = $region40
      $region39: #{tfspos_forward.1} parent=11 // pred_region
        _
      $region40: #{tfspos_forward.1} parent=11 // pred_fallthru
        _
      // Predicated region
      $region41: #{tfspos_forward.1} parent=11 // pred_check
        %p1280 = pneg %p357
      $region42: #{tfspos_forward.1} parent=11 // pred_check_branch
        %1282 = sbr.rel (%p1280) target = $region44
      $region43: #{tfspos_forward.1} parent=11 // pred_region
        _
      $region44: #{tfspos_forward.1} parent=11 // pred_fallthru
        _
      // Predicated region
      $region45: #{tfspos_forward.1} parent=11 // pred_check
        %p1283 = pneg %p378
      $region46: #{tfspos_forward.1} parent=11 // pred_check_branch
        %1285 = sbr.rel (%p1283) target = $region48
      $region47: #{tfspos_forward.1} parent=11 // pred_region
        _
      $region48: #{tfspos_forward.1} parent=11 // pred_fallthru
        _
      // Predicated region
      $region49: #{tfspos_forward.1} parent=11 // pred_check
        %p1286 = pneg %p399
      $region50: #{tfspos_forward.1} parent=11 // pred_check_branch
        %1288 = sbr.rel (%p1286) target = $region52
      $region51: #{tfspos_forward.1} parent=11 // pred_region
        _
      $region52: #{tfspos_forward.1} parent=11 // pred_fallthru
        _
      // Predicated region
      $region53: #{tfspos_forward.1} parent=11 // pred_check
        %p1289 = pneg %p420
      $region54: #{tfspos_forward.1} parent=11 // pred_check_branch
        %1291 = sbr.rel (%p1289) target = $region56
      $region55: #{tfspos_forward.1} parent=11 // pred_region
        _
      $region56: #{tfspos_forward.1} parent=11 // pred_fallthru
        _
      // Predicated region
      $region57: #{tfspos_forward.1} parent=11 // pred_check
        %p1292 = pneg %p441
      $region58: #{tfspos_forward.1} parent=11 // pred_check_branch
        %1294 = sbr.rel (%p1292) target = $region60
      $region59: #{tfspos_forward.1} parent=11 // pred_region
        _
      $region60: #{tfspos_forward.1} parent=11 // pred_fallthru
        _
      // Predicated region
      $region61: #{tfspos_forward.1} parent=11 // pred_check
        %p1295 = pneg %p462
      $region62: #{tfspos_forward.1} parent=11 // pred_check_branch
        %1297 = sbr.rel (%p1295) target = $region64
      $region63: #{tfspos_forward.1} parent=11 // pred_region
        _
      $region64: #{tfspos_forward.1} parent=11 // pred_fallthru
        _
      // Predicated region
      $region65: #{tfspos_forward.1} parent=11 // pred_check
        %p1298 = pneg %p483
      $region66: #{tfspos_forward.1} parent=11 // pred_check_branch
        %1300 = sbr.rel (%p1298) target = $region68
      $region67: #{tfspos_forward.1} parent=11 // pred_region
        _
      $region68: #{tfspos_forward.1} parent=11 // pred_fallthru
        _
      // Predicated region
      $region69: #{tfspos_forward.1} parent=11 // pred_check
        %p1301 = pneg %p504
      $region70: #{tfspos_forward.1} parent=11 // pred_check_branch
        %1303 = sbr.rel (%p1301) target = $region72
      $region71: #{tfspos_forward.1} parent=11 // pred_region
        _
      $region72: #{tfspos_forward.1} parent=11 // pred_fallthru
        _
      // Predicated region
      $region73: #{tfspos_forward.1} parent=11 // pred_check
        %p1304 = pneg %p525
      $region74: #{tfspos_forward.1} parent=11 // pred_check_branch
        %1306 = sbr.rel (%p1304) target = $region76
      $region75: #{tfspos_forward.1} parent=11 // pred_region
        _
      $region76: #{tfspos_forward.1} parent=11 // pred_fallthru
        _
      // Predicated region
      $region77: #{tfspos_forward.1} parent=11 // pred_check
        %p1307 = pneg %p546
      $region78: #{tfspos_forward.1} parent=11 // pred_check_branch
        %1309 = sbr.rel (%p1307) target = $region80
      $region79: #{tfspos_forward.1} parent=11 // pred_region
        _
      $region80: #{tfspos_forward.1} parent=11 // pred_fallthru
        _
      // Predicated region
      $region81: #{tfspos_forward.1} parent=11 // pred_check
        %p1310 = pneg %p567
      $region82: #{tfspos_forward.1} parent=11 // pred_check_branch
        %1312 = sbr.rel (%p1310) target = $region84
      $region83: #{tfspos_forward.1} parent=11 // pred_region
        _
      $region84: #{tfspos_forward.1} parent=11 // pred_fallthru
        _
      // Predicated region
      $region85: #{tfspos_forward.1} parent=11 // pred_check
        %p1313 = pneg %p588
      $region86: #{tfspos_forward.1} parent=11 // pred_check_branch
        %1315 = sbr.rel (%p1313) target = $region88
      $region87: #{tfspos_forward.1} parent=11 // pred_region
        _
      $region88: #{tfspos_forward.1} parent=11 // pred_fallthru
        _
      // Predicated region
      $region89: #{tfspos_forward.1} parent=11 // pred_check
        %p1316 = pneg %p609
      $region90: #{tfspos_forward.1} parent=11 // pred_check_branch
        %1318 = sbr.rel (%p1316) target = $region92
      $region91: #{tfspos_forward.1} parent=11 // pred_region
        _
      $region92: #{tfspos_forward.1} parent=11 // pred_fallthru
        _
      // Predicated region
      $region93: #{tfspos_forward.1} parent=11 // pred_check
        %p1319 = pneg %p630
      $region94: #{tfspos_forward.1} parent=11 // pred_check_branch
        %1321 = sbr.rel (%p1319) target = $region96
      $region95: #{tfspos_forward.1} parent=11 // pred_region
        _
      $region96: #{tfspos_forward.1} parent=11 // pred_fallthru
        _
      // Predicated region
      $region97: #{tfspos_forward.1} parent=11 // pred_check
        %p1322 = pneg %p651
      $region98: #{tfspos_forward.1} parent=11 // pred_check_branch
        %1324 = sbr.rel (%p1322) target = $region100
      $region99: #{tfspos_forward.1} parent=11 // pred_region
        _
      $region100: #{tfspos_forward.1} parent=11 // pred_fallthru
        _
      // Predicated region
      $region101: #{tfspos_forward.1} parent=11 // pred_check
        %p1325 = pneg %p672
      $region102: #{tfspos_forward.1} parent=11 // pred_check_branch
        %1327 = sbr.rel (%p1325) target = $region104
      $region103: #{tfspos_forward.1} parent=11 // pred_region
        _
      $region104: #{tfspos_forward.1} parent=11 // pred_fallthru
        _
      // Predicated region
      $region105: #{tfspos_forward.1} parent=11 // pred_check
        %p1328 = pneg %p693
      $region106: #{tfspos_forward.1} parent=11 // pred_check_branch
        %1330 = sbr.rel (%p1328) target = $region108
      $region107: #{tfspos_forward.1} parent=11 // pred_region
        _
      $region108: #{tfspos_forward.1} parent=11 // pred_fallthru
        _
      // Predicated region
      $region109: #{tfspos_forward.1} parent=11 // pred_check
        %p1331 = pneg %p714
      $region110: #{tfspos_forward.1} parent=11 // pred_check_branch
        %1333 = sbr.rel (%p1331) target = $region112
      $region111: #{tfspos_forward.1} parent=11 // pred_region
        _
      $region112: #{tfspos_forward.1} parent=11 // pred_fallthru
        _
      // Predicated region
      $region113: #{tfspos_forward.1} parent=11 // pred_check
        %p1334 = pneg %p735
      $region114: #{tfspos_forward.1} parent=11 // pred_check_branch
        %1336 = sbr.rel (%p1334) target = $region116
      $region115: #{tfspos_forward.1} parent=11 // pred_region
        _
      $region116: #{tfspos_forward.1} parent=11 // pred_fallthru
        _
      // Predicated region
      $region117: #{tfspos_forward.1} parent=11 // pred_check
        %p1337 = pneg %p756
      $region118: #{tfspos_forward.1} parent=11 // pred_check_branch
        %1339 = sbr.rel (%p1337) target = $region120
      $region119: #{tfspos_forward.1} parent=11 // pred_region
        _
      $region120: #{tfspos_forward.1} parent=11 // pred_fallthru
        _
      // Predicated region
      $region121: #{tfspos_forward.1} parent=11 // pred_check
        %p1340 = pneg %p777
      $region122: #{tfspos_forward.1} parent=11 // pred_check_branch
        %1342 = sbr.rel (%p1340) target = $region124
      $region123: #{tfspos_forward.1} parent=11 // pred_region
        _
      $region124: #{tfspos_forward.1} parent=11 // pred_fallthru
        _
      // Predicated region
      $region125: #{tfspos_forward.1} parent=11 // pred_check
        %p1343 = pneg %p798
      $region126: #{tfspos_forward.1} parent=11 // pred_check_branch
        %1345 = sbr.rel (%p1343) target = $region128
      $region127: #{tfspos_forward.1} parent=11 // pred_region
        _
      $region128: #{tfspos_forward.1} parent=11 // pred_fallthru
        _
      // Predicated region
      $region129: #{tfspos_forward.1} parent=11 // pred_check
        %p1346 = pneg %p819
      $region130: #{tfspos_forward.1} parent=11 // pred_check_branch
        %1348 = sbr.rel (%p1346) target = $region132
      $region131: #{tfspos_forward.1} parent=11 // pred_region
        _
      $region132: #{tfspos_forward.1} parent=11 // pred_fallthru
        _
      // Predicated region
      $region133: #{tfspos_forward.1} parent=11 // pred_check
        %p1349 = pneg %p840
      $region134: #{tfspos_forward.1} parent=11 // pred_check_branch
        %1351 = sbr.rel (%p1349) target = $region136
      $region135: #{tfspos_forward.1} parent=11 // pred_region
        _
      $region136: #{tfspos_forward.1} parent=11 // pred_fallthru
        _
      // Predicated region
      $region137: #{tfspos_forward.1} parent=11 // pred_check
        %p1352 = pneg %p861
      $region138: #{tfspos_forward.1} parent=11 // pred_check_branch
        %1354 = sbr.rel (%p1352) target = $region140
      $region139: #{tfspos_forward.1} parent=11 // pred_region
        _
      $region140: #{tfspos_forward.1} parent=11 // pred_fallthru
        _
      // Predicated region
      $region141: #{tfspos_forward.1} parent=11 // pred_check
        %p1355 = pneg %p882
      $region142: #{tfspos_forward.1} parent=11 // pred_check_branch
        %1357 = sbr.rel (%p1355) target = $region144
      $region143: #{tfspos_forward.1} parent=11 // pred_region
        _
      $region144: #{tfspos_forward.1} parent=11 // pred_fallthru
        _
      // Predicated region
      $region145: #{tfspos_forward.1} parent=11 // pred_check
        %p1358 = pneg %p903
      $region146: #{tfspos_forward.1} parent=11 // pred_check_branch
        %1360 = sbr.rel (%p1358) target = $region148
      $region147: #{tfspos_forward.1} parent=11 // pred_region
        _
      $region148: #{tfspos_forward.1} parent=11 // pred_fallthru
        _
      // Predicated region
      $region149: #{tfspos_forward.1} parent=11 // pred_check
        %p1361 = pneg %p924
      $region150: #{tfspos_forward.1} parent=11 // pred_check_branch
        %1363 = sbr.rel (%p1361) target = $region152
      $region151: #{tfspos_forward.1} parent=11 // pred_region
        _
      $region152: #{tfspos_forward.1} parent=11 // pred_fallthru
        _
      // Predicated region
      $region153: #{tfspos_forward.1} parent=11 // pred_check
        %p1364 = pneg %p945
      $region154: #{tfspos_forward.1} parent=11 // pred_check_branch
        %1366 = sbr.rel (%p1364) target = $region156
      $region155: #{tfspos_forward.1} parent=11 // pred_region
        _
      $region156: #{tfspos_forward.1} parent=11 // pred_fallthru
        _
      // Predicated region
      $region157: #{tfspos_forward.1} parent=11 // pred_check
        %p1367 = pneg %p966
      $region158: #{tfspos_forward.1} parent=11 // pred_check_branch
        %1369 = sbr.rel (%p1367) target = $region160
      $region159: #{tfspos_forward.1} parent=11 // pred_region
        _
      $region160: #{tfspos_forward.1} parent=11 // pred_fallthru
        _
      // Predicated region
      $region161: #{tfspos_forward.1} parent=11 // pred_check
        %p1370 = pneg %p987
      $region162: #{tfspos_forward.1} parent=11 // pred_check_branch
        %1372 = sbr.rel (%p1370) target = $region164
      $region163: #{tfspos_forward.1} parent=11 // pred_region
        _
      $region164: #{tfspos_forward.1} parent=11 // pred_fallthru
        _
      // Predicated region
      $region165: #{tfspos_forward.1} parent=11 // pred_check
        %p1373 = pneg %p1008
      $region166: #{tfspos_forward.1} parent=11 // pred_check_branch
        %1375 = sbr.rel (%p1373) target = $region168
      $region167: #{tfspos_forward.1} parent=11 // pred_region
        _
      $region168: #{tfspos_forward.1} parent=11 // pred_fallthru
        _
      // Predicated region
      $region169: #{tfspos_forward.1} parent=11 // pred_check
        %p1376 = pneg %p1029
      $region170: #{tfspos_forward.1} parent=11 // pred_check_branch
        %1378 = sbr.rel (%p1376) target = $region172
      $region171: #{tfspos_forward.1} parent=11 // pred_region
        _
      $region172: #{tfspos_forward.1} parent=11 // pred_fallthru
        _
      // Predicated region
      $region173: #{tfspos_forward.1} parent=11 // pred_check
        %p1379 = pneg %p1050
      $region174: #{tfspos_forward.1} parent=11 // pred_check_branch
        %1381 = sbr.rel (%p1379) target = $region176
      $region175: #{tfspos_forward.1} parent=11 // pred_region
        _
      $region176: #{tfspos_forward.1} parent=11 // pred_fallthru
        _
      // Predicated region
      $region177: #{tfspos_forward.1} parent=11 // pred_check
        %p1382 = pneg %p1071
      $region178: #{tfspos_forward.1} parent=11 // pred_check_branch
        %1384 = sbr.rel (%p1382) target = $region180
      $region179: #{tfspos_forward.1} parent=11 // pred_region
        _
      $region180: #{tfspos_forward.1} parent=11 // pred_fallthru
        _
      // Predicated region
      $region181: #{tfspos_forward.1} parent=11 // pred_check
        %p1385 = pneg %p1092
      $region182: #{tfspos_forward.1} parent=11 // pred_check_branch
        %1387 = sbr.rel (%p1385) target = $region184
      $region183: #{tfspos_forward.1} parent=11 // pred_region
        _
      $region184: #{tfspos_forward.1} parent=11 // pred_fallthru
        _
      // Predicated region
      $region185: #{tfspos_forward.1} parent=11 // pred_check
        %p1388 = pneg %p1113
      $region186: #{tfspos_forward.1} parent=11 // pred_check_branch
        %1390 = sbr.rel (%p1388) target = $region188
      $region187: #{tfspos_forward.1} parent=11 // pred_region
        _
      $region188: #{tfspos_forward.1} parent=11 // pred_fallthru
        _
      // Predicated region
      $region189: #{tfspos_forward.1} parent=11 // pred_check
        %p1391 = pneg %p1134
      $region190: #{tfspos_forward.1} parent=11 // pred_check_branch
        %1393 = sbr.rel (%p1391) target = $region192
      $region191: #{tfspos_forward.1} parent=11 // pred_region
        _
      $region192: #{tfspos_forward.1} parent=11 // pred_fallthru
        _
      // Predicated region
      $region193: #{tfspos_forward.1} parent=11 // pred_check
        %p1394 = pneg %p1155
      $region194: #{tfspos_forward.1} parent=11 // pred_check_branch
        %1396 = sbr.rel (%p1394) target = $region196
      $region195: #{tfspos_forward.1} parent=11 // pred_region
        _
      $region196: #{tfspos_forward.1} parent=11 // pred_fallthru
        _
      // Predicated region
      $region197: #{tfspos_forward.1} parent=11 // pred_check
        %p1397 = pneg %p1176
      $region198: #{tfspos_forward.1} parent=11 // pred_check_branch
        %1399 = sbr.rel (%p1397) target = $region200
      $region199: #{tfspos_forward.1} parent=11 // pred_region
        _
      $region200: #{tfspos_forward.1} parent=11 // pred_fallthru
        _
      // Predicated region
      $region201: #{tfspos_forward.1} parent=11 // pred_check
        %p1400 = pneg %p1197
      $region202: #{tfspos_forward.1} parent=11 // pred_check_branch
        %1402 = sbr.rel (%p1400) target = $region204
      $region203: #{tfspos_forward.1} parent=11 // pred_region
        _
      $region204: #{tfspos_forward.1} parent=11 // pred_fallthru
        _
      // Predicated region
      $region205: #{tfspos_forward.1} parent=11 // pred_check
        %p1403 = pneg %p1218
      $region206: #{tfspos_forward.1} parent=11 // pred_check_branch
        %1405 = sbr.rel (%p1403) target = $region208
      $region207: #{tfspos_forward.1} parent=11 // pred_region
        _
      $region208: #{tfspos_forward.1} parent=11 // pred_fallthru
        _
    $region12: #{tfspos_forward.1} parent=5 // pred_fallthru
      _
    %p1406 = scmp.lt.s32.totalorder %s111, 2
    // Predicated region
    $region209: #{tfspos_forward.1} parent=5 // pred_check
      %p1407 = pneg %p1406
    $region210: #{tfspos_forward.1} parent=5 // pred_check_branch
      %1409 = sbr.rel (%p1407) target = $region212
    $region211: #{tfspos_forward.1} parent=5 // pred_region
      // Predicated region
      $region213: #{tfspos_forward.1} parent=211 // pred_check
        %p1410 = pneg %p131
      $region214: #{tfspos_forward.1} parent=211 // pred_check_branch
        %1412 = sbr.rel (%p1410) target = $region216
      $region215: #{tfspos_forward.1} parent=211 // pred_region
        %p1413 = scmp.lt.s32.totalorder %s111, 1
        %s1414 = scalar_select %p1413, %s111, 1
        %s1415 = smul.addr %s1414, 2
        %s1416 = smul.addr %s1415, 8
        %s1417 = scalar_lea.vmem %s1, %s1416
      $region216: #{tfspos_forward.1} parent=211 // pred_fallthru
        _
      // Predicated region
      $region217: #{tfspos_forward.1} parent=211 // pred_check
        %p1418 = pneg %p157
      $region218: #{tfspos_forward.1} parent=211 // pred_check_branch
        %1420 = sbr.rel (%p1418) target = $region220
      $region219: #{tfspos_forward.1} parent=211 // pred_region
        %p1421 = scmp.lt.s32.totalorder %s111, 1
        %s1422 = scalar_select %p1421, %s111, 1
        %s1423 = smul.addr %s1422, 2
        %s1424 = smul.addr %s1423, 8
        %s1425 = scalar_lea.vmem %s3, %s1424
      $region220: #{tfspos_forward.1} parent=211 // pred_fallthru
        _
      // Predicated region
      $region221: #{tfspos_forward.1} parent=211 // pred_check
        %p1426 = pneg %p183
      $region222: #{tfspos_forward.1} parent=211 // pred_check_branch
        %1428 = sbr.rel (%p1426) target = $region224
      $region223: #{tfspos_forward.1} parent=211 // pred_region
        %p1429 = scmp.lt.s32.totalorder %s111, 1
        %s1430 = scalar_select %p1429, %s111, 1
        %s1431 = smul.addr %s1430, 8
        %s1432 = scalar_lea.vmem %s5, %s1431
      $region224: #{tfspos_forward.1} parent=211 // pred_fallthru
        _
    $region212: #{tfspos_forward.1} parent=5 // pred_fallthru
      _
    %p1433 = scmp.le.s32.totalorder 1, %s111
    %p1434 = scmp.lt.s32.totalorder %s111, 3
    %p1435 = pnand %p1433, %p1434
    %p1436 = pneg %p1435
    // Predicated region
    $region225: #{tfspos_forward.1} parent=5 // pred_check
      _
    $region226: #{tfspos_forward.1} parent=5 // pred_check_branch
      %1438 = sbr.rel (%p1435) target = $region228
    $region227: #{tfspos_forward.1} parent=5 // pred_region
      %s1439 = ssub.s32 %s111, 1
      %p1440 = scmp.lt.s32.totalorder %s116, 1
      %s1441 = scalar_select %p1440, %s116, 1
      %s1442 = smul.addr %s1441, 2
      %s1443 = smul.addr %s1442, 8
      %s1444 = scalar_lea.vmem %s1, %s1443
      %p1445 = pneg %p137
      %p1446 = pneg %p134
      %p1447 = scmp.lt.s32.totalorder %s116, 1
      %s1448 = scalar_select %p1447, %s116, 1
      %s1449 = smul.addr %s1448, 2
      %s1450 = smul.addr %s1449, 8
      %s1451 = scalar_lea.vmem %s3, %s1450
      %p1452 = pneg %p163
      %p1453 = pneg %p160
      %p1454 = scmp.lt.s32.totalorder %s116, 1
      %s1455 = scalar_select %p1454, %s116, 1
      %s1456 = smul.addr %s1455, 8
      %s1457 = scalar_lea.vmem %s5, %s1456
      %p1458 = pneg %p189
      %p1459 = pneg %p186
      %p1460 = pneg %p210
      %p1461 = pneg %p207
      %p1462 = pneg %p231
      %p1463 = pneg %p228
      %p1464 = pneg %p252
      %p1465 = pneg %p249
      %p1466 = pneg %p273
      %p1467 = pneg %p270
      %p1468 = pneg %p294
      %p1469 = pneg %p291
      %p1470 = pneg %p315
      %p1471 = pneg %p312
      %p1472 = pneg %p336
      %p1473 = pneg %p333
      %p1474 = pneg %p357
      %p1475 = pneg %p354
      %p1476 = pneg %p378
      %p1477 = pneg %p375
      %p1478 = pneg %p399
      %p1479 = pneg %p396
      %p1480 = pneg %p420
      %p1481 = pneg %p417
      %p1482 = pneg %p441
      %p1483 = pneg %p438
      %p1484 = pneg %p462
      %p1485 = pneg %p459
      %p1486 = pneg %p483
      %p1487 = pneg %p480
      %p1488 = pneg %p504
      %p1489 = pneg %p501
      %p1490 = pneg %p525
      %p1491 = pneg %p522
      %p1492 = pneg %p546
      %p1493 = pneg %p543
      %p1494 = pneg %p567
      %p1495 = pneg %p564
      %p1496 = pneg %p588
      %p1497 = pneg %p585
      %p1498 = pneg %p609
      %p1499 = pneg %p606
      %p1500 = pneg %p630
      %p1501 = pneg %p627
      %p1502 = pneg %p651
      %p1503 = pneg %p648
      %p1504 = pneg %p672
      %p1505 = pneg %p669
      %p1506 = pneg %p693
      %p1507 = pneg %p690
      %p1508 = pneg %p714
      %p1509 = pneg %p711
      %p1510 = pneg %p735
      %p1511 = pneg %p732
      %p1512 = pneg %p756
      %p1513 = pneg %p753
      %p1514 = pneg %p777
      %p1515 = pneg %p774
      %p1516 = pneg %p798
      %p1517 = pneg %p795
      %p1518 = pneg %p819
      %p1519 = pneg %p816
      %p1520 = pneg %p840
      %p1521 = pneg %p837
      %p1522 = pneg %p861
      %p1523 = pneg %p858
      %p1524 = pneg %p882
      %p1525 = pneg %p879
      %p1526 = pneg %p903
      %p1527 = pneg %p900
      %p1528 = pneg %p924
      %p1529 = pneg %p921
      %p1530 = pneg %p945
      %p1531 = pneg %p942
      %p1532 = pneg %p966
      %p1533 = pneg %p963
      %p1534 = pneg %p987
      %p1535 = pneg %p984
      %p1536 = pneg %p1008
      %p1537 = pneg %p1005
      %p1538 = pneg %p1029
      %p1539 = pneg %p1026
      %p1540 = pneg %p1050
      %p1541 = pneg %p1047
      %p1542 = pneg %p1071
      %p1543 = pneg %p1068
      %p1544 = pneg %p1092
      %p1545 = pneg %p1089
      %p1546 = pneg %p1113
      %p1547 = pneg %p1110
      %p1548 = pneg %p1134
      %p1549 = pneg %p1131
      %p1550 = pneg %p1155
      %p1551 = pneg %p1152
      %p1552 = pneg %p1176
      %p1553 = pneg %p1173
      %p1554 = pneg %p1197
      %p1555 = pneg %p1194
      %p1556 = pneg %p1218
      %p1557 = pneg %p1215
      %p1558 = pneg %p1244
      %p1559 = pneg %p1241
      %p1560 = scmp.lt.s32.totalorder %s116, 1
      %s1561 = scalar_select %p1560, %s116, 1
      %s1562 = smul.addr %s1561, 8
      %s1563 = scalar_lea.vmem %s105, %s1562
      %p1564 = scmp.lt.s32.totalorder %s116, 1
      %s1565 = scalar_select %p1564, %s116, 1
      %s1566 = smul.addr %s1565, 2
      %s1567 = smul.addr %s1566, 8
      %s1568 = scalar_lea.vmem %s1, %s1567
      %p1569 = scmp.lt.s32.totalorder %s116, 1
      %s1570 = scalar_select %p1569, %s116, 1
      %s1571 = smul.addr %s1570, 2
      %s1572 = smul.addr %s1571, 8
      %s1573 = scalar_lea.vmem %s3, %s1572
      %p1574 = scmp.lt.s32.totalorder %s116, 1
      %s1575 = scalar_select %p1574, %s116, 1
      %s1576 = smul.addr %s1575, 8
      %s1577 = scalar_lea.vmem %s5, %s1576
      %p1578 = scmp.lt.s32.totalorder %s116, 1
      %s1579 = scalar_select %p1578, %s116, 1
      %s1580 = smul.addr %s1579, 8
      %s1581 = scalar_lea.vmem %s105, %s1580
      %v1582 = vld [vmem:[%s1568] sm:$0xff]
      %v1583 = vld [vmem:[%s1568 + $0x8] sm:$0xff]
      %v1584 = vld [vmem:[%s1573] sm:$0xff]
      %v1585 = vld [vmem:[%s1573 + $0x8] sm:$0xff]
      %v1586 = vld [vmem:[%s1577] sm:$0xff]
      %v1587 = vld [vmem:[%s81] sm:$0xf]
      %v1588 = vld [vmem:[%s83] sm:$0x7]
      %vm1589 = vcmask 23552
      %v1591 = vsel %vm1589, %v1584, 0
      %v1594 = vsel %vm1589, %v1585, 0
      %vm1596 = vcmask 1042432
      %v1598 = vsel %vm1596, %v1588, 0
      %1600 = vmatprep.subr.mxu0 0.0
      %1601 = vmatpush1.msra.mxu0 0.0
      %1602 = vmatprep.subr.mxu0 0.0
      %1603 = vmatpush1.msra.mxu0 0.0
      %1604 = vmatprep.subr.mxu0 0.0
      %1605 = vmatpush1.msra.mxu0 0.0
      %1606 = vmatprep.subr.mxu0 0.0
      %1607 = vmatpush1.msra.mxu0 0.0
      %1608 = vmatprep.subr.mxu0 0.0
      %1609 = vmatpush1.msra.mxu0 0.0
      %1610 = vmatprep.subr.mxu0 0.0
      %1611 = vmatpush1.msra.mxu0 0.0
      %1612 = vmatprep.subr.mxu0 0.0
      %1613 = vmatpush1.msra.mxu0 0.0
      %1614 = vmatprep.subr.mxu0 0.0
      %1615 = vmatpush1.msra.mxu0 0.0
      %1616 = vmatprep.subr.mxu0 0.0
      %1617 = vmatpush1.msra.mxu0 0.0
      %1618 = vmatprep.subr.mxu0 0.0
      %1619 = vmatpush1.msra.mxu0 0.0
      %1620 = vmatprep.subr.mxu0 0.0
      %1621 = vmatpush1.msra.mxu0 0.0
      %1622 = vmatprep.subr.mxu0 0.0
      %1623 = vmatpush1.msra.mxu0 0.0
      %1624 = vmatprep.subr.mxu0 0.0
      %1625 = vmatpush1.msra.mxu0 0.0
      %1626 = vmatprep.subr.mxu0 0.0
      %1627 = vmatpush1.msra.mxu0 0.0
      %1628 = vmatprep.subr.mxu0 0.0
      %1629 = vmatpush1.msra.mxu0 0.0
      %1630 = vmatprep.subr.mxu0 0.0
      %1631 = vmatpush1.msra.mxu0 %v1598
      %1632 = vmatprep.subr.mxu0 0.0
      %1633 = vmatpush2.msra.mxu0 0.0
      %1634 = vmatprep.subr.mxu0 0.0
      %1635 = vmatpush2.msra.mxu0 0.0
      %1636 = vmatprep.subr.mxu0 0.0
      %1637 = vmatpush2.msra.mxu0 0.0
      %1638 = vmatprep.subr.mxu0 0.0
      %1639 = vmatpush2.msra.mxu0 0.0
      %1640 = vmatprep.subr.mxu0 0.0
      %1641 = vmatpush2.msra.mxu0 0.0
      %1642 = vmatprep.subr.mxu0 0.0
      %1643 = vmatpush2.msra.mxu0 0.0
      %1644 = vmatprep.subr.mxu0 0.0
      %1645 = vmatpush2.msra.mxu0 0.0
      %1646 = vmatprep.subr.mxu0 0.0
      %1647 = vmatpush2.msra.mxu0 0.0
      %1648 = vmatprep.subr.mxu0 0.0
      %1649 = vmatpush2.msra.mxu0 0.0
      %1650 = vmatprep.subr.mxu0 0.0
      %1651 = vmatpush2.msra.mxu0 0.0
      %1652 = vmatprep.subr.mxu0 0.0
      %1653 = vmatpush2.msra.mxu0 0.0
      %1654 = vmatprep.subr.mxu0 0.0
      %1655 = vmatpush2.msra.mxu0 0.0
      %1656 = vmatprep.subr.mxu0 0.0
      %1657 = vmatpush2.msra.mxu0 0.0
      %1658 = vmatprep.subr.mxu0 0.0
      %1659 = vmatpush2.msra.mxu0 0.0
      %1660 = vmatprep.subr.mxu0 0.0
      %1661 = vmatpush2.msra.mxu0 0.0
      %1662 = vmatprep.subr.mxu0 0.0
      %1663 = vmatpush2.msra.mxu0 0.0
      %1664 = vmatprep.mubr.f32.mxu0 0.0
      %1665 = vmatmul.mubr.f32.gmra.mxu0 %v1591
      %v1666 = vpop.f32.mrf.mxu0
      %v1667 = vadd.f32 0.0, %v1666
      %v1668 = vpop.f32.mrf.mxu0
      %1669 = vmatprep.mubr.f32.mxu0 0.0
      %1670 = vmatmul.mubr.f32.gmra.mxu0 %v1594
      %v1671 = vpop.f32.mrf.mxu0
      %v1672 = vadd.f32 0.0, %v1671
      %v1673 = vpop.f32.mrf.mxu0
      %1674 = vdwg.mxu0
      %vm1675 = vcmask 31744
      %v1677 = vsel %vm1675, %v1582, 0
      %v1680 = vsel %vm1675, %v1583, 0
      %vm1682 = vcmask 1043456
      %v1684 = vsel %vm1682, %v1587, 0
      %1686 = vmatprep.subr.mxu0 0.0
      %1687 = vmatpush1.msra.mxu0 0.0
      %1688 = vmatprep.subr.mxu0 0.0
      %1689 = vmatpush1.msra.mxu0 0.0
      %1690 = vmatprep.subr.mxu0 0.0
      %1691 = vmatpush1.msra.mxu0 0.0
      %1692 = vmatprep.subr.mxu0 0.0
      %1693 = vmatpush1.msra.mxu0 0.0
      %1694 = vmatprep.subr.mxu0 0.0
      %1695 = vmatpush1.msra.mxu0 0.0
      %1696 = vmatprep.subr.mxu0 0.0
      %1697 = vmatpush1.msra.mxu0 0.0
      %1698 = vmatprep.subr.mxu0 0.0
      %1699 = vmatpush1.msra.mxu0 0.0
      %1700 = vmatprep.subr.mxu0 0.0
      %1701 = vmatpush1.msra.mxu0 0.0
      %1702 = vmatprep.subr.mxu0 0.0
      %1703 = vmatpush1.msra.mxu0 0.0
      %1704 = vmatprep.subr.mxu0 0.0
      %1705 = vmatpush1.msra.mxu0 0.0
      %1706 = vmatprep.subr.mxu0 0.0
      %1707 = vmatpush1.msra.mxu0 0.0
      %1708 = vmatprep.subr.mxu0 0.0
      %1709 = vmatpush1.msra.mxu0 0.0
      %1710 = vmatprep.subr.mxu0 0.0
      %1711 = vmatpush1.msra.mxu0 0.0
      %1712 = vmatprep.subr.mxu0 0.0
      %1713 = vmatpush1.msra.mxu0 0.0
      %1714 = vmatprep.subr.mxu0 0.0
      %1715 = vmatpush1.msra.mxu0 0.0
      %1716 = vmatprep.subr.mxu0 0.0
      %1717 = vmatpush1.msra.mxu0 %v1684
      %1718 = vmatprep.subr.mxu0 0.0
      %1719 = vmatpush2.msra.mxu0 0.0
      %1720 = vmatprep.subr.mxu0 0.0
      %1721 = vmatpush2.msra.mxu0 0.0
      %1722 = vmatprep.subr.mxu0 0.0
      %1723 = vmatpush2.msra.mxu0 0.0
      %1724 = vmatprep.subr.mxu0 0.0
      %1725 = vmatpush2.msra.mxu0 0.0
      %1726 = vmatprep.subr.mxu0 0.0
      %1727 = vmatpush2.msra.mxu0 0.0
      %1728 = vmatprep.subr.mxu0 0.0
      %1729 = vmatpush2.msra.mxu0 0.0
      %1730 = vmatprep.subr.mxu0 0.0
      %1731 = vmatpush2.msra.mxu0 0.0
      %1732 = vmatprep.subr.mxu0 0.0
      %1733 = vmatpush2.msra.mxu0 0.0
      %1734 = vmatprep.subr.mxu0 0.0
      %1735 = vmatpush2.msra.mxu0 0.0
      %1736 = vmatprep.subr.mxu0 0.0
      %1737 = vmatpush2.msra.mxu0 0.0
      %1738 = vmatprep.subr.mxu0 0.0
      %1739 = vmatpush2.msra.mxu0 0.0
      %1740 = vmatprep.subr.mxu0 0.0
      %1741 = vmatpush2.msra.mxu0 0.0
      %1742 = vmatprep.subr.mxu0 0.0
      %1743 = vmatpush2.msra.mxu0 0.0
      %1744 = vmatprep.subr.mxu0 0.0
      %1745 = vmatpush2.msra.mxu0 0.0
      %1746 = vmatprep.subr.mxu0 0.0
      %1747 = vmatpush2.msra.mxu0 0.0
      %1748 = vmatprep.subr.mxu0 0.0
      %1749 = vmatpush2.msra.mxu0 0.0
      %1750 = vmatprep.mubr.f32.mxu0 0.0
      %1751 = vmatmul.mubr.f32.gmra.mxu0 %v1677
      %v1752 = vpop.f32.mrf.mxu0
      %v1753 = vadd.f32 %v1667, %v1752
      %v1754 = vpop.f32.mrf.mxu0
      %1755 = vmatprep.mubr.f32.mxu0 0.0
      %1756 = vmatmul.mubr.f32.gmra.mxu0 %v1680
      %v1757 = vpop.f32.mrf.mxu0
      %v1758 = vadd.f32 %v1672, %v1757
      %v1759 = vpop.f32.mrf.mxu0
      %1760 = vdwg.mxu0
      %v1761 = vld [vmem:[%s79] sm:$0x1]
      %v1763 = vlaneseq
      %v1764 = vshrl.u32 %v1763, 7
      %v1765 = vsub.s32 0, %v1764
      %v1766 = vrot.slane %v1761, %v1765
      %v1768 = vadd.f32 %v1753, %v1766
      %v1769 = vadd.f32 %v1758, %v1766
      %v1770 = vmax.f32 %v1768, 0.0
      %v1771 = vmax.f32 %v1769, 0.0
      %v1772 = vld [vmem:[%s87] sm:$0xff]
      %v1773 = vld [vmem:[%s87 + $0x8] sm:$0xff]
      %v1774 = vld [vmem:[%s87 + $0x10] sm:$0xff]
      %v1775 = vld [vmem:[%s87 + $0x18] sm:$0xff]
      %v1776 = vld [vmem:[%s85] sm:$0x1]
      %v1778 = vlaneseq
      %v1779 = vshrl.u32 %v1778, 7
      %v1780 = vsub.s32 0, %v1779
      %v1781 = vrot.slane %v1776, %v1780
      %vm1783 = vcmask 261120
      %v1785 = vsel %vm1783, %v1770, 0
      %v1788 = vsel %vm1783, %v1771, 0
      %1790 = vmatprep.subr.mxu0 0.0
      %1791 = vmatpush1.msra.mxu0 0.0
      %1792 = vmatprep.subr.mxu0 0.0
      %1793 = vmatpush1.msra.mxu0 0.0
      %1794 = vmatprep.subr.mxu0 0.0
      %1795 = vmatpush1.msra.mxu0 0.0
      %1796 = vmatprep.subr.mxu0 0.0
      %1797 = vmatpush1.msra.mxu0 0.0
      %1798 = vmatprep.subr.mxu0 0.0
      %1799 = vmatpush1.msra.mxu0 0.0
      %1800 = vmatprep.subr.mxu0 0.0
      %1801 = vmatpush1.msra.mxu0 0.0
      %1802 = vmatprep.subr.mxu0 0.0
      %1803 = vmatpush1.msra.mxu0 0.0
      %1804 = vmatprep.subr.mxu0 0.0
      %1805 = vmatpush1.msra.mxu0 0.0
      %1806 = vmatprep.subr.mxu0 0.0
      %1807 = vmatpush1.msra.mxu0 0.0
      %1808 = vmatprep.subr.mxu0 0.0
      %1809 = vmatpush1.msra.mxu0 0.0
      %1810 = vmatprep.subr.mxu0 0.0
      %1811 = vmatpush1.msra.mxu0 0.0
      %1812 = vmatprep.subr.mxu0 0.0
      %1813 = vmatpush1.msra.mxu0 0.0
      %1814 = vmatprep.subr.mxu0 0.0
      %1815 = vmatpush1.msra.mxu0 %v1775
      %1816 = vmatprep.subr.mxu0 0.0
      %1817 = vmatpush1.msra.mxu0 %v1774
      %1818 = vmatprep.subr.mxu0 0.0
      %1819 = vmatpush1.msra.mxu0 %v1773
      %1820 = vmatprep.subr.mxu0 0.0
      %1821 = vmatpush1.msra.mxu0 %v1772
      %1822 = vmatprep.subr.mxu0 0.0
      %1823 = vmatpush2.msra.mxu0 0.0
      %1824 = vmatprep.subr.mxu0 0.0
      %1825 = vmatpush2.msra.mxu0 0.0
      %1826 = vmatprep.subr.mxu0 0.0
      %1827 = vmatpush2.msra.mxu0 0.0
      %1828 = vmatprep.subr.mxu0 0.0
      %1829 = vmatpush2.msra.mxu0 0.0
      %1830 = vmatprep.subr.mxu0 0.0
      %1831 = vmatpush2.msra.mxu0 0.0
      %1832 = vmatprep.subr.mxu0 0.0
      %1833 = vmatpush2.msra.mxu0 0.0
      %1834 = vmatprep.subr.mxu0 0.0
      %1835 = vmatpush2.msra.mxu0 0.0
      %1836 = vmatprep.subr.mxu0 0.0
      %1837 = vmatpush2.msra.mxu0 0.0
      %1838 = vmatprep.subr.mxu0 0.0
      %1839 = vmatpush2.msra.mxu0 0.0
      %1840 = vmatprep.subr.mxu0 0.0
      %1841 = vmatpush2.msra.mxu0 0.0
      %1842 = vmatprep.subr.mxu0 0.0
      %1843 = vmatpush2.msra.mxu0 0.0
      %1844 = vmatprep.subr.mxu0 0.0
      %1845 = vmatpush2.msra.mxu0 0.0
      %1846 = vmatprep.subr.mxu0 0.0
      %1847 = vmatpush2.msra.mxu0 0.0
      %1848 = vmatprep.subr.mxu0 0.0
      %1849 = vmatpush2.msra.mxu0 0.0
      %1850 = vmatprep.subr.mxu0 0.0
      %1851 = vmatpush2.msra.mxu0 0.0
      %1852 = vmatprep.subr.mxu0 0.0
      %1853 = vmatpush2.msra.mxu0 0.0
      %1854 = vmatprep.mubr.f32.mxu0 0.0
      %1855 = vmatmul.mubr.f32.gmra.mxu0 %v1785
      %v1856 = vpop.f32.mrf.mxu0
      %v1857 = vadd.f32 %v1781, %v1856
      %v1858 = vpop.f32.mrf.mxu0
      %1859 = vmatprep.mubr.f32.mxu0 0.0
      %1860 = vmatmul.mubr.f32.gmra.mxu0 %v1788
      %v1861 = vpop.f32.mrf.mxu0
      %v1862 = vadd.f32 %v1781, %v1861
      %v1863 = vpop.f32.mrf.mxu0
      %1864 = vdwg.mxu0
      %v1865 = vmax.f32 %v1857, 0.0
      %v1866 = vmax.f32 %v1862, 0.0
      %v1867 = vld [vmem:[%s91] sm:$0xff]
      %v1868 = vld [vmem:[%s91 + $0x8] sm:$0xff]
      %v1869 = vld [vmem:[%s91 + $0x10] sm:$0xff]
      %v1870 = vld [vmem:[%s91 + $0x18] sm:$0xff]
      %v1871 = vld [vmem:[%s89] sm:$0x1]
      %v1873 = vlaneseq
      %v1874 = vshrl.u32 %v1873, 7
      %v1875 = vsub.s32 0, %v1874
      %v1876 = vrot.slane %v1871, %v1875
      %v1879 = vsel %vm1783, %v1865, 0
      %v1882 = vsel %vm1783, %v1866, 0
      %1884 = vmatprep.subr.mxu0 0.0
      %1885 = vmatpush1.msra.mxu0 0.0
      %1886 = vmatprep.subr.mxu0 0.0
      %1887 = vmatpush1.msra.mxu0 0.0
      %1888 = vmatprep.subr.mxu0 0.0
      %1889 = vmatpush1.msra.mxu0 0.0
      %1890 = vmatprep.subr.mxu0 0.0
      %1891 = vmatpush1.msra.mxu0 0.0
      %1892 = vmatprep.subr.mxu0 0.0
      %1893 = vmatpush1.msra.mxu0 0.0
      %1894 = vmatprep.subr.mxu0 0.0
      %1895 = vmatpush1.msra.mxu0 0.0
      %1896 = vmatprep.subr.mxu0 0.0
      %1897 = vmatpush1.msra.mxu0 0.0
      %1898 = vmatprep.subr.mxu0 0.0
      %1899 = vmatpush1.msra.mxu0 0.0
      %1900 = vmatprep.subr.mxu0 0.0
      %1901 = vmatpush1.msra.mxu0 0.0
      %1902 = vmatprep.subr.mxu0 0.0
      %1903 = vmatpush1.msra.mxu0 0.0
      %1904 = vmatprep.subr.mxu0 0.0
      %1905 = vmatpush1.msra.mxu0 0.0
      %1906 = vmatprep.subr.mxu0 0.0
      %1907 = vmatpush1.msra.mxu0 0.0
      %1908 = vmatprep.subr.mxu0 0.0
      %1909 = vmatpush1.msra.mxu0 %v1870
      %1910 = vmatprep.subr.mxu0 0.0
      %1911 = vmatpush1.msra.mxu0 %v1869
      %1912 = vmatprep.subr.mxu0 0.0
      %1913 = vmatpush1.msra.mxu0 %v1868
      %1914 = vmatprep.subr.mxu0 0.0
      %1915 = vmatpush1.msra.mxu0 %v1867
      %1916 = vmatprep.subr.mxu0 0.0
      %1917 = vmatpush2.msra.mxu0 0.0
      %1918 = vmatprep.subr.mxu0 0.0
      %1919 = vmatpush2.msra.mxu0 0.0
      %1920 = vmatprep.subr.mxu0 0.0
      %1921 = vmatpush2.msra.mxu0 0.0
      %1922 = vmatprep.subr.mxu0 0.0
      %1923 = vmatpush2.msra.mxu0 0.0
      %1924 = vmatprep.subr.mxu0 0.0
      %1925 = vmatpush2.msra.mxu0 0.0
      %1926 = vmatprep.subr.mxu0 0.0
      %1927 = vmatpush2.msra.mxu0 0.0
      %1928 = vmatprep.subr.mxu0 0.0
      %1929 = vmatpush2.msra.mxu0 0.0
      %1930 = vmatprep.subr.mxu0 0.0
      %1931 = vmatpush2.msra.mxu0 0.0
      %1932 = vmatprep.subr.mxu0 0.0
      %1933 = vmatpush2.msra.mxu0 0.0
      %1934 = vmatprep.subr.mxu0 0.0
      %1935 = vmatpush2.msra.mxu0 0.0
      %1936 = vmatprep.subr.mxu0 0.0
      %1937 = vmatpush2.msra.mxu0 0.0
      %1938 = vmatprep.subr.mxu0 0.0
      %1939 = vmatpush2.msra.mxu0 0.0
      %1940 = vmatprep.subr.mxu0 0.0
      %1941 = vmatpush2.msra.mxu0 0.0
      %1942 = vmatprep.subr.mxu0 0.0
      %1943 = vmatpush2.msra.mxu0 0.0
      %1944 = vmatprep.subr.mxu0 0.0
      %1945 = vmatpush2.msra.mxu0 0.0
      %1946 = vmatprep.subr.mxu0 0.0
      %1947 = vmatpush2.msra.mxu0 0.0
      %1948 = vmatprep.mubr.f32.mxu0 0.0
      %1949 = vmatmul.mubr.f32.gmra.mxu0 %v1879
      %v1950 = vpop.f32.mrf.mxu0
      %v1951 = vadd.f32 %v1876, %v1950
      %v1952 = vpop.f32.mrf.mxu0
      %1953 = vmatprep.mubr.f32.mxu0 0.0
      %1954 = vmatmul.mubr.f32.gmra.mxu0 %v1882
      %v1955 = vpop.f32.mrf.mxu0
      %v1956 = vadd.f32 %v1876, %v1955
      %v1957 = vpop.f32.mrf.mxu0
      %1958 = vdwg.mxu0
      loop: start=0, step=1, limit=2
      $region229: #{tfspos_forward.1} parent=227 // loop_pre_header
        _
      $region230: #{tfspos_forward.1} parent=227 // loop_header
        %s1960 = sphi 0, %s1964
        %p1961 = scmp.ge.s32.totalorder %s1960, 2
        %v1965 = vphi %v1951, %v5782
        %v1966 = vphi %v1956, %v5783
      $region231: #{tfspos_forward.1} parent=227 // loop_header_branch
        %1963 = sbr.rel (%p1961) target = $region235
      $region232: #{tfspos_forward.1} parent=227 // loop_body
        %v1967 = vld [vmem:[%s45] sm:$0xf]
        %v1968 = vld [vmem:[%s43] sm:$0xff]
        %v1969 = vld [vmem:[%s43 + $0x8] sm:$0xff]
        %v1970 = vld [vmem:[%s43 + $0x10] sm:$0xff]
        %v1971 = vld [vmem:[%s43 + $0x18] sm:$0xff]
        %v1973 = vsel %vm1783, %v1965, 0
        %v1976 = vsel %vm1783, %v1966, 0
        %1978 = vmatprep.subr.mxu0 0.0
        %1979 = vmatpush1.msra.mxu0 0.0
        %1980 = vmatprep.subr.mxu0 0.0
        %1981 = vmatpush1.msra.mxu0 0.0
        %1982 = vmatprep.subr.mxu0 0.0
        %1983 = vmatpush1.msra.mxu0 0.0
        %1984 = vmatprep.subr.mxu0 0.0
        %1985 = vmatpush1.msra.mxu0 0.0
        %1986 = vmatprep.subr.mxu0 0.0
        %1987 = vmatpush1.msra.mxu0 0.0
        %1988 = vmatprep.subr.mxu0 0.0
        %1989 = vmatpush1.msra.mxu0 0.0
        %1990 = vmatprep.subr.mxu0 0.0
        %1991 = vmatpush1.msra.mxu0 0.0
        %1992 = vmatprep.subr.mxu0 0.0
        %1993 = vmatpush1.msra.mxu0 0.0
        %1994 = vmatprep.subr.mxu0 0.0
        %1995 = vmatpush1.msra.mxu0 0.0
        %1996 = vmatprep.subr.mxu0 0.0
        %1997 = vmatpush1.msra.mxu0 0.0
        %1998 = vmatprep.subr.mxu0 0.0
        %1999 = vmatpush1.msra.mxu0 0.0
        %2000 = vmatprep.subr.mxu0 0.0
        %2001 = vmatpush1.msra.mxu0 0.0
        %2002 = vmatprep.subr.mxu0 0.0
        %2003 = vmatpush1.msra.mxu0 %v1971
        %2004 = vmatprep.subr.mxu0 0.0
        %2005 = vmatpush1.msra.mxu0 %v1970
        %2006 = vmatprep.subr.mxu0 0.0
        %2007 = vmatpush1.msra.mxu0 %v1969
        %2008 = vmatprep.subr.mxu0 0.0
        %2009 = vmatpush1.msra.mxu0 %v1968
        %2010 = vmatprep.subr.mxu0 0.0
        %2011 = vmatpush2.msra.mxu0 0.0
        %2012 = vmatprep.subr.mxu0 0.0
        %2013 = vmatpush2.msra.mxu0 0.0
        %2014 = vmatprep.subr.mxu0 0.0
        %2015 = vmatpush2.msra.mxu0 0.0
        %2016 = vmatprep.subr.mxu0 0.0
        %2017 = vmatpush2.msra.mxu0 0.0
        %2018 = vmatprep.subr.mxu0 0.0
        %2019 = vmatpush2.msra.mxu0 0.0
        %2020 = vmatprep.subr.mxu0 0.0
        %2021 = vmatpush2.msra.mxu0 0.0
        %2022 = vmatprep.subr.mxu0 0.0
        %2023 = vmatpush2.msra.mxu0 0.0
        %2024 = vmatprep.subr.mxu0 0.0
        %2025 = vmatpush2.msra.mxu0 0.0
        %2026 = vmatprep.subr.mxu0 0.0
        %2027 = vmatpush2.msra.mxu0 0.0
        %2028 = vmatprep.subr.mxu0 0.0
        %2029 = vmatpush2.msra.mxu0 0.0
        %2030 = vmatprep.subr.mxu0 0.0
        %2031 = vmatpush2.msra.mxu0 0.0
        %2032 = vmatprep.subr.mxu0 0.0
        %2033 = vmatpush2.msra.mxu0 0.0
        %2034 = vmatprep.subr.mxu0 0.0
        %2035 = vmatpush2.msra.mxu0 0.0
        %2036 = vmatprep.subr.mxu0 0.0
        %2037 = vmatpush2.msra.mxu0 0.0
        %2038 = vmatprep.subr.mxu0 0.0
        %2039 = vmatpush2.msra.mxu0 0.0
        %2040 = vmatprep.subr.mxu0 0.0
        %2041 = vmatpush2.msra.mxu0 0.0
        %2042 = vmatprep.mubr.f32.mxu0 0.0
        %2043 = vmatmul.mubr.f32.gmra.mxu0 %v1973
        %v2044 = vpop.f32.mrf.mxu0
        %v2045 = vadd.f32 0.0, %v2044
        %v2046 = vpop.f32.mrf.mxu0
        %2047 = vmatprep.mubr.f32.mxu0 0.0
        %2048 = vmatmul.mubr.f32.gmra.mxu0 %v1976
        %v2049 = vpop.f32.mrf.mxu0
        %v2050 = vadd.f32 0.0, %v2049
        %v2051 = vpop.f32.mrf.mxu0
        %2052 = vdwg.mxu0
        %v2054 = vsel %vm1682, %v1967, 0
        %2056 = vmatprep.subr.mxu0 0.0
        %2057 = vmatpush1.msra.mxu0 0.0
        %2058 = vmatprep.subr.mxu0 0.0
        %2059 = vmatpush1.msra.mxu0 0.0
        %2060 = vmatprep.subr.mxu0 0.0
        %2061 = vmatpush1.msra.mxu0 0.0
        %2062 = vmatprep.subr.mxu0 0.0
        %2063 = vmatpush1.msra.mxu0 0.0
        %2064 = vmatprep.subr.mxu0 0.0
        %2065 = vmatpush1.msra.mxu0 0.0
        %2066 = vmatprep.subr.mxu0 0.0
        %2067 = vmatpush1.msra.mxu0 0.0
        %2068 = vmatprep.subr.mxu0 0.0
        %2069 = vmatpush1.msra.mxu0 0.0
        %2070 = vmatprep.subr.mxu0 0.0
        %2071 = vmatpush1.msra.mxu0 0.0
        %2072 = vmatprep.subr.mxu0 0.0
        %2073 = vmatpush1.msra.mxu0 0.0
        %2074 = vmatprep.subr.mxu0 0.0
        %2075 = vmatpush1.msra.mxu0 0.0
        %2076 = vmatprep.subr.mxu0 0.0
        %2077 = vmatpush1.msra.mxu0 0.0
        %2078 = vmatprep.subr.mxu0 0.0
        %2079 = vmatpush1.msra.mxu0 0.0
        %2080 = vmatprep.subr.mxu0 0.0
        %2081 = vmatpush1.msra.mxu0 0.0
        %2082 = vmatprep.subr.mxu0 0.0
        %2083 = vmatpush1.msra.mxu0 0.0
        %2084 = vmatprep.subr.mxu0 0.0
        %2085 = vmatpush1.msra.mxu0 0.0
        %2086 = vmatprep.subr.mxu0 0.0
        %2087 = vmatpush1.msra.mxu0 %v2054
        %2088 = vmatprep.subr.mxu0 0.0
        %2089 = vmatpush2.msra.mxu0 0.0
        %2090 = vmatprep.subr.mxu0 0.0
        %2091 = vmatpush2.msra.mxu0 0.0
        %2092 = vmatprep.subr.mxu0 0.0
        %2093 = vmatpush2.msra.mxu0 0.0
        %2094 = vmatprep.subr.mxu0 0.0
        %2095 = vmatpush2.msra.mxu0 0.0
        %2096 = vmatprep.subr.mxu0 0.0
        %2097 = vmatpush2.msra.mxu0 0.0
        %2098 = vmatprep.subr.mxu0 0.0
        %2099 = vmatpush2.msra.mxu0 0.0
        %2100 = vmatprep.subr.mxu0 0.0
        %2101 = vmatpush2.msra.mxu0 0.0
        %2102 = vmatprep.subr.mxu0 0.0
        %2103 = vmatpush2.msra.mxu0 0.0
        %2104 = vmatprep.subr.mxu0 0.0
        %2105 = vmatpush2.msra.mxu0 0.0
        %2106 = vmatprep.subr.mxu0 0.0
        %2107 = vmatpush2.msra.mxu0 0.0
        %2108 = vmatprep.subr.mxu0 0.0
        %2109 = vmatpush2.msra.mxu0 0.0
        %2110 = vmatprep.subr.mxu0 0.0
        %2111 = vmatpush2.msra.mxu0 0.0
        %2112 = vmatprep.subr.mxu0 0.0
        %2113 = vmatpush2.msra.mxu0 0.0
        %2114 = vmatprep.subr.mxu0 0.0
        %2115 = vmatpush2.msra.mxu0 0.0
        %2116 = vmatprep.subr.mxu0 0.0
        %2117 = vmatpush2.msra.mxu0 0.0
        %2118 = vmatprep.subr.mxu0 0.0
        %2119 = vmatpush2.msra.mxu0 0.0
        %2120 = vmatprep.mubr.f32.mxu0 0.0
        %2121 = vmatmul.mubr.f32.gmra.mxu0 %v1677
        %v2122 = vpop.f32.mrf.mxu0
        %v2123 = vadd.f32 %v2045, %v2122
        %v2124 = vpop.f32.mrf.mxu0
        %2125 = vmatprep.mubr.f32.mxu0 0.0
        %2126 = vmatmul.mubr.f32.gmra.mxu0 %v1680
        %v2127 = vpop.f32.mrf.mxu0
        %v2128 = vadd.f32 %v2050, %v2127
        %v2129 = vpop.f32.mrf.mxu0
        %2130 = vdwg.mxu0
        %v2131 = vld [vmem:[%s13] sm:$0x1]
        %v2133 = vlaneseq
        %v2134 = vshrl.u32 %v2133, 7
        %v2135 = vsub.s32 0, %v2134
        %v2136 = vrot.slane %v2131, %v2135
        %v2138 = vadd.f32 %v2123, %v2136
        %v2139 = vadd.f32 %v2128, %v2136
        %v2140 = vld [vmem:[%s37] sm:$0xf]
        %v2141 = vld [vmem:[%s35] sm:$0xff]
        %v2142 = vld [vmem:[%s35 + $0x8] sm:$0xff]
        %v2143 = vld [vmem:[%s35 + $0x10] sm:$0xff]
        %v2144 = vld [vmem:[%s35 + $0x18] sm:$0xff]
        %2145 = vmatprep.subr.mxu0 0.0
        %2146 = vmatpush1.msra.mxu0 0.0
        %2147 = vmatprep.subr.mxu0 0.0
        %2148 = vmatpush1.msra.mxu0 0.0
        %2149 = vmatprep.subr.mxu0 0.0
        %2150 = vmatpush1.msra.mxu0 0.0
        %2151 = vmatprep.subr.mxu0 0.0
        %2152 = vmatpush1.msra.mxu0 0.0
        %2153 = vmatprep.subr.mxu0 0.0
        %2154 = vmatpush1.msra.mxu0 0.0
        %2155 = vmatprep.subr.mxu0 0.0
        %2156 = vmatpush1.msra.mxu0 0.0
        %2157 = vmatprep.subr.mxu0 0.0
        %2158 = vmatpush1.msra.mxu0 0.0
        %2159 = vmatprep.subr.mxu0 0.0
        %2160 = vmatpush1.msra.mxu0 0.0
        %2161 = vmatprep.subr.mxu0 0.0
        %2162 = vmatpush1.msra.mxu0 0.0
        %2163 = vmatprep.subr.mxu0 0.0
        %2164 = vmatpush1.msra.mxu0 0.0
        %2165 = vmatprep.subr.mxu0 0.0
        %2166 = vmatpush1.msra.mxu0 0.0
        %2167 = vmatprep.subr.mxu0 0.0
        %2168 = vmatpush1.msra.mxu0 0.0
        %2169 = vmatprep.subr.mxu0 0.0
        %2170 = vmatpush1.msra.mxu0 %v2144
        %2171 = vmatprep.subr.mxu0 0.0
        %2172 = vmatpush1.msra.mxu0 %v2143
        %2173 = vmatprep.subr.mxu0 0.0
        %2174 = vmatpush1.msra.mxu0 %v2142
        %2175 = vmatprep.subr.mxu0 0.0
        %2176 = vmatpush1.msra.mxu0 %v2141
        %2177 = vmatprep.subr.mxu0 0.0
        %2178 = vmatpush2.msra.mxu0 0.0
        %2179 = vmatprep.subr.mxu0 0.0
        %2180 = vmatpush2.msra.mxu0 0.0
        %2181 = vmatprep.subr.mxu0 0.0
        %2182 = vmatpush2.msra.mxu0 0.0
        %2183 = vmatprep.subr.mxu0 0.0
        %2184 = vmatpush2.msra.mxu0 0.0
        %2185 = vmatprep.subr.mxu0 0.0
        %2186 = vmatpush2.msra.mxu0 0.0
        %2187 = vmatprep.subr.mxu0 0.0
        %2188 = vmatpush2.msra.mxu0 0.0
        %2189 = vmatprep.subr.mxu0 0.0
        %2190 = vmatpush2.msra.mxu0 0.0
        %2191 = vmatprep.subr.mxu0 0.0
        %2192 = vmatpush2.msra.mxu0 0.0
        %2193 = vmatprep.subr.mxu0 0.0
        %2194 = vmatpush2.msra.mxu0 0.0
        %2195 = vmatprep.subr.mxu0 0.0
        %2196 = vmatpush2.msra.mxu0 0.0
        %2197 = vmatprep.subr.mxu0 0.0
        %2198 = vmatpush2.msra.mxu0 0.0
        %2199 = vmatprep.subr.mxu0 0.0
        %2200 = vmatpush2.msra.mxu0 0.0
        %2201 = vmatprep.subr.mxu0 0.0
        %2202 = vmatpush2.msra.mxu0 0.0
        %2203 = vmatprep.subr.mxu0 0.0
        %2204 = vmatpush2.msra.mxu0 0.0
        %2205 = vmatprep.subr.mxu0 0.0
        %2206 = vmatpush2.msra.mxu0 0.0
        %2207 = vmatprep.subr.mxu0 0.0
        %2208 = vmatpush2.msra.mxu0 0.0
        %2209 = vmatprep.mubr.f32.mxu0 0.0
        %2210 = vmatmul.mubr.f32.gmra.mxu0 %v1973
        %v2211 = vpop.f32.mrf.mxu0
        %v2212 = vadd.f32 0.0, %v2211
        %v2213 = vpop.f32.mrf.mxu0
        %2214 = vmatprep.mubr.f32.mxu0 0.0
        %2215 = vmatmul.mubr.f32.gmra.mxu0 %v1976
        %v2216 = vpop.f32.mrf.mxu0
        %v2217 = vadd.f32 0.0, %v2216
        %v2218 = vpop.f32.mrf.mxu0
        %2219 = vdwg.mxu0
        %v2221 = vsel %vm1682, %v2140, 0
        %2223 = vmatprep.subr.mxu0 0.0
        %2224 = vmatpush1.msra.mxu0 0.0
        %2225 = vmatprep.subr.mxu0 0.0
        %2226 = vmatpush1.msra.mxu0 0.0
        %2227 = vmatprep.subr.mxu0 0.0
        %2228 = vmatpush1.msra.mxu0 0.0
        %2229 = vmatprep.subr.mxu0 0.0
        %2230 = vmatpush1.msra.mxu0 0.0
        %2231 = vmatprep.subr.mxu0 0.0
        %2232 = vmatpush1.msra.mxu0 0.0
        %2233 = vmatprep.subr.mxu0 0.0
        %2234 = vmatpush1.msra.mxu0 0.0
        %2235 = vmatprep.subr.mxu0 0.0
        %2236 = vmatpush1.msra.mxu0 0.0
        %2237 = vmatprep.subr.mxu0 0.0
        %2238 = vmatpush1.msra.mxu0 0.0
        %2239 = vmatprep.subr.mxu0 0.0
        %2240 = vmatpush1.msra.mxu0 0.0
        %2241 = vmatprep.subr.mxu0 0.0
        %2242 = vmatpush1.msra.mxu0 0.0
        %2243 = vmatprep.subr.mxu0 0.0
        %2244 = vmatpush1.msra.mxu0 0.0
        %2245 = vmatprep.subr.mxu0 0.0
        %2246 = vmatpush1.msra.mxu0 0.0
        %2247 = vmatprep.subr.mxu0 0.0
        %2248 = vmatpush1.msra.mxu0 0.0
        %2249 = vmatprep.subr.mxu0 0.0
        %2250 = vmatpush1.msra.mxu0 0.0
        %2251 = vmatprep.subr.mxu0 0.0
        %2252 = vmatpush1.msra.mxu0 0.0
        %2253 = vmatprep.subr.mxu0 0.0
        %2254 = vmatpush1.msra.mxu0 %v2221
        %2255 = vmatprep.subr.mxu0 0.0
        %2256 = vmatpush2.msra.mxu0 0.0
        %2257 = vmatprep.subr.mxu0 0.0
        %2258 = vmatpush2.msra.mxu0 0.0
        %2259 = vmatprep.subr.mxu0 0.0
        %2260 = vmatpush2.msra.mxu0 0.0
        %2261 = vmatprep.subr.mxu0 0.0
        %2262 = vmatpush2.msra.mxu0 0.0
        %2263 = vmatprep.subr.mxu0 0.0
        %2264 = vmatpush2.msra.mxu0 0.0
        %2265 = vmatprep.subr.mxu0 0.0
        %2266 = vmatpush2.msra.mxu0 0.0
        %2267 = vmatprep.subr.mxu0 0.0
        %2268 = vmatpush2.msra.mxu0 0.0
        %2269 = vmatprep.subr.mxu0 0.0
        %2270 = vmatpush2.msra.mxu0 0.0
        %2271 = vmatprep.subr.mxu0 0.0
        %2272 = vmatpush2.msra.mxu0 0.0
        %2273 = vmatprep.subr.mxu0 0.0
        %2274 = vmatpush2.msra.mxu0 0.0
        %2275 = vmatprep.subr.mxu0 0.0
        %2276 = vmatpush2.msra.mxu0 0.0
        %2277 = vmatprep.subr.mxu0 0.0
        %2278 = vmatpush2.msra.mxu0 0.0
        %2279 = vmatprep.subr.mxu0 0.0
        %2280 = vmatpush2.msra.mxu0 0.0
        %2281 = vmatprep.subr.mxu0 0.0
        %2282 = vmatpush2.msra.mxu0 0.0
        %2283 = vmatprep.subr.mxu0 0.0
        %2284 = vmatpush2.msra.mxu0 0.0
        %2285 = vmatprep.subr.mxu0 0.0
        %2286 = vmatpush2.msra.mxu0 0.0
        %2287 = vmatprep.mubr.f32.mxu0 0.0
        %2288 = vmatmul.mubr.f32.gmra.mxu0 %v1677
        %v2289 = vpop.f32.mrf.mxu0
        %v2290 = vadd.f32 %v2212, %v2289
        %v2291 = vpop.f32.mrf.mxu0
        %2292 = vmatprep.mubr.f32.mxu0 0.0
        %2293 = vmatmul.mubr.f32.gmra.mxu0 %v1680
        %v2294 = vpop.f32.mrf.mxu0
        %v2295 = vadd.f32 %v2217, %v2294
        %v2296 = vpop.f32.mrf.mxu0
        %2297 = vdwg.mxu0
        %v2298 = vld [vmem:[%s7] sm:$0x1]
        %v2300 = vlaneseq
        %v2301 = vshrl.u32 %v2300, 7
        %v2302 = vsub.s32 0, %v2301
        %v2303 = vrot.slane %v2298, %v2302
        %v2305 = vadd.f32 %v2290, %v2303
        %v2306 = vadd.f32 %v2295, %v2303
        %v2307 = vld [vmem:[%s49] sm:$0xf]
        %v2308 = vld [vmem:[%s47] sm:$0xff]
        %v2309 = vld [vmem:[%s47 + $0x8] sm:$0xff]
        %v2310 = vld [vmem:[%s47 + $0x10] sm:$0xff]
        %v2311 = vld [vmem:[%s47 + $0x18] sm:$0xff]
        %2312 = vmatprep.subr.mxu0 0.0
        %2313 = vmatpush1.msra.mxu0 0.0
        %2314 = vmatprep.subr.mxu0 0.0
        %2315 = vmatpush1.msra.mxu0 0.0
        %2316 = vmatprep.subr.mxu0 0.0
        %2317 = vmatpush1.msra.mxu0 0.0
        %2318 = vmatprep.subr.mxu0 0.0
        %2319 = vmatpush1.msra.mxu0 0.0
        %2320 = vmatprep.subr.mxu0 0.0
        %2321 = vmatpush1.msra.mxu0 0.0
        %2322 = vmatprep.subr.mxu0 0.0
        %2323 = vmatpush1.msra.mxu0 0.0
        %2324 = vmatprep.subr.mxu0 0.0
        %2325 = vmatpush1.msra.mxu0 0.0
        %2326 = vmatprep.subr.mxu0 0.0
        %2327 = vmatpush1.msra.mxu0 0.0
        %2328 = vmatprep.subr.mxu0 0.0
        %2329 = vmatpush1.msra.mxu0 0.0
        %2330 = vmatprep.subr.mxu0 0.0
        %2331 = vmatpush1.msra.mxu0 0.0
        %2332 = vmatprep.subr.mxu0 0.0
        %2333 = vmatpush1.msra.mxu0 0.0
        %2334 = vmatprep.subr.mxu0 0.0
        %2335 = vmatpush1.msra.mxu0 0.0
        %2336 = vmatprep.subr.mxu0 0.0
        %2337 = vmatpush1.msra.mxu0 %v2311
        %2338 = vmatprep.subr.mxu0 0.0
        %2339 = vmatpush1.msra.mxu0 %v2310
        %2340 = vmatprep.subr.mxu0 0.0
        %2341 = vmatpush1.msra.mxu0 %v2309
        %2342 = vmatprep.subr.mxu0 0.0
        %2343 = vmatpush1.msra.mxu0 %v2308
        %2344 = vmatprep.subr.mxu0 0.0
        %2345 = vmatpush2.msra.mxu0 0.0
        %2346 = vmatprep.subr.mxu0 0.0
        %2347 = vmatpush2.msra.mxu0 0.0
        %2348 = vmatprep.subr.mxu0 0.0
        %2349 = vmatpush2.msra.mxu0 0.0
        %2350 = vmatprep.subr.mxu0 0.0
        %2351 = vmatpush2.msra.mxu0 0.0
        %2352 = vmatprep.subr.mxu0 0.0
        %2353 = vmatpush2.msra.mxu0 0.0
        %2354 = vmatprep.subr.mxu0 0.0
        %2355 = vmatpush2.msra.mxu0 0.0
        %2356 = vmatprep.subr.mxu0 0.0
        %2357 = vmatpush2.msra.mxu0 0.0
        %2358 = vmatprep.subr.mxu0 0.0
        %2359 = vmatpush2.msra.mxu0 0.0
        %2360 = vmatprep.subr.mxu0 0.0
        %2361 = vmatpush2.msra.mxu0 0.0
        %2362 = vmatprep.subr.mxu0 0.0
        %2363 = vmatpush2.msra.mxu0 0.0
        %2364 = vmatprep.subr.mxu0 0.0
        %2365 = vmatpush2.msra.mxu0 0.0
        %2366 = vmatprep.subr.mxu0 0.0
        %2367 = vmatpush2.msra.mxu0 0.0
        %2368 = vmatprep.subr.mxu0 0.0
        %2369 = vmatpush2.msra.mxu0 0.0
        %2370 = vmatprep.subr.mxu0 0.0
        %2371 = vmatpush2.msra.mxu0 0.0
        %2372 = vmatprep.subr.mxu0 0.0
        %2373 = vmatpush2.msra.mxu0 0.0
        %2374 = vmatprep.subr.mxu0 0.0
        %2375 = vmatpush2.msra.mxu0 0.0
        %2376 = vmatprep.mubr.f32.mxu0 0.0
        %2377 = vmatmul.mubr.f32.gmra.mxu0 %v1973
        %v2378 = vpop.f32.mrf.mxu0
        %v2379 = vadd.f32 0.0, %v2378
        %v2380 = vpop.f32.mrf.mxu0
        %2381 = vmatprep.mubr.f32.mxu0 0.0
        %2382 = vmatmul.mubr.f32.gmra.mxu0 %v1976
        %v2383 = vpop.f32.mrf.mxu0
        %v2384 = vadd.f32 0.0, %v2383
        %v2385 = vpop.f32.mrf.mxu0
        %2386 = vdwg.mxu0
        %v2388 = vsel %vm1682, %v2307, 0
        %2390 = vmatprep.subr.mxu0 0.0
        %2391 = vmatpush1.msra.mxu0 0.0
        %2392 = vmatprep.subr.mxu0 0.0
        %2393 = vmatpush1.msra.mxu0 0.0
        %2394 = vmatprep.subr.mxu0 0.0
        %2395 = vmatpush1.msra.mxu0 0.0
        %2396 = vmatprep.subr.mxu0 0.0
        %2397 = vmatpush1.msra.mxu0 0.0
        %2398 = vmatprep.subr.mxu0 0.0
        %2399 = vmatpush1.msra.mxu0 0.0
        %2400 = vmatprep.subr.mxu0 0.0
        %2401 = vmatpush1.msra.mxu0 0.0
        %2402 = vmatprep.subr.mxu0 0.0
        %2403 = vmatpush1.msra.mxu0 0.0
        %2404 = vmatprep.subr.mxu0 0.0
        %2405 = vmatpush1.msra.mxu0 0.0
        %2406 = vmatprep.subr.mxu0 0.0
        %2407 = vmatpush1.msra.mxu0 0.0
        %2408 = vmatprep.subr.mxu0 0.0
        %2409 = vmatpush1.msra.mxu0 0.0
        %2410 = vmatprep.subr.mxu0 0.0
        %2411 = vmatpush1.msra.mxu0 0.0
        %2412 = vmatprep.subr.mxu0 0.0
        %2413 = vmatpush1.msra.mxu0 0.0
        %2414 = vmatprep.subr.mxu0 0.0
        %2415 = vmatpush1.msra.mxu0 0.0
        %2416 = vmatprep.subr.mxu0 0.0
        %2417 = vmatpush1.msra.mxu0 0.0
        %2418 = vmatprep.subr.mxu0 0.0
        %2419 = vmatpush1.msra.mxu0 0.0
        %2420 = vmatprep.subr.mxu0 0.0
        %2421 = vmatpush1.msra.mxu0 %v2388
        %2422 = vmatprep.subr.mxu0 0.0
        %2423 = vmatpush2.msra.mxu0 0.0
        %2424 = vmatprep.subr.mxu0 0.0
        %2425 = vmatpush2.msra.mxu0 0.0
        %2426 = vmatprep.subr.mxu0 0.0
        %2427 = vmatpush2.msra.mxu0 0.0
        %2428 = vmatprep.subr.mxu0 0.0
        %2429 = vmatpush2.msra.mxu0 0.0
        %2430 = vmatprep.subr.mxu0 0.0
        %2431 = vmatpush2.msra.mxu0 0.0
        %2432 = vmatprep.subr.mxu0 0.0
        %2433 = vmatpush2.msra.mxu0 0.0
        %2434 = vmatprep.subr.mxu0 0.0
        %2435 = vmatpush2.msra.mxu0 0.0
        %2436 = vmatprep.subr.mxu0 0.0
        %2437 = vmatpush2.msra.mxu0 0.0
        %2438 = vmatprep.subr.mxu0 0.0
        %2439 = vmatpush2.msra.mxu0 0.0
        %2440 = vmatprep.subr.mxu0 0.0
        %2441 = vmatpush2.msra.mxu0 0.0
        %2442 = vmatprep.subr.mxu0 0.0
        %2443 = vmatpush2.msra.mxu0 0.0
        %2444 = vmatprep.subr.mxu0 0.0
        %2445 = vmatpush2.msra.mxu0 0.0
        %2446 = vmatprep.subr.mxu0 0.0
        %2447 = vmatpush2.msra.mxu0 0.0
        %2448 = vmatprep.subr.mxu0 0.0
        %2449 = vmatpush2.msra.mxu0 0.0
        %2450 = vmatprep.subr.mxu0 0.0
        %2451 = vmatpush2.msra.mxu0 0.0
        %2452 = vmatprep.subr.mxu0 0.0
        %2453 = vmatpush2.msra.mxu0 0.0
        %2454 = vmatprep.mubr.f32.mxu0 0.0
        %2455 = vmatmul.mubr.f32.gmra.mxu0 %v1677
        %v2456 = vpop.f32.mrf.mxu0
        %v2457 = vadd.f32 %v2379, %v2456
        %v2458 = vpop.f32.mrf.mxu0
        %2459 = vmatprep.mubr.f32.mxu0 0.0
        %2460 = vmatmul.mubr.f32.gmra.mxu0 %v1680
        %v2461 = vpop.f32.mrf.mxu0
        %v2462 = vadd.f32 %v2384, %v2461
        %v2463 = vpop.f32.mrf.mxu0
        %2464 = vdwg.mxu0
        %v2465 = vld [vmem:[%s15] sm:$0x1]
        %v2467 = vlaneseq
        %v2468 = vshrl.u32 %v2467, 7
        %v2469 = vsub.s32 0, %v2468
        %v2470 = vrot.slane %v2465, %v2469
        %v2472 = vadd.f32 %v2457, %v2470
        %v2473 = vadd.f32 %v2462, %v2470
        %vm2474 = vcmask 72704
        %v2476 = vsel %vm2474, %v2138, 0
        %v2479 = vsel %vm2474, %v2139, 0
        %v2482 = vsel %vm2474, %v2305, 0
        %v2485 = vsel %vm2474, %v2306, 0
        %2487 = vmatprep.subr.mxu0 0.0
        %2488 = vmatpush1.xpose.msra.mxu0 0.0
        %2489 = vmatprep.subr.mxu0 0.0
        %2490 = vmatpush1.xpose.msra.mxu0 0.0
        %2491 = vmatprep.subr.mxu0 0.0
        %2492 = vmatpush1.xpose.msra.mxu0 0.0
        %2493 = vmatprep.subr.mxu0 0.0
        %2494 = vmatpush1.xpose.msra.mxu0 0.0
        %2495 = vmatprep.subr.mxu0 0.0
        %2496 = vmatpush1.xpose.msra.mxu0 0.0
        %2497 = vmatprep.subr.mxu0 0.0
        %2498 = vmatpush1.xpose.msra.mxu0 0.0
        %2499 = vmatprep.subr.mxu0 0.0
        %2500 = vmatpush1.xpose.msra.mxu0 0.0
        %2501 = vmatprep.subr.mxu0 0.0
        %2502 = vmatpush1.xpose.msra.mxu0 0.0
        %2503 = vmatprep.subr.mxu0 0.0
        %2504 = vmatpush1.xpose.msra.mxu0 0.0
        %2505 = vmatprep.subr.mxu0 0.0
        %2506 = vmatpush1.xpose.msra.mxu0 0.0
        %2507 = vmatprep.subr.mxu0 0.0
        %2508 = vmatpush1.xpose.msra.mxu0 0.0
        %2509 = vmatprep.subr.mxu0 0.0
        %2510 = vmatpush1.xpose.msra.mxu0 0.0
        %2511 = vmatprep.subr.mxu0 0.0
        %2512 = vmatpush1.xpose.msra.mxu0 0.0
        %2513 = vmatprep.subr.mxu0 0.0
        %2514 = vmatpush1.xpose.msra.mxu0 0.0
        %2515 = vmatprep.subr.mxu0 0.0
        %2516 = vmatpush1.xpose.msra.mxu0 %v2485
        %2517 = vmatprep.subr.mxu0 0.0
        %2518 = vmatpush1.xpose.msra.mxu0 %v2482
        %2519 = vmatprep.subr.mxu0 0.0
        %2520 = vmatpush2.xpose.msra.mxu0 0.0
        %2521 = vmatprep.subr.mxu0 0.0
        %2522 = vmatpush2.xpose.msra.mxu0 0.0
        %2523 = vmatprep.subr.mxu0 0.0
        %2524 = vmatpush2.xpose.msra.mxu0 0.0
        %2525 = vmatprep.subr.mxu0 0.0
        %2526 = vmatpush2.xpose.msra.mxu0 0.0
        %2527 = vmatprep.subr.mxu0 0.0
        %2528 = vmatpush2.xpose.msra.mxu0 0.0
        %2529 = vmatprep.subr.mxu0 0.0
        %2530 = vmatpush2.xpose.msra.mxu0 0.0
        %2531 = vmatprep.subr.mxu0 0.0
        %2532 = vmatpush2.xpose.msra.mxu0 0.0
        %2533 = vmatprep.subr.mxu0 0.0
        %2534 = vmatpush2.xpose.msra.mxu0 0.0
        %2535 = vmatprep.subr.mxu0 0.0
        %2536 = vmatpush2.xpose.msra.mxu0 0.0
        %2537 = vmatprep.subr.mxu0 0.0
        %2538 = vmatpush2.xpose.msra.mxu0 0.0
        %2539 = vmatprep.subr.mxu0 0.0
        %2540 = vmatpush2.xpose.msra.mxu0 0.0
        %2541 = vmatprep.subr.mxu0 0.0
        %2542 = vmatpush2.xpose.msra.mxu0 0.0
        %2543 = vmatprep.subr.mxu0 0.0
        %2544 = vmatpush2.xpose.msra.mxu0 0.0
        %2545 = vmatprep.subr.mxu0 0.0
        %2546 = vmatpush2.xpose.msra.mxu0 0.0
        %2547 = vmatprep.subr.mxu0 0.0
        %2548 = vmatpush2.xpose.msra.mxu0 0.0
        %2549 = vmatprep.subr.mxu0 0.0
        %2550 = vmatpush2.xpose.msra.mxu0 0.0
        %2551 = vmatprep.mubr.f32.mxu0 0.0
        %2552 = vmatmul.mubr.f32.gmra.mxu0 %v2476
        %v2553 = vpop.f32.mrf.mxu0
        %v2554 = vadd.f32 0.0, %v2553
        %v2555 = vpop.f32.mrf.mxu0
        %2556 = vmatprep.mubr.f32.mxu0 0.0
        %2557 = vmatmul.mubr.f32.gmra.mxu0 %v2479
        %v2558 = vpop.f32.mrf.mxu0
        %v2559 = vadd.f32 0.0, %v2558
        %v2560 = vpop.f32.mrf.mxu0
        %2561 = vdwg.mxu0
        %v2562 = vmul.f32 %v2554, 0.33333334
        %v2563 = vmul.f32 %v2559, 0.33333334
        %vm2564 = vcmask 130048
        %v2565 = vsel %vm2564, %v2562, -inf
        %2566 = vmax.xlane.f32.xlu0 %v2565
        %v2567 = vpop.xlane.xlu0 %2566
        %v2568 = vsel %vm2564, %v2563, -inf
        %2569 = vmax.xlane.f32.xlu0 %v2568
        %v2570 = vpop.xlane.xlu0 %2569
        %v2571 = vsub.f32 %v2562, %v2567
        %v2572 = vsub.f32 %v2563, %v2570
        %v2573 = vmul.f32 %v2571, 1.442695
        %v2574 = vpow.pop %v2573
        %v2575 = vmul.f32 %v2572, 1.442695
        %v2576 = vpow.pop %v2575
        %v2577 = vsel %vm2564, %v2574, 0.0
        %2578 = vadd.xlane.f32.xlu0 %v2577
        %v2579 = vpop.xlane.xlu0 %2578
        %v2580 = vsel %vm2564, %v2576, 0.0
        %2581 = vadd.xlane.f32.xlu0 %v2580
        %v2582 = vpop.xlane.xlu0 %2581
        %v2583 = vrcp.pop %v2579
        %v2584 = vrcp.pop %v2582
        %v2585 = vmul.f32 %v2574, %v2583
        %v2586 = vmul.f32 %v2576, %v2584
        %v2588 = vsel %vm2564, %v2585, 0
        %v2591 = vsel %vm2564, %v2586, 0
        %2593 = vmatprep.subr.mxu0 0.0
        %2594 = vmatpush1.msra.mxu0 0.0
        %2595 = vmatprep.subr.mxu0 0.0
        %2596 = vmatpush1.msra.mxu0 0.0
        %2597 = vmatprep.subr.mxu0 0.0
        %2598 = vmatpush1.msra.mxu0 0.0
        %2599 = vmatprep.subr.mxu0 0.0
        %2600 = vmatpush1.msra.mxu0 0.0
        %2601 = vmatprep.subr.mxu0 0.0
        %2602 = vmatpush1.msra.mxu0 0.0
        %2603 = vmatprep.subr.mxu0 0.0
        %2604 = vmatpush1.msra.mxu0 0.0
        %2605 = vmatprep.subr.mxu0 0.0
        %2606 = vmatpush1.msra.mxu0 0.0
        %2607 = vmatprep.subr.mxu0 0.0
        %2608 = vmatpush1.msra.mxu0 0.0
        %2609 = vmatprep.subr.mxu0 0.0
        %2610 = vmatpush1.msra.mxu0 0.0
        %2611 = vmatprep.subr.mxu0 0.0
        %2612 = vmatpush1.msra.mxu0 0.0
        %2613 = vmatprep.subr.mxu0 0.0
        %2614 = vmatpush1.msra.mxu0 0.0
        %2615 = vmatprep.subr.mxu0 0.0
        %2616 = vmatpush1.msra.mxu0 0.0
        %2617 = vmatprep.subr.mxu0 0.0
        %2618 = vmatpush1.msra.mxu0 0.0
        %2619 = vmatprep.subr.mxu0 0.0
        %2620 = vmatpush1.msra.mxu0 0.0
        %2621 = vmatprep.subr.mxu0 0.0
        %2622 = vmatpush1.msra.mxu0 %v2473
        %2623 = vmatprep.subr.mxu0 0.0
        %2624 = vmatpush1.msra.mxu0 %v2472
        %2625 = vmatprep.subr.mxu0 0.0
        %2626 = vmatpush2.msra.mxu0 0.0
        %2627 = vmatprep.subr.mxu0 0.0
        %2628 = vmatpush2.msra.mxu0 0.0
        %2629 = vmatprep.subr.mxu0 0.0
        %2630 = vmatpush2.msra.mxu0 0.0
        %2631 = vmatprep.subr.mxu0 0.0
        %2632 = vmatpush2.msra.mxu0 0.0
        %2633 = vmatprep.subr.mxu0 0.0
        %2634 = vmatpush2.msra.mxu0 0.0
        %2635 = vmatprep.subr.mxu0 0.0
        %2636 = vmatpush2.msra.mxu0 0.0
        %2637 = vmatprep.subr.mxu0 0.0
        %2638 = vmatpush2.msra.mxu0 0.0
        %2639 = vmatprep.subr.mxu0 0.0
        %2640 = vmatpush2.msra.mxu0 0.0
        %2641 = vmatprep.subr.mxu0 0.0
        %2642 = vmatpush2.msra.mxu0 0.0
        %2643 = vmatprep.subr.mxu0 0.0
        %2644 = vmatpush2.msra.mxu0 0.0
        %2645 = vmatprep.subr.mxu0 0.0
        %2646 = vmatpush2.msra.mxu0 0.0
        %2647 = vmatprep.subr.mxu0 0.0
        %2648 = vmatpush2.msra.mxu0 0.0
        %2649 = vmatprep.subr.mxu0 0.0
        %2650 = vmatpush2.msra.mxu0 0.0
        %2651 = vmatprep.subr.mxu0 0.0
        %2652 = vmatpush2.msra.mxu0 0.0
        %2653 = vmatprep.subr.mxu0 0.0
        %2654 = vmatpush2.msra.mxu0 0.0
        %2655 = vmatprep.subr.mxu0 0.0
        %2656 = vmatpush2.msra.mxu0 0.0
        %2657 = vmatprep.mubr.f32.mxu0 0.0
        %2658 = vmatmul.mubr.f32.gmra.mxu0 %v2588
        %v2659 = vpop.f32.mrf.mxu0
        %v2660 = vadd.f32 0.0, %v2659
        %v2661 = vpop.f32.mrf.mxu0
        %2662 = vmatprep.mubr.f32.mxu0 0.0
        %2663 = vmatmul.mubr.f32.gmra.mxu0 %v2591
        %v2664 = vpop.f32.mrf.mxu0
        %v2665 = vadd.f32 0.0, %v2664
        %v2666 = vpop.f32.mrf.mxu0
        %2667 = vdwg.mxu0
        %v2668 = vld [vmem:[%s41] sm:$0xff]
        %v2669 = vld [vmem:[%s41 + $0x8] sm:$0x1]
        %v2670 = vld [vmem:[%s39] sm:$0xff]
        %v2671 = vld [vmem:[%s39 + $0x8] sm:$0x1]
        %s2672 = scalar_lea.vmem %s45, 4
        %v2673 = vld [vmem:[%s2672] sm:$0xf]
        %s2674 = scalar_lea.vmem %s43, 32
        %v2675 = vld [vmem:[%s2674] sm:$0xff]
        %v2676 = vld [vmem:[%s2674 + $0x8] sm:$0xff]
        %v2677 = vld [vmem:[%s2674 + $0x10] sm:$0xff]
        %v2678 = vld [vmem:[%s2674 + $0x18] sm:$0xff]
        %2679 = vmatprep.subr.mxu0 0.0
        %2680 = vmatpush1.msra.mxu0 0.0
        %2681 = vmatprep.subr.mxu0 0.0
        %2682 = vmatpush1.msra.mxu0 0.0
        %2683 = vmatprep.subr.mxu0 0.0
        %2684 = vmatpush1.msra.mxu0 0.0
        %2685 = vmatprep.subr.mxu0 0.0
        %2686 = vmatpush1.msra.mxu0 0.0
        %2687 = vmatprep.subr.mxu0 0.0
        %2688 = vmatpush1.msra.mxu0 0.0
        %2689 = vmatprep.subr.mxu0 0.0
        %2690 = vmatpush1.msra.mxu0 0.0
        %2691 = vmatprep.subr.mxu0 0.0
        %2692 = vmatpush1.msra.mxu0 0.0
        %2693 = vmatprep.subr.mxu0 0.0
        %2694 = vmatpush1.msra.mxu0 0.0
        %2695 = vmatprep.subr.mxu0 0.0
        %2696 = vmatpush1.msra.mxu0 0.0
        %2697 = vmatprep.subr.mxu0 0.0
        %2698 = vmatpush1.msra.mxu0 0.0
        %2699 = vmatprep.subr.mxu0 0.0
        %2700 = vmatpush1.msra.mxu0 0.0
        %2701 = vmatprep.subr.mxu0 0.0
        %2702 = vmatpush1.msra.mxu0 0.0
        %2703 = vmatprep.subr.mxu0 0.0
        %2704 = vmatpush1.msra.mxu0 %v2678
        %2705 = vmatprep.subr.mxu0 0.0
        %2706 = vmatpush1.msra.mxu0 %v2677
        %2707 = vmatprep.subr.mxu0 0.0
        %2708 = vmatpush1.msra.mxu0 %v2676
        %2709 = vmatprep.subr.mxu0 0.0
        %2710 = vmatpush1.msra.mxu0 %v2675
        %2711 = vmatprep.subr.mxu0 0.0
        %2712 = vmatpush2.msra.mxu0 0.0
        %2713 = vmatprep.subr.mxu0 0.0
        %2714 = vmatpush2.msra.mxu0 0.0
        %2715 = vmatprep.subr.mxu0 0.0
        %2716 = vmatpush2.msra.mxu0 0.0
        %2717 = vmatprep.subr.mxu0 0.0
        %2718 = vmatpush2.msra.mxu0 0.0
        %2719 = vmatprep.subr.mxu0 0.0
        %2720 = vmatpush2.msra.mxu0 0.0
        %2721 = vmatprep.subr.mxu0 0.0
        %2722 = vmatpush2.msra.mxu0 0.0
        %2723 = vmatprep.subr.mxu0 0.0
        %2724 = vmatpush2.msra.mxu0 0.0
        %2725 = vmatprep.subr.mxu0 0.0
        %2726 = vmatpush2.msra.mxu0 0.0
        %2727 = vmatprep.subr.mxu0 0.0
        %2728 = vmatpush2.msra.mxu0 0.0
        %2729 = vmatprep.subr.mxu0 0.0
        %2730 = vmatpush2.msra.mxu0 0.0
        %2731 = vmatprep.subr.mxu0 0.0
        %2732 = vmatpush2.msra.mxu0 0.0
        %2733 = vmatprep.subr.mxu0 0.0
        %2734 = vmatpush2.msra.mxu0 0.0
        %2735 = vmatprep.subr.mxu0 0.0
        %2736 = vmatpush2.msra.mxu0 0.0
        %2737 = vmatprep.subr.mxu0 0.0
        %2738 = vmatpush2.msra.mxu0 0.0
        %2739 = vmatprep.subr.mxu0 0.0
        %2740 = vmatpush2.msra.mxu0 0.0
        %2741 = vmatprep.subr.mxu0 0.0
        %2742 = vmatpush2.msra.mxu0 0.0
        %2743 = vmatprep.mubr.f32.mxu0 0.0
        %2744 = vmatmul.mubr.f32.gmra.mxu0 %v1973
        %v2745 = vpop.f32.mrf.mxu0
        %v2746 = vadd.f32 0.0, %v2745
        %v2747 = vpop.f32.mrf.mxu0
        %2748 = vmatprep.mubr.f32.mxu0 0.0
        %2749 = vmatmul.mubr.f32.gmra.mxu0 %v1976
        %v2750 = vpop.f32.mrf.mxu0
        %v2751 = vadd.f32 0.0, %v2750
        %v2752 = vpop.f32.mrf.mxu0
        %2753 = vdwg.mxu0
        %v2755 = vsel %vm1682, %v2673, 0
        %2757 = vmatprep.subr.mxu0 0.0
        %2758 = vmatpush1.msra.mxu0 0.0
        %2759 = vmatprep.subr.mxu0 0.0
        %2760 = vmatpush1.msra.mxu0 0.0
        %2761 = vmatprep.subr.mxu0 0.0
        %2762 = vmatpush1.msra.mxu0 0.0
        %2763 = vmatprep.subr.mxu0 0.0
        %2764 = vmatpush1.msra.mxu0 0.0
        %2765 = vmatprep.subr.mxu0 0.0
        %2766 = vmatpush1.msra.mxu0 0.0
        %2767 = vmatprep.subr.mxu0 0.0
        %2768 = vmatpush1.msra.mxu0 0.0
        %2769 = vmatprep.subr.mxu0 0.0
        %2770 = vmatpush1.msra.mxu0 0.0
        %2771 = vmatprep.subr.mxu0 0.0
        %2772 = vmatpush1.msra.mxu0 0.0
        %2773 = vmatprep.subr.mxu0 0.0
        %2774 = vmatpush1.msra.mxu0 0.0
        %2775 = vmatprep.subr.mxu0 0.0
        %2776 = vmatpush1.msra.mxu0 0.0
        %2777 = vmatprep.subr.mxu0 0.0
        %2778 = vmatpush1.msra.mxu0 0.0
        %2779 = vmatprep.subr.mxu0 0.0
        %2780 = vmatpush1.msra.mxu0 0.0
        %2781 = vmatprep.subr.mxu0 0.0
        %2782 = vmatpush1.msra.mxu0 0.0
        %2783 = vmatprep.subr.mxu0 0.0
        %2784 = vmatpush1.msra.mxu0 0.0
        %2785 = vmatprep.subr.mxu0 0.0
        %2786 = vmatpush1.msra.mxu0 0.0
        %2787 = vmatprep.subr.mxu0 0.0
        %2788 = vmatpush1.msra.mxu0 %v2755
        %2789 = vmatprep.subr.mxu0 0.0
        %2790 = vmatpush2.msra.mxu0 0.0
        %2791 = vmatprep.subr.mxu0 0.0
        %2792 = vmatpush2.msra.mxu0 0.0
        %2793 = vmatprep.subr.mxu0 0.0
        %2794 = vmatpush2.msra.mxu0 0.0
        %2795 = vmatprep.subr.mxu0 0.0
        %2796 = vmatpush2.msra.mxu0 0.0
        %2797 = vmatprep.subr.mxu0 0.0
        %2798 = vmatpush2.msra.mxu0 0.0
        %2799 = vmatprep.subr.mxu0 0.0
        %2800 = vmatpush2.msra.mxu0 0.0
        %2801 = vmatprep.subr.mxu0 0.0
        %2802 = vmatpush2.msra.mxu0 0.0
        %2803 = vmatprep.subr.mxu0 0.0
        %2804 = vmatpush2.msra.mxu0 0.0
        %2805 = vmatprep.subr.mxu0 0.0
        %2806 = vmatpush2.msra.mxu0 0.0
        %2807 = vmatprep.subr.mxu0 0.0
        %2808 = vmatpush2.msra.mxu0 0.0
        %2809 = vmatprep.subr.mxu0 0.0
        %2810 = vmatpush2.msra.mxu0 0.0
        %2811 = vmatprep.subr.mxu0 0.0
        %2812 = vmatpush2.msra.mxu0 0.0
        %2813 = vmatprep.subr.mxu0 0.0
        %2814 = vmatpush2.msra.mxu0 0.0
        %2815 = vmatprep.subr.mxu0 0.0
        %2816 = vmatpush2.msra.mxu0 0.0
        %2817 = vmatprep.subr.mxu0 0.0
        %2818 = vmatpush2.msra.mxu0 0.0
        %2819 = vmatprep.subr.mxu0 0.0
        %2820 = vmatpush2.msra.mxu0 0.0
        %2821 = vmatprep.mubr.f32.mxu0 0.0
        %2822 = vmatmul.mubr.f32.gmra.mxu0 %v1677
        %v2823 = vpop.f32.mrf.mxu0
        %v2824 = vadd.f32 %v2746, %v2823
        %v2825 = vpop.f32.mrf.mxu0
        %2826 = vmatprep.mubr.f32.mxu0 0.0
        %2827 = vmatmul.mubr.f32.gmra.mxu0 %v1680
        %v2828 = vpop.f32.mrf.mxu0
        %v2829 = vadd.f32 %v2751, %v2828
        %v2830 = vpop.f32.mrf.mxu0
        %2831 = vdwg.mxu0
        %s2832 = scalar_lea.vmem %s13, 1
        %v2833 = vld [vmem:[%s2832] sm:$0x1]
        %v2835 = vlaneseq
        %v2836 = vshrl.u32 %v2835, 7
        %v2837 = vsub.s32 0, %v2836
        %v2838 = vrot.slane %v2833, %v2837
        %v2840 = vadd.f32 %v2824, %v2838
        %v2841 = vadd.f32 %v2829, %v2838
        %s2842 = scalar_lea.vmem %s37, 4
        %v2843 = vld [vmem:[%s2842] sm:$0xf]
        %s2844 = scalar_lea.vmem %s35, 32
        %v2845 = vld [vmem:[%s2844] sm:$0xff]
        %v2846 = vld [vmem:[%s2844 + $0x8] sm:$0xff]
        %v2847 = vld [vmem:[%s2844 + $0x10] sm:$0xff]
        %v2848 = vld [vmem:[%s2844 + $0x18] sm:$0xff]
        %2849 = vmatprep.subr.mxu0 0.0
        %2850 = vmatpush1.msra.mxu0 0.0
        %2851 = vmatprep.subr.mxu0 0.0
        %2852 = vmatpush1.msra.mxu0 0.0
        %2853 = vmatprep.subr.mxu0 0.0
        %2854 = vmatpush1.msra.mxu0 0.0
        %2855 = vmatprep.subr.mxu0 0.0
        %2856 = vmatpush1.msra.mxu0 0.0
        %2857 = vmatprep.subr.mxu0 0.0
        %2858 = vmatpush1.msra.mxu0 0.0
        %2859 = vmatprep.subr.mxu0 0.0
        %2860 = vmatpush1.msra.mxu0 0.0
        %2861 = vmatprep.subr.mxu0 0.0
        %2862 = vmatpush1.msra.mxu0 0.0
        %2863 = vmatprep.subr.mxu0 0.0
        %2864 = vmatpush1.msra.mxu0 0.0
        %2865 = vmatprep.subr.mxu0 0.0
        %2866 = vmatpush1.msra.mxu0 0.0
        %2867 = vmatprep.subr.mxu0 0.0
        %2868 = vmatpush1.msra.mxu0 0.0
        %2869 = vmatprep.subr.mxu0 0.0
        %2870 = vmatpush1.msra.mxu0 0.0
        %2871 = vmatprep.subr.mxu0 0.0
        %2872 = vmatpush1.msra.mxu0 0.0
        %2873 = vmatprep.subr.mxu0 0.0
        %2874 = vmatpush1.msra.mxu0 %v2848
        %2875 = vmatprep.subr.mxu0 0.0
        %2876 = vmatpush1.msra.mxu0 %v2847
        %2877 = vmatprep.subr.mxu0 0.0
        %2878 = vmatpush1.msra.mxu0 %v2846
        %2879 = vmatprep.subr.mxu0 0.0
        %2880 = vmatpush1.msra.mxu0 %v2845
        %2881 = vmatprep.subr.mxu0 0.0
        %2882 = vmatpush2.msra.mxu0 0.0
        %2883 = vmatprep.subr.mxu0 0.0
        %2884 = vmatpush2.msra.mxu0 0.0
        %2885 = vmatprep.subr.mxu0 0.0
        %2886 = vmatpush2.msra.mxu0 0.0
        %2887 = vmatprep.subr.mxu0 0.0
        %2888 = vmatpush2.msra.mxu0 0.0
        %2889 = vmatprep.subr.mxu0 0.0
        %2890 = vmatpush2.msra.mxu0 0.0
        %2891 = vmatprep.subr.mxu0 0.0
        %2892 = vmatpush2.msra.mxu0 0.0
        %2893 = vmatprep.subr.mxu0 0.0
        %2894 = vmatpush2.msra.mxu0 0.0
        %2895 = vmatprep.subr.mxu0 0.0
        %2896 = vmatpush2.msra.mxu0 0.0
        %2897 = vmatprep.subr.mxu0 0.0
        %2898 = vmatpush2.msra.mxu0 0.0
        %2899 = vmatprep.subr.mxu0 0.0
        %2900 = vmatpush2.msra.mxu0 0.0
        %2901 = vmatprep.subr.mxu0 0.0
        %2902 = vmatpush2.msra.mxu0 0.0
        %2903 = vmatprep.subr.mxu0 0.0
        %2904 = vmatpush2.msra.mxu0 0.0
        %2905 = vmatprep.subr.mxu0 0.0
        %2906 = vmatpush2.msra.mxu0 0.0
        %2907 = vmatprep.subr.mxu0 0.0
        %2908 = vmatpush2.msra.mxu0 0.0
        %2909 = vmatprep.subr.mxu0 0.0
        %2910 = vmatpush2.msra.mxu0 0.0
        %2911 = vmatprep.subr.mxu0 0.0
        %2912 = vmatpush2.msra.mxu0 0.0
        %2913 = vmatprep.mubr.f32.mxu0 0.0
        %2914 = vmatmul.mubr.f32.gmra.mxu0 %v1973
        %v2915 = vpop.f32.mrf.mxu0
        %v2916 = vadd.f32 0.0, %v2915
        %v2917 = vpop.f32.mrf.mxu0
        %2918 = vmatprep.mubr.f32.mxu0 0.0
        %2919 = vmatmul.mubr.f32.gmra.mxu0 %v1976
        %v2920 = vpop.f32.mrf.mxu0
        %v2921 = vadd.f32 0.0, %v2920
        %v2922 = vpop.f32.mrf.mxu0
        %2923 = vdwg.mxu0
        %v2925 = vsel %vm1682, %v2843, 0
        %2927 = vmatprep.subr.mxu0 0.0
        %2928 = vmatpush1.msra.mxu0 0.0
        %2929 = vmatprep.subr.mxu0 0.0
        %2930 = vmatpush1.msra.mxu0 0.0
        %2931 = vmatprep.subr.mxu0 0.0
        %2932 = vmatpush1.msra.mxu0 0.0
        %2933 = vmatprep.subr.mxu0 0.0
        %2934 = vmatpush1.msra.mxu0 0.0
        %2935 = vmatprep.subr.mxu0 0.0
        %2936 = vmatpush1.msra.mxu0 0.0
        %2937 = vmatprep.subr.mxu0 0.0
        %2938 = vmatpush1.msra.mxu0 0.0
        %2939 = vmatprep.subr.mxu0 0.0
        %2940 = vmatpush1.msra.mxu0 0.0
        %2941 = vmatprep.subr.mxu0 0.0
        %2942 = vmatpush1.msra.mxu0 0.0
        %2943 = vmatprep.subr.mxu0 0.0
        %2944 = vmatpush1.msra.mxu0 0.0
        %2945 = vmatprep.subr.mxu0 0.0
        %2946 = vmatpush1.msra.mxu0 0.0
        %2947 = vmatprep.subr.mxu0 0.0
        %2948 = vmatpush1.msra.mxu0 0.0
        %2949 = vmatprep.subr.mxu0 0.0
        %2950 = vmatpush1.msra.mxu0 0.0
        %2951 = vmatprep.subr.mxu0 0.0
        %2952 = vmatpush1.msra.mxu0 0.0
        %2953 = vmatprep.subr.mxu0 0.0
        %2954 = vmatpush1.msra.mxu0 0.0
        %2955 = vmatprep.subr.mxu0 0.0
        %2956 = vmatpush1.msra.mxu0 0.0
        %2957 = vmatprep.subr.mxu0 0.0
        %2958 = vmatpush1.msra.mxu0 %v2925
        %2959 = vmatprep.subr.mxu0 0.0
        %2960 = vmatpush2.msra.mxu0 0.0
        %2961 = vmatprep.subr.mxu0 0.0
        %2962 = vmatpush2.msra.mxu0 0.0
        %2963 = vmatprep.subr.mxu0 0.0
        %2964 = vmatpush2.msra.mxu0 0.0
        %2965 = vmatprep.subr.mxu0 0.0
        %2966 = vmatpush2.msra.mxu0 0.0
        %2967 = vmatprep.subr.mxu0 0.0
        %2968 = vmatpush2.msra.mxu0 0.0
        %2969 = vmatprep.subr.mxu0 0.0
        %2970 = vmatpush2.msra.mxu0 0.0
        %2971 = vmatprep.subr.mxu0 0.0
        %2972 = vmatpush2.msra.mxu0 0.0
        %2973 = vmatprep.subr.mxu0 0.0
        %2974 = vmatpush2.msra.mxu0 0.0
        %2975 = vmatprep.subr.mxu0 0.0
        %2976 = vmatpush2.msra.mxu0 0.0
        %2977 = vmatprep.subr.mxu0 0.0
        %2978 = vmatpush2.msra.mxu0 0.0
        %2979 = vmatprep.subr.mxu0 0.0
        %2980 = vmatpush2.msra.mxu0 0.0
        %2981 = vmatprep.subr.mxu0 0.0
        %2982 = vmatpush2.msra.mxu0 0.0
        %2983 = vmatprep.subr.mxu0 0.0
        %2984 = vmatpush2.msra.mxu0 0.0
        %2985 = vmatprep.subr.mxu0 0.0
        %2986 = vmatpush2.msra.mxu0 0.0
        %2987 = vmatprep.subr.mxu0 0.0
        %2988 = vmatpush2.msra.mxu0 0.0
        %2989 = vmatprep.subr.mxu0 0.0
        %2990 = vmatpush2.msra.mxu0 0.0
        %2991 = vmatprep.mubr.f32.mxu0 0.0
        %2992 = vmatmul.mubr.f32.gmra.mxu0 %v1677
        %v2993 = vpop.f32.mrf.mxu0
        %v2994 = vadd.f32 %v2916, %v2993
        %v2995 = vpop.f32.mrf.mxu0
        %2996 = vmatprep.mubr.f32.mxu0 0.0
        %2997 = vmatmul.mubr.f32.gmra.mxu0 %v1680
        %v2998 = vpop.f32.mrf.mxu0
        %v2999 = vadd.f32 %v2921, %v2998
        %v3000 = vpop.f32.mrf.mxu0
        %3001 = vdwg.mxu0
        %s3002 = scalar_lea.vmem %s7, 1
        %v3003 = vld [vmem:[%s3002] sm:$0x1]
        %v3005 = vlaneseq
        %v3006 = vshrl.u32 %v3005, 7
        %v3007 = vsub.s32 0, %v3006
        %v3008 = vrot.slane %v3003, %v3007
        %v3010 = vadd.f32 %v2994, %v3008
        %v3011 = vadd.f32 %v2999, %v3008
        %s3012 = scalar_lea.vmem %s49, 4
        %v3013 = vld [vmem:[%s3012] sm:$0xf]
        %s3014 = scalar_lea.vmem %s47, 32
        %v3015 = vld [vmem:[%s3014] sm:$0xff]
        %v3016 = vld [vmem:[%s3014 + $0x8] sm:$0xff]
        %v3017 = vld [vmem:[%s3014 + $0x10] sm:$0xff]
        %v3018 = vld [vmem:[%s3014 + $0x18] sm:$0xff]
        %3019 = vmatprep.subr.mxu0 0.0
        %3020 = vmatpush1.msra.mxu0 0.0
        %3021 = vmatprep.subr.mxu0 0.0
        %3022 = vmatpush1.msra.mxu0 0.0
        %3023 = vmatprep.subr.mxu0 0.0
        %3024 = vmatpush1.msra.mxu0 0.0
        %3025 = vmatprep.subr.mxu0 0.0
        %3026 = vmatpush1.msra.mxu0 0.0
        %3027 = vmatprep.subr.mxu0 0.0
        %3028 = vmatpush1.msra.mxu0 0.0
        %3029 = vmatprep.subr.mxu0 0.0
        %3030 = vmatpush1.msra.mxu0 0.0
        %3031 = vmatprep.subr.mxu0 0.0
        %3032 = vmatpush1.msra.mxu0 0.0
        %3033 = vmatprep.subr.mxu0 0.0
        %3034 = vmatpush1.msra.mxu0 0.0
        %3035 = vmatprep.subr.mxu0 0.0
        %3036 = vmatpush1.msra.mxu0 0.0
        %3037 = vmatprep.subr.mxu0 0.0
        %3038 = vmatpush1.msra.mxu0 0.0
        %3039 = vmatprep.subr.mxu0 0.0
        %3040 = vmatpush1.msra.mxu0 0.0
        %3041 = vmatprep.subr.mxu0 0.0
        %3042 = vmatpush1.msra.mxu0 0.0
        %3043 = vmatprep.subr.mxu0 0.0
        %3044 = vmatpush1.msra.mxu0 %v3018
        %3045 = vmatprep.subr.mxu0 0.0
        %3046 = vmatpush1.msra.mxu0 %v3017
        %3047 = vmatprep.subr.mxu0 0.0
        %3048 = vmatpush1.msra.mxu0 %v3016
        %3049 = vmatprep.subr.mxu0 0.0
        %3050 = vmatpush1.msra.mxu0 %v3015
        %3051 = vmatprep.subr.mxu0 0.0
        %3052 = vmatpush2.msra.mxu0 0.0
        %3053 = vmatprep.subr.mxu0 0.0
        %3054 = vmatpush2.msra.mxu0 0.0
        %3055 = vmatprep.subr.mxu0 0.0
        %3056 = vmatpush2.msra.mxu0 0.0
        %3057 = vmatprep.subr.mxu0 0.0
        %3058 = vmatpush2.msra.mxu0 0.0
        %3059 = vmatprep.subr.mxu0 0.0
        %3060 = vmatpush2.msra.mxu0 0.0
        %3061 = vmatprep.subr.mxu0 0.0
        %3062 = vmatpush2.msra.mxu0 0.0
        %3063 = vmatprep.subr.mxu0 0.0
        %3064 = vmatpush2.msra.mxu0 0.0
        %3065 = vmatprep.subr.mxu0 0.0
        %3066 = vmatpush2.msra.mxu0 0.0
        %3067 = vmatprep.subr.mxu0 0.0
        %3068 = vmatpush2.msra.mxu0 0.0
        %3069 = vmatprep.subr.mxu0 0.0
        %3070 = vmatpush2.msra.mxu0 0.0
        %3071 = vmatprep.subr.mxu0 0.0
        %3072 = vmatpush2.msra.mxu0 0.0
        %3073 = vmatprep.subr.mxu0 0.0
        %3074 = vmatpush2.msra.mxu0 0.0
        %3075 = vmatprep.subr.mxu0 0.0
        %3076 = vmatpush2.msra.mxu0 0.0
        %3077 = vmatprep.subr.mxu0 0.0
        %3078 = vmatpush2.msra.mxu0 0.0
        %3079 = vmatprep.subr.mxu0 0.0
        %3080 = vmatpush2.msra.mxu0 0.0
        %3081 = vmatprep.subr.mxu0 0.0
        %3082 = vmatpush2.msra.mxu0 0.0
        %3083 = vmatprep.mubr.f32.mxu0 0.0
        %3084 = vmatmul.mubr.f32.gmra.mxu0 %v1973
        %v3085 = vpop.f32.mrf.mxu0
        %v3086 = vadd.f32 0.0, %v3085
        %v3087 = vpop.f32.mrf.mxu0
        %3088 = vmatprep.mubr.f32.mxu0 0.0
        %3089 = vmatmul.mubr.f32.gmra.mxu0 %v1976
        %v3090 = vpop.f32.mrf.mxu0
        %v3091 = vadd.f32 0.0, %v3090
        %v3092 = vpop.f32.mrf.mxu0
        %3093 = vdwg.mxu0
        %v3095 = vsel %vm1682, %v3013, 0
        %3097 = vmatprep.subr.mxu0 0.0
        %3098 = vmatpush1.msra.mxu0 0.0
        %3099 = vmatprep.subr.mxu0 0.0
        %3100 = vmatpush1.msra.mxu0 0.0
        %3101 = vmatprep.subr.mxu0 0.0
        %3102 = vmatpush1.msra.mxu0 0.0
        %3103 = vmatprep.subr.mxu0 0.0
        %3104 = vmatpush1.msra.mxu0 0.0
        %3105 = vmatprep.subr.mxu0 0.0
        %3106 = vmatpush1.msra.mxu0 0.0
        %3107 = vmatprep.subr.mxu0 0.0
        %3108 = vmatpush1.msra.mxu0 0.0
        %3109 = vmatprep.subr.mxu0 0.0
        %3110 = vmatpush1.msra.mxu0 0.0
        %3111 = vmatprep.subr.mxu0 0.0
        %3112 = vmatpush1.msra.mxu0 0.0
        %3113 = vmatprep.subr.mxu0 0.0
        %3114 = vmatpush1.msra.mxu0 0.0
        %3115 = vmatprep.subr.mxu0 0.0
        %3116 = vmatpush1.msra.mxu0 0.0
        %3117 = vmatprep.subr.mxu0 0.0
        %3118 = vmatpush1.msra.mxu0 0.0
        %3119 = vmatprep.subr.mxu0 0.0
        %3120 = vmatpush1.msra.mxu0 0.0
        %3121 = vmatprep.subr.mxu0 0.0
        %3122 = vmatpush1.msra.mxu0 0.0
        %3123 = vmatprep.subr.mxu0 0.0
        %3124 = vmatpush1.msra.mxu0 0.0
        %3125 = vmatprep.subr.mxu0 0.0
        %3126 = vmatpush1.msra.mxu0 0.0
        %3127 = vmatprep.subr.mxu0 0.0
        %3128 = vmatpush1.msra.mxu0 %v3095
        %3129 = vmatprep.subr.mxu0 0.0
        %3130 = vmatpush2.msra.mxu0 0.0
        %3131 = vmatprep.subr.mxu0 0.0
        %3132 = vmatpush2.msra.mxu0 0.0
        %3133 = vmatprep.subr.mxu0 0.0
        %3134 = vmatpush2.msra.mxu0 0.0
        %3135 = vmatprep.subr.mxu0 0.0
        %3136 = vmatpush2.msra.mxu0 0.0
        %3137 = vmatprep.subr.mxu0 0.0
        %3138 = vmatpush2.msra.mxu0 0.0
        %3139 = vmatprep.subr.mxu0 0.0
        %3140 = vmatpush2.msra.mxu0 0.0
        %3141 = vmatprep.subr.mxu0 0.0
        %3142 = vmatpush2.msra.mxu0 0.0
        %3143 = vmatprep.subr.mxu0 0.0
        %3144 = vmatpush2.msra.mxu0 0.0
        %3145 = vmatprep.subr.mxu0 0.0
        %3146 = vmatpush2.msra.mxu0 0.0
        %3147 = vmatprep.subr.mxu0 0.0
        %3148 = vmatpush2.msra.mxu0 0.0
        %3149 = vmatprep.subr.mxu0 0.0
        %3150 = vmatpush2.msra.mxu0 0.0
        %3151 = vmatprep.subr.mxu0 0.0
        %3152 = vmatpush2.msra.mxu0 0.0
        %3153 = vmatprep.subr.mxu0 0.0
        %3154 = vmatpush2.msra.mxu0 0.0
        %3155 = vmatprep.subr.mxu0 0.0
        %3156 = vmatpush2.msra.mxu0 0.0
        %3157 = vmatprep.subr.mxu0 0.0
        %3158 = vmatpush2.msra.mxu0 0.0
        %3159 = vmatprep.subr.mxu0 0.0
        %3160 = vmatpush2.msra.mxu0 0.0
        %3161 = vmatprep.mubr.f32.mxu0 0.0
        %3162 = vmatmul.mubr.f32.gmra.mxu0 %v1677
        %v3163 = vpop.f32.mrf.mxu0
        %v3164 = vadd.f32 %v3086, %v3163
        %v3165 = vpop.f32.mrf.mxu0
        %3166 = vmatprep.mubr.f32.mxu0 0.0
        %3167 = vmatmul.mubr.f32.gmra.mxu0 %v1680
        %v3168 = vpop.f32.mrf.mxu0
        %v3169 = vadd.f32 %v3091, %v3168
        %v3170 = vpop.f32.mrf.mxu0
        %3171 = vdwg.mxu0
        %s3172 = scalar_lea.vmem %s15, 1
        %v3173 = vld [vmem:[%s3172] sm:$0x1]
        %v3175 = vlaneseq
        %v3176 = vshrl.u32 %v3175, 7
        %v3177 = vsub.s32 0, %v3176
        %v3178 = vrot.slane %v3173, %v3177
        %v3180 = vadd.f32 %v3164, %v3178
        %v3181 = vadd.f32 %v3169, %v3178
        %v3183 = vsel %vm2474, %v2840, 0
        %v3186 = vsel %vm2474, %v2841, 0
        %v3189 = vsel %vm2474, %v3010, 0
        %v3192 = vsel %vm2474, %v3011, 0
        %3194 = vmatprep.subr.mxu0 0.0
        %3195 = vmatpush1.xpose.msra.mxu0 0.0
        %3196 = vmatprep.subr.mxu0 0.0
        %3197 = vmatpush1.xpose.msra.mxu0 0.0
        %3198 = vmatprep.subr.mxu0 0.0
        %3199 = vmatpush1.xpose.msra.mxu0 0.0
        %3200 = vmatprep.subr.mxu0 0.0
        %3201 = vmatpush1.xpose.msra.mxu0 0.0
        %3202 = vmatprep.subr.mxu0 0.0
        %3203 = vmatpush1.xpose.msra.mxu0 0.0
        %3204 = vmatprep.subr.mxu0 0.0
        %3205 = vmatpush1.xpose.msra.mxu0 0.0
        %3206 = vmatprep.subr.mxu0 0.0
        %3207 = vmatpush1.xpose.msra.mxu0 0.0
        %3208 = vmatprep.subr.mxu0 0.0
        %3209 = vmatpush1.xpose.msra.mxu0 0.0
        %3210 = vmatprep.subr.mxu0 0.0
        %3211 = vmatpush1.xpose.msra.mxu0 0.0
        %3212 = vmatprep.subr.mxu0 0.0
        %3213 = vmatpush1.xpose.msra.mxu0 0.0
        %3214 = vmatprep.subr.mxu0 0.0
        %3215 = vmatpush1.xpose.msra.mxu0 0.0
        %3216 = vmatprep.subr.mxu0 0.0
        %3217 = vmatpush1.xpose.msra.mxu0 0.0
        %3218 = vmatprep.subr.mxu0 0.0
        %3219 = vmatpush1.xpose.msra.mxu0 0.0
        %3220 = vmatprep.subr.mxu0 0.0
        %3221 = vmatpush1.xpose.msra.mxu0 0.0
        %3222 = vmatprep.subr.mxu0 0.0
        %3223 = vmatpush1.xpose.msra.mxu0 %v3192
        %3224 = vmatprep.subr.mxu0 0.0
        %3225 = vmatpush1.xpose.msra.mxu0 %v3189
        %3226 = vmatprep.subr.mxu0 0.0
        %3227 = vmatpush2.xpose.msra.mxu0 0.0
        %3228 = vmatprep.subr.mxu0 0.0
        %3229 = vmatpush2.xpose.msra.mxu0 0.0
        %3230 = vmatprep.subr.mxu0 0.0
        %3231 = vmatpush2.xpose.msra.mxu0 0.0
        %3232 = vmatprep.subr.mxu0 0.0
        %3233 = vmatpush2.xpose.msra.mxu0 0.0
        %3234 = vmatprep.subr.mxu0 0.0
        %3235 = vmatpush2.xpose.msra.mxu0 0.0
        %3236 = vmatprep.subr.mxu0 0.0
        %3237 = vmatpush2.xpose.msra.mxu0 0.0
        %3238 = vmatprep.subr.mxu0 0.0
        %3239 = vmatpush2.xpose.msra.mxu0 0.0
        %3240 = vmatprep.subr.mxu0 0.0
        %3241 = vmatpush2.xpose.msra.mxu0 0.0
        %3242 = vmatprep.subr.mxu0 0.0
        %3243 = vmatpush2.xpose.msra.mxu0 0.0
        %3244 = vmatprep.subr.mxu0 0.0
        %3245 = vmatpush2.xpose.msra.mxu0 0.0
        %3246 = vmatprep.subr.mxu0 0.0
        %3247 = vmatpush2.xpose.msra.mxu0 0.0
        %3248 = vmatprep.subr.mxu0 0.0
        %3249 = vmatpush2.xpose.msra.mxu0 0.0
        %3250 = vmatprep.subr.mxu0 0.0
        %3251 = vmatpush2.xpose.msra.mxu0 0.0
        %3252 = vmatprep.subr.mxu0 0.0
        %3253 = vmatpush2.xpose.msra.mxu0 0.0
        %3254 = vmatprep.subr.mxu0 0.0
        %3255 = vmatpush2.xpose.msra.mxu0 0.0
        %3256 = vmatprep.subr.mxu0 0.0
        %3257 = vmatpush2.xpose.msra.mxu0 0.0
        %3258 = vmatprep.mubr.f32.mxu0 0.0
        %3259 = vmatmul.mubr.f32.gmra.mxu0 %v3183
        %v3260 = vpop.f32.mrf.mxu0
        %v3261 = vadd.f32 0.0, %v3260
        %v3262 = vpop.f32.mrf.mxu0
        %3263 = vmatprep.mubr.f32.mxu0 0.0
        %3264 = vmatmul.mubr.f32.gmra.mxu0 %v3186
        %v3265 = vpop.f32.mrf.mxu0
        %v3266 = vadd.f32 0.0, %v3265
        %v3267 = vpop.f32.mrf.mxu0
        %3268 = vdwg.mxu0
        %v3269 = vmul.f32 %v3261, 0.33333334
        %v3270 = vmul.f32 %v3266, 0.33333334
        %v3271 = vsel %vm2564, %v3269, -inf
        %3272 = vmax.xlane.f32.xlu0 %v3271
        %v3273 = vpop.xlane.xlu0 %3272
        %v3274 = vsel %vm2564, %v3270, -inf
        %3275 = vmax.xlane.f32.xlu0 %v3274
        %v3276 = vpop.xlane.xlu0 %3275
        %v3277 = vsub.f32 %v3269, %v3273
        %v3278 = vsub.f32 %v3270, %v3276
        %v3279 = vmul.f32 %v3277, 1.442695
        %v3280 = vpow.pop %v3279
        %v3281 = vmul.f32 %v3278, 1.442695
        %v3282 = vpow.pop %v3281
        %v3283 = vsel %vm2564, %v3280, 0.0
        %3284 = vadd.xlane.f32.xlu0 %v3283
        %v3285 = vpop.xlane.xlu0 %3284
        %v3286 = vsel %vm2564, %v3282, 0.0
        %3287 = vadd.xlane.f32.xlu0 %v3286
        %v3288 = vpop.xlane.xlu0 %3287
        %v3289 = vrcp.pop %v3285
        %v3290 = vrcp.pop %v3288
        %v3291 = vmul.f32 %v3280, %v3289
        %v3292 = vmul.f32 %v3282, %v3290
        %v3294 = vsel %vm2564, %v3291, 0
        %v3297 = vsel %vm2564, %v3292, 0
        %3299 = vmatprep.subr.mxu0 0.0
        %3300 = vmatpush1.msra.mxu0 0.0
        %3301 = vmatprep.subr.mxu0 0.0
        %3302 = vmatpush1.msra.mxu0 0.0
        %3303 = vmatprep.subr.mxu0 0.0
        %3304 = vmatpush1.msra.mxu0 0.0
        %3305 = vmatprep.subr.mxu0 0.0
        %3306 = vmatpush1.msra.mxu0 0.0
        %3307 = vmatprep.subr.mxu0 0.0
        %3308 = vmatpush1.msra.mxu0 0.0
        %3309 = vmatprep.subr.mxu0 0.0
        %3310 = vmatpush1.msra.mxu0 0.0
        %3311 = vmatprep.subr.mxu0 0.0
        %3312 = vmatpush1.msra.mxu0 0.0
        %3313 = vmatprep.subr.mxu0 0.0
        %3314 = vmatpush1.msra.mxu0 0.0
        %3315 = vmatprep.subr.mxu0 0.0
        %3316 = vmatpush1.msra.mxu0 0.0
        %3317 = vmatprep.subr.mxu0 0.0
        %3318 = vmatpush1.msra.mxu0 0.0
        %3319 = vmatprep.subr.mxu0 0.0
        %3320 = vmatpush1.msra.mxu0 0.0
        %3321 = vmatprep.subr.mxu0 0.0
        %3322 = vmatpush1.msra.mxu0 0.0
        %3323 = vmatprep.subr.mxu0 0.0
        %3324 = vmatpush1.msra.mxu0 0.0
        %3325 = vmatprep.subr.mxu0 0.0
        %3326 = vmatpush1.msra.mxu0 0.0
        %3327 = vmatprep.subr.mxu0 0.0
        %3328 = vmatpush1.msra.mxu0 %v3181
        %3329 = vmatprep.subr.mxu0 0.0
        %3330 = vmatpush1.msra.mxu0 %v3180
        %3331 = vmatprep.subr.mxu0 0.0
        %3332 = vmatpush2.msra.mxu0 0.0
        %3333 = vmatprep.subr.mxu0 0.0
        %3334 = vmatpush2.msra.mxu0 0.0
        %3335 = vmatprep.subr.mxu0 0.0
        %3336 = vmatpush2.msra.mxu0 0.0
        %3337 = vmatprep.subr.mxu0 0.0
        %3338 = vmatpush2.msra.mxu0 0.0
        %3339 = vmatprep.subr.mxu0 0.0
        %3340 = vmatpush2.msra.mxu0 0.0
        %3341 = vmatprep.subr.mxu0 0.0
        %3342 = vmatpush2.msra.mxu0 0.0
        %3343 = vmatprep.subr.mxu0 0.0
        %3344 = vmatpush2.msra.mxu0 0.0
        %3345 = vmatprep.subr.mxu0 0.0
        %3346 = vmatpush2.msra.mxu0 0.0
        %3347 = vmatprep.subr.mxu0 0.0
        %3348 = vmatpush2.msra.mxu0 0.0
        %3349 = vmatprep.subr.mxu0 0.0
        %3350 = vmatpush2.msra.mxu0 0.0
        %3351 = vmatprep.subr.mxu0 0.0
        %3352 = vmatpush2.msra.mxu0 0.0
        %3353 = vmatprep.subr.mxu0 0.0
        %3354 = vmatpush2.msra.mxu0 0.0
        %3355 = vmatprep.subr.mxu0 0.0
        %3356 = vmatpush2.msra.mxu0 0.0
        %3357 = vmatprep.subr.mxu0 0.0
        %3358 = vmatpush2.msra.mxu0 0.0
        %3359 = vmatprep.subr.mxu0 0.0
        %3360 = vmatpush2.msra.mxu0 0.0
        %3361 = vmatprep.subr.mxu0 0.0
        %3362 = vmatpush2.msra.mxu0 0.0
        %3363 = vmatprep.mubr.f32.mxu0 0.0
        %3364 = vmatmul.mubr.f32.gmra.mxu0 %v3294
        %v3365 = vpop.f32.mrf.mxu0
        %v3366 = vadd.f32 0.0, %v3365
        %v3367 = vpop.f32.mrf.mxu0
        %3368 = vmatprep.mubr.f32.mxu0 0.0
        %3369 = vmatmul.mubr.f32.gmra.mxu0 %v3297
        %v3370 = vpop.f32.mrf.mxu0
        %v3371 = vadd.f32 0.0, %v3370
        %v3372 = vpop.f32.mrf.mxu0
        %3373 = vdwg.mxu0
        %s3374 = scalar_lea.vmem %s41, 16
        %v3375 = vld [vmem:[%s3374] sm:$0xff]
        %v3376 = vld [vmem:[%s3374 + $0x8] sm:$0x1]
        %v3378 = vsel %vm2474, %v3366, 0
        %v3381 = vsel %vm2474, %v3371, 0
        %vm3383 = vcmask 1040384
        %v3385 = vsel %vm3383, %v3376, 0
        %3387 = vmatprep.subr.mxu0 0.0
        %3388 = vmatpush1.msra.mxu0 0.0
        %3389 = vmatprep.subr.mxu0 0.0
        %3390 = vmatpush1.msra.mxu0 0.0
        %3391 = vmatprep.subr.mxu0 0.0
        %3392 = vmatpush1.msra.mxu0 0.0
        %3393 = vmatprep.subr.mxu0 0.0
        %3394 = vmatpush1.msra.mxu0 0.0
        %3395 = vmatprep.subr.mxu0 0.0
        %3396 = vmatpush1.msra.mxu0 0.0
        %3397 = vmatprep.subr.mxu0 0.0
        %3398 = vmatpush1.msra.mxu0 0.0
        %3399 = vmatprep.subr.mxu0 0.0
        %3400 = vmatpush1.msra.mxu0 0.0
        %3401 = vmatprep.subr.mxu0 0.0
        %3402 = vmatpush1.msra.mxu0 0.0
        %3403 = vmatprep.subr.mxu0 0.0
        %3404 = vmatpush1.msra.mxu0 0.0
        %3405 = vmatprep.subr.mxu0 0.0
        %3406 = vmatpush1.msra.mxu0 0.0
        %3407 = vmatprep.subr.mxu0 0.0
        %3408 = vmatpush1.msra.mxu0 0.0
        %3409 = vmatprep.subr.mxu0 0.0
        %3410 = vmatpush1.msra.mxu0 0.0
        %3411 = vmatprep.subr.mxu0 0.0
        %3412 = vmatpush1.msra.mxu0 0.0
        %3413 = vmatprep.subr.mxu0 0.0
        %3414 = vmatpush1.msra.mxu0 0.0
        %3415 = vmatprep.subr.mxu0 0.0
        %3416 = vmatpush1.msra.mxu0 %v3385
        %3417 = vmatprep.subr.mxu0 0.0
        %3418 = vmatpush1.msra.mxu0 %v3375
        %3419 = vmatprep.subr.mxu0 0.0
        %3420 = vmatpush2.msra.mxu0 0.0
        %3421 = vmatprep.subr.mxu0 0.0
        %3422 = vmatpush2.msra.mxu0 0.0
        %3423 = vmatprep.subr.mxu0 0.0
        %3424 = vmatpush2.msra.mxu0 0.0
        %3425 = vmatprep.subr.mxu0 0.0
        %3426 = vmatpush2.msra.mxu0 0.0
        %3427 = vmatprep.subr.mxu0 0.0
        %3428 = vmatpush2.msra.mxu0 0.0
        %3429 = vmatprep.subr.mxu0 0.0
        %3430 = vmatpush2.msra.mxu0 0.0
        %3431 = vmatprep.subr.mxu0 0.0
        %3432 = vmatpush2.msra.mxu0 0.0
        %3433 = vmatprep.subr.mxu0 0.0
        %3434 = vmatpush2.msra.mxu0 0.0
        %3435 = vmatprep.subr.mxu0 0.0
        %3436 = vmatpush2.msra.mxu0 0.0
        %3437 = vmatprep.subr.mxu0 0.0
        %3438 = vmatpush2.msra.mxu0 0.0
        %3439 = vmatprep.subr.mxu0 0.0
        %3440 = vmatpush2.msra.mxu0 0.0
        %3441 = vmatprep.subr.mxu0 0.0
        %3442 = vmatpush2.msra.mxu0 0.0
        %3443 = vmatprep.subr.mxu0 0.0
        %3444 = vmatpush2.msra.mxu0 0.0
        %3445 = vmatprep.subr.mxu0 0.0
        %3446 = vmatpush2.msra.mxu0 0.0
        %3447 = vmatprep.subr.mxu0 0.0
        %3448 = vmatpush2.msra.mxu0 0.0
        %3449 = vmatprep.subr.mxu0 0.0
        %3450 = vmatpush2.msra.mxu0 0.0
        %3451 = vmatprep.mubr.f32.mxu0 0.0
        %3452 = vmatmul.mubr.f32.gmra.mxu0 %v3378
        %v3453 = vpop.f32.mrf.mxu0
        %v3454 = vadd.f32 0.0, %v3453
        %v3455 = vpop.f32.mrf.mxu0
        %3456 = vmatprep.mubr.f32.mxu0 0.0
        %3457 = vmatmul.mubr.f32.gmra.mxu0 %v3381
        %v3458 = vpop.f32.mrf.mxu0
        %v3459 = vadd.f32 0.0, %v3458
        %v3460 = vpop.f32.mrf.mxu0
        %3461 = vdwg.mxu0
        %v3463 = vsel %vm2474, %v2660, 0
        %v3466 = vsel %vm2474, %v2665, 0
        %v3469 = vsel %vm3383, %v2669, 0
        %3471 = vmatprep.subr.mxu0 0.0
        %3472 = vmatpush1.msra.mxu0 0.0
        %3473 = vmatprep.subr.mxu0 0.0
        %3474 = vmatpush1.msra.mxu0 0.0
        %3475 = vmatprep.subr.mxu0 0.0
        %3476 = vmatpush1.msra.mxu0 0.0
        %3477 = vmatprep.subr.mxu0 0.0
        %3478 = vmatpush1.msra.mxu0 0.0
        %3479 = vmatprep.subr.mxu0 0.0
        %3480 = vmatpush1.msra.mxu0 0.0
        %3481 = vmatprep.subr.mxu0 0.0
        %3482 = vmatpush1.msra.mxu0 0.0
        %3483 = vmatprep.subr.mxu0 0.0
        %3484 = vmatpush1.msra.mxu0 0.0
        %3485 = vmatprep.subr.mxu0 0.0
        %3486 = vmatpush1.msra.mxu0 0.0
        %3487 = vmatprep.subr.mxu0 0.0
        %3488 = vmatpush1.msra.mxu0 0.0
        %3489 = vmatprep.subr.mxu0 0.0
        %3490 = vmatpush1.msra.mxu0 0.0
        %3491 = vmatprep.subr.mxu0 0.0
        %3492 = vmatpush1.msra.mxu0 0.0
        %3493 = vmatprep.subr.mxu0 0.0
        %3494 = vmatpush1.msra.mxu0 0.0
        %3495 = vmatprep.subr.mxu0 0.0
        %3496 = vmatpush1.msra.mxu0 0.0
        %3497 = vmatprep.subr.mxu0 0.0
        %3498 = vmatpush1.msra.mxu0 0.0
        %3499 = vmatprep.subr.mxu0 0.0
        %3500 = vmatpush1.msra.mxu0 %v3469
        %3501 = vmatprep.subr.mxu0 0.0
        %3502 = vmatpush1.msra.mxu0 %v2668
        %3503 = vmatprep.subr.mxu0 0.0
        %3504 = vmatpush2.msra.mxu0 0.0
        %3505 = vmatprep.subr.mxu0 0.0
        %3506 = vmatpush2.msra.mxu0 0.0
        %3507 = vmatprep.subr.mxu0 0.0
        %3508 = vmatpush2.msra.mxu0 0.0
        %3509 = vmatprep.subr.mxu0 0.0
        %3510 = vmatpush2.msra.mxu0 0.0
        %3511 = vmatprep.subr.mxu0 0.0
        %3512 = vmatpush2.msra.mxu0 0.0
        %3513 = vmatprep.subr.mxu0 0.0
        %3514 = vmatpush2.msra.mxu0 0.0
        %3515 = vmatprep.subr.mxu0 0.0
        %3516 = vmatpush2.msra.mxu0 0.0
        %3517 = vmatprep.subr.mxu0 0.0
        %3518 = vmatpush2.msra.mxu0 0.0
        %3519 = vmatprep.subr.mxu0 0.0
        %3520 = vmatpush2.msra.mxu0 0.0
        %3521 = vmatprep.subr.mxu0 0.0
        %3522 = vmatpush2.msra.mxu0 0.0
        %3523 = vmatprep.subr.mxu0 0.0
        %3524 = vmatpush2.msra.mxu0 0.0
        %3525 = vmatprep.subr.mxu0 0.0
        %3526 = vmatpush2.msra.mxu0 0.0
        %3527 = vmatprep.subr.mxu0 0.0
        %3528 = vmatpush2.msra.mxu0 0.0
        %3529 = vmatprep.subr.mxu0 0.0
        %3530 = vmatpush2.msra.mxu0 0.0
        %3531 = vmatprep.subr.mxu0 0.0
        %3532 = vmatpush2.msra.mxu0 0.0
        %3533 = vmatprep.subr.mxu0 0.0
        %3534 = vmatpush2.msra.mxu0 0.0
        %3535 = vmatprep.mubr.f32.mxu0 0.0
        %3536 = vmatmul.mubr.f32.gmra.mxu0 %v3463
        %v3537 = vpop.f32.mrf.mxu0
        %v3538 = vadd.f32 %v3454, %v3537
        %v3539 = vpop.f32.mrf.mxu0
        %3540 = vmatprep.mubr.f32.mxu0 0.0
        %3541 = vmatmul.mubr.f32.gmra.mxu0 %v3466
        %v3542 = vpop.f32.mrf.mxu0
        %v3543 = vadd.f32 %v3459, %v3542
        %v3544 = vpop.f32.mrf.mxu0
        %3545 = vdwg.mxu0
        %s3546 = scalar_lea.vmem %s39, 16
        %v3547 = vld [vmem:[%s3546] sm:$0xff]
        %v3548 = vld [vmem:[%s3546 + $0x8] sm:$0x1]
        %v3550 = vsel %vm3383, %v3548, 0
        %3552 = vmatprep.subr.mxu0 0.0
        %3553 = vmatpush1.msra.mxu0 0.0
        %3554 = vmatprep.subr.mxu0 0.0
        %3555 = vmatpush1.msra.mxu0 0.0
        %3556 = vmatprep.subr.mxu0 0.0
        %3557 = vmatpush1.msra.mxu0 0.0
        %3558 = vmatprep.subr.mxu0 0.0
        %3559 = vmatpush1.msra.mxu0 0.0
        %3560 = vmatprep.subr.mxu0 0.0
        %3561 = vmatpush1.msra.mxu0 0.0
        %3562 = vmatprep.subr.mxu0 0.0
        %3563 = vmatpush1.msra.mxu0 0.0
        %3564 = vmatprep.subr.mxu0 0.0
        %3565 = vmatpush1.msra.mxu0 0.0
        %3566 = vmatprep.subr.mxu0 0.0
        %3567 = vmatpush1.msra.mxu0 0.0
        %3568 = vmatprep.subr.mxu0 0.0
        %3569 = vmatpush1.msra.mxu0 0.0
        %3570 = vmatprep.subr.mxu0 0.0
        %3571 = vmatpush1.msra.mxu0 0.0
        %3572 = vmatprep.subr.mxu0 0.0
        %3573 = vmatpush1.msra.mxu0 0.0
        %3574 = vmatprep.subr.mxu0 0.0
        %3575 = vmatpush1.msra.mxu0 0.0
        %3576 = vmatprep.subr.mxu0 0.0
        %3577 = vmatpush1.msra.mxu0 0.0
        %3578 = vmatprep.subr.mxu0 0.0
        %3579 = vmatpush1.msra.mxu0 0.0
        %3580 = vmatprep.subr.mxu0 0.0
        %3581 = vmatpush1.msra.mxu0 %v3550
        %3582 = vmatprep.subr.mxu0 0.0
        %3583 = vmatpush1.msra.mxu0 %v3547
        %3584 = vmatprep.subr.mxu0 0.0
        %3585 = vmatpush2.msra.mxu0 0.0
        %3586 = vmatprep.subr.mxu0 0.0
        %3587 = vmatpush2.msra.mxu0 0.0
        %3588 = vmatprep.subr.mxu0 0.0
        %3589 = vmatpush2.msra.mxu0 0.0
        %3590 = vmatprep.subr.mxu0 0.0
        %3591 = vmatpush2.msra.mxu0 0.0
        %3592 = vmatprep.subr.mxu0 0.0
        %3593 = vmatpush2.msra.mxu0 0.0
        %3594 = vmatprep.subr.mxu0 0.0
        %3595 = vmatpush2.msra.mxu0 0.0
        %3596 = vmatprep.subr.mxu0 0.0
        %3597 = vmatpush2.msra.mxu0 0.0
        %3598 = vmatprep.subr.mxu0 0.0
        %3599 = vmatpush2.msra.mxu0 0.0
        %3600 = vmatprep.subr.mxu0 0.0
        %3601 = vmatpush2.msra.mxu0 0.0
        %3602 = vmatprep.subr.mxu0 0.0
        %3603 = vmatpush2.msra.mxu0 0.0
        %3604 = vmatprep.subr.mxu0 0.0
        %3605 = vmatpush2.msra.mxu0 0.0
        %3606 = vmatprep.subr.mxu0 0.0
        %3607 = vmatpush2.msra.mxu0 0.0
        %3608 = vmatprep.subr.mxu0 0.0
        %3609 = vmatpush2.msra.mxu0 0.0
        %3610 = vmatprep.subr.mxu0 0.0
        %3611 = vmatpush2.msra.mxu0 0.0
        %3612 = vmatprep.subr.mxu0 0.0
        %3613 = vmatpush2.msra.mxu0 0.0
        %3614 = vmatprep.subr.mxu0 0.0
        %3615 = vmatpush2.msra.mxu0 0.0
        %3616 = vmatprep.mubr.f32.mxu0 0.0
        %3617 = vmatmul.mubr.f32.gmra.mxu0 %v3378
        %v3618 = vpop.f32.mrf.mxu0
        %v3619 = vadd.f32 0.0, %v3618
        %v3620 = vpop.f32.mrf.mxu0
        %3621 = vmatprep.mubr.f32.mxu0 0.0
        %3622 = vmatmul.mubr.f32.gmra.mxu0 %v3381
        %v3623 = vpop.f32.mrf.mxu0
        %v3624 = vadd.f32 0.0, %v3623
        %v3625 = vpop.f32.mrf.mxu0
        %3626 = vdwg.mxu0
        %v3628 = vsel %vm3383, %v2671, 0
        %3630 = vmatprep.subr.mxu0 0.0
        %3631 = vmatpush1.msra.mxu0 0.0
        %3632 = vmatprep.subr.mxu0 0.0
        %3633 = vmatpush1.msra.mxu0 0.0
        %3634 = vmatprep.subr.mxu0 0.0
        %3635 = vmatpush1.msra.mxu0 0.0
        %3636 = vmatprep.subr.mxu0 0.0
        %3637 = vmatpush1.msra.mxu0 0.0
        %3638 = vmatprep.subr.mxu0 0.0
        %3639 = vmatpush1.msra.mxu0 0.0
        %3640 = vmatprep.subr.mxu0 0.0
        %3641 = vmatpush1.msra.mxu0 0.0
        %3642 = vmatprep.subr.mxu0 0.0
        %3643 = vmatpush1.msra.mxu0 0.0
        %3644 = vmatprep.subr.mxu0 0.0
        %3645 = vmatpush1.msra.mxu0 0.0
        %3646 = vmatprep.subr.mxu0 0.0
        %3647 = vmatpush1.msra.mxu0 0.0
        %3648 = vmatprep.subr.mxu0 0.0
        %3649 = vmatpush1.msra.mxu0 0.0
        %3650 = vmatprep.subr.mxu0 0.0
        %3651 = vmatpush1.msra.mxu0 0.0
        %3652 = vmatprep.subr.mxu0 0.0
        %3653 = vmatpush1.msra.mxu0 0.0
        %3654 = vmatprep.subr.mxu0 0.0
        %3655 = vmatpush1.msra.mxu0 0.0
        %3656 = vmatprep.subr.mxu0 0.0
        %3657 = vmatpush1.msra.mxu0 0.0
        %3658 = vmatprep.subr.mxu0 0.0
        %3659 = vmatpush1.msra.mxu0 %v3628
        %3660 = vmatprep.subr.mxu0 0.0
        %3661 = vmatpush1.msra.mxu0 %v2670
        %3662 = vmatprep.subr.mxu0 0.0
        %3663 = vmatpush2.msra.mxu0 0.0
        %3664 = vmatprep.subr.mxu0 0.0
        %3665 = vmatpush2.msra.mxu0 0.0
        %3666 = vmatprep.subr.mxu0 0.0
        %3667 = vmatpush2.msra.mxu0 0.0
        %3668 = vmatprep.subr.mxu0 0.0
        %3669 = vmatpush2.msra.mxu0 0.0
        %3670 = vmatprep.subr.mxu0 0.0
        %3671 = vmatpush2.msra.mxu0 0.0
        %3672 = vmatprep.subr.mxu0 0.0
        %3673 = vmatpush2.msra.mxu0 0.0
        %3674 = vmatprep.subr.mxu0 0.0
        %3675 = vmatpush2.msra.mxu0 0.0
        %3676 = vmatprep.subr.mxu0 0.0
        %3677 = vmatpush2.msra.mxu0 0.0
        %3678 = vmatprep.subr.mxu0 0.0
        %3679 = vmatpush2.msra.mxu0 0.0
        %3680 = vmatprep.subr.mxu0 0.0
        %3681 = vmatpush2.msra.mxu0 0.0
        %3682 = vmatprep.subr.mxu0 0.0
        %3683 = vmatpush2.msra.mxu0 0.0
        %3684 = vmatprep.subr.mxu0 0.0
        %3685 = vmatpush2.msra.mxu0 0.0
        %3686 = vmatprep.subr.mxu0 0.0
        %3687 = vmatpush2.msra.mxu0 0.0
        %3688 = vmatprep.subr.mxu0 0.0
        %3689 = vmatpush2.msra.mxu0 0.0
        %3690 = vmatprep.subr.mxu0 0.0
        %3691 = vmatpush2.msra.mxu0 0.0
        %3692 = vmatprep.subr.mxu0 0.0
        %3693 = vmatpush2.msra.mxu0 0.0
        %3694 = vmatprep.mubr.f32.mxu0 0.0
        %3695 = vmatmul.mubr.f32.gmra.mxu0 %v3463
        %v3696 = vpop.f32.mrf.mxu0
        %v3697 = vadd.f32 %v3619, %v3696
        %v3698 = vpop.f32.mrf.mxu0
        %3699 = vmatprep.mubr.f32.mxu0 0.0
        %3700 = vmatmul.mubr.f32.gmra.mxu0 %v3466
        %v3701 = vpop.f32.mrf.mxu0
        %v3702 = vadd.f32 %v3624, %v3701
        %v3703 = vpop.f32.mrf.mxu0
        %3704 = vdwg.mxu0
        %s3705 = scalar_lea.vmem %s45, 8
        %v3706 = vld [vmem:[%s3705] sm:$0xf]
        %s3707 = scalar_lea.vmem %s43, 64
        %v3708 = vld [vmem:[%s3707] sm:$0xff]
        %v3709 = vld [vmem:[%s3707 + $0x8] sm:$0xff]
        %v3710 = vld [vmem:[%s3707 + $0x10] sm:$0xff]
        %v3711 = vld [vmem:[%s3707 + $0x18] sm:$0xff]
        %3712 = vmatprep.subr.mxu0 0.0
        %3713 = vmatpush1.msra.mxu0 0.0
        %3714 = vmatprep.subr.mxu0 0.0
        %3715 = vmatpush1.msra.mxu0 0.0
        %3716 = vmatprep.subr.mxu0 0.0
        %3717 = vmatpush1.msra.mxu0 0.0
        %3718 = vmatprep.subr.mxu0 0.0
        %3719 = vmatpush1.msra.mxu0 0.0
        %3720 = vmatprep.subr.mxu0 0.0
        %3721 = vmatpush1.msra.mxu0 0.0
        %3722 = vmatprep.subr.mxu0 0.0
        %3723 = vmatpush1.msra.mxu0 0.0
        %3724 = vmatprep.subr.mxu0 0.0
        %3725 = vmatpush1.msra.mxu0 0.0
        %3726 = vmatprep.subr.mxu0 0.0
        %3727 = vmatpush1.msra.mxu0 0.0
        %3728 = vmatprep.subr.mxu0 0.0
        %3729 = vmatpush1.msra.mxu0 0.0
        %3730 = vmatprep.subr.mxu0 0.0
        %3731 = vmatpush1.msra.mxu0 0.0
        %3732 = vmatprep.subr.mxu0 0.0
        %3733 = vmatpush1.msra.mxu0 0.0
        %3734 = vmatprep.subr.mxu0 0.0
        %3735 = vmatpush1.msra.mxu0 0.0
        %3736 = vmatprep.subr.mxu0 0.0
        %3737 = vmatpush1.msra.mxu0 %v3711
        %3738 = vmatprep.subr.mxu0 0.0
        %3739 = vmatpush1.msra.mxu0 %v3710
        %3740 = vmatprep.subr.mxu0 0.0
        %3741 = vmatpush1.msra.mxu0 %v3709
        %3742 = vmatprep.subr.mxu0 0.0
        %3743 = vmatpush1.msra.mxu0 %v3708
        %3744 = vmatprep.subr.mxu0 0.0
        %3745 = vmatpush2.msra.mxu0 0.0
        %3746 = vmatprep.subr.mxu0 0.0
        %3747 = vmatpush2.msra.mxu0 0.0
        %3748 = vmatprep.subr.mxu0 0.0
        %3749 = vmatpush2.msra.mxu0 0.0
        %3750 = vmatprep.subr.mxu0 0.0
        %3751 = vmatpush2.msra.mxu0 0.0
        %3752 = vmatprep.subr.mxu0 0.0
        %3753 = vmatpush2.msra.mxu0 0.0
        %3754 = vmatprep.subr.mxu0 0.0
        %3755 = vmatpush2.msra.mxu0 0.0
        %3756 = vmatprep.subr.mxu0 0.0
        %3757 = vmatpush2.msra.mxu0 0.0
        %3758 = vmatprep.subr.mxu0 0.0
        %3759 = vmatpush2.msra.mxu0 0.0
        %3760 = vmatprep.subr.mxu0 0.0
        %3761 = vmatpush2.msra.mxu0 0.0
        %3762 = vmatprep.subr.mxu0 0.0
        %3763 = vmatpush2.msra.mxu0 0.0
        %3764 = vmatprep.subr.mxu0 0.0
        %3765 = vmatpush2.msra.mxu0 0.0
        %3766 = vmatprep.subr.mxu0 0.0
        %3767 = vmatpush2.msra.mxu0 0.0
        %3768 = vmatprep.subr.mxu0 0.0
        %3769 = vmatpush2.msra.mxu0 0.0
        %3770 = vmatprep.subr.mxu0 0.0
        %3771 = vmatpush2.msra.mxu0 0.0
        %3772 = vmatprep.subr.mxu0 0.0
        %3773 = vmatpush2.msra.mxu0 0.0
        %3774 = vmatprep.subr.mxu0 0.0
        %3775 = vmatpush2.msra.mxu0 0.0
        %3776 = vmatprep.mubr.f32.mxu0 0.0
        %3777 = vmatmul.mubr.f32.gmra.mxu0 %v1973
        %v3778 = vpop.f32.mrf.mxu0
        %v3779 = vadd.f32 0.0, %v3778
        %v3780 = vpop.f32.mrf.mxu0
        %3781 = vmatprep.mubr.f32.mxu0 0.0
        %3782 = vmatmul.mubr.f32.gmra.mxu0 %v1976
        %v3783 = vpop.f32.mrf.mxu0
        %v3784 = vadd.f32 0.0, %v3783
        %v3785 = vpop.f32.mrf.mxu0
        %3786 = vdwg.mxu0
        %v3788 = vsel %vm1682, %v3706, 0
        %3790 = vmatprep.subr.mxu0 0.0
        %3791 = vmatpush1.msra.mxu0 0.0
        %3792 = vmatprep.subr.mxu0 0.0
        %3793 = vmatpush1.msra.mxu0 0.0
        %3794 = vmatprep.subr.mxu0 0.0
        %3795 = vmatpush1.msra.mxu0 0.0
        %3796 = vmatprep.subr.mxu0 0.0
        %3797 = vmatpush1.msra.mxu0 0.0
        %3798 = vmatprep.subr.mxu0 0.0
        %3799 = vmatpush1.msra.mxu0 0.0
        %3800 = vmatprep.subr.mxu0 0.0
        %3801 = vmatpush1.msra.mxu0 0.0
        %3802 = vmatprep.subr.mxu0 0.0
        %3803 = vmatpush1.msra.mxu0 0.0
        %3804 = vmatprep.subr.mxu0 0.0
        %3805 = vmatpush1.msra.mxu0 0.0
        %3806 = vmatprep.subr.mxu0 0.0
        %3807 = vmatpush1.msra.mxu0 0.0
        %3808 = vmatprep.subr.mxu0 0.0
        %3809 = vmatpush1.msra.mxu0 0.0
        %3810 = vmatprep.subr.mxu0 0.0
        %3811 = vmatpush1.msra.mxu0 0.0
        %3812 = vmatprep.subr.mxu0 0.0
        %3813 = vmatpush1.msra.mxu0 0.0
        %3814 = vmatprep.subr.mxu0 0.0
        %3815 = vmatpush1.msra.mxu0 0.0
        %3816 = vmatprep.subr.mxu0 0.0
        %3817 = vmatpush1.msra.mxu0 0.0
        %3818 = vmatprep.subr.mxu0 0.0
        %3819 = vmatpush1.msra.mxu0 0.0
        %3820 = vmatprep.subr.mxu0 0.0
        %3821 = vmatpush1.msra.mxu0 %v3788
        %3822 = vmatprep.subr.mxu0 0.0
        %3823 = vmatpush2.msra.mxu0 0.0
        %3824 = vmatprep.subr.mxu0 0.0
        %3825 = vmatpush2.msra.mxu0 0.0
        %3826 = vmatprep.subr.mxu0 0.0
        %3827 = vmatpush2.msra.mxu0 0.0
        %3828 = vmatprep.subr.mxu0 0.0
        %3829 = vmatpush2.msra.mxu0 0.0
        %3830 = vmatprep.subr.mxu0 0.0
        %3831 = vmatpush2.msra.mxu0 0.0
        %3832 = vmatprep.subr.mxu0 0.0
        %3833 = vmatpush2.msra.mxu0 0.0
        %3834 = vmatprep.subr.mxu0 0.0
        %3835 = vmatpush2.msra.mxu0 0.0
        %3836 = vmatprep.subr.mxu0 0.0
        %3837 = vmatpush2.msra.mxu0 0.0
        %3838 = vmatprep.subr.mxu0 0.0
        %3839 = vmatpush2.msra.mxu0 0.0
        %3840 = vmatprep.subr.mxu0 0.0
        %3841 = vmatpush2.msra.mxu0 0.0
        %3842 = vmatprep.subr.mxu0 0.0
        %3843 = vmatpush2.msra.mxu0 0.0
        %3844 = vmatprep.subr.mxu0 0.0
        %3845 = vmatpush2.msra.mxu0 0.0
        %3846 = vmatprep.subr.mxu0 0.0
        %3847 = vmatpush2.msra.mxu0 0.0
        %3848 = vmatprep.subr.mxu0 0.0
        %3849 = vmatpush2.msra.mxu0 0.0
        %3850 = vmatprep.subr.mxu0 0.0
        %3851 = vmatpush2.msra.mxu0 0.0
        %3852 = vmatprep.subr.mxu0 0.0
        %3853 = vmatpush2.msra.mxu0 0.0
        %3854 = vmatprep.mubr.f32.mxu0 0.0
        %3855 = vmatmul.mubr.f32.gmra.mxu0 %v1677
        %v3856 = vpop.f32.mrf.mxu0
        %v3857 = vadd.f32 %v3779, %v3856
        %v3858 = vpop.f32.mrf.mxu0
        %3859 = vmatprep.mubr.f32.mxu0 0.0
        %3860 = vmatmul.mubr.f32.gmra.mxu0 %v1680
        %v3861 = vpop.f32.mrf.mxu0
        %v3862 = vadd.f32 %v3784, %v3861
        %v3863 = vpop.f32.mrf.mxu0
        %3864 = vdwg.mxu0
        %s3865 = scalar_lea.vmem %s13, 2
        %v3866 = vld [vmem:[%s3865] sm:$0x1]
        %v3868 = vlaneseq
        %v3869 = vshrl.u32 %v3868, 7
        %v3870 = vsub.s32 0, %v3869
        %v3871 = vrot.slane %v3866, %v3870
        %v3873 = vadd.f32 %v3857, %v3871
        %v3874 = vadd.f32 %v3862, %v3871
        %s3875 = scalar_lea.vmem %s37, 8
        %v3876 = vld [vmem:[%s3875] sm:$0xf]
        %s3877 = scalar_lea.vmem %s35, 64
        %v3878 = vld [vmem:[%s3877] sm:$0xff]
        %v3879 = vld [vmem:[%s3877 + $0x8] sm:$0xff]
        %v3880 = vld [vmem:[%s3877 + $0x10] sm:$0xff]
        %v3881 = vld [vmem:[%s3877 + $0x18] sm:$0xff]
        %3882 = vmatprep.subr.mxu0 0.0
        %3883 = vmatpush1.msra.mxu0 0.0
        %3884 = vmatprep.subr.mxu0 0.0
        %3885 = vmatpush1.msra.mxu0 0.0
        %3886 = vmatprep.subr.mxu0 0.0
        %3887 = vmatpush1.msra.mxu0 0.0
        %3888 = vmatprep.subr.mxu0 0.0
        %3889 = vmatpush1.msra.mxu0 0.0
        %3890 = vmatprep.subr.mxu0 0.0
        %3891 = vmatpush1.msra.mxu0 0.0
        %3892 = vmatprep.subr.mxu0 0.0
        %3893 = vmatpush1.msra.mxu0 0.0
        %3894 = vmatprep.subr.mxu0 0.0
        %3895 = vmatpush1.msra.mxu0 0.0
        %3896 = vmatprep.subr.mxu0 0.0
        %3897 = vmatpush1.msra.mxu0 0.0
        %3898 = vmatprep.subr.mxu0 0.0
        %3899 = vmatpush1.msra.mxu0 0.0
        %3900 = vmatprep.subr.mxu0 0.0
        %3901 = vmatpush1.msra.mxu0 0.0
        %3902 = vmatprep.subr.mxu0 0.0
        %3903 = vmatpush1.msra.mxu0 0.0
        %3904 = vmatprep.subr.mxu0 0.0
        %3905 = vmatpush1.msra.mxu0 0.0
        %3906 = vmatprep.subr.mxu0 0.0
        %3907 = vmatpush1.msra.mxu0 %v3881
        %3908 = vmatprep.subr.mxu0 0.0
        %3909 = vmatpush1.msra.mxu0 %v3880
        %3910 = vmatprep.subr.mxu0 0.0
        %3911 = vmatpush1.msra.mxu0 %v3879
        %3912 = vmatprep.subr.mxu0 0.0
        %3913 = vmatpush1.msra.mxu0 %v3878
        %3914 = vmatprep.subr.mxu0 0.0
        %3915 = vmatpush2.msra.mxu0 0.0
        %3916 = vmatprep.subr.mxu0 0.0
        %3917 = vmatpush2.msra.mxu0 0.0
        %3918 = vmatprep.subr.mxu0 0.0
        %3919 = vmatpush2.msra.mxu0 0.0
        %3920 = vmatprep.subr.mxu0 0.0
        %3921 = vmatpush2.msra.mxu0 0.0
        %3922 = vmatprep.subr.mxu0 0.0
        %3923 = vmatpush2.msra.mxu0 0.0
        %3924 = vmatprep.subr.mxu0 0.0
        %3925 = vmatpush2.msra.mxu0 0.0
        %3926 = vmatprep.subr.mxu0 0.0
        %3927 = vmatpush2.msra.mxu0 0.0
        %3928 = vmatprep.subr.mxu0 0.0
        %3929 = vmatpush2.msra.mxu0 0.0
        %3930 = vmatprep.subr.mxu0 0.0
        %3931 = vmatpush2.msra.mxu0 0.0
        %3932 = vmatprep.subr.mxu0 0.0
        %3933 = vmatpush2.msra.mxu0 0.0
        %3934 = vmatprep.subr.mxu0 0.0
        %3935 = vmatpush2.msra.mxu0 0.0
        %3936 = vmatprep.subr.mxu0 0.0
        %3937 = vmatpush2.msra.mxu0 0.0
        %3938 = vmatprep.subr.mxu0 0.0
        %3939 = vmatpush2.msra.mxu0 0.0
        %3940 = vmatprep.subr.mxu0 0.0
        %3941 = vmatpush2.msra.mxu0 0.0
        %3942 = vmatprep.subr.mxu0 0.0
        %3943 = vmatpush2.msra.mxu0 0.0
        %3944 = vmatprep.subr.mxu0 0.0
        %3945 = vmatpush2.msra.mxu0 0.0
        %3946 = vmatprep.mubr.f32.mxu0 0.0
        %3947 = vmatmul.mubr.f32.gmra.mxu0 %v1973
        %v3948 = vpop.f32.mrf.mxu0
        %v3949 = vadd.f32 0.0, %v3948
        %v3950 = vpop.f32.mrf.mxu0
        %3951 = vmatprep.mubr.f32.mxu0 0.0
        %3952 = vmatmul.mubr.f32.gmra.mxu0 %v1976
        %v3953 = vpop.f32.mrf.mxu0
        %v3954 = vadd.f32 0.0, %v3953
        %v3955 = vpop.f32.mrf.mxu0
        %3956 = vdwg.mxu0
        %v3958 = vsel %vm1682, %v3876, 0
        %3960 = vmatprep.subr.mxu0 0.0
        %3961 = vmatpush1.msra.mxu0 0.0
        %3962 = vmatprep.subr.mxu0 0.0
        %3963 = vmatpush1.msra.mxu0 0.0
        %3964 = vmatprep.subr.mxu0 0.0
        %3965 = vmatpush1.msra.mxu0 0.0
        %3966 = vmatprep.subr.mxu0 0.0
        %3967 = vmatpush1.msra.mxu0 0.0
        %3968 = vmatprep.subr.mxu0 0.0
        %3969 = vmatpush1.msra.mxu0 0.0
        %3970 = vmatprep.subr.mxu0 0.0
        %3971 = vmatpush1.msra.mxu0 0.0
        %3972 = vmatprep.subr.mxu0 0.0
        %3973 = vmatpush1.msra.mxu0 0.0
        %3974 = vmatprep.subr.mxu0 0.0
        %3975 = vmatpush1.msra.mxu0 0.0
        %3976 = vmatprep.subr.mxu0 0.0
        %3977 = vmatpush1.msra.mxu0 0.0
        %3978 = vmatprep.subr.mxu0 0.0
        %3979 = vmatpush1.msra.mxu0 0.0
        %3980 = vmatprep.subr.mxu0 0.0
        %3981 = vmatpush1.msra.mxu0 0.0
        %3982 = vmatprep.subr.mxu0 0.0
        %3983 = vmatpush1.msra.mxu0 0.0
        %3984 = vmatprep.subr.mxu0 0.0
        %3985 = vmatpush1.msra.mxu0 0.0
        %3986 = vmatprep.subr.mxu0 0.0
        %3987 = vmatpush1.msra.mxu0 0.0
        %3988 = vmatprep.subr.mxu0 0.0
        %3989 = vmatpush1.msra.mxu0 0.0
        %3990 = vmatprep.subr.mxu0 0.0
        %3991 = vmatpush1.msra.mxu0 %v3958
        %3992 = vmatprep.subr.mxu0 0.0
        %3993 = vmatpush2.msra.mxu0 0.0
        %3994 = vmatprep.subr.mxu0 0.0
        %3995 = vmatpush2.msra.mxu0 0.0
        %3996 = vmatprep.subr.mxu0 0.0
        %3997 = vmatpush2.msra.mxu0 0.0
        %3998 = vmatprep.subr.mxu0 0.0
        %3999 = vmatpush2.msra.mxu0 0.0
        %4000 = vmatprep.subr.mxu0 0.0
        %4001 = vmatpush2.msra.mxu0 0.0
        %4002 = vmatprep.subr.mxu0 0.0
        %4003 = vmatpush2.msra.mxu0 0.0
        %4004 = vmatprep.subr.mxu0 0.0
        %4005 = vmatpush2.msra.mxu0 0.0
        %4006 = vmatprep.subr.mxu0 0.0
        %4007 = vmatpush2.msra.mxu0 0.0
        %4008 = vmatprep.subr.mxu0 0.0
        %4009 = vmatpush2.msra.mxu0 0.0
        %4010 = vmatprep.subr.mxu0 0.0
        %4011 = vmatpush2.msra.mxu0 0.0
        %4012 = vmatprep.subr.mxu0 0.0
        %4013 = vmatpush2.msra.mxu0 0.0
        %4014 = vmatprep.subr.mxu0 0.0
        %4015 = vmatpush2.msra.mxu0 0.0
        %4016 = vmatprep.subr.mxu0 0.0
        %4017 = vmatpush2.msra.mxu0 0.0
        %4018 = vmatprep.subr.mxu0 0.0
        %4019 = vmatpush2.msra.mxu0 0.0
        %4020 = vmatprep.subr.mxu0 0.0
        %4021 = vmatpush2.msra.mxu0 0.0
        %4022 = vmatprep.subr.mxu0 0.0
        %4023 = vmatpush2.msra.mxu0 0.0
        %4024 = vmatprep.mubr.f32.mxu0 0.0
        %4025 = vmatmul.mubr.f32.gmra.mxu0 %v1677
        %v4026 = vpop.f32.mrf.mxu0
        %v4027 = vadd.f32 %v3949, %v4026
        %v4028 = vpop.f32.mrf.mxu0
        %4029 = vmatprep.mubr.f32.mxu0 0.0
        %4030 = vmatmul.mubr.f32.gmra.mxu0 %v1680
        %v4031 = vpop.f32.mrf.mxu0
        %v4032 = vadd.f32 %v3954, %v4031
        %v4033 = vpop.f32.mrf.mxu0
        %4034 = vdwg.mxu0
        %s4035 = scalar_lea.vmem %s7, 2
        %v4036 = vld [vmem:[%s4035] sm:$0x1]
        %v4038 = vlaneseq
        %v4039 = vshrl.u32 %v4038, 7
        %v4040 = vsub.s32 0, %v4039
        %v4041 = vrot.slane %v4036, %v4040
        %v4043 = vadd.f32 %v4027, %v4041
        %v4044 = vadd.f32 %v4032, %v4041
        %s4045 = scalar_lea.vmem %s49, 8
        %v4046 = vld [vmem:[%s4045] sm:$0xf]
        %s4047 = scalar_lea.vmem %s47, 64
        %v4048 = vld [vmem:[%s4047] sm:$0xff]
        %v4049 = vld [vmem:[%s4047 + $0x8] sm:$0xff]
        %v4050 = vld [vmem:[%s4047 + $0x10] sm:$0xff]
        %v4051 = vld [vmem:[%s4047 + $0x18] sm:$0xff]
        %4052 = vmatprep.subr.mxu0 0.0
        %4053 = vmatpush1.msra.mxu0 0.0
        %4054 = vmatprep.subr.mxu0 0.0
        %4055 = vmatpush1.msra.mxu0 0.0
        %4056 = vmatprep.subr.mxu0 0.0
        %4057 = vmatpush1.msra.mxu0 0.0
        %4058 = vmatprep.subr.mxu0 0.0
        %4059 = vmatpush1.msra.mxu0 0.0
        %4060 = vmatprep.subr.mxu0 0.0
        %4061 = vmatpush1.msra.mxu0 0.0
        %4062 = vmatprep.subr.mxu0 0.0
        %4063 = vmatpush1.msra.mxu0 0.0
        %4064 = vmatprep.subr.mxu0 0.0
        %4065 = vmatpush1.msra.mxu0 0.0
        %4066 = vmatprep.subr.mxu0 0.0
        %4067 = vmatpush1.msra.mxu0 0.0
        %4068 = vmatprep.subr.mxu0 0.0
        %4069 = vmatpush1.msra.mxu0 0.0
        %4070 = vmatprep.subr.mxu0 0.0
        %4071 = vmatpush1.msra.mxu0 0.0
        %4072 = vmatprep.subr.mxu0 0.0
        %4073 = vmatpush1.msra.mxu0 0.0
        %4074 = vmatprep.subr.mxu0 0.0
        %4075 = vmatpush1.msra.mxu0 0.0
        %4076 = vmatprep.subr.mxu0 0.0
        %4077 = vmatpush1.msra.mxu0 %v4051
        %4078 = vmatprep.subr.mxu0 0.0
        %4079 = vmatpush1.msra.mxu0 %v4050
        %4080 = vmatprep.subr.mxu0 0.0
        %4081 = vmatpush1.msra.mxu0 %v4049
        %4082 = vmatprep.subr.mxu0 0.0
        %4083 = vmatpush1.msra.mxu0 %v4048
        %4084 = vmatprep.subr.mxu0 0.0
        %4085 = vmatpush2.msra.mxu0 0.0
        %4086 = vmatprep.subr.mxu0 0.0
        %4087 = vmatpush2.msra.mxu0 0.0
        %4088 = vmatprep.subr.mxu0 0.0
        %4089 = vmatpush2.msra.mxu0 0.0
        %4090 = vmatprep.subr.mxu0 0.0
        %4091 = vmatpush2.msra.mxu0 0.0
        %4092 = vmatprep.subr.mxu0 0.0
        %4093 = vmatpush2.msra.mxu0 0.0
        %4094 = vmatprep.subr.mxu0 0.0
        %4095 = vmatpush2.msra.mxu0 0.0
        %4096 = vmatprep.subr.mxu0 0.0
        %4097 = vmatpush2.msra.mxu0 0.0
        %4098 = vmatprep.subr.mxu0 0.0
        %4099 = vmatpush2.msra.mxu0 0.0
        %4100 = vmatprep.subr.mxu0 0.0
        %4101 = vmatpush2.msra.mxu0 0.0
        %4102 = vmatprep.subr.mxu0 0.0
        %4103 = vmatpush2.msra.mxu0 0.0
        %4104 = vmatprep.subr.mxu0 0.0
        %4105 = vmatpush2.msra.mxu0 0.0
        %4106 = vmatprep.subr.mxu0 0.0
        %4107 = vmatpush2.msra.mxu0 0.0
        %4108 = vmatprep.subr.mxu0 0.0
        %4109 = vmatpush2.msra.mxu0 0.0
        %4110 = vmatprep.subr.mxu0 0.0
        %4111 = vmatpush2.msra.mxu0 0.0
        %4112 = vmatprep.subr.mxu0 0.0
        %4113 = vmatpush2.msra.mxu0 0.0
        %4114 = vmatprep.subr.mxu0 0.0
        %4115 = vmatpush2.msra.mxu0 0.0
        %4116 = vmatprep.mubr.f32.mxu0 0.0
        %4117 = vmatmul.mubr.f32.gmra.mxu0 %v1973
        %v4118 = vpop.f32.mrf.mxu0
        %v4119 = vadd.f32 0.0, %v4118
        %v4120 = vpop.f32.mrf.mxu0
        %4121 = vmatprep.mubr.f32.mxu0 0.0
        %4122 = vmatmul.mubr.f32.gmra.mxu0 %v1976
        %v4123 = vpop.f32.mrf.mxu0
        %v4124 = vadd.f32 0.0, %v4123
        %v4125 = vpop.f32.mrf.mxu0
        %4126 = vdwg.mxu0
        %v4128 = vsel %vm1682, %v4046, 0
        %4130 = vmatprep.subr.mxu0 0.0
        %4131 = vmatpush1.msra.mxu0 0.0
        %4132 = vmatprep.subr.mxu0 0.0
        %4133 = vmatpush1.msra.mxu0 0.0
        %4134 = vmatprep.subr.mxu0 0.0
        %4135 = vmatpush1.msra.mxu0 0.0
        %4136 = vmatprep.subr.mxu0 0.0
        %4137 = vmatpush1.msra.mxu0 0.0
        %4138 = vmatprep.subr.mxu0 0.0
        %4139 = vmatpush1.msra.mxu0 0.0
        %4140 = vmatprep.subr.mxu0 0.0
        %4141 = vmatpush1.msra.mxu0 0.0
        %4142 = vmatprep.subr.mxu0 0.0
        %4143 = vmatpush1.msra.mxu0 0.0
        %4144 = vmatprep.subr.mxu0 0.0
        %4145 = vmatpush1.msra.mxu0 0.0
        %4146 = vmatprep.subr.mxu0 0.0
        %4147 = vmatpush1.msra.mxu0 0.0
        %4148 = vmatprep.subr.mxu0 0.0
        %4149 = vmatpush1.msra.mxu0 0.0
        %4150 = vmatprep.subr.mxu0 0.0
        %4151 = vmatpush1.msra.mxu0 0.0
        %4152 = vmatprep.subr.mxu0 0.0
        %4153 = vmatpush1.msra.mxu0 0.0
        %4154 = vmatprep.subr.mxu0 0.0
        %4155 = vmatpush1.msra.mxu0 0.0
        %4156 = vmatprep.subr.mxu0 0.0
        %4157 = vmatpush1.msra.mxu0 0.0
        %4158 = vmatprep.subr.mxu0 0.0
        %4159 = vmatpush1.msra.mxu0 0.0
        %4160 = vmatprep.subr.mxu0 0.0
        %4161 = vmatpush1.msra.mxu0 %v4128
        %4162 = vmatprep.subr.mxu0 0.0
        %4163 = vmatpush2.msra.mxu0 0.0
        %4164 = vmatprep.subr.mxu0 0.0
        %4165 = vmatpush2.msra.mxu0 0.0
        %4166 = vmatprep.subr.mxu0 0.0
        %4167 = vmatpush2.msra.mxu0 0.0
        %4168 = vmatprep.subr.mxu0 0.0
        %4169 = vmatpush2.msra.mxu0 0.0
        %4170 = vmatprep.subr.mxu0 0.0
        %4171 = vmatpush2.msra.mxu0 0.0
        %4172 = vmatprep.subr.mxu0 0.0
        %4173 = vmatpush2.msra.mxu0 0.0
        %4174 = vmatprep.subr.mxu0 0.0
        %4175 = vmatpush2.msra.mxu0 0.0
        %4176 = vmatprep.subr.mxu0 0.0
        %4177 = vmatpush2.msra.mxu0 0.0
        %4178 = vmatprep.subr.mxu0 0.0
        %4179 = vmatpush2.msra.mxu0 0.0
        %4180 = vmatprep.subr.mxu0 0.0
        %4181 = vmatpush2.msra.mxu0 0.0
        %4182 = vmatprep.subr.mxu0 0.0
        %4183 = vmatpush2.msra.mxu0 0.0
        %4184 = vmatprep.subr.mxu0 0.0
        %4185 = vmatpush2.msra.mxu0 0.0
        %4186 = vmatprep.subr.mxu0 0.0
        %4187 = vmatpush2.msra.mxu0 0.0
        %4188 = vmatprep.subr.mxu0 0.0
        %4189 = vmatpush2.msra.mxu0 0.0
        %4190 = vmatprep.subr.mxu0 0.0
        %4191 = vmatpush2.msra.mxu0 0.0
        %4192 = vmatprep.subr.mxu0 0.0
        %4193 = vmatpush2.msra.mxu0 0.0
        %4194 = vmatprep.mubr.f32.mxu0 0.0
        %4195 = vmatmul.mubr.f32.gmra.mxu0 %v1677
        %v4196 = vpop.f32.mrf.mxu0
        %v4197 = vadd.f32 %v4119, %v4196
        %v4198 = vpop.f32.mrf.mxu0
        %4199 = vmatprep.mubr.f32.mxu0 0.0
        %4200 = vmatmul.mubr.f32.gmra.mxu0 %v1680
        %v4201 = vpop.f32.mrf.mxu0
        %v4202 = vadd.f32 %v4124, %v4201
        %v4203 = vpop.f32.mrf.mxu0
        %4204 = vdwg.mxu0
        %s4205 = scalar_lea.vmem %s15, 2
        %v4206 = vld [vmem:[%s4205] sm:$0x1]
        %v4208 = vlaneseq
        %v4209 = vshrl.u32 %v4208, 7
        %v4210 = vsub.s32 0, %v4209
        %v4211 = vrot.slane %v4206, %v4210
        %v4213 = vadd.f32 %v4197, %v4211
        %v4214 = vadd.f32 %v4202, %v4211
        %v4216 = vsel %vm2474, %v3873, 0
        %v4219 = vsel %vm2474, %v3874, 0
        %v4222 = vsel %vm2474, %v4043, 0
        %v4225 = vsel %vm2474, %v4044, 0
        %4227 = vmatprep.subr.mxu0 0.0
        %4228 = vmatpush1.xpose.msra.mxu0 0.0
        %4229 = vmatprep.subr.mxu0 0.0
        %4230 = vmatpush1.xpose.msra.mxu0 0.0
        %4231 = vmatprep.subr.mxu0 0.0
        %4232 = vmatpush1.xpose.msra.mxu0 0.0
        %4233 = vmatprep.subr.mxu0 0.0
        %4234 = vmatpush1.xpose.msra.mxu0 0.0
        %4235 = vmatprep.subr.mxu0 0.0
        %4236 = vmatpush1.xpose.msra.mxu0 0.0
        %4237 = vmatprep.subr.mxu0 0.0
        %4238 = vmatpush1.xpose.msra.mxu0 0.0
        %4239 = vmatprep.subr.mxu0 0.0
        %4240 = vmatpush1.xpose.msra.mxu0 0.0
        %4241 = vmatprep.subr.mxu0 0.0
        %4242 = vmatpush1.xpose.msra.mxu0 0.0
        %4243 = vmatprep.subr.mxu0 0.0
        %4244 = vmatpush1.xpose.msra.mxu0 0.0
        %4245 = vmatprep.subr.mxu0 0.0
        %4246 = vmatpush1.xpose.msra.mxu0 0.0
        %4247 = vmatprep.subr.mxu0 0.0
        %4248 = vmatpush1.xpose.msra.mxu0 0.0
        %4249 = vmatprep.subr.mxu0 0.0
        %4250 = vmatpush1.xpose.msra.mxu0 0.0
        %4251 = vmatprep.subr.mxu0 0.0
        %4252 = vmatpush1.xpose.msra.mxu0 0.0
        %4253 = vmatprep.subr.mxu0 0.0
        %4254 = vmatpush1.xpose.msra.mxu0 0.0
        %4255 = vmatprep.subr.mxu0 0.0
        %4256 = vmatpush1.xpose.msra.mxu0 %v4225
        %4257 = vmatprep.subr.mxu0 0.0
        %4258 = vmatpush1.xpose.msra.mxu0 %v4222
        %4259 = vmatprep.subr.mxu0 0.0
        %4260 = vmatpush2.xpose.msra.mxu0 0.0
        %4261 = vmatprep.subr.mxu0 0.0
        %4262 = vmatpush2.xpose.msra.mxu0 0.0
        %4263 = vmatprep.subr.mxu0 0.0
        %4264 = vmatpush2.xpose.msra.mxu0 0.0
        %4265 = vmatprep.subr.mxu0 0.0
        %4266 = vmatpush2.xpose.msra.mxu0 0.0
        %4267 = vmatprep.subr.mxu0 0.0
        %4268 = vmatpush2.xpose.msra.mxu0 0.0
        %4269 = vmatprep.subr.mxu0 0.0
        %4270 = vmatpush2.xpose.msra.mxu0 0.0
        %4271 = vmatprep.subr.mxu0 0.0
        %4272 = vmatpush2.xpose.msra.mxu0 0.0
        %4273 = vmatprep.subr.mxu0 0.0
        %4274 = vmatpush2.xpose.msra.mxu0 0.0
        %4275 = vmatprep.subr.mxu0 0.0
        %4276 = vmatpush2.xpose.msra.mxu0 0.0
        %4277 = vmatprep.subr.mxu0 0.0
        %4278 = vmatpush2.xpose.msra.mxu0 0.0
        %4279 = vmatprep.subr.mxu0 0.0
        %4280 = vmatpush2.xpose.msra.mxu0 0.0
        %4281 = vmatprep.subr.mxu0 0.0
        %4282 = vmatpush2.xpose.msra.mxu0 0.0
        %4283 = vmatprep.subr.mxu0 0.0
        %4284 = vmatpush2.xpose.msra.mxu0 0.0
        %4285 = vmatprep.subr.mxu0 0.0
        %4286 = vmatpush2.xpose.msra.mxu0 0.0
        %4287 = vmatprep.subr.mxu0 0.0
        %4288 = vmatpush2.xpose.msra.mxu0 0.0
        %4289 = vmatprep.subr.mxu0 0.0
        %4290 = vmatpush2.xpose.msra.mxu0 0.0
        %4291 = vmatprep.mubr.f32.mxu0 0.0
        %4292 = vmatmul.mubr.f32.gmra.mxu0 %v4216
        %v4293 = vpop.f32.mrf.mxu0
        %v4294 = vadd.f32 0.0, %v4293
        %v4295 = vpop.f32.mrf.mxu0
        %4296 = vmatprep.mubr.f32.mxu0 0.0
        %4297 = vmatmul.mubr.f32.gmra.mxu0 %v4219
        %v4298 = vpop.f32.mrf.mxu0
        %v4299 = vadd.f32 0.0, %v4298
        %v4300 = vpop.f32.mrf.mxu0
        %4301 = vdwg.mxu0
        %v4302 = vmul.f32 %v4294, 0.33333334
        %v4303 = vmul.f32 %v4299, 0.33333334
        %v4304 = vsel %vm2564, %v4302, -inf
        %4305 = vmax.xlane.f32.xlu0 %v4304
        %v4306 = vpop.xlane.xlu0 %4305
        %v4307 = vsel %vm2564, %v4303, -inf
        %4308 = vmax.xlane.f32.xlu0 %v4307
        %v4309 = vpop.xlane.xlu0 %4308
        %v4310 = vsub.f32 %v4302, %v4306
        %v4311 = vsub.f32 %v4303, %v4309
        %v4312 = vmul.f32 %v4310, 1.442695
        %v4313 = vpow.pop %v4312
        %v4314 = vmul.f32 %v4311, 1.442695
        %v4315 = vpow.pop %v4314
        %v4316 = vsel %vm2564, %v4313, 0.0
        %4317 = vadd.xlane.f32.xlu0 %v4316
        %v4318 = vpop.xlane.xlu0 %4317
        %v4319 = vsel %vm2564, %v4315, 0.0
        %4320 = vadd.xlane.f32.xlu0 %v4319
        %v4321 = vpop.xlane.xlu0 %4320
        %v4322 = vrcp.pop %v4318
        %v4323 = vrcp.pop %v4321
        %v4324 = vmul.f32 %v4313, %v4322
        %v4325 = vmul.f32 %v4315, %v4323
        %v4327 = vsel %vm2564, %v4324, 0
        %v4330 = vsel %vm2564, %v4325, 0
        %4332 = vmatprep.subr.mxu0 0.0
        %4333 = vmatpush1.msra.mxu0 0.0
        %4334 = vmatprep.subr.mxu0 0.0
        %4335 = vmatpush1.msra.mxu0 0.0
        %4336 = vmatprep.subr.mxu0 0.0
        %4337 = vmatpush1.msra.mxu0 0.0
        %4338 = vmatprep.subr.mxu0 0.0
        %4339 = vmatpush1.msra.mxu0 0.0
        %4340 = vmatprep.subr.mxu0 0.0
        %4341 = vmatpush1.msra.mxu0 0.0
        %4342 = vmatprep.subr.mxu0 0.0
        %4343 = vmatpush1.msra.mxu0 0.0
        %4344 = vmatprep.subr.mxu0 0.0
        %4345 = vmatpush1.msra.mxu0 0.0
        %4346 = vmatprep.subr.mxu0 0.0
        %4347 = vmatpush1.msra.mxu0 0.0
        %4348 = vmatprep.subr.mxu0 0.0
        %4349 = vmatpush1.msra.mxu0 0.0
        %4350 = vmatprep.subr.mxu0 0.0
        %4351 = vmatpush1.msra.mxu0 0.0
        %4352 = vmatprep.subr.mxu0 0.0
        %4353 = vmatpush1.msra.mxu0 0.0
        %4354 = vmatprep.subr.mxu0 0.0
        %4355 = vmatpush1.msra.mxu0 0.0
        %4356 = vmatprep.subr.mxu0 0.0
        %4357 = vmatpush1.msra.mxu0 0.0
        %4358 = vmatprep.subr.mxu0 0.0
        %4359 = vmatpush1.msra.mxu0 0.0
        %4360 = vmatprep.subr.mxu0 0.0
        %4361 = vmatpush1.msra.mxu0 %v4214
        %4362 = vmatprep.subr.mxu0 0.0
        %4363 = vmatpush1.msra.mxu0 %v4213
        %4364 = vmatprep.subr.mxu0 0.0
        %4365 = vmatpush2.msra.mxu0 0.0
        %4366 = vmatprep.subr.mxu0 0.0
        %4367 = vmatpush2.msra.mxu0 0.0
        %4368 = vmatprep.subr.mxu0 0.0
        %4369 = vmatpush2.msra.mxu0 0.0
        %4370 = vmatprep.subr.mxu0 0.0
        %4371 = vmatpush2.msra.mxu0 0.0
        %4372 = vmatprep.subr.mxu0 0.0
        %4373 = vmatpush2.msra.mxu0 0.0
        %4374 = vmatprep.subr.mxu0 0.0
        %4375 = vmatpush2.msra.mxu0 0.0
        %4376 = vmatprep.subr.mxu0 0.0
        %4377 = vmatpush2.msra.mxu0 0.0
        %4378 = vmatprep.subr.mxu0 0.0
        %4379 = vmatpush2.msra.mxu0 0.0
        %4380 = vmatprep.subr.mxu0 0.0
        %4381 = vmatpush2.msra.mxu0 0.0
        %4382 = vmatprep.subr.mxu0 0.0
        %4383 = vmatpush2.msra.mxu0 0.0
        %4384 = vmatprep.subr.mxu0 0.0
        %4385 = vmatpush2.msra.mxu0 0.0
        %4386 = vmatprep.subr.mxu0 0.0
        %4387 = vmatpush2.msra.mxu0 0.0
        %4388 = vmatprep.subr.mxu0 0.0
        %4389 = vmatpush2.msra.mxu0 0.0
        %4390 = vmatprep.subr.mxu0 0.0
        %4391 = vmatpush2.msra.mxu0 0.0
        %4392 = vmatprep.subr.mxu0 0.0
        %4393 = vmatpush2.msra.mxu0 0.0
        %4394 = vmatprep.subr.mxu0 0.0
        %4395 = vmatpush2.msra.mxu0 0.0
        %4396 = vmatprep.mubr.f32.mxu0 0.0
        %4397 = vmatmul.mubr.f32.gmra.mxu0 %v4327
        %v4398 = vpop.f32.mrf.mxu0
        %v4399 = vadd.f32 0.0, %v4398
        %v4400 = vpop.f32.mrf.mxu0
        %4401 = vmatprep.mubr.f32.mxu0 0.0
        %4402 = vmatmul.mubr.f32.gmra.mxu0 %v4330
        %v4403 = vpop.f32.mrf.mxu0
        %v4404 = vadd.f32 0.0, %v4403
        %v4405 = vpop.f32.mrf.mxu0
        %4406 = vdwg.mxu0
        %s4407 = scalar_lea.vmem %s41, 32
        %v4408 = vld [vmem:[%s4407] sm:$0xff]
        %v4409 = vld [vmem:[%s4407 + $0x8] sm:$0x1]
        %v4411 = vsel %vm2474, %v4399, 0
        %v4414 = vsel %vm2474, %v4404, 0
        %v4417 = vsel %vm3383, %v4409, 0
        %4419 = vmatprep.subr.mxu0 0.0
        %4420 = vmatpush1.msra.mxu0 0.0
        %4421 = vmatprep.subr.mxu0 0.0
        %4422 = vmatpush1.msra.mxu0 0.0
        %4423 = vmatprep.subr.mxu0 0.0
        %4424 = vmatpush1.msra.mxu0 0.0
        %4425 = vmatprep.subr.mxu0 0.0
        %4426 = vmatpush1.msra.mxu0 0.0
        %4427 = vmatprep.subr.mxu0 0.0
        %4428 = vmatpush1.msra.mxu0 0.0
        %4429 = vmatprep.subr.mxu0 0.0
        %4430 = vmatpush1.msra.mxu0 0.0
        %4431 = vmatprep.subr.mxu0 0.0
        %4432 = vmatpush1.msra.mxu0 0.0
        %4433 = vmatprep.subr.mxu0 0.0
        %4434 = vmatpush1.msra.mxu0 0.0
        %4435 = vmatprep.subr.mxu0 0.0
        %4436 = vmatpush1.msra.mxu0 0.0
        %4437 = vmatprep.subr.mxu0 0.0
        %4438 = vmatpush1.msra.mxu0 0.0
        %4439 = vmatprep.subr.mxu0 0.0
        %4440 = vmatpush1.msra.mxu0 0.0
        %4441 = vmatprep.subr.mxu0 0.0
        %4442 = vmatpush1.msra.mxu0 0.0
        %4443 = vmatprep.subr.mxu0 0.0
        %4444 = vmatpush1.msra.mxu0 0.0
        %4445 = vmatprep.subr.mxu0 0.0
        %4446 = vmatpush1.msra.mxu0 0.0
        %4447 = vmatprep.subr.mxu0 0.0
        %4448 = vmatpush1.msra.mxu0 %v4417
        %4449 = vmatprep.subr.mxu0 0.0
        %4450 = vmatpush1.msra.mxu0 %v4408
        %4451 = vmatprep.subr.mxu0 0.0
        %4452 = vmatpush2.msra.mxu0 0.0
        %4453 = vmatprep.subr.mxu0 0.0
        %4454 = vmatpush2.msra.mxu0 0.0
        %4455 = vmatprep.subr.mxu0 0.0
        %4456 = vmatpush2.msra.mxu0 0.0
        %4457 = vmatprep.subr.mxu0 0.0
        %4458 = vmatpush2.msra.mxu0 0.0
        %4459 = vmatprep.subr.mxu0 0.0
        %4460 = vmatpush2.msra.mxu0 0.0
        %4461 = vmatprep.subr.mxu0 0.0
        %4462 = vmatpush2.msra.mxu0 0.0
        %4463 = vmatprep.subr.mxu0 0.0
        %4464 = vmatpush2.msra.mxu0 0.0
        %4465 = vmatprep.subr.mxu0 0.0
        %4466 = vmatpush2.msra.mxu0 0.0
        %4467 = vmatprep.subr.mxu0 0.0
        %4468 = vmatpush2.msra.mxu0 0.0
        %4469 = vmatprep.subr.mxu0 0.0
        %4470 = vmatpush2.msra.mxu0 0.0
        %4471 = vmatprep.subr.mxu0 0.0
        %4472 = vmatpush2.msra.mxu0 0.0
        %4473 = vmatprep.subr.mxu0 0.0
        %4474 = vmatpush2.msra.mxu0 0.0
        %4475 = vmatprep.subr.mxu0 0.0
        %4476 = vmatpush2.msra.mxu0 0.0
        %4477 = vmatprep.subr.mxu0 0.0
        %4478 = vmatpush2.msra.mxu0 0.0
        %4479 = vmatprep.subr.mxu0 0.0
        %4480 = vmatpush2.msra.mxu0 0.0
        %4481 = vmatprep.subr.mxu0 0.0
        %4482 = vmatpush2.msra.mxu0 0.0
        %4483 = vmatprep.mubr.f32.mxu0 0.0
        %4484 = vmatmul.mubr.f32.gmra.mxu0 %v4411
        %v4485 = vpop.f32.mrf.mxu0
        %v4486 = vadd.f32 0.0, %v4485
        %v4487 = vpop.f32.mrf.mxu0
        %4488 = vmatprep.mubr.f32.mxu0 0.0
        %4489 = vmatmul.mubr.f32.gmra.mxu0 %v4414
        %v4490 = vpop.f32.mrf.mxu0
        %v4491 = vadd.f32 0.0, %v4490
        %v4492 = vpop.f32.mrf.mxu0
        %4493 = vdwg.mxu0
        %v4494 = vadd.f32 %v3538, %v4486
        %v4495 = vadd.f32 %v3543, %v4491
        %s4496 = scalar_lea.vmem %s39, 32
        %v4497 = vld [vmem:[%s4496] sm:$0xff]
        %v4498 = vld [vmem:[%s4496 + $0x8] sm:$0x1]
        %v4500 = vsel %vm3383, %v4498, 0
        %4502 = vmatprep.subr.mxu0 0.0
        %4503 = vmatpush1.msra.mxu0 0.0
        %4504 = vmatprep.subr.mxu0 0.0
        %4505 = vmatpush1.msra.mxu0 0.0
        %4506 = vmatprep.subr.mxu0 0.0
        %4507 = vmatpush1.msra.mxu0 0.0
        %4508 = vmatprep.subr.mxu0 0.0
        %4509 = vmatpush1.msra.mxu0 0.0
        %4510 = vmatprep.subr.mxu0 0.0
        %4511 = vmatpush1.msra.mxu0 0.0
        %4512 = vmatprep.subr.mxu0 0.0
        %4513 = vmatpush1.msra.mxu0 0.0
        %4514 = vmatprep.subr.mxu0 0.0
        %4515 = vmatpush1.msra.mxu0 0.0
        %4516 = vmatprep.subr.mxu0 0.0
        %4517 = vmatpush1.msra.mxu0 0.0
        %4518 = vmatprep.subr.mxu0 0.0
        %4519 = vmatpush1.msra.mxu0 0.0
        %4520 = vmatprep.subr.mxu0 0.0
        %4521 = vmatpush1.msra.mxu0 0.0
        %4522 = vmatprep.subr.mxu0 0.0
        %4523 = vmatpush1.msra.mxu0 0.0
        %4524 = vmatprep.subr.mxu0 0.0
        %4525 = vmatpush1.msra.mxu0 0.0
        %4526 = vmatprep.subr.mxu0 0.0
        %4527 = vmatpush1.msra.mxu0 0.0
        %4528 = vmatprep.subr.mxu0 0.0
        %4529 = vmatpush1.msra.mxu0 0.0
        %4530 = vmatprep.subr.mxu0 0.0
        %4531 = vmatpush1.msra.mxu0 %v4500
        %4532 = vmatprep.subr.mxu0 0.0
        %4533 = vmatpush1.msra.mxu0 %v4497
        %4534 = vmatprep.subr.mxu0 0.0
        %4535 = vmatpush2.msra.mxu0 0.0
        %4536 = vmatprep.subr.mxu0 0.0
        %4537 = vmatpush2.msra.mxu0 0.0
        %4538 = vmatprep.subr.mxu0 0.0
        %4539 = vmatpush2.msra.mxu0 0.0
        %4540 = vmatprep.subr.mxu0 0.0
        %4541 = vmatpush2.msra.mxu0 0.0
        %4542 = vmatprep.subr.mxu0 0.0
        %4543 = vmatpush2.msra.mxu0 0.0
        %4544 = vmatprep.subr.mxu0 0.0
        %4545 = vmatpush2.msra.mxu0 0.0
        %4546 = vmatprep.subr.mxu0 0.0
        %4547 = vmatpush2.msra.mxu0 0.0
        %4548 = vmatprep.subr.mxu0 0.0
        %4549 = vmatpush2.msra.mxu0 0.0
        %4550 = vmatprep.subr.mxu0 0.0
        %4551 = vmatpush2.msra.mxu0 0.0
        %4552 = vmatprep.subr.mxu0 0.0
        %4553 = vmatpush2.msra.mxu0 0.0
        %4554 = vmatprep.subr.mxu0 0.0
        %4555 = vmatpush2.msra.mxu0 0.0
        %4556 = vmatprep.subr.mxu0 0.0
        %4557 = vmatpush2.msra.mxu0 0.0
        %4558 = vmatprep.subr.mxu0 0.0
        %4559 = vmatpush2.msra.mxu0 0.0
        %4560 = vmatprep.subr.mxu0 0.0
        %4561 = vmatpush2.msra.mxu0 0.0
        %4562 = vmatprep.subr.mxu0 0.0
        %4563 = vmatpush2.msra.mxu0 0.0
        %4564 = vmatprep.subr.mxu0 0.0
        %4565 = vmatpush2.msra.mxu0 0.0
        %4566 = vmatprep.mubr.f32.mxu0 0.0
        %4567 = vmatmul.mubr.f32.gmra.mxu0 %v4411
        %v4568 = vpop.f32.mrf.mxu0
        %v4569 = vadd.f32 0.0, %v4568
        %v4570 = vpop.f32.mrf.mxu0
        %4571 = vmatprep.mubr.f32.mxu0 0.0
        %4572 = vmatmul.mubr.f32.gmra.mxu0 %v4414
        %v4573 = vpop.f32.mrf.mxu0
        %v4574 = vadd.f32 0.0, %v4573
        %v4575 = vpop.f32.mrf.mxu0
        %4576 = vdwg.mxu0
        %v4577 = vadd.f32 %v3697, %v4569
        %v4578 = vadd.f32 %v3702, %v4574
        %s4579 = scalar_lea.vmem %s45, 12
        %v4580 = vld [vmem:[%s4579] sm:$0xf]
        %s4581 = scalar_lea.vmem %s43, 96
        %v4582 = vld [vmem:[%s4581] sm:$0xff]
        %v4583 = vld [vmem:[%s4581 + $0x8] sm:$0xff]
        %v4584 = vld [vmem:[%s4581 + $0x10] sm:$0xff]
        %v4585 = vld [vmem:[%s4581 + $0x18] sm:$0xff]
        %4586 = vmatprep.subr.mxu0 0.0
        %4587 = vmatpush1.msra.mxu0 0.0
        %4588 = vmatprep.subr.mxu0 0.0
        %4589 = vmatpush1.msra.mxu0 0.0
        %4590 = vmatprep.subr.mxu0 0.0
        %4591 = vmatpush1.msra.mxu0 0.0
        %4592 = vmatprep.subr.mxu0 0.0
        %4593 = vmatpush1.msra.mxu0 0.0
        %4594 = vmatprep.subr.mxu0 0.0
        %4595 = vmatpush1.msra.mxu0 0.0
        %4596 = vmatprep.subr.mxu0 0.0
        %4597 = vmatpush1.msra.mxu0 0.0
        %4598 = vmatprep.subr.mxu0 0.0
        %4599 = vmatpush1.msra.mxu0 0.0
        %4600 = vmatprep.subr.mxu0 0.0
        %4601 = vmatpush1.msra.mxu0 0.0
        %4602 = vmatprep.subr.mxu0 0.0
        %4603 = vmatpush1.msra.mxu0 0.0
        %4604 = vmatprep.subr.mxu0 0.0
        %4605 = vmatpush1.msra.mxu0 0.0
        %4606 = vmatprep.subr.mxu0 0.0
        %4607 = vmatpush1.msra.mxu0 0.0
        %4608 = vmatprep.subr.mxu0 0.0
        %4609 = vmatpush1.msra.mxu0 0.0
        %4610 = vmatprep.subr.mxu0 0.0
        %4611 = vmatpush1.msra.mxu0 %v4585
        %4612 = vmatprep.subr.mxu0 0.0
        %4613 = vmatpush1.msra.mxu0 %v4584
        %4614 = vmatprep.subr.mxu0 0.0
        %4615 = vmatpush1.msra.mxu0 %v4583
        %4616 = vmatprep.subr.mxu0 0.0
        %4617 = vmatpush1.msra.mxu0 %v4582
        %4618 = vmatprep.subr.mxu0 0.0
        %4619 = vmatpush2.msra.mxu0 0.0
        %4620 = vmatprep.subr.mxu0 0.0
        %4621 = vmatpush2.msra.mxu0 0.0
        %4622 = vmatprep.subr.mxu0 0.0
        %4623 = vmatpush2.msra.mxu0 0.0
        %4624 = vmatprep.subr.mxu0 0.0
        %4625 = vmatpush2.msra.mxu0 0.0
        %4626 = vmatprep.subr.mxu0 0.0
        %4627 = vmatpush2.msra.mxu0 0.0
        %4628 = vmatprep.subr.mxu0 0.0
        %4629 = vmatpush2.msra.mxu0 0.0
        %4630 = vmatprep.subr.mxu0 0.0
        %4631 = vmatpush2.msra.mxu0 0.0
        %4632 = vmatprep.subr.mxu0 0.0
        %4633 = vmatpush2.msra.mxu0 0.0
        %4634 = vmatprep.subr.mxu0 0.0
        %4635 = vmatpush2.msra.mxu0 0.0
        %4636 = vmatprep.subr.mxu0 0.0
        %4637 = vmatpush2.msra.mxu0 0.0
        %4638 = vmatprep.subr.mxu0 0.0
        %4639 = vmatpush2.msra.mxu0 0.0
        %4640 = vmatprep.subr.mxu0 0.0
        %4641 = vmatpush2.msra.mxu0 0.0
        %4642 = vmatprep.subr.mxu0 0.0
        %4643 = vmatpush2.msra.mxu0 0.0
        %4644 = vmatprep.subr.mxu0 0.0
        %4645 = vmatpush2.msra.mxu0 0.0
        %4646 = vmatprep.subr.mxu0 0.0
        %4647 = vmatpush2.msra.mxu0 0.0
        %4648 = vmatprep.subr.mxu0 0.0
        %4649 = vmatpush2.msra.mxu0 0.0
        %4650 = vmatprep.mubr.f32.mxu0 0.0
        %4651 = vmatmul.mubr.f32.gmra.mxu0 %v1973
        %v4652 = vpop.f32.mrf.mxu0
        %v4653 = vadd.f32 0.0, %v4652
        %v4654 = vpop.f32.mrf.mxu0
        %4655 = vmatprep.mubr.f32.mxu0 0.0
        %4656 = vmatmul.mubr.f32.gmra.mxu0 %v1976
        %v4657 = vpop.f32.mrf.mxu0
        %v4658 = vadd.f32 0.0, %v4657
        %v4659 = vpop.f32.mrf.mxu0
        %4660 = vdwg.mxu0
        %v4662 = vsel %vm1682, %v4580, 0
        %4664 = vmatprep.subr.mxu0 0.0
        %4665 = vmatpush1.msra.mxu0 0.0
        %4666 = vmatprep.subr.mxu0 0.0
        %4667 = vmatpush1.msra.mxu0 0.0
        %4668 = vmatprep.subr.mxu0 0.0
        %4669 = vmatpush1.msra.mxu0 0.0
        %4670 = vmatprep.subr.mxu0 0.0
        %4671 = vmatpush1.msra.mxu0 0.0
        %4672 = vmatprep.subr.mxu0 0.0
        %4673 = vmatpush1.msra.mxu0 0.0
        %4674 = vmatprep.subr.mxu0 0.0
        %4675 = vmatpush1.msra.mxu0 0.0
        %4676 = vmatprep.subr.mxu0 0.0
        %4677 = vmatpush1.msra.mxu0 0.0
        %4678 = vmatprep.subr.mxu0 0.0
        %4679 = vmatpush1.msra.mxu0 0.0
        %4680 = vmatprep.subr.mxu0 0.0
        %4681 = vmatpush1.msra.mxu0 0.0
        %4682 = vmatprep.subr.mxu0 0.0
        %4683 = vmatpush1.msra.mxu0 0.0
        %4684 = vmatprep.subr.mxu0 0.0
        %4685 = vmatpush1.msra.mxu0 0.0
        %4686 = vmatprep.subr.mxu0 0.0
        %4687 = vmatpush1.msra.mxu0 0.0
        %4688 = vmatprep.subr.mxu0 0.0
        %4689 = vmatpush1.msra.mxu0 0.0
        %4690 = vmatprep.subr.mxu0 0.0
        %4691 = vmatpush1.msra.mxu0 0.0
        %4692 = vmatprep.subr.mxu0 0.0
        %4693 = vmatpush1.msra.mxu0 0.0
        %4694 = vmatprep.subr.mxu0 0.0
        %4695 = vmatpush1.msra.mxu0 %v4662
        %4696 = vmatprep.subr.mxu0 0.0
        %4697 = vmatpush2.msra.mxu0 0.0
        %4698 = vmatprep.subr.mxu0 0.0
        %4699 = vmatpush2.msra.mxu0 0.0
        %4700 = vmatprep.subr.mxu0 0.0
        %4701 = vmatpush2.msra.mxu0 0.0
        %4702 = vmatprep.subr.mxu0 0.0
        %4703 = vmatpush2.msra.mxu0 0.0
        %4704 = vmatprep.subr.mxu0 0.0
        %4705 = vmatpush2.msra.mxu0 0.0
        %4706 = vmatprep.subr.mxu0 0.0
        %4707 = vmatpush2.msra.mxu0 0.0
        %4708 = vmatprep.subr.mxu0 0.0
        %4709 = vmatpush2.msra.mxu0 0.0
        %4710 = vmatprep.subr.mxu0 0.0
        %4711 = vmatpush2.msra.mxu0 0.0
        %4712 = vmatprep.subr.mxu0 0.0
        %4713 = vmatpush2.msra.mxu0 0.0
        %4714 = vmatprep.subr.mxu0 0.0
        %4715 = vmatpush2.msra.mxu0 0.0
        %4716 = vmatprep.subr.mxu0 0.0
        %4717 = vmatpush2.msra.mxu0 0.0
        %4718 = vmatprep.subr.mxu0 0.0
        %4719 = vmatpush2.msra.mxu0 0.0
        %4720 = vmatprep.subr.mxu0 0.0
        %4721 = vmatpush2.msra.mxu0 0.0
        %4722 = vmatprep.subr.mxu0 0.0
        %4723 = vmatpush2.msra.mxu0 0.0
        %4724 = vmatprep.subr.mxu0 0.0
        %4725 = vmatpush2.msra.mxu0 0.0
        %4726 = vmatprep.subr.mxu0 0.0
        %4727 = vmatpush2.msra.mxu0 0.0
        %4728 = vmatprep.mubr.f32.mxu0 0.0
        %4729 = vmatmul.mubr.f32.gmra.mxu0 %v1677
        %v4730 = vpop.f32.mrf.mxu0
        %v4731 = vadd.f32 %v4653, %v4730
        %v4732 = vpop.f32.mrf.mxu0
        %4733 = vmatprep.mubr.f32.mxu0 0.0
        %4734 = vmatmul.mubr.f32.gmra.mxu0 %v1680
        %v4735 = vpop.f32.mrf.mxu0
        %v4736 = vadd.f32 %v4658, %v4735
        %v4737 = vpop.f32.mrf.mxu0
        %4738 = vdwg.mxu0
        %s4739 = scalar_lea.vmem %s13, 3
        %v4740 = vld [vmem:[%s4739] sm:$0x1]
        %v4742 = vlaneseq
        %v4743 = vshrl.u32 %v4742, 7
        %v4744 = vsub.s32 0, %v4743
        %v4745 = vrot.slane %v4740, %v4744
        %v4747 = vadd.f32 %v4731, %v4745
        %v4748 = vadd.f32 %v4736, %v4745
        %s4749 = scalar_lea.vmem %s37, 12
        %v4750 = vld [vmem:[%s4749] sm:$0xf]
        %s4751 = scalar_lea.vmem %s35, 96
        %v4752 = vld [vmem:[%s4751] sm:$0xff]
        %v4753 = vld [vmem:[%s4751 + $0x8] sm:$0xff]
        %v4754 = vld [vmem:[%s4751 + $0x10] sm:$0xff]
        %v4755 = vld [vmem:[%s4751 + $0x18] sm:$0xff]
        %4756 = vmatprep.subr.mxu0 0.0
        %4757 = vmatpush1.msra.mxu0 0.0
        %4758 = vmatprep.subr.mxu0 0.0
        %4759 = vmatpush1.msra.mxu0 0.0
        %4760 = vmatprep.subr.mxu0 0.0
        %4761 = vmatpush1.msra.mxu0 0.0
        %4762 = vmatprep.subr.mxu0 0.0
        %4763 = vmatpush1.msra.mxu0 0.0
        %4764 = vmatprep.subr.mxu0 0.0
        %4765 = vmatpush1.msra.mxu0 0.0
        %4766 = vmatprep.subr.mxu0 0.0
        %4767 = vmatpush1.msra.mxu0 0.0
        %4768 = vmatprep.subr.mxu0 0.0
        %4769 = vmatpush1.msra.mxu0 0.0
        %4770 = vmatprep.subr.mxu0 0.0
        %4771 = vmatpush1.msra.mxu0 0.0
        %4772 = vmatprep.subr.mxu0 0.0
        %4773 = vmatpush1.msra.mxu0 0.0
        %4774 = vmatprep.subr.mxu0 0.0
        %4775 = vmatpush1.msra.mxu0 0.0
        %4776 = vmatprep.subr.mxu0 0.0
        %4777 = vmatpush1.msra.mxu0 0.0
        %4778 = vmatprep.subr.mxu0 0.0
        %4779 = vmatpush1.msra.mxu0 0.0
        %4780 = vmatprep.subr.mxu0 0.0
        %4781 = vmatpush1.msra.mxu0 %v4755
        %4782 = vmatprep.subr.mxu0 0.0
        %4783 = vmatpush1.msra.mxu0 %v4754
        %4784 = vmatprep.subr.mxu0 0.0
        %4785 = vmatpush1.msra.mxu0 %v4753
        %4786 = vmatprep.subr.mxu0 0.0
        %4787 = vmatpush1.msra.mxu0 %v4752
        %4788 = vmatprep.subr.mxu0 0.0
        %4789 = vmatpush2.msra.mxu0 0.0
        %4790 = vmatprep.subr.mxu0 0.0
        %4791 = vmatpush2.msra.mxu0 0.0
        %4792 = vmatprep.subr.mxu0 0.0
        %4793 = vmatpush2.msra.mxu0 0.0
        %4794 = vmatprep.subr.mxu0 0.0
        %4795 = vmatpush2.msra.mxu0 0.0
        %4796 = vmatprep.subr.mxu0 0.0
        %4797 = vmatpush2.msra.mxu0 0.0
        %4798 = vmatprep.subr.mxu0 0.0
        %4799 = vmatpush2.msra.mxu0 0.0
        %4800 = vmatprep.subr.mxu0 0.0
        %4801 = vmatpush2.msra.mxu0 0.0
        %4802 = vmatprep.subr.mxu0 0.0
        %4803 = vmatpush2.msra.mxu0 0.0
        %4804 = vmatprep.subr.mxu0 0.0
        %4805 = vmatpush2.msra.mxu0 0.0
        %4806 = vmatprep.subr.mxu0 0.0
        %4807 = vmatpush2.msra.mxu0 0.0
        %4808 = vmatprep.subr.mxu0 0.0
        %4809 = vmatpush2.msra.mxu0 0.0
        %4810 = vmatprep.subr.mxu0 0.0
        %4811 = vmatpush2.msra.mxu0 0.0
        %4812 = vmatprep.subr.mxu0 0.0
        %4813 = vmatpush2.msra.mxu0 0.0
        %4814 = vmatprep.subr.mxu0 0.0
        %4815 = vmatpush2.msra.mxu0 0.0
        %4816 = vmatprep.subr.mxu0 0.0
        %4817 = vmatpush2.msra.mxu0 0.0
        %4818 = vmatprep.subr.mxu0 0.0
        %4819 = vmatpush2.msra.mxu0 0.0
        %4820 = vmatprep.mubr.f32.mxu0 0.0
        %4821 = vmatmul.mubr.f32.gmra.mxu0 %v1973
        %v4822 = vpop.f32.mrf.mxu0
        %v4823 = vadd.f32 0.0, %v4822
        %v4824 = vpop.f32.mrf.mxu0
        %4825 = vmatprep.mubr.f32.mxu0 0.0
        %4826 = vmatmul.mubr.f32.gmra.mxu0 %v1976
        %v4827 = vpop.f32.mrf.mxu0
        %v4828 = vadd.f32 0.0, %v4827
        %v4829 = vpop.f32.mrf.mxu0
        %4830 = vdwg.mxu0
        %v4832 = vsel %vm1682, %v4750, 0
        %4834 = vmatprep.subr.mxu0 0.0
        %4835 = vmatpush1.msra.mxu0 0.0
        %4836 = vmatprep.subr.mxu0 0.0
        %4837 = vmatpush1.msra.mxu0 0.0
        %4838 = vmatprep.subr.mxu0 0.0
        %4839 = vmatpush1.msra.mxu0 0.0
        %4840 = vmatprep.subr.mxu0 0.0
        %4841 = vmatpush1.msra.mxu0 0.0
        %4842 = vmatprep.subr.mxu0 0.0
        %4843 = vmatpush1.msra.mxu0 0.0
        %4844 = vmatprep.subr.mxu0 0.0
        %4845 = vmatpush1.msra.mxu0 0.0
        %4846 = vmatprep.subr.mxu0 0.0
        %4847 = vmatpush1.msra.mxu0 0.0
        %4848 = vmatprep.subr.mxu0 0.0
        %4849 = vmatpush1.msra.mxu0 0.0
        %4850 = vmatprep.subr.mxu0 0.0
        %4851 = vmatpush1.msra.mxu0 0.0
        %4852 = vmatprep.subr.mxu0 0.0
        %4853 = vmatpush1.msra.mxu0 0.0
        %4854 = vmatprep.subr.mxu0 0.0
        %4855 = vmatpush1.msra.mxu0 0.0
        %4856 = vmatprep.subr.mxu0 0.0
        %4857 = vmatpush1.msra.mxu0 0.0
        %4858 = vmatprep.subr.mxu0 0.0
        %4859 = vmatpush1.msra.mxu0 0.0
        %4860 = vmatprep.subr.mxu0 0.0
        %4861 = vmatpush1.msra.mxu0 0.0
        %4862 = vmatprep.subr.mxu0 0.0
        %4863 = vmatpush1.msra.mxu0 0.0
        %4864 = vmatprep.subr.mxu0 0.0
        %4865 = vmatpush1.msra.mxu0 %v4832
        %4866 = vmatprep.subr.mxu0 0.0
        %4867 = vmatpush2.msra.mxu0 0.0
        %4868 = vmatprep.subr.mxu0 0.0
        %4869 = vmatpush2.msra.mxu0 0.0
        %4870 = vmatprep.subr.mxu0 0.0
        %4871 = vmatpush2.msra.mxu0 0.0
        %4872 = vmatprep.subr.mxu0 0.0
        %4873 = vmatpush2.msra.mxu0 0.0
        %4874 = vmatprep.subr.mxu0 0.0
        %4875 = vmatpush2.msra.mxu0 0.0
        %4876 = vmatprep.subr.mxu0 0.0
        %4877 = vmatpush2.msra.mxu0 0.0
        %4878 = vmatprep.subr.mxu0 0.0
        %4879 = vmatpush2.msra.mxu0 0.0
        %4880 = vmatprep.subr.mxu0 0.0
        %4881 = vmatpush2.msra.mxu0 0.0
        %4882 = vmatprep.subr.mxu0 0.0
        %4883 = vmatpush2.msra.mxu0 0.0
        %4884 = vmatprep.subr.mxu0 0.0
        %4885 = vmatpush2.msra.mxu0 0.0
        %4886 = vmatprep.subr.mxu0 0.0
        %4887 = vmatpush2.msra.mxu0 0.0
        %4888 = vmatprep.subr.mxu0 0.0
        %4889 = vmatpush2.msra.mxu0 0.0
        %4890 = vmatprep.subr.mxu0 0.0
        %4891 = vmatpush2.msra.mxu0 0.0
        %4892 = vmatprep.subr.mxu0 0.0
        %4893 = vmatpush2.msra.mxu0 0.0
        %4894 = vmatprep.subr.mxu0 0.0
        %4895 = vmatpush2.msra.mxu0 0.0
        %4896 = vmatprep.subr.mxu0 0.0
        %4897 = vmatpush2.msra.mxu0 0.0
        %4898 = vmatprep.mubr.f32.mxu0 0.0
        %4899 = vmatmul.mubr.f32.gmra.mxu0 %v1677
        %v4900 = vpop.f32.mrf.mxu0
        %v4901 = vadd.f32 %v4823, %v4900
        %v4902 = vpop.f32.mrf.mxu0
        %4903 = vmatprep.mubr.f32.mxu0 0.0
        %4904 = vmatmul.mubr.f32.gmra.mxu0 %v1680
        %v4905 = vpop.f32.mrf.mxu0
        %v4906 = vadd.f32 %v4828, %v4905
        %v4907 = vpop.f32.mrf.mxu0
        %4908 = vdwg.mxu0
        %s4909 = scalar_lea.vmem %s7, 3
        %v4910 = vld [vmem:[%s4909] sm:$0x1]
        %v4912 = vlaneseq
        %v4913 = vshrl.u32 %v4912, 7
        %v4914 = vsub.s32 0, %v4913
        %v4915 = vrot.slane %v4910, %v4914
        %v4917 = vadd.f32 %v4901, %v4915
        %v4918 = vadd.f32 %v4906, %v4915
        %s4919 = scalar_lea.vmem %s49, 12
        %v4920 = vld [vmem:[%s4919] sm:$0xf]
        %s4921 = scalar_lea.vmem %s47, 96
        %v4922 = vld [vmem:[%s4921] sm:$0xff]
        %v4923 = vld [vmem:[%s4921 + $0x8] sm:$0xff]
        %v4924 = vld [vmem:[%s4921 + $0x10] sm:$0xff]
        %v4925 = vld [vmem:[%s4921 + $0x18] sm:$0xff]
        %4926 = vmatprep.subr.mxu0 0.0
        %4927 = vmatpush1.msra.mxu0 0.0
        %4928 = vmatprep.subr.mxu0 0.0
        %4929 = vmatpush1.msra.mxu0 0.0
        %4930 = vmatprep.subr.mxu0 0.0
        %4931 = vmatpush1.msra.mxu0 0.0
        %4932 = vmatprep.subr.mxu0 0.0
        %4933 = vmatpush1.msra.mxu0 0.0
        %4934 = vmatprep.subr.mxu0 0.0
        %4935 = vmatpush1.msra.mxu0 0.0
        %4936 = vmatprep.subr.mxu0 0.0
        %4937 = vmatpush1.msra.mxu0 0.0
        %4938 = vmatprep.subr.mxu0 0.0
        %4939 = vmatpush1.msra.mxu0 0.0
        %4940 = vmatprep.subr.mxu0 0.0
        %4941 = vmatpush1.msra.mxu0 0.0
        %4942 = vmatprep.subr.mxu0 0.0
        %4943 = vmatpush1.msra.mxu0 0.0
        %4944 = vmatprep.subr.mxu0 0.0
        %4945 = vmatpush1.msra.mxu0 0.0
        %4946 = vmatprep.subr.mxu0 0.0
        %4947 = vmatpush1.msra.mxu0 0.0
        %4948 = vmatprep.subr.mxu0 0.0
        %4949 = vmatpush1.msra.mxu0 0.0
        %4950 = vmatprep.subr.mxu0 0.0
        %4951 = vmatpush1.msra.mxu0 %v4925
        %4952 = vmatprep.subr.mxu0 0.0
        %4953 = vmatpush1.msra.mxu0 %v4924
        %4954 = vmatprep.subr.mxu0 0.0
        %4955 = vmatpush1.msra.mxu0 %v4923
        %4956 = vmatprep.subr.mxu0 0.0
        %4957 = vmatpush1.msra.mxu0 %v4922
        %4958 = vmatprep.subr.mxu0 0.0
        %4959 = vmatpush2.msra.mxu0 0.0
        %4960 = vmatprep.subr.mxu0 0.0
        %4961 = vmatpush2.msra.mxu0 0.0
        %4962 = vmatprep.subr.mxu0 0.0
        %4963 = vmatpush2.msra.mxu0 0.0
        %4964 = vmatprep.subr.mxu0 0.0
        %4965 = vmatpush2.msra.mxu0 0.0
        %4966 = vmatprep.subr.mxu0 0.0
        %4967 = vmatpush2.msra.mxu0 0.0
        %4968 = vmatprep.subr.mxu0 0.0
        %4969 = vmatpush2.msra.mxu0 0.0
        %4970 = vmatprep.subr.mxu0 0.0
        %4971 = vmatpush2.msra.mxu0 0.0
        %4972 = vmatprep.subr.mxu0 0.0
        %4973 = vmatpush2.msra.mxu0 0.0
        %4974 = vmatprep.subr.mxu0 0.0
        %4975 = vmatpush2.msra.mxu0 0.0
        %4976 = vmatprep.subr.mxu0 0.0
        %4977 = vmatpush2.msra.mxu0 0.0
        %4978 = vmatprep.subr.mxu0 0.0
        %4979 = vmatpush2.msra.mxu0 0.0
        %4980 = vmatprep.subr.mxu0 0.0
        %4981 = vmatpush2.msra.mxu0 0.0
        %4982 = vmatprep.subr.mxu0 0.0
        %4983 = vmatpush2.msra.mxu0 0.0
        %4984 = vmatprep.subr.mxu0 0.0
        %4985 = vmatpush2.msra.mxu0 0.0
        %4986 = vmatprep.subr.mxu0 0.0
        %4987 = vmatpush2.msra.mxu0 0.0
        %4988 = vmatprep.subr.mxu0 0.0
        %4989 = vmatpush2.msra.mxu0 0.0
        %4990 = vmatprep.mubr.f32.mxu0 0.0
        %4991 = vmatmul.mubr.f32.gmra.mxu0 %v1973
        %v4992 = vpop.f32.mrf.mxu0
        %v4993 = vadd.f32 0.0, %v4992
        %v4994 = vpop.f32.mrf.mxu0
        %4995 = vmatprep.mubr.f32.mxu0 0.0
        %4996 = vmatmul.mubr.f32.gmra.mxu0 %v1976
        %v4997 = vpop.f32.mrf.mxu0
        %v4998 = vadd.f32 0.0, %v4997
        %v4999 = vpop.f32.mrf.mxu0
        %5000 = vdwg.mxu0
        %v5002 = vsel %vm1682, %v4920, 0
        %5004 = vmatprep.subr.mxu0 0.0
        %5005 = vmatpush1.msra.mxu0 0.0
        %5006 = vmatprep.subr.mxu0 0.0
        %5007 = vmatpush1.msra.mxu0 0.0
        %5008 = vmatprep.subr.mxu0 0.0
        %5009 = vmatpush1.msra.mxu0 0.0
        %5010 = vmatprep.subr.mxu0 0.0
        %5011 = vmatpush1.msra.mxu0 0.0
        %5012 = vmatprep.subr.mxu0 0.0
        %5013 = vmatpush1.msra.mxu0 0.0
        %5014 = vmatprep.subr.mxu0 0.0
        %5015 = vmatpush1.msra.mxu0 0.0
        %5016 = vmatprep.subr.mxu0 0.0
        %5017 = vmatpush1.msra.mxu0 0.0
        %5018 = vmatprep.subr.mxu0 0.0
        %5019 = vmatpush1.msra.mxu0 0.0
        %5020 = vmatprep.subr.mxu0 0.0
        %5021 = vmatpush1.msra.mxu0 0.0
        %5022 = vmatprep.subr.mxu0 0.0
        %5023 = vmatpush1.msra.mxu0 0.0
        %5024 = vmatprep.subr.mxu0 0.0
        %5025 = vmatpush1.msra.mxu0 0.0
        %5026 = vmatprep.subr.mxu0 0.0
        %5027 = vmatpush1.msra.mxu0 0.0
        %5028 = vmatprep.subr.mxu0 0.0
        %5029 = vmatpush1.msra.mxu0 0.0
        %5030 = vmatprep.subr.mxu0 0.0
        %5031 = vmatpush1.msra.mxu0 0.0
        %5032 = vmatprep.subr.mxu0 0.0
        %5033 = vmatpush1.msra.mxu0 0.0
        %5034 = vmatprep.subr.mxu0 0.0
        %5035 = vmatpush1.msra.mxu0 %v5002
        %5036 = vmatprep.subr.mxu0 0.0
        %5037 = vmatpush2.msra.mxu0 0.0
        %5038 = vmatprep.subr.mxu0 0.0
        %5039 = vmatpush2.msra.mxu0 0.0
        %5040 = vmatprep.subr.mxu0 0.0
        %5041 = vmatpush2.msra.mxu0 0.0
        %5042 = vmatprep.subr.mxu0 0.0
        %5043 = vmatpush2.msra.mxu0 0.0
        %5044 = vmatprep.subr.mxu0 0.0
        %5045 = vmatpush2.msra.mxu0 0.0
        %5046 = vmatprep.subr.mxu0 0.0
        %5047 = vmatpush2.msra.mxu0 0.0
        %5048 = vmatprep.subr.mxu0 0.0
        %5049 = vmatpush2.msra.mxu0 0.0
        %5050 = vmatprep.subr.mxu0 0.0
        %5051 = vmatpush2.msra.mxu0 0.0
        %5052 = vmatprep.subr.mxu0 0.0
        %5053 = vmatpush2.msra.mxu0 0.0
        %5054 = vmatprep.subr.mxu0 0.0
        %5055 = vmatpush2.msra.mxu0 0.0
        %5056 = vmatprep.subr.mxu0 0.0
        %5057 = vmatpush2.msra.mxu0 0.0
        %5058 = vmatprep.subr.mxu0 0.0
        %5059 = vmatpush2.msra.mxu0 0.0
        %5060 = vmatprep.subr.mxu0 0.0
        %5061 = vmatpush2.msra.mxu0 0.0
        %5062 = vmatprep.subr.mxu0 0.0
        %5063 = vmatpush2.msra.mxu0 0.0
        %5064 = vmatprep.subr.mxu0 0.0
        %5065 = vmatpush2.msra.mxu0 0.0
        %5066 = vmatprep.subr.mxu0 0.0
        %5067 = vmatpush2.msra.mxu0 0.0
        %5068 = vmatprep.mubr.f32.mxu0 0.0
        %5069 = vmatmul.mubr.f32.gmra.mxu0 %v1677
        %v5070 = vpop.f32.mrf.mxu0
        %v5071 = vadd.f32 %v4993, %v5070
        %v5072 = vpop.f32.mrf.mxu0
        %5073 = vmatprep.mubr.f32.mxu0 0.0
        %5074 = vmatmul.mubr.f32.gmra.mxu0 %v1680
        %v5075 = vpop.f32.mrf.mxu0
        %v5076 = vadd.f32 %v4998, %v5075
        %v5077 = vpop.f32.mrf.mxu0
        %5078 = vdwg.mxu0
        %s5079 = scalar_lea.vmem %s15, 3
        %v5080 = vld [vmem:[%s5079] sm:$0x1]
        %v5082 = vlaneseq
        %v5083 = vshrl.u32 %v5082, 7
        %v5084 = vsub.s32 0, %v5083
        %v5085 = vrot.slane %v5080, %v5084
        %v5087 = vadd.f32 %v5071, %v5085
        %v5088 = vadd.f32 %v5076, %v5085
        %v5090 = vsel %vm2474, %v4747, 0
        %v5093 = vsel %vm2474, %v4748, 0
        %v5096 = vsel %vm2474, %v4917, 0
        %v5099 = vsel %vm2474, %v4918, 0
        %5101 = vmatprep.subr.mxu0 0.0
        %5102 = vmatpush1.xpose.msra.mxu0 0.0
        %5103 = vmatprep.subr.mxu0 0.0
        %5104 = vmatpush1.xpose.msra.mxu0 0.0
        %5105 = vmatprep.subr.mxu0 0.0
        %5106 = vmatpush1.xpose.msra.mxu0 0.0
        %5107 = vmatprep.subr.mxu0 0.0
        %5108 = vmatpush1.xpose.msra.mxu0 0.0
        %5109 = vmatprep.subr.mxu0 0.0
        %5110 = vmatpush1.xpose.msra.mxu0 0.0
        %5111 = vmatprep.subr.mxu0 0.0
        %5112 = vmatpush1.xpose.msra.mxu0 0.0
        %5113 = vmatprep.subr.mxu0 0.0
        %5114 = vmatpush1.xpose.msra.mxu0 0.0
        %5115 = vmatprep.subr.mxu0 0.0
        %5116 = vmatpush1.xpose.msra.mxu0 0.0
        %5117 = vmatprep.subr.mxu0 0.0
        %5118 = vmatpush1.xpose.msra.mxu0 0.0
        %5119 = vmatprep.subr.mxu0 0.0
        %5120 = vmatpush1.xpose.msra.mxu0 0.0
        %5121 = vmatprep.subr.mxu0 0.0
        %5122 = vmatpush1.xpose.msra.mxu0 0.0
        %5123 = vmatprep.subr.mxu0 0.0
        %5124 = vmatpush1.xpose.msra.mxu0 0.0
        %5125 = vmatprep.subr.mxu0 0.0
        %5126 = vmatpush1.xpose.msra.mxu0 0.0
        %5127 = vmatprep.subr.mxu0 0.0
        %5128 = vmatpush1.xpose.msra.mxu0 0.0
        %5129 = vmatprep.subr.mxu0 0.0
        %5130 = vmatpush1.xpose.msra.mxu0 %v5099
        %5131 = vmatprep.subr.mxu0 0.0
        %5132 = vmatpush1.xpose.msra.mxu0 %v5096
        %5133 = vmatprep.subr.mxu0 0.0
        %5134 = vmatpush2.xpose.msra.mxu0 0.0
        %5135 = vmatprep.subr.mxu0 0.0
        %5136 = vmatpush2.xpose.msra.mxu0 0.0
        %5137 = vmatprep.subr.mxu0 0.0
        %5138 = vmatpush2.xpose.msra.mxu0 0.0
        %5139 = vmatprep.subr.mxu0 0.0
        %5140 = vmatpush2.xpose.msra.mxu0 0.0
        %5141 = vmatprep.subr.mxu0 0.0
        %5142 = vmatpush2.xpose.msra.mxu0 0.0
        %5143 = vmatprep.subr.mxu0 0.0
        %5144 = vmatpush2.xpose.msra.mxu0 0.0
        %5145 = vmatprep.subr.mxu0 0.0
        %5146 = vmatpush2.xpose.msra.mxu0 0.0
        %5147 = vmatprep.subr.mxu0 0.0
        %5148 = vmatpush2.xpose.msra.mxu0 0.0
        %5149 = vmatprep.subr.mxu0 0.0
        %5150 = vmatpush2.xpose.msra.mxu0 0.0
        %5151 = vmatprep.subr.mxu0 0.0
        %5152 = vmatpush2.xpose.msra.mxu0 0.0
        %5153 = vmatprep.subr.mxu0 0.0
        %5154 = vmatpush2.xpose.msra.mxu0 0.0
        %5155 = vmatprep.subr.mxu0 0.0
        %5156 = vmatpush2.xpose.msra.mxu0 0.0
        %5157 = vmatprep.subr.mxu0 0.0
        %5158 = vmatpush2.xpose.msra.mxu0 0.0
        %5159 = vmatprep.subr.mxu0 0.0
        %5160 = vmatpush2.xpose.msra.mxu0 0.0
        %5161 = vmatprep.subr.mxu0 0.0
        %5162 = vmatpush2.xpose.msra.mxu0 0.0
        %5163 = vmatprep.subr.mxu0 0.0
        %5164 = vmatpush2.xpose.msra.mxu0 0.0
        %5165 = vmatprep.mubr.f32.mxu0 0.0
        %5166 = vmatmul.mubr.f32.gmra.mxu0 %v5090
        %v5167 = vpop.f32.mrf.mxu0
        %v5168 = vadd.f32 0.0, %v5167
        %v5169 = vpop.f32.mrf.mxu0
        %5170 = vmatprep.mubr.f32.mxu0 0.0
        %5171 = vmatmul.mubr.f32.gmra.mxu0 %v5093
        %v5172 = vpop.f32.mrf.mxu0
        %v5173 = vadd.f32 0.0, %v5172
        %v5174 = vpop.f32.mrf.mxu0
        %5175 = vdwg.mxu0
        %v5176 = vmul.f32 %v5168, 0.33333334
        %v5177 = vmul.f32 %v5173, 0.33333334
        %v5178 = vsel %vm2564, %v5176, -inf
        %5179 = vmax.xlane.f32.xlu0 %v5178
        %v5180 = vpop.xlane.xlu0 %5179
        %v5181 = vsel %vm2564, %v5177, -inf
        %5182 = vmax.xlane.f32.xlu0 %v5181
        %v5183 = vpop.xlane.xlu0 %5182
        %v5184 = vsub.f32 %v5176, %v5180
        %v5185 = vsub.f32 %v5177, %v5183
        %v5186 = vmul.f32 %v5184, 1.442695
        %v5187 = vpow.pop %v5186
        %v5188 = vmul.f32 %v5185, 1.442695
        %v5189 = vpow.pop %v5188
        %v5190 = vsel %vm2564, %v5187, 0.0
        %5191 = vadd.xlane.f32.xlu0 %v5190
        %v5192 = vpop.xlane.xlu0 %5191
        %v5193 = vsel %vm2564, %v5189, 0.0
        %5194 = vadd.xlane.f32.xlu0 %v5193
        %v5195 = vpop.xlane.xlu0 %5194
        %v5196 = vrcp.pop %v5192
        %v5197 = vrcp.pop %v5195
        %v5198 = vmul.f32 %v5187, %v5196
        %v5199 = vmul.f32 %v5189, %v5197
        %v5201 = vsel %vm2564, %v5198, 0
        %v5204 = vsel %vm2564, %v5199, 0
        %5206 = vmatprep.subr.mxu0 0.0
        %5207 = vmatpush1.msra.mxu0 0.0
        %5208 = vmatprep.subr.mxu0 0.0
        %5209 = vmatpush1.msra.mxu0 0.0
        %5210 = vmatprep.subr.mxu0 0.0
        %5211 = vmatpush1.msra.mxu0 0.0
        %5212 = vmatprep.subr.mxu0 0.0
        %5213 = vmatpush1.msra.mxu0 0.0
        %5214 = vmatprep.subr.mxu0 0.0
        %5215 = vmatpush1.msra.mxu0 0.0
        %5216 = vmatprep.subr.mxu0 0.0
        %5217 = vmatpush1.msra.mxu0 0.0
        %5218 = vmatprep.subr.mxu0 0.0
        %5219 = vmatpush1.msra.mxu0 0.0
        %5220 = vmatprep.subr.mxu0 0.0
        %5221 = vmatpush1.msra.mxu0 0.0
        %5222 = vmatprep.subr.mxu0 0.0
        %5223 = vmatpush1.msra.mxu0 0.0
        %5224 = vmatprep.subr.mxu0 0.0
        %5225 = vmatpush1.msra.mxu0 0.0
        %5226 = vmatprep.subr.mxu0 0.0
        %5227 = vmatpush1.msra.mxu0 0.0
        %5228 = vmatprep.subr.mxu0 0.0
        %5229 = vmatpush1.msra.mxu0 0.0
        %5230 = vmatprep.subr.mxu0 0.0
        %5231 = vmatpush1.msra.mxu0 0.0
        %5232 = vmatprep.subr.mxu0 0.0
        %5233 = vmatpush1.msra.mxu0 0.0
        %5234 = vmatprep.subr.mxu0 0.0
        %5235 = vmatpush1.msra.mxu0 %v5088
        %5236 = vmatprep.subr.mxu0 0.0
        %5237 = vmatpush1.msra.mxu0 %v5087
        %5238 = vmatprep.subr.mxu0 0.0
        %5239 = vmatpush2.msra.mxu0 0.0
        %5240 = vmatprep.subr.mxu0 0.0
        %5241 = vmatpush2.msra.mxu0 0.0
        %5242 = vmatprep.subr.mxu0 0.0
        %5243 = vmatpush2.msra.mxu0 0.0
        %5244 = vmatprep.subr.mxu0 0.0
        %5245 = vmatpush2.msra.mxu0 0.0
        %5246 = vmatprep.subr.mxu0 0.0
        %5247 = vmatpush2.msra.mxu0 0.0
        %5248 = vmatprep.subr.mxu0 0.0
        %5249 = vmatpush2.msra.mxu0 0.0
        %5250 = vmatprep.subr.mxu0 0.0
        %5251 = vmatpush2.msra.mxu0 0.0
        %5252 = vmatprep.subr.mxu0 0.0
        %5253 = vmatpush2.msra.mxu0 0.0
        %5254 = vmatprep.subr.mxu0 0.0
        %5255 = vmatpush2.msra.mxu0 0.0
        %5256 = vmatprep.subr.mxu0 0.0
        %5257 = vmatpush2.msra.mxu0 0.0
        %5258 = vmatprep.subr.mxu0 0.0
        %5259 = vmatpush2.msra.mxu0 0.0
        %5260 = vmatprep.subr.mxu0 0.0
        %5261 = vmatpush2.msra.mxu0 0.0
        %5262 = vmatprep.subr.mxu0 0.0
        %5263 = vmatpush2.msra.mxu0 0.0
        %5264 = vmatprep.subr.mxu0 0.0
        %5265 = vmatpush2.msra.mxu0 0.0
        %5266 = vmatprep.subr.mxu0 0.0
        %5267 = vmatpush2.msra.mxu0 0.0
        %5268 = vmatprep.subr.mxu0 0.0
        %5269 = vmatpush2.msra.mxu0 0.0
        %5270 = vmatprep.mubr.f32.mxu0 0.0
        %5271 = vmatmul.mubr.f32.gmra.mxu0 %v5201
        %v5272 = vpop.f32.mrf.mxu0
        %v5273 = vadd.f32 0.0, %v5272
        %v5274 = vpop.f32.mrf.mxu0
        %5275 = vmatprep.mubr.f32.mxu0 0.0
        %5276 = vmatmul.mubr.f32.gmra.mxu0 %v5204
        %v5277 = vpop.f32.mrf.mxu0
        %v5278 = vadd.f32 0.0, %v5277
        %v5279 = vpop.f32.mrf.mxu0
        %5280 = vdwg.mxu0
        %s5281 = scalar_lea.vmem %s41, 48
        %v5282 = vld [vmem:[%s5281] sm:$0xff]
        %v5283 = vld [vmem:[%s5281 + $0x8] sm:$0x1]
        %v5285 = vsel %vm2474, %v5273, 0
        %v5288 = vsel %vm2474, %v5278, 0
        %v5291 = vsel %vm3383, %v5283, 0
        %5293 = vmatprep.subr.mxu0 0.0
        %5294 = vmatpush1.msra.mxu0 0.0
        %5295 = vmatprep.subr.mxu0 0.0
        %5296 = vmatpush1.msra.mxu0 0.0
        %5297 = vmatprep.subr.mxu0 0.0
        %5298 = vmatpush1.msra.mxu0 0.0
        %5299 = vmatprep.subr.mxu0 0.0
        %5300 = vmatpush1.msra.mxu0 0.0
        %5301 = vmatprep.subr.mxu0 0.0
        %5302 = vmatpush1.msra.mxu0 0.0
        %5303 = vmatprep.subr.mxu0 0.0
        %5304 = vmatpush1.msra.mxu0 0.0
        %5305 = vmatprep.subr.mxu0 0.0
        %5306 = vmatpush1.msra.mxu0 0.0
        %5307 = vmatprep.subr.mxu0 0.0
        %5308 = vmatpush1.msra.mxu0 0.0
        %5309 = vmatprep.subr.mxu0 0.0
        %5310 = vmatpush1.msra.mxu0 0.0
        %5311 = vmatprep.subr.mxu0 0.0
        %5312 = vmatpush1.msra.mxu0 0.0
        %5313 = vmatprep.subr.mxu0 0.0
        %5314 = vmatpush1.msra.mxu0 0.0
        %5315 = vmatprep.subr.mxu0 0.0
        %5316 = vmatpush1.msra.mxu0 0.0
        %5317 = vmatprep.subr.mxu0 0.0
        %5318 = vmatpush1.msra.mxu0 0.0
        %5319 = vmatprep.subr.mxu0 0.0
        %5320 = vmatpush1.msra.mxu0 0.0
        %5321 = vmatprep.subr.mxu0 0.0
        %5322 = vmatpush1.msra.mxu0 %v5291
        %5323 = vmatprep.subr.mxu0 0.0
        %5324 = vmatpush1.msra.mxu0 %v5282
        %5325 = vmatprep.subr.mxu0 0.0
        %5326 = vmatpush2.msra.mxu0 0.0
        %5327 = vmatprep.subr.mxu0 0.0
        %5328 = vmatpush2.msra.mxu0 0.0
        %5329 = vmatprep.subr.mxu0 0.0
        %5330 = vmatpush2.msra.mxu0 0.0
        %5331 = vmatprep.subr.mxu0 0.0
        %5332 = vmatpush2.msra.mxu0 0.0
        %5333 = vmatprep.subr.mxu0 0.0
        %5334 = vmatpush2.msra.mxu0 0.0
        %5335 = vmatprep.subr.mxu0 0.0
        %5336 = vmatpush2.msra.mxu0 0.0
        %5337 = vmatprep.subr.mxu0 0.0
        %5338 = vmatpush2.msra.mxu0 0.0
        %5339 = vmatprep.subr.mxu0 0.0
        %5340 = vmatpush2.msra.mxu0 0.0
        %5341 = vmatprep.subr.mxu0 0.0
        %5342 = vmatpush2.msra.mxu0 0.0
        %5343 = vmatprep.subr.mxu0 0.0
        %5344 = vmatpush2.msra.mxu0 0.0
        %5345 = vmatprep.subr.mxu0 0.0
        %5346 = vmatpush2.msra.mxu0 0.0
        %5347 = vmatprep.subr.mxu0 0.0
        %5348 = vmatpush2.msra.mxu0 0.0
        %5349 = vmatprep.subr.mxu0 0.0
        %5350 = vmatpush2.msra.mxu0 0.0
        %5351 = vmatprep.subr.mxu0 0.0
        %5352 = vmatpush2.msra.mxu0 0.0
        %5353 = vmatprep.subr.mxu0 0.0
        %5354 = vmatpush2.msra.mxu0 0.0
        %5355 = vmatprep.subr.mxu0 0.0
        %5356 = vmatpush2.msra.mxu0 0.0
        %5357 = vmatprep.mubr.f32.mxu0 0.0
        %5358 = vmatmul.mubr.f32.gmra.mxu0 %v5285
        %v5359 = vpop.f32.mrf.mxu0
        %v5360 = vadd.f32 0.0, %v5359
        %v5361 = vpop.f32.mrf.mxu0
        %5362 = vmatprep.mubr.f32.mxu0 0.0
        %5363 = vmatmul.mubr.f32.gmra.mxu0 %v5288
        %v5364 = vpop.f32.mrf.mxu0
        %v5365 = vadd.f32 0.0, %v5364
        %v5366 = vpop.f32.mrf.mxu0
        %5367 = vdwg.mxu0
        %v5368 = vadd.f32 %v4494, %v5360
        %v5369 = vadd.f32 %v4495, %v5365
        %s5370 = scalar_lea.vmem %s39, 48
        %v5371 = vld [vmem:[%s5370] sm:$0xff]
        %v5372 = vld [vmem:[%s5370 + $0x8] sm:$0x1]
        %v5374 = vsel %vm3383, %v5372, 0
        %5376 = vmatprep.subr.mxu0 0.0
        %5377 = vmatpush1.msra.mxu0 0.0
        %5378 = vmatprep.subr.mxu0 0.0
        %5379 = vmatpush1.msra.mxu0 0.0
        %5380 = vmatprep.subr.mxu0 0.0
        %5381 = vmatpush1.msra.mxu0 0.0
        %5382 = vmatprep.subr.mxu0 0.0
        %5383 = vmatpush1.msra.mxu0 0.0
        %5384 = vmatprep.subr.mxu0 0.0
        %5385 = vmatpush1.msra.mxu0 0.0
        %5386 = vmatprep.subr.mxu0 0.0
        %5387 = vmatpush1.msra.mxu0 0.0
        %5388 = vmatprep.subr.mxu0 0.0
        %5389 = vmatpush1.msra.mxu0 0.0
        %5390 = vmatprep.subr.mxu0 0.0
        %5391 = vmatpush1.msra.mxu0 0.0
        %5392 = vmatprep.subr.mxu0 0.0
        %5393 = vmatpush1.msra.mxu0 0.0
        %5394 = vmatprep.subr.mxu0 0.0
        %5395 = vmatpush1.msra.mxu0 0.0
        %5396 = vmatprep.subr.mxu0 0.0
        %5397 = vmatpush1.msra.mxu0 0.0
        %5398 = vmatprep.subr.mxu0 0.0
        %5399 = vmatpush1.msra.mxu0 0.0
        %5400 = vmatprep.subr.mxu0 0.0
        %5401 = vmatpush1.msra.mxu0 0.0
        %5402 = vmatprep.subr.mxu0 0.0
        %5403 = vmatpush1.msra.mxu0 0.0
        %5404 = vmatprep.subr.mxu0 0.0
        %5405 = vmatpush1.msra.mxu0 %v5374
        %5406 = vmatprep.subr.mxu0 0.0
        %5407 = vmatpush1.msra.mxu0 %v5371
        %5408 = vmatprep.subr.mxu0 0.0
        %5409 = vmatpush2.msra.mxu0 0.0
        %5410 = vmatprep.subr.mxu0 0.0
        %5411 = vmatpush2.msra.mxu0 0.0
        %5412 = vmatprep.subr.mxu0 0.0
        %5413 = vmatpush2.msra.mxu0 0.0
        %5414 = vmatprep.subr.mxu0 0.0
        %5415 = vmatpush2.msra.mxu0 0.0
        %5416 = vmatprep.subr.mxu0 0.0
        %5417 = vmatpush2.msra.mxu0 0.0
        %5418 = vmatprep.subr.mxu0 0.0
        %5419 = vmatpush2.msra.mxu0 0.0
        %5420 = vmatprep.subr.mxu0 0.0
        %5421 = vmatpush2.msra.mxu0 0.0
        %5422 = vmatprep.subr.mxu0 0.0
        %5423 = vmatpush2.msra.mxu0 0.0
        %5424 = vmatprep.subr.mxu0 0.0
        %5425 = vmatpush2.msra.mxu0 0.0
        %5426 = vmatprep.subr.mxu0 0.0
        %5427 = vmatpush2.msra.mxu0 0.0
        %5428 = vmatprep.subr.mxu0 0.0
        %5429 = vmatpush2.msra.mxu0 0.0
        %5430 = vmatprep.subr.mxu0 0.0
        %5431 = vmatpush2.msra.mxu0 0.0
        %5432 = vmatprep.subr.mxu0 0.0
        %5433 = vmatpush2.msra.mxu0 0.0
        %5434 = vmatprep.subr.mxu0 0.0
        %5435 = vmatpush2.msra.mxu0 0.0
        %5436 = vmatprep.subr.mxu0 0.0
        %5437 = vmatpush2.msra.mxu0 0.0
        %5438 = vmatprep.subr.mxu0 0.0
        %5439 = vmatpush2.msra.mxu0 0.0
        %5440 = vmatprep.mubr.f32.mxu0 0.0
        %5441 = vmatmul.mubr.f32.gmra.mxu0 %v5285
        %v5442 = vpop.f32.mrf.mxu0
        %v5443 = vadd.f32 0.0, %v5442
        %v5444 = vpop.f32.mrf.mxu0
        %5445 = vmatprep.mubr.f32.mxu0 0.0
        %5446 = vmatmul.mubr.f32.gmra.mxu0 %v5288
        %v5447 = vpop.f32.mrf.mxu0
        %v5448 = vadd.f32 0.0, %v5447
        %v5449 = vpop.f32.mrf.mxu0
        %5450 = vdwg.mxu0
        %v5451 = vadd.f32 %v4577, %v5443
        %v5452 = vadd.f32 %v4578, %v5448
        %v5453 = vadd.f32 %v1582, %v5368
        %v5454 = vadd.f32 %v1583, %v5369
        %v5455 = vld [vmem:[%s11] sm:$0x1]
        %v5457 = vlaneseq
        %v5458 = vshrl.u32 %v5457, 7
        %v5459 = vsub.s32 0, %v5458
        %v5460 = vrot.slane %v5455, %v5459
        %v5462 = vadd.f32 %v5453, %v5460
        %v5463 = vadd.f32 %v5454, %v5460
        %v5464 = vadd.f32 %v1965, %v5451
        %v5465 = vadd.f32 %v1966, %v5452
        %v5466 = vld [vmem:[%s9] sm:$0x1]
        %v5468 = vlaneseq
        %v5469 = vshrl.u32 %v5468, 7
        %v5470 = vsub.s32 0, %v5469
        %v5471 = vrot.slane %v5466, %v5470
        %v5473 = vadd.f32 %v5464, %v5471
        %v5474 = vadd.f32 %v5465, %v5471
        %v5475 = vsel %vm1675, %v5462, 0.0
        %5476 = vadd.xlane.f32.xlu0 %v5475
        %v5477 = vpop.xlane.xlu0 %5476
        %v5478 = vsel %vm1675, %v5463, 0.0
        %5479 = vadd.xlane.f32.xlu0 %v5478
        %v5480 = vpop.xlane.xlu0 %5479
        %v5481 = vsel %vm1783, %v5473, 0.0
        %5482 = vadd.xlane.f32.xlu0 %v5481
        %v5483 = vpop.xlane.xlu0 %5482
        %v5484 = vsel %vm1783, %v5474, 0.0
        %5485 = vadd.xlane.f32.xlu0 %v5484
        %v5486 = vpop.xlane.xlu0 %5485
        %v5487 = vadd.f32 %v5477, %v5483
        %v5488 = vadd.f32 %v5480, %v5486
        %v5489 = vrcp.pop 36.0
        %v5490 = vmul.f32 %v5487, %v5489
        %v5491 = vmul.f32 %v5488, %v5489
        %v5492 = vsub.f32 %v5462, %v5490
        %v5493 = vsub.f32 %v5463, %v5491
        %v5494 = vsub.f32 %v5473, %v5490
        %v5495 = vsub.f32 %v5474, %v5491
        %v5496 = vmul.f32 %v5492, %v5492
        %v5497 = vmul.f32 %v5493, %v5493
        %v5498 = vsel %vm1675, %v5496, 0.0
        %5499 = vadd.xlane.f32.xlu0 %v5498
        %v5500 = vpop.xlane.xlu0 %5499
        %v5501 = vsel %vm1675, %v5497, 0.0
        %5502 = vadd.xlane.f32.xlu0 %v5501
        %v5503 = vpop.xlane.xlu0 %5502
        %v5504 = vmul.f32 %v5494, %v5494
        %v5505 = vmul.f32 %v5495, %v5495
        %v5506 = vsel %vm1783, %v5504, 0.0
        %5507 = vadd.xlane.f32.xlu0 %v5506
        %v5508 = vpop.xlane.xlu0 %5507
        %v5509 = vsel %vm1783, %v5505, 0.0
        %5510 = vadd.xlane.f32.xlu0 %v5509
        %v5511 = vpop.xlane.xlu0 %5510
        %v5512 = vadd.f32 %v5500, %v5508
        %v5513 = vadd.f32 %v5503, %v5511
        %v5514 = vmul.f32 %v5512, %v5489
        %v5515 = vmul.f32 %v5513, %v5489
        %v5516 = vadd.f32 %v5514, 1e-05
        %v5517 = vadd.f32 %v5515, 1e-05
        %v5518 = vrsqrt.pop %v5516
        %v5519 = vrsqrt.pop %v5517
        %v5520 = vmul.f32 %v5492, %v5518
        %v5521 = vmul.f32 %v5493, %v5519
        %v5522 = vld [vmem:[%s29] sm:$0x1]
        %v5524 = vlaneseq
        %v5525 = vshrl.u32 %v5524, 7
        %v5526 = vsub.s32 0, %v5525
        %v5527 = vrot.slane %v5522, %v5526
        %v5529 = vmul.f32 %v5520, %v5527
        %v5530 = vmul.f32 %v5521, %v5527
        %v5531 = vld [vmem:[%s25] sm:$0x1]
        %v5533 = vlaneseq
        %v5534 = vshrl.u32 %v5533, 7
        %v5535 = vsub.s32 0, %v5534
        %v5536 = vrot.slane %v5531, %v5535
        %v5538 = vadd.f32 %v5529, %v5536
        %v5539 = vadd.f32 %v5530, %v5536
        %v5540 = vmul.f32 %v5494, %v5518
        %v5541 = vmul.f32 %v5495, %v5519
        %v5542 = vld [vmem:[%s27] sm:$0x1]
        %v5544 = vlaneseq
        %v5545 = vshrl.u32 %v5544, 7
        %v5546 = vsub.s32 0, %v5545
        %v5547 = vrot.slane %v5542, %v5546
        %v5549 = vmul.f32 %v5540, %v5547
        %v5550 = vmul.f32 %v5541, %v5547
        %v5551 = vld [vmem:[%s23] sm:$0x1]
        %v5553 = vlaneseq
        %v5554 = vshrl.u32 %v5553, 7
        %v5555 = vsub.s32 0, %v5554
        %v5556 = vrot.slane %v5551, %v5555
        %v5558 = vadd.f32 %v5549, %v5556
        %v5559 = vadd.f32 %v5550, %v5556
        %v5560 = vld [vmem:[%s21] sm:$0xf]
        %v5561 = vld [vmem:[%s19] sm:$0xff]
        %v5562 = vld [vmem:[%s19 + $0x8] sm:$0xff]
        %v5563 = vld [vmem:[%s19 + $0x10] sm:$0xff]
        %v5564 = vld [vmem:[%s19 + $0x18] sm:$0xff]
        %v5566 = vsel %vm1783, %v5558, 0
        %v5569 = vsel %vm1783, %v5559, 0
        %5571 = vmatprep.subr.mxu0 0.0
        %5572 = vmatpush1.msra.mxu0 0.0
        %5573 = vmatprep.subr.mxu0 0.0
        %5574 = vmatpush1.msra.mxu0 0.0
        %5575 = vmatprep.subr.mxu0 0.0
        %5576 = vmatpush1.msra.mxu0 0.0
        %5577 = vmatprep.subr.mxu0 0.0
        %5578 = vmatpush1.msra.mxu0 0.0
        %5579 = vmatprep.subr.mxu0 0.0
        %5580 = vmatpush1.msra.mxu0 0.0
        %5581 = vmatprep.subr.mxu0 0.0
        %5582 = vmatpush1.msra.mxu0 0.0
        %5583 = vmatprep.subr.mxu0 0.0
        %5584 = vmatpush1.msra.mxu0 0.0
        %5585 = vmatprep.subr.mxu0 0.0
        %5586 = vmatpush1.msra.mxu0 0.0
        %5587 = vmatprep.subr.mxu0 0.0
        %5588 = vmatpush1.msra.mxu0 0.0
        %5589 = vmatprep.subr.mxu0 0.0
        %5590 = vmatpush1.msra.mxu0 0.0
        %5591 = vmatprep.subr.mxu0 0.0
        %5592 = vmatpush1.msra.mxu0 0.0
        %5593 = vmatprep.subr.mxu0 0.0
        %5594 = vmatpush1.msra.mxu0 0.0
        %5595 = vmatprep.subr.mxu0 0.0
        %5596 = vmatpush1.msra.mxu0 %v5564
        %5597 = vmatprep.subr.mxu0 0.0
        %5598 = vmatpush1.msra.mxu0 %v5563
        %5599 = vmatprep.subr.mxu0 0.0
        %5600 = vmatpush1.msra.mxu0 %v5562
        %5601 = vmatprep.subr.mxu0 0.0
        %5602 = vmatpush1.msra.mxu0 %v5561
        %5603 = vmatprep.subr.mxu0 0.0
        %5604 = vmatpush2.msra.mxu0 0.0
        %5605 = vmatprep.subr.mxu0 0.0
        %5606 = vmatpush2.msra.mxu0 0.0
        %5607 = vmatprep.subr.mxu0 0.0
        %5608 = vmatpush2.msra.mxu0 0.0
        %5609 = vmatprep.subr.mxu0 0.0
        %5610 = vmatpush2.msra.mxu0 0.0
        %5611 = vmatprep.subr.mxu0 0.0
        %5612 = vmatpush2.msra.mxu0 0.0
        %5613 = vmatprep.subr.mxu0 0.0
        %5614 = vmatpush2.msra.mxu0 0.0
        %5615 = vmatprep.subr.mxu0 0.0
        %5616 = vmatpush2.msra.mxu0 0.0
        %5617 = vmatprep.subr.mxu0 0.0
        %5618 = vmatpush2.msra.mxu0 0.0
        %5619 = vmatprep.subr.mxu0 0.0
        %5620 = vmatpush2.msra.mxu0 0.0
        %5621 = vmatprep.subr.mxu0 0.0
        %5622 = vmatpush2.msra.mxu0 0.0
        %5623 = vmatprep.subr.mxu0 0.0
        %5624 = vmatpush2.msra.mxu0 0.0
        %5625 = vmatprep.subr.mxu0 0.0
        %5626 = vmatpush2.msra.mxu0 0.0
        %5627 = vmatprep.subr.mxu0 0.0
        %5628 = vmatpush2.msra.mxu0 0.0
        %5629 = vmatprep.subr.mxu0 0.0
        %5630 = vmatpush2.msra.mxu0 0.0
        %5631 = vmatprep.subr.mxu0 0.0
        %5632 = vmatpush2.msra.mxu0 0.0
        %5633 = vmatprep.subr.mxu0 0.0
        %5634 = vmatpush2.msra.mxu0 0.0
        %5635 = vmatprep.mubr.f32.mxu0 0.0
        %5636 = vmatmul.mubr.f32.gmra.mxu0 %v5566
        %v5637 = vpop.f32.mrf.mxu0
        %v5638 = vadd.f32 0.0, %v5637
        %v5639 = vpop.f32.mrf.mxu0
        %5640 = vmatprep.mubr.f32.mxu0 0.0
        %5641 = vmatmul.mubr.f32.gmra.mxu0 %v5569
        %v5642 = vpop.f32.mrf.mxu0
        %v5643 = vadd.f32 0.0, %v5642
        %v5644 = vpop.f32.mrf.mxu0
        %5645 = vdwg.mxu0
        %v5647 = vsel %vm1675, %v5538, 0
        %v5650 = vsel %vm1675, %v5539, 0
        %v5653 = vsel %vm1682, %v5560, 0
        %5655 = vmatprep.subr.mxu0 0.0
        %5656 = vmatpush1.msra.mxu0 0.0
        %5657 = vmatprep.subr.mxu0 0.0
        %5658 = vmatpush1.msra.mxu0 0.0
        %5659 = vmatprep.subr.mxu0 0.0
        %5660 = vmatpush1.msra.mxu0 0.0
        %5661 = vmatprep.subr.mxu0 0.0
        %5662 = vmatpush1.msra.mxu0 0.0
        %5663 = vmatprep.subr.mxu0 0.0
        %5664 = vmatpush1.msra.mxu0 0.0
        %5665 = vmatprep.subr.mxu0 0.0
        %5666 = vmatpush1.msra.mxu0 0.0
        %5667 = vmatprep.subr.mxu0 0.0
        %5668 = vmatpush1.msra.mxu0 0.0
        %5669 = vmatprep.subr.mxu0 0.0
        %5670 = vmatpush1.msra.mxu0 0.0
        %5671 = vmatprep.subr.mxu0 0.0
        %5672 = vmatpush1.msra.mxu0 0.0
        %5673 = vmatprep.subr.mxu0 0.0
        %5674 = vmatpush1.msra.mxu0 0.0
        %5675 = vmatprep.subr.mxu0 0.0
        %5676 = vmatpush1.msra.mxu0 0.0
        %5677 = vmatprep.subr.mxu0 0.0
        %5678 = vmatpush1.msra.mxu0 0.0
        %5679 = vmatprep.subr.mxu0 0.0
        %5680 = vmatpush1.msra.mxu0 0.0
        %5681 = vmatprep.subr.mxu0 0.0
        %5682 = vmatpush1.msra.mxu0 0.0
        %5683 = vmatprep.subr.mxu0 0.0
        %5684 = vmatpush1.msra.mxu0 0.0
        %5685 = vmatprep.subr.mxu0 0.0
        %5686 = vmatpush1.msra.mxu0 %v5653
        %5687 = vmatprep.subr.mxu0 0.0
        %5688 = vmatpush2.msra.mxu0 0.0
        %5689 = vmatprep.subr.mxu0 0.0
        %5690 = vmatpush2.msra.mxu0 0.0
        %5691 = vmatprep.subr.mxu0 0.0
        %5692 = vmatpush2.msra.mxu0 0.0
        %5693 = vmatprep.subr.mxu0 0.0
        %5694 = vmatpush2.msra.mxu0 0.0
        %5695 = vmatprep.subr.mxu0 0.0
        %5696 = vmatpush2.msra.mxu0 0.0
        %5697 = vmatprep.subr.mxu0 0.0
        %5698 = vmatpush2.msra.mxu0 0.0
        %5699 = vmatprep.subr.mxu0 0.0
        %5700 = vmatpush2.msra.mxu0 0.0
        %5701 = vmatprep.subr.mxu0 0.0
        %5702 = vmatpush2.msra.mxu0 0.0
        %5703 = vmatprep.subr.mxu0 0.0
        %5704 = vmatpush2.msra.mxu0 0.0
        %5705 = vmatprep.subr.mxu0 0.0
        %5706 = vmatpush2.msra.mxu0 0.0
        %5707 = vmatprep.subr.mxu0 0.0
        %5708 = vmatpush2.msra.mxu0 0.0
        %5709 = vmatprep.subr.mxu0 0.0
        %5710 = vmatpush2.msra.mxu0 0.0
        %5711 = vmatprep.subr.mxu0 0.0
        %5712 = vmatpush2.msra.mxu0 0.0
        %5713 = vmatprep.subr.mxu0 0.0
        %5714 = vmatpush2.msra.mxu0 0.0
        %5715 = vmatprep.subr.mxu0 0.0
        %5716 = vmatpush2.msra.mxu0 0.0
        %5717 = vmatprep.subr.mxu0 0.0
        %5718 = vmatpush2.msra.mxu0 0.0
        %5719 = vmatprep.mubr.f32.mxu0 0.0
        %5720 = vmatmul.mubr.f32.gmra.mxu0 %v5647
        %v5721 = vpop.f32.mrf.mxu0
        %v5722 = vadd.f32 %v5638, %v5721
        %v5723 = vpop.f32.mrf.mxu0
        %5724 = vmatprep.mubr.f32.mxu0 0.0
        %5725 = vmatmul.mubr.f32.gmra.mxu0 %v5650
        %v5726 = vpop.f32.mrf.mxu0
        %v5727 = vadd.f32 %v5643, %v5726
        %v5728 = vpop.f32.mrf.mxu0
        %5729 = vdwg.mxu0
        %v5730 = vld [vmem:[%s17] sm:$0x1]
        %v5732 = vlaneseq
        %v5733 = vshrl.u32 %v5732, 7
        %v5734 = vsub.s32 0, %v5733
        %v5735 = vrot.slane %v5730, %v5734
        %v5737 = vadd.f32 %v5722, %v5735
        %v5738 = vadd.f32 %v5727, %v5735
        %v5739 = vsel %vm1783, %v5737, 0.0
        %5740 = vadd.xlane.f32.xlu0 %v5739
        %v5741 = vpop.xlane.xlu0 %5740
        %v5742 = vsel %vm1783, %v5738, 0.0
        %5743 = vadd.xlane.f32.xlu0 %v5742
        %v5744 = vpop.xlane.xlu0 %5743
        %v5745 = vrcp.pop 32.0
        %v5746 = vmul.f32 %v5741, %v5745
        %v5747 = vmul.f32 %v5744, %v5745
        %v5748 = vsub.f32 %v5737, %v5746
        %v5749 = vsub.f32 %v5738, %v5747
        %v5750 = vmul.f32 %v5748, %v5748
        %v5751 = vmul.f32 %v5749, %v5749
        %v5752 = vsel %vm1783, %v5750, 0.0
        %5753 = vadd.xlane.f32.xlu0 %v5752
        %v5754 = vpop.xlane.xlu0 %5753
        %v5755 = vsel %vm1783, %v5751, 0.0
        %5756 = vadd.xlane.f32.xlu0 %v5755
        %v5757 = vpop.xlane.xlu0 %5756
        %v5758 = vmul.f32 %v5754, %v5745
        %v5759 = vmul.f32 %v5757, %v5745
        %v5760 = vadd.f32 %v5758, 1e-05
        %v5761 = vadd.f32 %v5759, 1e-05
        %v5762 = vrsqrt.pop %v5760
        %v5763 = vrsqrt.pop %v5761
        %v5764 = vmul.f32 %v5748, %v5762
        %v5765 = vmul.f32 %v5749, %v5763
        %v5766 = vld [vmem:[%s33] sm:$0x1]
        %v5768 = vlaneseq
        %v5769 = vshrl.u32 %v5768, 7
        %v5770 = vsub.s32 0, %v5769
        %v5771 = vrot.slane %v5766, %v5770
        %v5773 = vmul.f32 %v5764, %v5771
        %v5774 = vmul.f32 %v5765, %v5771
        %v5775 = vld [vmem:[%s31] sm:$0x1]
        %v5777 = vlaneseq
        %v5778 = vshrl.u32 %v5777, 7
        %v5779 = vsub.s32 0, %v5778
        %v5780 = vrot.slane %v5775, %v5779
        %v5782 = vadd.f32 %v5773, %v5780
        %v5783 = vadd.f32 %v5774, %v5780
      $region233: #{tfspos_forward.1} parent=227 // loop_footer
        %s1964 = sadd.s32 1, %s1960
      $region234: #{tfspos_forward.1} parent=227 // loop_footer_branch
        %1959 = sbr.rel target = $region230
      $region235: #{tfspos_forward.1} parent=227 // loop_exit
        _
      %v5784 = vld [vmem:[%s95] sm:$0xf]
      %v5785 = vld [vmem:[%s93] sm:$0x1]
      %v5787 = vlaneseq
      %v5788 = vshrl.u32 %v5787, 7
      %v5789 = vsub.s32 0, %v5788
      %v5790 = vrot.slane %v5785, %v5789
      %v5793 = vsel %vm1675, %v1586, 0
      %v5796 = vsel %vm1682, %v5784, 0
      %5798 = vmatprep.subr.mxu0 0.0
      %5799 = vmatpush1.msra.mxu0 0.0
      %5800 = vmatprep.subr.mxu0 0.0
      %5801 = vmatpush1.msra.mxu0 0.0
      %5802 = vmatprep.subr.mxu0 0.0
      %5803 = vmatpush1.msra.mxu0 0.0
      %5804 = vmatprep.subr.mxu0 0.0
      %5805 = vmatpush1.msra.mxu0 0.0
      %5806 = vmatprep.subr.mxu0 0.0
      %5807 = vmatpush1.msra.mxu0 0.0
      %5808 = vmatprep.subr.mxu0 0.0
      %5809 = vmatpush1.msra.mxu0 0.0
      %5810 = vmatprep.subr.mxu0 0.0
      %5811 = vmatpush1.msra.mxu0 0.0
      %5812 = vmatprep.subr.mxu0 0.0
      %5813 = vmatpush1.msra.mxu0 0.0
      %5814 = vmatprep.subr.mxu0 0.0
      %5815 = vmatpush1.msra.mxu0 0.0
      %5816 = vmatprep.subr.mxu0 0.0
      %5817 = vmatpush1.msra.mxu0 0.0
      %5818 = vmatprep.subr.mxu0 0.0
      %5819 = vmatpush1.msra.mxu0 0.0
      %5820 = vmatprep.subr.mxu0 0.0
      %5821 = vmatpush1.msra.mxu0 0.0
      %5822 = vmatprep.subr.mxu0 0.0
      %5823 = vmatpush1.msra.mxu0 0.0
      %5824 = vmatprep.subr.mxu0 0.0
      %5825 = vmatpush1.msra.mxu0 0.0
      %5826 = vmatprep.subr.mxu0 0.0
      %5827 = vmatpush1.msra.mxu0 0.0
      %5828 = vmatprep.subr.mxu0 0.0
      %5829 = vmatpush1.msra.mxu0 %v5796
      %5830 = vmatprep.subr.mxu0 0.0
      %5831 = vmatpush2.msra.mxu0 0.0
      %5832 = vmatprep.subr.mxu0 0.0
      %5833 = vmatpush2.msra.mxu0 0.0
      %5834 = vmatprep.subr.mxu0 0.0
      %5835 = vmatpush2.msra.mxu0 0.0
      %5836 = vmatprep.subr.mxu0 0.0
      %5837 = vmatpush2.msra.mxu0 0.0
      %5838 = vmatprep.subr.mxu0 0.0
      %5839 = vmatpush2.msra.mxu0 0.0
      %5840 = vmatprep.subr.mxu0 0.0
      %5841 = vmatpush2.msra.mxu0 0.0
      %5842 = vmatprep.subr.mxu0 0.0
      %5843 = vmatpush2.msra.mxu0 0.0
      %5844 = vmatprep.subr.mxu0 0.0
      %5845 = vmatpush2.msra.mxu0 0.0
      %5846 = vmatprep.subr.mxu0 0.0
      %5847 = vmatpush2.msra.mxu0 0.0
      %5848 = vmatprep.subr.mxu0 0.0
      %5849 = vmatpush2.msra.mxu0 0.0
      %5850 = vmatprep.subr.mxu0 0.0
      %5851 = vmatpush2.msra.mxu0 0.0
      %5852 = vmatprep.subr.mxu0 0.0
      %5853 = vmatpush2.msra.mxu0 0.0
      %5854 = vmatprep.subr.mxu0 0.0
      %5855 = vmatpush2.msra.mxu0 0.0
      %5856 = vmatprep.subr.mxu0 0.0
      %5857 = vmatpush2.msra.mxu0 0.0
      %5858 = vmatprep.subr.mxu0 0.0
      %5859 = vmatpush2.msra.mxu0 0.0
      %5860 = vmatprep.subr.mxu0 0.0
      %5861 = vmatpush2.msra.mxu0 0.0
      %5862 = vmatprep.mubr.f32.mxu0 0.0
      %5863 = vmatmul.mubr.f32.gmra.mxu0 %v5793
      %v5864 = vpop.f32.mrf.mxu0
      %v5865 = vadd.f32 %v5790, %v5864
      %v5866 = vpop.f32.mrf.mxu0
      %5867 = vdwg.mxu0
      %v5868 = vmax.f32 %v5865, 0.0
      %v5869 = vld [vmem:[%s99] sm:$0xff]
      %v5870 = vld [vmem:[%s99 + $0x8] sm:$0xff]
      %v5871 = vld [vmem:[%s99 + $0x10] sm:$0xff]
      %v5872 = vld [vmem:[%s99 + $0x18] sm:$0xff]
      %v5873 = vld [vmem:[%s97] sm:$0x1]
      %v5875 = vlaneseq
      %v5876 = vshrl.u32 %v5875, 7
      %v5877 = vsub.s32 0, %v5876
      %v5878 = vrot.slane %v5873, %v5877
      %v5881 = vsel %vm1783, %v5868, 0
      %5883 = vmatprep.subr.mxu0 0.0
      %5884 = vmatpush1.msra.mxu0 0.0
      %5885 = vmatprep.subr.mxu0 0.0
      %5886 = vmatpush1.msra.mxu0 0.0
      %5887 = vmatprep.subr.mxu0 0.0
      %5888 = vmatpush1.msra.mxu0 0.0
      %5889 = vmatprep.subr.mxu0 0.0
      %5890 = vmatpush1.msra.mxu0 0.0
      %5891 = vmatprep.subr.mxu0 0.0
      %5892 = vmatpush1.msra.mxu0 0.0
      %5893 = vmatprep.subr.mxu0 0.0
      %5894 = vmatpush1.msra.mxu0 0.0
      %5895 = vmatprep.subr.mxu0 0.0
      %5896 = vmatpush1.msra.mxu0 0.0
      %5897 = vmatprep.subr.mxu0 0.0
      %5898 = vmatpush1.msra.mxu0 0.0
      %5899 = vmatprep.subr.mxu0 0.0
      %5900 = vmatpush1.msra.mxu0 0.0
      %5901 = vmatprep.subr.mxu0 0.0
      %5902 = vmatpush1.msra.mxu0 0.0
      %5903 = vmatprep.subr.mxu0 0.0
      %5904 = vmatpush1.msra.mxu0 0.0
      %5905 = vmatprep.subr.mxu0 0.0
      %5906 = vmatpush1.msra.mxu0 0.0
      %5907 = vmatprep.subr.mxu0 0.0
      %5908 = vmatpush1.msra.mxu0 %v5872
      %5909 = vmatprep.subr.mxu0 0.0
      %5910 = vmatpush1.msra.mxu0 %v5871
      %5911 = vmatprep.subr.mxu0 0.0
      %5912 = vmatpush1.msra.mxu0 %v5870
      %5913 = vmatprep.subr.mxu0 0.0
      %5914 = vmatpush1.msra.mxu0 %v5869
      %5915 = vmatprep.subr.mxu0 0.0
      %5916 = vmatpush2.msra.mxu0 0.0
      %5917 = vmatprep.subr.mxu0 0.0
      %5918 = vmatpush2.msra.mxu0 0.0
      %5919 = vmatprep.subr.mxu0 0.0
      %5920 = vmatpush2.msra.mxu0 0.0
      %5921 = vmatprep.subr.mxu0 0.0
      %5922 = vmatpush2.msra.mxu0 0.0
      %5923 = vmatprep.subr.mxu0 0.0
      %5924 = vmatpush2.msra.mxu0 0.0
      %5925 = vmatprep.subr.mxu0 0.0
      %5926 = vmatpush2.msra.mxu0 0.0
      %5927 = vmatprep.subr.mxu0 0.0
      %5928 = vmatpush2.msra.mxu0 0.0
      %5929 = vmatprep.subr.mxu0 0.0
      %5930 = vmatpush2.msra.mxu0 0.0
      %5931 = vmatprep.subr.mxu0 0.0
      %5932 = vmatpush2.msra.mxu0 0.0
      %5933 = vmatprep.subr.mxu0 0.0
      %5934 = vmatpush2.msra.mxu0 0.0
      %5935 = vmatprep.subr.mxu0 0.0
      %5936 = vmatpush2.msra.mxu0 0.0
      %5937 = vmatprep.subr.mxu0 0.0
      %5938 = vmatpush2.msra.mxu0 0.0
      %5939 = vmatprep.subr.mxu0 0.0
      %5940 = vmatpush2.msra.mxu0 0.0
      %5941 = vmatprep.subr.mxu0 0.0
      %5942 = vmatpush2.msra.mxu0 0.0
      %5943 = vmatprep.subr.mxu0 0.0
      %5944 = vmatpush2.msra.mxu0 0.0
      %5945 = vmatprep.subr.mxu0 0.0
      %5946 = vmatpush2.msra.mxu0 0.0
      %5947 = vmatprep.mubr.f32.mxu0 0.0
      %5948 = vmatmul.mubr.f32.gmra.mxu0 %v5881
      %v5949 = vpop.f32.mrf.mxu0
      %v5950 = vadd.f32 %v5878, %v5949
      %v5951 = vpop.f32.mrf.mxu0
      %5952 = vdwg.mxu0
      %v5953 = vmax.f32 %v5950, 0.0
      %v5954 = vld [vmem:[%s103] sm:$0xff]
      %v5955 = vld [vmem:[%s103 + $0x8] sm:$0xff]
      %v5956 = vld [vmem:[%s103 + $0x10] sm:$0xff]
      %v5957 = vld [vmem:[%s103 + $0x18] sm:$0xff]
      %v5958 = vld [vmem:[%s101] sm:$0x1]
      %v5960 = vlaneseq
      %v5961 = vshrl.u32 %v5960, 7
      %v5962 = vsub.s32 0, %v5961
      %v5963 = vrot.slane %v5958, %v5962
      %v5966 = vsel %vm1783, %v5953, 0
      %5968 = vmatprep.subr.mxu0 0.0
      %5969 = vmatpush1.msra.mxu0 0.0
      %5970 = vmatprep.subr.mxu0 0.0
      %5971 = vmatpush1.msra.mxu0 0.0
      %5972 = vmatprep.subr.mxu0 0.0
      %5973 = vmatpush1.msra.mxu0 0.0
      %5974 = vmatprep.subr.mxu0 0.0
      %5975 = vmatpush1.msra.mxu0 0.0
      %5976 = vmatprep.subr.mxu0 0.0
      %5977 = vmatpush1.msra.mxu0 0.0
      %5978 = vmatprep.subr.mxu0 0.0
      %5979 = vmatpush1.msra.mxu0 0.0
      %5980 = vmatprep.subr.mxu0 0.0
      %5981 = vmatpush1.msra.mxu0 0.0
      %5982 = vmatprep.subr.mxu0 0.0
      %5983 = vmatpush1.msra.mxu0 0.0
      %5984 = vmatprep.subr.mxu0 0.0
      %5985 = vmatpush1.msra.mxu0 0.0
      %5986 = vmatprep.subr.mxu0 0.0
      %5987 = vmatpush1.msra.mxu0 0.0
      %5988 = vmatprep.subr.mxu0 0.0
      %5989 = vmatpush1.msra.mxu0 0.0
      %5990 = vmatprep.subr.mxu0 0.0
      %5991 = vmatpush1.msra.mxu0 0.0
      %5992 = vmatprep.subr.mxu0 0.0
      %5993 = vmatpush1.msra.mxu0 %v5957
      %5994 = vmatprep.subr.mxu0 0.0
      %5995 = vmatpush1.msra.mxu0 %v5956
      %5996 = vmatprep.subr.mxu0 0.0
      %5997 = vmatpush1.msra.mxu0 %v5955
      %5998 = vmatprep.subr.mxu0 0.0
      %5999 = vmatpush1.msra.mxu0 %v5954
      %6000 = vmatprep.subr.mxu0 0.0
      %6001 = vmatpush2.msra.mxu0 0.0
      %6002 = vmatprep.subr.mxu0 0.0
      %6003 = vmatpush2.msra.mxu0 0.0
      %6004 = vmatprep.subr.mxu0 0.0
      %6005 = vmatpush2.msra.mxu0 0.0
      %6006 = vmatprep.subr.mxu0 0.0
      %6007 = vmatpush2.msra.mxu0 0.0
      %6008 = vmatprep.subr.mxu0 0.0
      %6009 = vmatpush2.msra.mxu0 0.0
      %6010 = vmatprep.subr.mxu0 0.0
      %6011 = vmatpush2.msra.mxu0 0.0
      %6012 = vmatprep.subr.mxu0 0.0
      %6013 = vmatpush2.msra.mxu0 0.0
      %6014 = vmatprep.subr.mxu0 0.0
      %6015 = vmatpush2.msra.mxu0 0.0
      %6016 = vmatprep.subr.mxu0 0.0
      %6017 = vmatpush2.msra.mxu0 0.0
      %6018 = vmatprep.subr.mxu0 0.0
      %6019 = vmatpush2.msra.mxu0 0.0
      %6020 = vmatprep.subr.mxu0 0.0
      %6021 = vmatpush2.msra.mxu0 0.0
      %6022 = vmatprep.subr.mxu0 0.0
      %6023 = vmatpush2.msra.mxu0 0.0
      %6024 = vmatprep.subr.mxu0 0.0
      %6025 = vmatpush2.msra.mxu0 0.0
      %6026 = vmatprep.subr.mxu0 0.0
      %6027 = vmatpush2.msra.mxu0 0.0
      %6028 = vmatprep.subr.mxu0 0.0
      %6029 = vmatpush2.msra.mxu0 0.0
      %6030 = vmatprep.subr.mxu0 0.0
      %6031 = vmatpush2.msra.mxu0 0.0
      %6032 = vmatprep.mubr.f32.mxu0 0.0
      %6033 = vmatmul.mubr.f32.gmra.mxu0 %v5966
      %v6034 = vpop.f32.mrf.mxu0
      %v6035 = vadd.f32 %v5963, %v6034
      %v6036 = vpop.f32.mrf.mxu0
      %6037 = vdwg.mxu0
      %v6038 = vld [vmem:[%s63] sm:$0xff]
      %v6039 = vld [vmem:[%s63 + $0x8] sm:$0xff]
      %v6040 = vld [vmem:[%s63 + $0x10] sm:$0xff]
      %v6041 = vld [vmem:[%s63 + $0x18] sm:$0xff]
      %v6042 = vld [vmem:[%s55] sm:$0x1]
      %v6044 = vlaneseq
      %v6045 = vshrl.u32 %v6044, 7
      %v6046 = vsub.s32 0, %v6045
      %v6047 = vrot.slane %v6042, %v6046
      %v6050 = vsel %vm1783, %v6035, 0
      %6052 = vmatprep.subr.mxu0 0.0
      %6053 = vmatpush1.msra.mxu0 0.0
      %6054 = vmatprep.subr.mxu0 0.0
      %6055 = vmatpush1.msra.mxu0 0.0
      %6056 = vmatprep.subr.mxu0 0.0
      %6057 = vmatpush1.msra.mxu0 0.0
      %6058 = vmatprep.subr.mxu0 0.0
      %6059 = vmatpush1.msra.mxu0 0.0
      %6060 = vmatprep.subr.mxu0 0.0
      %6061 = vmatpush1.msra.mxu0 0.0
      %6062 = vmatprep.subr.mxu0 0.0
      %6063 = vmatpush1.msra.mxu0 0.0
      %6064 = vmatprep.subr.mxu0 0.0
      %6065 = vmatpush1.msra.mxu0 0.0
      %6066 = vmatprep.subr.mxu0 0.0
      %6067 = vmatpush1.msra.mxu0 0.0
      %6068 = vmatprep.subr.mxu0 0.0
      %6069 = vmatpush1.msra.mxu0 0.0
      %6070 = vmatprep.subr.mxu0 0.0
      %6071 = vmatpush1.msra.mxu0 0.0
      %6072 = vmatprep.subr.mxu0 0.0
      %6073 = vmatpush1.msra.mxu0 0.0
      %6074 = vmatprep.subr.mxu0 0.0
      %6075 = vmatpush1.msra.mxu0 0.0
      %6076 = vmatprep.subr.mxu0 0.0
      %6077 = vmatpush1.msra.mxu0 %v6041
      %6078 = vmatprep.subr.mxu0 0.0
      %6079 = vmatpush1.msra.mxu0 %v6040
      %6080 = vmatprep.subr.mxu0 0.0
      %6081 = vmatpush1.msra.mxu0 %v6039
      %6082 = vmatprep.subr.mxu0 0.0
      %6083 = vmatpush1.msra.mxu0 %v6038
      %6084 = vmatprep.subr.mxu0 0.0
      %6085 = vmatpush2.msra.mxu0 0.0
      %6086 = vmatprep.subr.mxu0 0.0
      %6087 = vmatpush2.msra.mxu0 0.0
      %6088 = vmatprep.subr.mxu0 0.0
      %6089 = vmatpush2.msra.mxu0 0.0
      %6090 = vmatprep.subr.mxu0 0.0
      %6091 = vmatpush2.msra.mxu0 0.0
      %6092 = vmatprep.subr.mxu0 0.0
      %6093 = vmatpush2.msra.mxu0 0.0
      %6094 = vmatprep.subr.mxu0 0.0
      %6095 = vmatpush2.msra.mxu0 0.0
      %6096 = vmatprep.subr.mxu0 0.0
      %6097 = vmatpush2.msra.mxu0 0.0
      %6098 = vmatprep.subr.mxu0 0.0
      %6099 = vmatpush2.msra.mxu0 0.0
      %6100 = vmatprep.subr.mxu0 0.0
      %6101 = vmatpush2.msra.mxu0 0.0
      %6102 = vmatprep.subr.mxu0 0.0
      %6103 = vmatpush2.msra.mxu0 0.0
      %6104 = vmatprep.subr.mxu0 0.0
      %6105 = vmatpush2.msra.mxu0 0.0
      %6106 = vmatprep.subr.mxu0 0.0
      %6107 = vmatpush2.msra.mxu0 0.0
      %6108 = vmatprep.subr.mxu0 0.0
      %6109 = vmatpush2.msra.mxu0 0.0
      %6110 = vmatprep.subr.mxu0 0.0
      %6111 = vmatpush2.msra.mxu0 0.0
      %6112 = vmatprep.subr.mxu0 0.0
      %6113 = vmatpush2.msra.mxu0 0.0
      %6114 = vmatprep.subr.mxu0 0.0
      %6115 = vmatpush2.msra.mxu0 0.0
      %6116 = vmatprep.mubr.f32.mxu0 0.0
      %6117 = vmatmul.mubr.f32.gmra.mxu0 %v6050
      %v6118 = vpop.f32.mrf.mxu0
      %v6119 = vadd.f32 %v6047, %v6118
      %v6120 = vpop.f32.mrf.mxu0
      %6121 = vdwg.mxu0
      %v6122 = vld [vmem:[%s59] sm:$0xff]
      %v6123 = vld [vmem:[%s59 + $0x8] sm:$0xff]
      %v6124 = vld [vmem:[%s59 + $0x10] sm:$0xff]
      %v6125 = vld [vmem:[%s59 + $0x18] sm:$0xff]
      %v6126 = vld [vmem:[%s51] sm:$0x1]
      %v6128 = vlaneseq
      %v6129 = vshrl.u32 %v6128, 7
      %v6130 = vsub.s32 0, %v6129
      %v6131 = vrot.slane %v6126, %v6130
      %v6134 = vsel %vm1783, %v1965, 0
      %v6137 = vsel %vm1783, %v1966, 0
      %6139 = vmatprep.subr.mxu0 0.0
      %6140 = vmatpush1.msra.mxu0 0.0
      %6141 = vmatprep.subr.mxu0 0.0
      %6142 = vmatpush1.msra.mxu0 0.0
      %6143 = vmatprep.subr.mxu0 0.0
      %6144 = vmatpush1.msra.mxu0 0.0
      %6145 = vmatprep.subr.mxu0 0.0
      %6146 = vmatpush1.msra.mxu0 0.0
      %6147 = vmatprep.subr.mxu0 0.0
      %6148 = vmatpush1.msra.mxu0 0.0
      %6149 = vmatprep.subr.mxu0 0.0
      %6150 = vmatpush1.msra.mxu0 0.0
      %6151 = vmatprep.subr.mxu0 0.0
      %6152 = vmatpush1.msra.mxu0 0.0
      %6153 = vmatprep.subr.mxu0 0.0
      %6154 = vmatpush1.msra.mxu0 0.0
      %6155 = vmatprep.subr.mxu0 0.0
      %6156 = vmatpush1.msra.mxu0 0.0
      %6157 = vmatprep.subr.mxu0 0.0
      %6158 = vmatpush1.msra.mxu0 0.0
      %6159 = vmatprep.subr.mxu0 0.0
      %6160 = vmatpush1.msra.mxu0 0.0
      %6161 = vmatprep.subr.mxu0 0.0
      %6162 = vmatpush1.msra.mxu0 0.0
      %6163 = vmatprep.subr.mxu0 0.0
      %6164 = vmatpush1.msra.mxu0 %v6125
      %6165 = vmatprep.subr.mxu0 0.0
      %6166 = vmatpush1.msra.mxu0 %v6124
      %6167 = vmatprep.subr.mxu0 0.0
      %6168 = vmatpush1.msra.mxu0 %v6123
      %6169 = vmatprep.subr.mxu0 0.0
      %6170 = vmatpush1.msra.mxu0 %v6122
      %6171 = vmatprep.subr.mxu0 0.0
      %6172 = vmatpush2.msra.mxu0 0.0
      %6173 = vmatprep.subr.mxu0 0.0
      %6174 = vmatpush2.msra.mxu0 0.0
      %6175 = vmatprep.subr.mxu0 0.0
      %6176 = vmatpush2.msra.mxu0 0.0
      %6177 = vmatprep.subr.mxu0 0.0
      %6178 = vmatpush2.msra.mxu0 0.0
      %6179 = vmatprep.subr.mxu0 0.0
      %6180 = vmatpush2.msra.mxu0 0.0
      %6181 = vmatprep.subr.mxu0 0.0
      %6182 = vmatpush2.msra.mxu0 0.0
      %6183 = vmatprep.subr.mxu0 0.0
      %6184 = vmatpush2.msra.mxu0 0.0
      %6185 = vmatprep.subr.mxu0 0.0
      %6186 = vmatpush2.msra.mxu0 0.0
      %6187 = vmatprep.subr.mxu0 0.0
      %6188 = vmatpush2.msra.mxu0 0.0
      %6189 = vmatprep.subr.mxu0 0.0
      %6190 = vmatpush2.msra.mxu0 0.0
      %6191 = vmatprep.subr.mxu0 0.0
      %6192 = vmatpush2.msra.mxu0 0.0
      %6193 = vmatprep.subr.mxu0 0.0
      %6194 = vmatpush2.msra.mxu0 0.0
      %6195 = vmatprep.subr.mxu0 0.0
      %6196 = vmatpush2.msra.mxu0 0.0
      %6197 = vmatprep.subr.mxu0 0.0
      %6198 = vmatpush2.msra.mxu0 0.0
      %6199 = vmatprep.subr.mxu0 0.0
      %6200 = vmatpush2.msra.mxu0 0.0
      %6201 = vmatprep.subr.mxu0 0.0
      %6202 = vmatpush2.msra.mxu0 0.0
      %6203 = vmatprep.mubr.f32.mxu0 0.0
      %6204 = vmatmul.mubr.f32.gmra.mxu0 %v6134
      %v6205 = vpop.f32.mrf.mxu0
      %v6206 = vadd.f32 %v6131, %v6205
      %v6207 = vpop.f32.mrf.mxu0
      %6208 = vmatprep.mubr.f32.mxu0 0.0
      %6209 = vmatmul.mubr.f32.gmra.mxu0 %v6137
      %v6210 = vpop.f32.mrf.mxu0
      %v6211 = vadd.f32 %v6131, %v6210
      %v6212 = vpop.f32.mrf.mxu0
      %6213 = vdwg.mxu0
      %v6214 = vld [vmem:[%s65] sm:$0xff]
      %v6215 = vld [vmem:[%s65 + $0x8] sm:$0xff]
      %v6216 = vld [vmem:[%s65 + $0x10] sm:$0xff]
      %v6217 = vld [vmem:[%s65 + $0x18] sm:$0xff]
      %v6218 = vld [vmem:[%s57] sm:$0x1]
      %v6220 = vlaneseq
      %v6221 = vshrl.u32 %v6220, 7
      %v6222 = vsub.s32 0, %v6221
      %v6223 = vrot.slane %v6218, %v6222
      %6225 = vmatprep.subr.mxu0 0.0
      %6226 = vmatpush1.msra.mxu0 0.0
      %6227 = vmatprep.subr.mxu0 0.0
      %6228 = vmatpush1.msra.mxu0 0.0
      %6229 = vmatprep.subr.mxu0 0.0
      %6230 = vmatpush1.msra.mxu0 0.0
      %6231 = vmatprep.subr.mxu0 0.0
      %6232 = vmatpush1.msra.mxu0 0.0
      %6233 = vmatprep.subr.mxu0 0.0
      %6234 = vmatpush1.msra.mxu0 0.0
      %6235 = vmatprep.subr.mxu0 0.0
      %6236 = vmatpush1.msra.mxu0 0.0
      %6237 = vmatprep.subr.mxu0 0.0
      %6238 = vmatpush1.msra.mxu0 0.0
      %6239 = vmatprep.subr.mxu0 0.0
      %6240 = vmatpush1.msra.mxu0 0.0
      %6241 = vmatprep.subr.mxu0 0.0
      %6242 = vmatpush1.msra.mxu0 0.0
      %6243 = vmatprep.subr.mxu0 0.0
      %6244 = vmatpush1.msra.mxu0 0.0
      %6245 = vmatprep.subr.mxu0 0.0
      %6246 = vmatpush1.msra.mxu0 0.0
      %6247 = vmatprep.subr.mxu0 0.0
      %6248 = vmatpush1.msra.mxu0 0.0
      %6249 = vmatprep.subr.mxu0 0.0
      %6250 = vmatpush1.msra.mxu0 %v6217
      %6251 = vmatprep.subr.mxu0 0.0
      %6252 = vmatpush1.msra.mxu0 %v6216
      %6253 = vmatprep.subr.mxu0 0.0
      %6254 = vmatpush1.msra.mxu0 %v6215
      %6255 = vmatprep.subr.mxu0 0.0
      %6256 = vmatpush1.msra.mxu0 %v6214
      %6257 = vmatprep.subr.mxu0 0.0
      %6258 = vmatpush2.msra.mxu0 0.0
      %6259 = vmatprep.subr.mxu0 0.0
      %6260 = vmatpush2.msra.mxu0 0.0
      %6261 = vmatprep.subr.mxu0 0.0
      %6262 = vmatpush2.msra.mxu0 0.0
      %6263 = vmatprep.subr.mxu0 0.0
      %6264 = vmatpush2.msra.mxu0 0.0
      %6265 = vmatprep.subr.mxu0 0.0
      %6266 = vmatpush2.msra.mxu0 0.0
      %6267 = vmatprep.subr.mxu0 0.0
      %6268 = vmatpush2.msra.mxu0 0.0
      %6269 = vmatprep.subr.mxu0 0.0
      %6270 = vmatpush2.msra.mxu0 0.0
      %6271 = vmatprep.subr.mxu0 0.0
      %6272 = vmatpush2.msra.mxu0 0.0
      %6273 = vmatprep.subr.mxu0 0.0
      %6274 = vmatpush2.msra.mxu0 0.0
      %6275 = vmatprep.subr.mxu0 0.0
      %6276 = vmatpush2.msra.mxu0 0.0
      %6277 = vmatprep.subr.mxu0 0.0
      %6278 = vmatpush2.msra.mxu0 0.0
      %6279 = vmatprep.subr.mxu0 0.0
      %6280 = vmatpush2.msra.mxu0 0.0
      %6281 = vmatprep.subr.mxu0 0.0
      %6282 = vmatpush2.msra.mxu0 0.0
      %6283 = vmatprep.subr.mxu0 0.0
      %6284 = vmatpush2.msra.mxu0 0.0
      %6285 = vmatprep.subr.mxu0 0.0
      %6286 = vmatpush2.msra.mxu0 0.0
      %6287 = vmatprep.subr.mxu0 0.0
      %6288 = vmatpush2.msra.mxu0 0.0
      %6289 = vmatprep.mubr.f32.mxu0 0.0
      %6290 = vmatmul.mubr.f32.gmra.mxu0 %v6134
      %v6291 = vpop.f32.mrf.mxu0
      %v6292 = vadd.f32 %v6223, %v6291
      %v6293 = vpop.f32.mrf.mxu0
      %6294 = vmatprep.mubr.f32.mxu0 0.0
      %6295 = vmatmul.mubr.f32.gmra.mxu0 %v6137
      %v6296 = vpop.f32.mrf.mxu0
      %v6297 = vadd.f32 %v6223, %v6296
      %v6298 = vpop.f32.mrf.mxu0
      %6299 = vdwg.mxu0
      %vm6300 = vcmask 64512
      %v6302 = vsel %vm6300, %v6119, 0
      %v6305 = vsel %vm6300, %v6206, 0
      %v6308 = vsel %vm6300, %v6211, 0
      %6310 = vmatprep.subr.mxu0 0.0
      %6311 = vmatpush1.xpose.msra.mxu0 0.0
      %6312 = vmatprep.subr.mxu0 0.0
      %6313 = vmatpush1.xpose.msra.mxu0 0.0
      %6314 = vmatprep.subr.mxu0 0.0
      %6315 = vmatpush1.xpose.msra.mxu0 0.0
      %6316 = vmatprep.subr.mxu0 0.0
      %6317 = vmatpush1.xpose.msra.mxu0 0.0
      %6318 = vmatprep.subr.mxu0 0.0
      %6319 = vmatpush1.xpose.msra.mxu0 0.0
      %6320 = vmatprep.subr.mxu0 0.0
      %6321 = vmatpush1.xpose.msra.mxu0 0.0
      %6322 = vmatprep.subr.mxu0 0.0
      %6323 = vmatpush1.xpose.msra.mxu0 0.0
      %6324 = vmatprep.subr.mxu0 0.0
      %6325 = vmatpush1.xpose.msra.mxu0 0.0
      %6326 = vmatprep.subr.mxu0 0.0
      %6327 = vmatpush1.xpose.msra.mxu0 0.0
      %6328 = vmatprep.subr.mxu0 0.0
      %6329 = vmatpush1.xpose.msra.mxu0 0.0
      %6330 = vmatprep.subr.mxu0 0.0
      %6331 = vmatpush1.xpose.msra.mxu0 0.0
      %6332 = vmatprep.subr.mxu0 0.0
      %6333 = vmatpush1.xpose.msra.mxu0 0.0
      %6334 = vmatprep.subr.mxu0 0.0
      %6335 = vmatpush1.xpose.msra.mxu0 0.0
      %6336 = vmatprep.subr.mxu0 0.0
      %6337 = vmatpush1.xpose.msra.mxu0 0.0
      %6338 = vmatprep.subr.mxu0 0.0
      %6339 = vmatpush1.xpose.msra.mxu0 %v6308
      %6340 = vmatprep.subr.mxu0 0.0
      %6341 = vmatpush1.xpose.msra.mxu0 %v6305
      %6342 = vmatprep.subr.mxu0 0.0
      %6343 = vmatpush2.xpose.msra.mxu0 0.0
      %6344 = vmatprep.subr.mxu0 0.0
      %6345 = vmatpush2.xpose.msra.mxu0 0.0
      %6346 = vmatprep.subr.mxu0 0.0
      %6347 = vmatpush2.xpose.msra.mxu0 0.0
      %6348 = vmatprep.subr.mxu0 0.0
      %6349 = vmatpush2.xpose.msra.mxu0 0.0
      %6350 = vmatprep.subr.mxu0 0.0
      %6351 = vmatpush2.xpose.msra.mxu0 0.0
      %6352 = vmatprep.subr.mxu0 0.0
      %6353 = vmatpush2.xpose.msra.mxu0 0.0
      %6354 = vmatprep.subr.mxu0 0.0
      %6355 = vmatpush2.xpose.msra.mxu0 0.0
      %6356 = vmatprep.subr.mxu0 0.0
      %6357 = vmatpush2.xpose.msra.mxu0 0.0
      %6358 = vmatprep.subr.mxu0 0.0
      %6359 = vmatpush2.xpose.msra.mxu0 0.0
      %6360 = vmatprep.subr.mxu0 0.0
      %6361 = vmatpush2.xpose.msra.mxu0 0.0
      %6362 = vmatprep.subr.mxu0 0.0
      %6363 = vmatpush2.xpose.msra.mxu0 0.0
      %6364 = vmatprep.subr.mxu0 0.0
      %6365 = vmatpush2.xpose.msra.mxu0 0.0
      %6366 = vmatprep.subr.mxu0 0.0
      %6367 = vmatpush2.xpose.msra.mxu0 0.0
      %6368 = vmatprep.subr.mxu0 0.0
      %6369 = vmatpush2.xpose.msra.mxu0 0.0
      %6370 = vmatprep.subr.mxu0 0.0
      %6371 = vmatpush2.xpose.msra.mxu0 0.0
      %6372 = vmatprep.subr.mxu0 0.0
      %6373 = vmatpush2.xpose.msra.mxu0 0.0
      %6374 = vmatprep.mubr.f32.mxu0 0.0
      %6375 = vmatmul.mubr.f32.gmra.mxu0 %v6302
      %v6376 = vpop.f32.mrf.mxu0
      %v6377 = vadd.f32 0.0, %v6376
      %v6378 = vpop.f32.mrf.mxu0
      %6379 = vdwg.mxu0
      %v6380 = vmul.f32 %v6377, 0.35355338
      %vm6381 = vcmask 130048
      %v6382 = vsel %vm6381, %v6380, -inf
      %6383 = vmax.xlane.f32.xlu0 %v6382
      %v6384 = vpop.xlane.xlu0 %6383
      %v6385 = vsub.f32 %v6380, %v6384
      %v6386 = vmul.f32 %v6385, 1.442695
      %v6387 = vpow.pop %v6386
      %v6388 = vsel %vm6381, %v6387, 0.0
      %6389 = vadd.xlane.f32.xlu0 %v6388
      %v6390 = vpop.xlane.xlu0 %6389
      %v6391 = vrcp.pop %v6390
      %v6392 = vmul.f32 %v6387, %v6391
      %v6394 = vsel %vm6381, %v6392, 0
      %6396 = vmatprep.subr.mxu0 0.0
      %6397 = vmatpush1.msra.mxu0 0.0
      %6398 = vmatprep.subr.mxu0 0.0
      %6399 = vmatpush1.msra.mxu0 0.0
      %6400 = vmatprep.subr.mxu0 0.0
      %6401 = vmatpush1.msra.mxu0 0.0
      %6402 = vmatprep.subr.mxu0 0.0
      %6403 = vmatpush1.msra.mxu0 0.0
      %6404 = vmatprep.subr.mxu0 0.0
      %6405 = vmatpush1.msra.mxu0 0.0
      %6406 = vmatprep.subr.mxu0 0.0
      %6407 = vmatpush1.msra.mxu0 0.0
      %6408 = vmatprep.subr.mxu0 0.0
      %6409 = vmatpush1.msra.mxu0 0.0
      %6410 = vmatprep.subr.mxu0 0.0
      %6411 = vmatpush1.msra.mxu0 0.0
      %6412 = vmatprep.subr.mxu0 0.0
      %6413 = vmatpush1.msra.mxu0 0.0
      %6414 = vmatprep.subr.mxu0 0.0
      %6415 = vmatpush1.msra.mxu0 0.0
      %6416 = vmatprep.subr.mxu0 0.0
      %6417 = vmatpush1.msra.mxu0 0.0
      %6418 = vmatprep.subr.mxu0 0.0
      %6419 = vmatpush1.msra.mxu0 0.0
      %6420 = vmatprep.subr.mxu0 0.0
      %6421 = vmatpush1.msra.mxu0 0.0
      %6422 = vmatprep.subr.mxu0 0.0
      %6423 = vmatpush1.msra.mxu0 0.0
      %6424 = vmatprep.subr.mxu0 0.0
      %6425 = vmatpush1.msra.mxu0 %v6297
      %6426 = vmatprep.subr.mxu0 0.0
      %6427 = vmatpush1.msra.mxu0 %v6292
      %6428 = vmatprep.subr.mxu0 0.0
      %6429 = vmatpush2.msra.mxu0 0.0
      %6430 = vmatprep.subr.mxu0 0.0
      %6431 = vmatpush2.msra.mxu0 0.0
      %6432 = vmatprep.subr.mxu0 0.0
      %6433 = vmatpush2.msra.mxu0 0.0
      %6434 = vmatprep.subr.mxu0 0.0
      %6435 = vmatpush2.msra.mxu0 0.0
      %6436 = vmatprep.subr.mxu0 0.0
      %6437 = vmatpush2.msra.mxu0 0.0
      %6438 = vmatprep.subr.mxu0 0.0
      %6439 = vmatpush2.msra.mxu0 0.0
      %6440 = vmatprep.subr.mxu0 0.0
      %6441 = vmatpush2.msra.mxu0 0.0
      %6442 = vmatprep.subr.mxu0 0.0
      %6443 = vmatpush2.msra.mxu0 0.0
      %6444 = vmatprep.subr.mxu0 0.0
      %6445 = vmatpush2.msra.mxu0 0.0
      %6446 = vmatprep.subr.mxu0 0.0
      %6447 = vmatpush2.msra.mxu0 0.0
      %6448 = vmatprep.subr.mxu0 0.0
      %6449 = vmatpush2.msra.mxu0 0.0
      %6450 = vmatprep.subr.mxu0 0.0
      %6451 = vmatpush2.msra.mxu0 0.0
      %6452 = vmatprep.subr.mxu0 0.0
      %6453 = vmatpush2.msra.mxu0 0.0
      %6454 = vmatprep.subr.mxu0 0.0
      %6455 = vmatpush2.msra.mxu0 0.0
      %6456 = vmatprep.subr.mxu0 0.0
      %6457 = vmatpush2.msra.mxu0 0.0
      %6458 = vmatprep.subr.mxu0 0.0
      %6459 = vmatpush2.msra.mxu0 0.0
      %6460 = vmatprep.mubr.f32.mxu0 0.0
      %6461 = vmatmul.mubr.f32.gmra.mxu0 %v6394
      %v6462 = vpop.f32.mrf.mxu0
      %v6463 = vadd.f32 0.0, %v6462
      %v6464 = vpop.f32.mrf.mxu0
      %6465 = vdwg.mxu0
      %v6466 = vld [vmem:[%s61] sm:$0xff]
      %s6467 = scalar_lea.vmem %s63, 32
      %v6468 = vld [vmem:[%s6467] sm:$0xff]
      %v6469 = vld [vmem:[%s6467 + $0x8] sm:$0xff]
      %v6470 = vld [vmem:[%s6467 + $0x10] sm:$0xff]
      %v6471 = vld [vmem:[%s6467 + $0x18] sm:$0xff]
      %s6472 = scalar_lea.vmem %s55, 1
      %v6473 = vld [vmem:[%s6472] sm:$0x1]
      %v6475 = vlaneseq
      %v6476 = vshrl.u32 %v6475, 7
      %v6477 = vsub.s32 0, %v6476
      %v6478 = vrot.slane %v6473, %v6477
      %6480 = vmatprep.subr.mxu0 0.0
      %6481 = vmatpush1.msra.mxu0 0.0
      %6482 = vmatprep.subr.mxu0 0.0
      %6483 = vmatpush1.msra.mxu0 0.0
      %6484 = vmatprep.subr.mxu0 0.0
      %6485 = vmatpush1.msra.mxu0 0.0
      %6486 = vmatprep.subr.mxu0 0.0
      %6487 = vmatpush1.msra.mxu0 0.0
      %6488 = vmatprep.subr.mxu0 0.0
      %6489 = vmatpush1.msra.mxu0 0.0
      %6490 = vmatprep.subr.mxu0 0.0
      %6491 = vmatpush1.msra.mxu0 0.0
      %6492 = vmatprep.subr.mxu0 0.0
      %6493 = vmatpush1.msra.mxu0 0.0
      %6494 = vmatprep.subr.mxu0 0.0
      %6495 = vmatpush1.msra.mxu0 0.0
      %6496 = vmatprep.subr.mxu0 0.0
      %6497 = vmatpush1.msra.mxu0 0.0
      %6498 = vmatprep.subr.mxu0 0.0
      %6499 = vmatpush1.msra.mxu0 0.0
      %6500 = vmatprep.subr.mxu0 0.0
      %6501 = vmatpush1.msra.mxu0 0.0
      %6502 = vmatprep.subr.mxu0 0.0
      %6503 = vmatpush1.msra.mxu0 0.0
      %6504 = vmatprep.subr.mxu0 0.0
      %6505 = vmatpush1.msra.mxu0 %v6471
      %6506 = vmatprep.subr.mxu0 0.0
      %6507 = vmatpush1.msra.mxu0 %v6470
      %6508 = vmatprep.subr.mxu0 0.0
      %6509 = vmatpush1.msra.mxu0 %v6469
      %6510 = vmatprep.subr.mxu0 0.0
      %6511 = vmatpush1.msra.mxu0 %v6468
      %6512 = vmatprep.subr.mxu0 0.0
      %6513 = vmatpush2.msra.mxu0 0.0
      %6514 = vmatprep.subr.mxu0 0.0
      %6515 = vmatpush2.msra.mxu0 0.0
      %6516 = vmatprep.subr.mxu0 0.0
      %6517 = vmatpush2.msra.mxu0 0.0
      %6518 = vmatprep.subr.mxu0 0.0
      %6519 = vmatpush2.msra.mxu0 0.0
      %6520 = vmatprep.subr.mxu0 0.0
      %6521 = vmatpush2.msra.mxu0 0.0
      %6522 = vmatprep.subr.mxu0 0.0
      %6523 = vmatpush2.msra.mxu0 0.0
      %6524 = vmatprep.subr.mxu0 0.0
      %6525 = vmatpush2.msra.mxu0 0.0
      %6526 = vmatprep.subr.mxu0 0.0
      %6527 = vmatpush2.msra.mxu0 0.0
      %6528 = vmatprep.subr.mxu0 0.0
      %6529 = vmatpush2.msra.mxu0 0.0
      %6530 = vmatprep.subr.mxu0 0.0
      %6531 = vmatpush2.msra.mxu0 0.0
      %6532 = vmatprep.subr.mxu0 0.0
      %6533 = vmatpush2.msra.mxu0 0.0
      %6534 = vmatprep.subr.mxu0 0.0
      %6535 = vmatpush2.msra.mxu0 0.0
      %6536 = vmatprep.subr.mxu0 0.0
      %6537 = vmatpush2.msra.mxu0 0.0
      %6538 = vmatprep.subr.mxu0 0.0
      %6539 = vmatpush2.msra.mxu0 0.0
      %6540 = vmatprep.subr.mxu0 0.0
      %6541 = vmatpush2.msra.mxu0 0.0
      %6542 = vmatprep.subr.mxu0 0.0
      %6543 = vmatpush2.msra.mxu0 0.0
      %6544 = vmatprep.mubr.f32.mxu0 0.0
      %6545 = vmatmul.mubr.f32.gmra.mxu0 %v6050
      %v6546 = vpop.f32.mrf.mxu0
      %v6547 = vadd.f32 %v6478, %v6546
      %v6548 = vpop.f32.mrf.mxu0
      %6549 = vdwg.mxu0
      %s6550 = scalar_lea.vmem %s59, 32
      %v6551 = vld [vmem:[%s6550] sm:$0xff]
      %v6552 = vld [vmem:[%s6550 + $0x8] sm:$0xff]
      %v6553 = vld [vmem:[%s6550 + $0x10] sm:$0xff]
      %v6554 = vld [vmem:[%s6550 + $0x18] sm:$0xff]
      %s6555 = scalar_lea.vmem %s51, 1
      %v6556 = vld [vmem:[%s6555] sm:$0x1]
      %v6558 = vlaneseq
      %v6559 = vshrl.u32 %v6558, 7
      %v6560 = vsub.s32 0, %v6559
      %v6561 = vrot.slane %v6556, %v6560
      %6563 = vmatprep.subr.mxu0 0.0
      %6564 = vmatpush1.msra.mxu0 0.0
      %6565 = vmatprep.subr.mxu0 0.0
      %6566 = vmatpush1.msra.mxu0 0.0
      %6567 = vmatprep.subr.mxu0 0.0
      %6568 = vmatpush1.msra.mxu0 0.0
      %6569 = vmatprep.subr.mxu0 0.0
      %6570 = vmatpush1.msra.mxu0 0.0
      %6571 = vmatprep.subr.mxu0 0.0
      %6572 = vmatpush1.msra.mxu0 0.0
      %6573 = vmatprep.subr.mxu0 0.0
      %6574 = vmatpush1.msra.mxu0 0.0
      %6575 = vmatprep.subr.mxu0 0.0
      %6576 = vmatpush1.msra.mxu0 0.0
      %6577 = vmatprep.subr.mxu0 0.0
      %6578 = vmatpush1.msra.mxu0 0.0
      %6579 = vmatprep.subr.mxu0 0.0
      %6580 = vmatpush1.msra.mxu0 0.0
      %6581 = vmatprep.subr.mxu0 0.0
      %6582 = vmatpush1.msra.mxu0 0.0
      %6583 = vmatprep.subr.mxu0 0.0
      %6584 = vmatpush1.msra.mxu0 0.0
      %6585 = vmatprep.subr.mxu0 0.0
      %6586 = vmatpush1.msra.mxu0 0.0
      %6587 = vmatprep.subr.mxu0 0.0
      %6588 = vmatpush1.msra.mxu0 %v6554
      %6589 = vmatprep.subr.mxu0 0.0
      %6590 = vmatpush1.msra.mxu0 %v6553
      %6591 = vmatprep.subr.mxu0 0.0
      %6592 = vmatpush1.msra.mxu0 %v6552
      %6593 = vmatprep.subr.mxu0 0.0
      %6594 = vmatpush1.msra.mxu0 %v6551
      %6595 = vmatprep.subr.mxu0 0.0
      %6596 = vmatpush2.msra.mxu0 0.0
      %6597 = vmatprep.subr.mxu0 0.0
      %6598 = vmatpush2.msra.mxu0 0.0
      %6599 = vmatprep.subr.mxu0 0.0
      %6600 = vmatpush2.msra.mxu0 0.0
      %6601 = vmatprep.subr.mxu0 0.0
      %6602 = vmatpush2.msra.mxu0 0.0
      %6603 = vmatprep.subr.mxu0 0.0
      %6604 = vmatpush2.msra.mxu0 0.0
      %6605 = vmatprep.subr.mxu0 0.0
      %6606 = vmatpush2.msra.mxu0 0.0
      %6607 = vmatprep.subr.mxu0 0.0
      %6608 = vmatpush2.msra.mxu0 0.0
      %6609 = vmatprep.subr.mxu0 0.0
      %6610 = vmatpush2.msra.mxu0 0.0
      %6611 = vmatprep.subr.mxu0 0.0
      %6612 = vmatpush2.msra.mxu0 0.0
      %6613 = vmatprep.subr.mxu0 0.0
      %6614 = vmatpush2.msra.mxu0 0.0
      %6615 = vmatprep.subr.mxu0 0.0
      %6616 = vmatpush2.msra.mxu0 0.0
      %6617 = vmatprep.subr.mxu0 0.0
      %6618 = vmatpush2.msra.mxu0 0.0
      %6619 = vmatprep.subr.mxu0 0.0
      %6620 = vmatpush2.msra.mxu0 0.0
      %6621 = vmatprep.subr.mxu0 0.0
      %6622 = vmatpush2.msra.mxu0 0.0
      %6623 = vmatprep.subr.mxu0 0.0
      %6624 = vmatpush2.msra.mxu0 0.0
      %6625 = vmatprep.subr.mxu0 0.0
      %6626 = vmatpush2.msra.mxu0 0.0
      %6627 = vmatprep.mubr.f32.mxu0 0.0
      %6628 = vmatmul.mubr.f32.gmra.mxu0 %v6134
      %v6629 = vpop.f32.mrf.mxu0
      %v6630 = vadd.f32 %v6561, %v6629
      %v6631 = vpop.f32.mrf.mxu0
      %6632 = vmatprep.mubr.f32.mxu0 0.0
      %6633 = vmatmul.mubr.f32.gmra.mxu0 %v6137
      %v6634 = vpop.f32.mrf.mxu0
      %v6635 = vadd.f32 %v6561, %v6634
      %v6636 = vpop.f32.mrf.mxu0
      %6637 = vdwg.mxu0
      %s6638 = scalar_lea.vmem %s65, 32
      %v6639 = vld [vmem:[%s6638] sm:$0xff]
      %v6640 = vld [vmem:[%s6638 + $0x8] sm:$0xff]
      %v6641 = vld [vmem:[%s6638 + $0x10] sm:$0xff]
      %v6642 = vld [vmem:[%s6638 + $0x18] sm:$0xff]
      %s6643 = scalar_lea.vmem %s57, 1
      %v6644 = vld [vmem:[%s6643] sm:$0x1]
      %v6646 = vlaneseq
      %v6647 = vshrl.u32 %v6646, 7
      %v6648 = vsub.s32 0, %v6647
      %v6649 = vrot.slane %v6644, %v6648
      %6651 = vmatprep.subr.mxu0 0.0
      %6652 = vmatpush1.msra.mxu0 0.0
      %6653 = vmatprep.subr.mxu0 0.0
      %6654 = vmatpush1.msra.mxu0 0.0
      %6655 = vmatprep.subr.mxu0 0.0
      %6656 = vmatpush1.msra.mxu0 0.0
      %6657 = vmatprep.subr.mxu0 0.0
      %6658 = vmatpush1.msra.mxu0 0.0
      %6659 = vmatprep.subr.mxu0 0.0
      %6660 = vmatpush1.msra.mxu0 0.0
      %6661 = vmatprep.subr.mxu0 0.0
      %6662 = vmatpush1.msra.mxu0 0.0
      %6663 = vmatprep.subr.mxu0 0.0
      %6664 = vmatpush1.msra.mxu0 0.0
      %6665 = vmatprep.subr.mxu0 0.0
      %6666 = vmatpush1.msra.mxu0 0.0
      %6667 = vmatprep.subr.mxu0 0.0
      %6668 = vmatpush1.msra.mxu0 0.0
      %6669 = vmatprep.subr.mxu0 0.0
      %6670 = vmatpush1.msra.mxu0 0.0
      %6671 = vmatprep.subr.mxu0 0.0
      %6672 = vmatpush1.msra.mxu0 0.0
      %6673 = vmatprep.subr.mxu0 0.0
      %6674 = vmatpush1.msra.mxu0 0.0
      %6675 = vmatprep.subr.mxu0 0.0
      %6676 = vmatpush1.msra.mxu0 %v6642
      %6677 = vmatprep.subr.mxu0 0.0
      %6678 = vmatpush1.msra.mxu0 %v6641
      %6679 = vmatprep.subr.mxu0 0.0
      %6680 = vmatpush1.msra.mxu0 %v6640
      %6681 = vmatprep.subr.mxu0 0.0
      %6682 = vmatpush1.msra.mxu0 %v6639
      %6683 = vmatprep.subr.mxu0 0.0
      %6684 = vmatpush2.msra.mxu0 0.0
      %6685 = vmatprep.subr.mxu0 0.0
      %6686 = vmatpush2.msra.mxu0 0.0
      %6687 = vmatprep.subr.mxu0 0.0
      %6688 = vmatpush2.msra.mxu0 0.0
      %6689 = vmatprep.subr.mxu0 0.0
      %6690 = vmatpush2.msra.mxu0 0.0
      %6691 = vmatprep.subr.mxu0 0.0
      %6692 = vmatpush2.msra.mxu0 0.0
      %6693 = vmatprep.subr.mxu0 0.0
      %6694 = vmatpush2.msra.mxu0 0.0
      %6695 = vmatprep.subr.mxu0 0.0
      %6696 = vmatpush2.msra.mxu0 0.0
      %6697 = vmatprep.subr.mxu0 0.0
      %6698 = vmatpush2.msra.mxu0 0.0
      %6699 = vmatprep.subr.mxu0 0.0
      %6700 = vmatpush2.msra.mxu0 0.0
      %6701 = vmatprep.subr.mxu0 0.0
      %6702 = vmatpush2.msra.mxu0 0.0
      %6703 = vmatprep.subr.mxu0 0.0
      %6704 = vmatpush2.msra.mxu0 0.0
      %6705 = vmatprep.subr.mxu0 0.0
      %6706 = vmatpush2.msra.mxu0 0.0
      %6707 = vmatprep.subr.mxu0 0.0
      %6708 = vmatpush2.msra.mxu0 0.0
      %6709 = vmatprep.subr.mxu0 0.0
      %6710 = vmatpush2.msra.mxu0 0.0
      %6711 = vmatprep.subr.mxu0 0.0
      %6712 = vmatpush2.msra.mxu0 0.0
      %6713 = vmatprep.subr.mxu0 0.0
      %6714 = vmatpush2.msra.mxu0 0.0
      %6715 = vmatprep.mubr.f32.mxu0 0.0
      %6716 = vmatmul.mubr.f32.gmra.mxu0 %v6134
      %v6717 = vpop.f32.mrf.mxu0
      %v6718 = vadd.f32 %v6649, %v6717
      %v6719 = vpop.f32.mrf.mxu0
      %6720 = vmatprep.mubr.f32.mxu0 0.0
      %6721 = vmatmul.mubr.f32.gmra.mxu0 %v6137
      %v6722 = vpop.f32.mrf.mxu0
      %v6723 = vadd.f32 %v6649, %v6722
      %v6724 = vpop.f32.mrf.mxu0
      %6725 = vdwg.mxu0
      %v6727 = vsel %vm6300, %v6547, 0
      %v6730 = vsel %vm6300, %v6630, 0
      %v6733 = vsel %vm6300, %v6635, 0
      %6735 = vmatprep.subr.mxu0 0.0
      %6736 = vmatpush1.xpose.msra.mxu0 0.0
      %6737 = vmatprep.subr.mxu0 0.0
      %6738 = vmatpush1.xpose.msra.mxu0 0.0
      %6739 = vmatprep.subr.mxu0 0.0
      %6740 = vmatpush1.xpose.msra.mxu0 0.0
      %6741 = vmatprep.subr.mxu0 0.0
      %6742 = vmatpush1.xpose.msra.mxu0 0.0
      %6743 = vmatprep.subr.mxu0 0.0
      %6744 = vmatpush1.xpose.msra.mxu0 0.0
      %6745 = vmatprep.subr.mxu0 0.0
      %6746 = vmatpush1.xpose.msra.mxu0 0.0
      %6747 = vmatprep.subr.mxu0 0.0
      %6748 = vmatpush1.xpose.msra.mxu0 0.0
      %6749 = vmatprep.subr.mxu0 0.0
      %6750 = vmatpush1.xpose.msra.mxu0 0.0
      %6751 = vmatprep.subr.mxu0 0.0
      %6752 = vmatpush1.xpose.msra.mxu0 0.0
      %6753 = vmatprep.subr.mxu0 0.0
      %6754 = vmatpush1.xpose.msra.mxu0 0.0
      %6755 = vmatprep.subr.mxu0 0.0
      %6756 = vmatpush1.xpose.msra.mxu0 0.0
      %6757 = vmatprep.subr.mxu0 0.0
      %6758 = vmatpush1.xpose.msra.mxu0 0.0
      %6759 = vmatprep.subr.mxu0 0.0
      %6760 = vmatpush1.xpose.msra.mxu0 0.0
      %6761 = vmatprep.subr.mxu0 0.0
      %6762 = vmatpush1.xpose.msra.mxu0 0.0
      %6763 = vmatprep.subr.mxu0 0.0
      %6764 = vmatpush1.xpose.msra.mxu0 %v6733
      %6765 = vmatprep.subr.mxu0 0.0
      %6766 = vmatpush1.xpose.msra.mxu0 %v6730
      %6767 = vmatprep.subr.mxu0 0.0
      %6768 = vmatpush2.xpose.msra.mxu0 0.0
      %6769 = vmatprep.subr.mxu0 0.0
      %6770 = vmatpush2.xpose.msra.mxu0 0.0
      %6771 = vmatprep.subr.mxu0 0.0
      %6772 = vmatpush2.xpose.msra.mxu0 0.0
      %6773 = vmatprep.subr.mxu0 0.0
      %6774 = vmatpush2.xpose.msra.mxu0 0.0
      %6775 = vmatprep.subr.mxu0 0.0
      %6776 = vmatpush2.xpose.msra.mxu0 0.0
      %6777 = vmatprep.subr.mxu0 0.0
      %6778 = vmatpush2.xpose.msra.mxu0 0.0
      %6779 = vmatprep.subr.mxu0 0.0
      %6780 = vmatpush2.xpose.msra.mxu0 0.0
      %6781 = vmatprep.subr.mxu0 0.0
      %6782 = vmatpush2.xpose.msra.mxu0 0.0
      %6783 = vmatprep.subr.mxu0 0.0
      %6784 = vmatpush2.xpose.msra.mxu0 0.0
      %6785 = vmatprep.subr.mxu0 0.0
      %6786 = vmatpush2.xpose.msra.mxu0 0.0
      %6787 = vmatprep.subr.mxu0 0.0
      %6788 = vmatpush2.xpose.msra.mxu0 0.0
      %6789 = vmatprep.subr.mxu0 0.0
      %6790 = vmatpush2.xpose.msra.mxu0 0.0
      %6791 = vmatprep.subr.mxu0 0.0
      %6792 = vmatpush2.xpose.msra.mxu0 0.0
      %6793 = vmatprep.subr.mxu0 0.0
      %6794 = vmatpush2.xpose.msra.mxu0 0.0
      %6795 = vmatprep.subr.mxu0 0.0
      %6796 = vmatpush2.xpose.msra.mxu0 0.0
      %6797 = vmatprep.subr.mxu0 0.0
      %6798 = vmatpush2.xpose.msra.mxu0 0.0
      %6799 = vmatprep.mubr.f32.mxu0 0.0
      %6800 = vmatmul.mubr.f32.gmra.mxu0 %v6727
      %v6801 = vpop.f32.mrf.mxu0
      %v6802 = vadd.f32 0.0, %v6801
      %v6803 = vpop.f32.mrf.mxu0
      %6804 = vdwg.mxu0
      %v6805 = vmul.f32 %v6802, 0.35355338
      %v6806 = vsel %vm6381, %v6805, -inf
      %6807 = vmax.xlane.f32.xlu0 %v6806
      %v6808 = vpop.xlane.xlu0 %6807
      %v6809 = vsub.f32 %v6805, %v6808
      %v6810 = vmul.f32 %v6809, 1.442695
      %v6811 = vpow.pop %v6810
      %v6812 = vsel %vm6381, %v6811, 0.0
      %6813 = vadd.xlane.f32.xlu0 %v6812
      %v6814 = vpop.xlane.xlu0 %6813
      %v6815 = vrcp.pop %v6814
      %v6816 = vmul.f32 %v6811, %v6815
      %v6818 = vsel %vm6381, %v6816, 0
      %6820 = vmatprep.subr.mxu0 0.0
      %6821 = vmatpush1.msra.mxu0 0.0
      %6822 = vmatprep.subr.mxu0 0.0
      %6823 = vmatpush1.msra.mxu0 0.0
      %6824 = vmatprep.subr.mxu0 0.0
      %6825 = vmatpush1.msra.mxu0 0.0
      %6826 = vmatprep.subr.mxu0 0.0
      %6827 = vmatpush1.msra.mxu0 0.0
      %6828 = vmatprep.subr.mxu0 0.0
      %6829 = vmatpush1.msra.mxu0 0.0
      %6830 = vmatprep.subr.mxu0 0.0
      %6831 = vmatpush1.msra.mxu0 0.0
      %6832 = vmatprep.subr.mxu0 0.0
      %6833 = vmatpush1.msra.mxu0 0.0
      %6834 = vmatprep.subr.mxu0 0.0
      %6835 = vmatpush1.msra.mxu0 0.0
      %6836 = vmatprep.subr.mxu0 0.0
      %6837 = vmatpush1.msra.mxu0 0.0
      %6838 = vmatprep.subr.mxu0 0.0
      %6839 = vmatpush1.msra.mxu0 0.0
      %6840 = vmatprep.subr.mxu0 0.0
      %6841 = vmatpush1.msra.mxu0 0.0
      %6842 = vmatprep.subr.mxu0 0.0
      %6843 = vmatpush1.msra.mxu0 0.0
      %6844 = vmatprep.subr.mxu0 0.0
      %6845 = vmatpush1.msra.mxu0 0.0
      %6846 = vmatprep.subr.mxu0 0.0
      %6847 = vmatpush1.msra.mxu0 0.0
      %6848 = vmatprep.subr.mxu0 0.0
      %6849 = vmatpush1.msra.mxu0 %v6723
      %6850 = vmatprep.subr.mxu0 0.0
      %6851 = vmatpush1.msra.mxu0 %v6718
      %6852 = vmatprep.subr.mxu0 0.0
      %6853 = vmatpush2.msra.mxu0 0.0
      %6854 = vmatprep.subr.mxu0 0.0
      %6855 = vmatpush2.msra.mxu0 0.0
      %6856 = vmatprep.subr.mxu0 0.0
      %6857 = vmatpush2.msra.mxu0 0.0
      %6858 = vmatprep.subr.mxu0 0.0
      %6859 = vmatpush2.msra.mxu0 0.0
      %6860 = vmatprep.subr.mxu0 0.0
      %6861 = vmatpush2.msra.mxu0 0.0
      %6862 = vmatprep.subr.mxu0 0.0
      %6863 = vmatpush2.msra.mxu0 0.0
      %6864 = vmatprep.subr.mxu0 0.0
      %6865 = vmatpush2.msra.mxu0 0.0
      %6866 = vmatprep.subr.mxu0 0.0
      %6867 = vmatpush2.msra.mxu0 0.0
      %6868 = vmatprep.subr.mxu0 0.0
      %6869 = vmatpush2.msra.mxu0 0.0
      %6870 = vmatprep.subr.mxu0 0.0
      %6871 = vmatpush2.msra.mxu0 0.0
      %6872 = vmatprep.subr.mxu0 0.0
      %6873 = vmatpush2.msra.mxu0 0.0
      %6874 = vmatprep.subr.mxu0 0.0
      %6875 = vmatpush2.msra.mxu0 0.0
      %6876 = vmatprep.subr.mxu0 0.0
      %6877 = vmatpush2.msra.mxu0 0.0
      %6878 = vmatprep.subr.mxu0 0.0
      %6879 = vmatpush2.msra.mxu0 0.0
      %6880 = vmatprep.subr.mxu0 0.0
      %6881 = vmatpush2.msra.mxu0 0.0
      %6882 = vmatprep.subr.mxu0 0.0
      %6883 = vmatpush2.msra.mxu0 0.0
      %6884 = vmatprep.mubr.f32.mxu0 0.0
      %6885 = vmatmul.mubr.f32.gmra.mxu0 %v6818
      %v6886 = vpop.f32.mrf.mxu0
      %v6887 = vadd.f32 0.0, %v6886
      %v6888 = vpop.f32.mrf.mxu0
      %6889 = vdwg.mxu0
      %s6890 = scalar_lea.vmem %s61, 8
      %v6891 = vld [vmem:[%s6890] sm:$0xff]
      %v6893 = vsel %vm6300, %v6887, 0
      %6895 = vmatprep.subr.mxu0 0.0
      %6896 = vmatpush1.msra.mxu0 0.0
      %6897 = vmatprep.subr.mxu0 0.0
      %6898 = vmatpush1.msra.mxu0 0.0
      %6899 = vmatprep.subr.mxu0 0.0
      %6900 = vmatpush1.msra.mxu0 0.0
      %6901 = vmatprep.subr.mxu0 0.0
      %6902 = vmatpush1.msra.mxu0 0.0
      %6903 = vmatprep.subr.mxu0 0.0
      %6904 = vmatpush1.msra.mxu0 0.0
      %6905 = vmatprep.subr.mxu0 0.0
      %6906 = vmatpush1.msra.mxu0 0.0
      %6907 = vmatprep.subr.mxu0 0.0
      %6908 = vmatpush1.msra.mxu0 0.0
      %6909 = vmatprep.subr.mxu0 0.0
      %6910 = vmatpush1.msra.mxu0 0.0
      %6911 = vmatprep.subr.mxu0 0.0
      %6912 = vmatpush1.msra.mxu0 0.0
      %6913 = vmatprep.subr.mxu0 0.0
      %6914 = vmatpush1.msra.mxu0 0.0
      %6915 = vmatprep.subr.mxu0 0.0
      %6916 = vmatpush1.msra.mxu0 0.0
      %6917 = vmatprep.subr.mxu0 0.0
      %6918 = vmatpush1.msra.mxu0 0.0
      %6919 = vmatprep.subr.mxu0 0.0
      %6920 = vmatpush1.msra.mxu0 0.0
      %6921 = vmatprep.subr.mxu0 0.0
      %6922 = vmatpush1.msra.mxu0 0.0
      %6923 = vmatprep.subr.mxu0 0.0
      %6924 = vmatpush1.msra.mxu0 0.0
      %6925 = vmatprep.subr.mxu0 0.0
      %6926 = vmatpush1.msra.mxu0 %v6891
      %6927 = vmatprep.subr.mxu0 0.0
      %6928 = vmatpush2.msra.mxu0 0.0
      %6929 = vmatprep.subr.mxu0 0.0
      %6930 = vmatpush2.msra.mxu0 0.0
      %6931 = vmatprep.subr.mxu0 0.0
      %6932 = vmatpush2.msra.mxu0 0.0
      %6933 = vmatprep.subr.mxu0 0.0
      %6934 = vmatpush2.msra.mxu0 0.0
      %6935 = vmatprep.subr.mxu0 0.0
      %6936 = vmatpush2.msra.mxu0 0.0
      %6937 = vmatprep.subr.mxu0 0.0
      %6938 = vmatpush2.msra.mxu0 0.0
      %6939 = vmatprep.subr.mxu0 0.0
      %6940 = vmatpush2.msra.mxu0 0.0
      %6941 = vmatprep.subr.mxu0 0.0
      %6942 = vmatpush2.msra.mxu0 0.0
      %6943 = vmatprep.subr.mxu0 0.0
      %6944 = vmatpush2.msra.mxu0 0.0
      %6945 = vmatprep.subr.mxu0 0.0
      %6946 = vmatpush2.msra.mxu0 0.0
      %6947 = vmatprep.subr.mxu0 0.0
      %6948 = vmatpush2.msra.mxu0 0.0
      %6949 = vmatprep.subr.mxu0 0.0
      %6950 = vmatpush2.msra.mxu0 0.0
      %6951 = vmatprep.subr.mxu0 0.0
      %6952 = vmatpush2.msra.mxu0 0.0
      %6953 = vmatprep.subr.mxu0 0.0
      %6954 = vmatpush2.msra.mxu0 0.0
      %6955 = vmatprep.subr.mxu0 0.0
      %6956 = vmatpush2.msra.mxu0 0.0
      %6957 = vmatprep.subr.mxu0 0.0
      %6958 = vmatpush2.msra.mxu0 0.0
      %6959 = vmatprep.mubr.f32.mxu0 0.0
      %6960 = vmatmul.mubr.f32.gmra.mxu0 %v6893
      %v6961 = vpop.f32.mrf.mxu0
      %v6962 = vadd.f32 0.0, %v6961
      %v6963 = vpop.f32.mrf.mxu0
      %6964 = vdwg.mxu0
      %v6966 = vsel %vm6300, %v6463, 0
      %6968 = vmatprep.subr.mxu0 0.0
      %6969 = vmatpush1.msra.mxu0 0.0
      %6970 = vmatprep.subr.mxu0 0.0
      %6971 = vmatpush1.msra.mxu0 0.0
      %6972 = vmatprep.subr.mxu0 0.0
      %6973 = vmatpush1.msra.mxu0 0.0
      %6974 = vmatprep.subr.mxu0 0.0
      %6975 = vmatpush1.msra.mxu0 0.0
      %6976 = vmatprep.subr.mxu0 0.0
      %6977 = vmatpush1.msra.mxu0 0.0
      %6978 = vmatprep.subr.mxu0 0.0
      %6979 = vmatpush1.msra.mxu0 0.0
      %6980 = vmatprep.subr.mxu0 0.0
      %6981 = vmatpush1.msra.mxu0 0.0
      %6982 = vmatprep.subr.mxu0 0.0
      %6983 = vmatpush1.msra.mxu0 0.0
      %6984 = vmatprep.subr.mxu0 0.0
      %6985 = vmatpush1.msra.mxu0 0.0
      %6986 = vmatprep.subr.mxu0 0.0
      %6987 = vmatpush1.msra.mxu0 0.0
      %6988 = vmatprep.subr.mxu0 0.0
      %6989 = vmatpush1.msra.mxu0 0.0
      %6990 = vmatprep.subr.mxu0 0.0
      %6991 = vmatpush1.msra.mxu0 0.0
      %6992 = vmatprep.subr.mxu0 0.0
      %6993 = vmatpush1.msra.mxu0 0.0
      %6994 = vmatprep.subr.mxu0 0.0
      %6995 = vmatpush1.msra.mxu0 0.0
      %6996 = vmatprep.subr.mxu0 0.0
      %6997 = vmatpush1.msra.mxu0 0.0
      %6998 = vmatprep.subr.mxu0 0.0
      %6999 = vmatpush1.msra.mxu0 %v6466
      %7000 = vmatprep.subr.mxu0 0.0
      %7001 = vmatpush2.msra.mxu0 0.0
      %7002 = vmatprep.subr.mxu0 0.0
      %7003 = vmatpush2.msra.mxu0 0.0
      %7004 = vmatprep.subr.mxu0 0.0
      %7005 = vmatpush2.msra.mxu0 0.0
      %7006 = vmatprep.subr.mxu0 0.0
      %7007 = vmatpush2.msra.mxu0 0.0
      %7008 = vmatprep.subr.mxu0 0.0
      %7009 = vmatpush2.msra.mxu0 0.0
      %7010 = vmatprep.subr.mxu0 0.0
      %7011 = vmatpush2.msra.mxu0 0.0
      %7012 = vmatprep.subr.mxu0 0.0
      %7013 = vmatpush2.msra.mxu0 0.0
      %7014 = vmatprep.subr.mxu0 0.0
      %7015 = vmatpush2.msra.mxu0 0.0
      %7016 = vmatprep.subr.mxu0 0.0
      %7017 = vmatpush2.msra.mxu0 0.0
      %7018 = vmatprep.subr.mxu0 0.0
      %7019 = vmatpush2.msra.mxu0 0.0
      %7020 = vmatprep.subr.mxu0 0.0
      %7021 = vmatpush2.msra.mxu0 0.0
      %7022 = vmatprep.subr.mxu0 0.0
      %7023 = vmatpush2.msra.mxu0 0.0
      %7024 = vmatprep.subr.mxu0 0.0
      %7025 = vmatpush2.msra.mxu0 0.0
      %7026 = vmatprep.subr.mxu0 0.0
      %7027 = vmatpush2.msra.mxu0 0.0
      %7028 = vmatprep.subr.mxu0 0.0
      %7029 = vmatpush2.msra.mxu0 0.0
      %7030 = vmatprep.subr.mxu0 0.0
      %7031 = vmatpush2.msra.mxu0 0.0
      %7032 = vmatprep.mubr.f32.mxu0 0.0
      %7033 = vmatmul.mubr.f32.gmra.mxu0 %v6966
      %v7034 = vpop.f32.mrf.mxu0
      %v7035 = vadd.f32 %v6962, %v7034
      %v7036 = vpop.f32.mrf.mxu0
      %7037 = vdwg.mxu0
      %s7038 = scalar_lea.vmem %s63, 64
      %v7039 = vld [vmem:[%s7038] sm:$0xff]
      %v7040 = vld [vmem:[%s7038 + $0x8] sm:$0xff]
      %v7041 = vld [vmem:[%s7038 + $0x10] sm:$0xff]
      %v7042 = vld [vmem:[%s7038 + $0x18] sm:$0xff]
      %s7043 = scalar_lea.vmem %s55, 2
      %v7044 = vld [vmem:[%s7043] sm:$0x1]
      %v7046 = vlaneseq
      %v7047 = vshrl.u32 %v7046, 7
      %v7048 = vsub.s32 0, %v7047
      %v7049 = vrot.slane %v7044, %v7048
      %7051 = vmatprep.subr.mxu0 0.0
      %7052 = vmatpush1.msra.mxu0 0.0
      %7053 = vmatprep.subr.mxu0 0.0
      %7054 = vmatpush1.msra.mxu0 0.0
      %7055 = vmatprep.subr.mxu0 0.0
      %7056 = vmatpush1.msra.mxu0 0.0
      %7057 = vmatprep.subr.mxu0 0.0
      %7058 = vmatpush1.msra.mxu0 0.0
      %7059 = vmatprep.subr.mxu0 0.0
      %7060 = vmatpush1.msra.mxu0 0.0
      %7061 = vmatprep.subr.mxu0 0.0
      %7062 = vmatpush1.msra.mxu0 0.0
      %7063 = vmatprep.subr.mxu0 0.0
      %7064 = vmatpush1.msra.mxu0 0.0
      %7065 = vmatprep.subr.mxu0 0.0
      %7066 = vmatpush1.msra.mxu0 0.0
      %7067 = vmatprep.subr.mxu0 0.0
      %7068 = vmatpush1.msra.mxu0 0.0
      %7069 = vmatprep.subr.mxu0 0.0
      %7070 = vmatpush1.msra.mxu0 0.0
      %7071 = vmatprep.subr.mxu0 0.0
      %7072 = vmatpush1.msra.mxu0 0.0
      %7073 = vmatprep.subr.mxu0 0.0
      %7074 = vmatpush1.msra.mxu0 0.0
      %7075 = vmatprep.subr.mxu0 0.0
      %7076 = vmatpush1.msra.mxu0 %v7042
      %7077 = vmatprep.subr.mxu0 0.0
      %7078 = vmatpush1.msra.mxu0 %v7041
      %7079 = vmatprep.subr.mxu0 0.0
      %7080 = vmatpush1.msra.mxu0 %v7040
      %7081 = vmatprep.subr.mxu0 0.0
      %7082 = vmatpush1.msra.mxu0 %v7039
      %7083 = vmatprep.subr.mxu0 0.0
      %7084 = vmatpush2.msra.mxu0 0.0
      %7085 = vmatprep.subr.mxu0 0.0
      %7086 = vmatpush2.msra.mxu0 0.0
      %7087 = vmatprep.subr.mxu0 0.0
      %7088 = vmatpush2.msra.mxu0 0.0
      %7089 = vmatprep.subr.mxu0 0.0
      %7090 = vmatpush2.msra.mxu0 0.0
      %7091 = vmatprep.subr.mxu0 0.0
      %7092 = vmatpush2.msra.mxu0 0.0
      %7093 = vmatprep.subr.mxu0 0.0
      %7094 = vmatpush2.msra.mxu0 0.0
      %7095 = vmatprep.subr.mxu0 0.0
      %7096 = vmatpush2.msra.mxu0 0.0
      %7097 = vmatprep.subr.mxu0 0.0
      %7098 = vmatpush2.msra.mxu0 0.0
      %7099 = vmatprep.subr.mxu0 0.0
      %7100 = vmatpush2.msra.mxu0 0.0
      %7101 = vmatprep.subr.mxu0 0.0
      %7102 = vmatpush2.msra.mxu0 0.0
      %7103 = vmatprep.subr.mxu0 0.0
      %7104 = vmatpush2.msra.mxu0 0.0
      %7105 = vmatprep.subr.mxu0 0.0
      %7106 = vmatpush2.msra.mxu0 0.0
      %7107 = vmatprep.subr.mxu0 0.0
      %7108 = vmatpush2.msra.mxu0 0.0
      %7109 = vmatprep.subr.mxu0 0.0
      %7110 = vmatpush2.msra.mxu0 0.0
      %7111 = vmatprep.subr.mxu0 0.0
      %7112 = vmatpush2.msra.mxu0 0.0
      %7113 = vmatprep.subr.mxu0 0.0
      %7114 = vmatpush2.msra.mxu0 0.0
      %7115 = vmatprep.mubr.f32.mxu0 0.0
      %7116 = vmatmul.mubr.f32.gmra.mxu0 %v6050
      %v7117 = vpop.f32.mrf.mxu0
      %v7118 = vadd.f32 %v7049, %v7117
      %v7119 = vpop.f32.mrf.mxu0
      %7120 = vdwg.mxu0
      %s7121 = scalar_lea.vmem %s59, 64
      %v7122 = vld [vmem:[%s7121] sm:$0xff]
      %v7123 = vld [vmem:[%s7121 + $0x8] sm:$0xff]
      %v7124 = vld [vmem:[%s7121 + $0x10] sm:$0xff]
      %v7125 = vld [vmem:[%s7121 + $0x18] sm:$0xff]
      %s7126 = scalar_lea.vmem %s51, 2
      %v7127 = vld [vmem:[%s7126] sm:$0x1]
      %v7129 = vlaneseq
      %v7130 = vshrl.u32 %v7129, 7
      %v7131 = vsub.s32 0, %v7130
      %v7132 = vrot.slane %v7127, %v7131
      %7134 = vmatprep.subr.mxu0 0.0
      %7135 = vmatpush1.msra.mxu0 0.0
      %7136 = vmatprep.subr.mxu0 0.0
      %7137 = vmatpush1.msra.mxu0 0.0
      %7138 = vmatprep.subr.mxu0 0.0
      %7139 = vmatpush1.msra.mxu0 0.0
      %7140 = vmatprep.subr.mxu0 0.0
      %7141 = vmatpush1.msra.mxu0 0.0
      %7142 = vmatprep.subr.mxu0 0.0
      %7143 = vmatpush1.msra.mxu0 0.0
      %7144 = vmatprep.subr.mxu0 0.0
      %7145 = vmatpush1.msra.mxu0 0.0
      %7146 = vmatprep.subr.mxu0 0.0
      %7147 = vmatpush1.msra.mxu0 0.0
      %7148 = vmatprep.subr.mxu0 0.0
      %7149 = vmatpush1.msra.mxu0 0.0
      %7150 = vmatprep.subr.mxu0 0.0
      %7151 = vmatpush1.msra.mxu0 0.0
      %7152 = vmatprep.subr.mxu0 0.0
      %7153 = vmatpush1.msra.mxu0 0.0
      %7154 = vmatprep.subr.mxu0 0.0
      %7155 = vmatpush1.msra.mxu0 0.0
      %7156 = vmatprep.subr.mxu0 0.0
      %7157 = vmatpush1.msra.mxu0 0.0
      %7158 = vmatprep.subr.mxu0 0.0
      %7159 = vmatpush1.msra.mxu0 %v7125
      %7160 = vmatprep.subr.mxu0 0.0
      %7161 = vmatpush1.msra.mxu0 %v7124
      %7162 = vmatprep.subr.mxu0 0.0
      %7163 = vmatpush1.msra.mxu0 %v7123
      %7164 = vmatprep.subr.mxu0 0.0
      %7165 = vmatpush1.msra.mxu0 %v7122
      %7166 = vmatprep.subr.mxu0 0.0
      %7167 = vmatpush2.msra.mxu0 0.0
      %7168 = vmatprep.subr.mxu0 0.0
      %7169 = vmatpush2.msra.mxu0 0.0
      %7170 = vmatprep.subr.mxu0 0.0
      %7171 = vmatpush2.msra.mxu0 0.0
      %7172 = vmatprep.subr.mxu0 0.0
      %7173 = vmatpush2.msra.mxu0 0.0
      %7174 = vmatprep.subr.mxu0 0.0
      %7175 = vmatpush2.msra.mxu0 0.0
      %7176 = vmatprep.subr.mxu0 0.0
      %7177 = vmatpush2.msra.mxu0 0.0
      %7178 = vmatprep.subr.mxu0 0.0
      %7179 = vmatpush2.msra.mxu0 0.0
      %7180 = vmatprep.subr.mxu0 0.0
      %7181 = vmatpush2.msra.mxu0 0.0
      %7182 = vmatprep.subr.mxu0 0.0
      %7183 = vmatpush2.msra.mxu0 0.0
      %7184 = vmatprep.subr.mxu0 0.0
      %7185 = vmatpush2.msra.mxu0 0.0
      %7186 = vmatprep.subr.mxu0 0.0
      %7187 = vmatpush2.msra.mxu0 0.0
      %7188 = vmatprep.subr.mxu0 0.0
      %7189 = vmatpush2.msra.mxu0 0.0
      %7190 = vmatprep.subr.mxu0 0.0
      %7191 = vmatpush2.msra.mxu0 0.0
      %7192 = vmatprep.subr.mxu0 0.0
      %7193 = vmatpush2.msra.mxu0 0.0
      %7194 = vmatprep.subr.mxu0 0.0
      %7195 = vmatpush2.msra.mxu0 0.0
      %7196 = vmatprep.subr.mxu0 0.0
      %7197 = vmatpush2.msra.mxu0 0.0
      %7198 = vmatprep.mubr.f32.mxu0 0.0
      %7199 = vmatmul.mubr.f32.gmra.mxu0 %v6134
      %v7200 = vpop.f32.mrf.mxu0
      %v7201 = vadd.f32 %v7132, %v7200
      %v7202 = vpop.f32.mrf.mxu0
      %7203 = vmatprep.mubr.f32.mxu0 0.0
      %7204 = vmatmul.mubr.f32.gmra.mxu0 %v6137
      %v7205 = vpop.f32.mrf.mxu0
      %v7206 = vadd.f32 %v7132, %v7205
      %v7207 = vpop.f32.mrf.mxu0
      %7208 = vdwg.mxu0
      %s7209 = scalar_lea.vmem %s65, 64
      %v7210 = vld [vmem:[%s7209] sm:$0xff]
      %v7211 = vld [vmem:[%s7209 + $0x8] sm:$0xff]
      %v7212 = vld [vmem:[%s7209 + $0x10] sm:$0xff]
      %v7213 = vld [vmem:[%s7209 + $0x18] sm:$0xff]
      %s7214 = scalar_lea.vmem %s57, 2
      %v7215 = vld [vmem:[%s7214] sm:$0x1]
      %v7217 = vlaneseq
      %v7218 = vshrl.u32 %v7217, 7
      %v7219 = vsub.s32 0, %v7218
      %v7220 = vrot.slane %v7215, %v7219
      %7222 = vmatprep.subr.mxu0 0.0
      %7223 = vmatpush1.msra.mxu0 0.0
      %7224 = vmatprep.subr.mxu0 0.0
      %7225 = vmatpush1.msra.mxu0 0.0
      %7226 = vmatprep.subr.mxu0 0.0
      %7227 = vmatpush1.msra.mxu0 0.0
      %7228 = vmatprep.subr.mxu0 0.0
      %7229 = vmatpush1.msra.mxu0 0.0
      %7230 = vmatprep.subr.mxu0 0.0
      %7231 = vmatpush1.msra.mxu0 0.0
      %7232 = vmatprep.subr.mxu0 0.0
      %7233 = vmatpush1.msra.mxu0 0.0
      %7234 = vmatprep.subr.mxu0 0.0
      %7235 = vmatpush1.msra.mxu0 0.0
      %7236 = vmatprep.subr.mxu0 0.0
      %7237 = vmatpush1.msra.mxu0 0.0
      %7238 = vmatprep.subr.mxu0 0.0
      %7239 = vmatpush1.msra.mxu0 0.0
      %7240 = vmatprep.subr.mxu0 0.0
      %7241 = vmatpush1.msra.mxu0 0.0
      %7242 = vmatprep.subr.mxu0 0.0
      %7243 = vmatpush1.msra.mxu0 0.0
      %7244 = vmatprep.subr.mxu0 0.0
      %7245 = vmatpush1.msra.mxu0 0.0
      %7246 = vmatprep.subr.mxu0 0.0
      %7247 = vmatpush1.msra.mxu0 %v7213
      %7248 = vmatprep.subr.mxu0 0.0
      %7249 = vmatpush1.msra.mxu0 %v7212
      %7250 = vmatprep.subr.mxu0 0.0
      %7251 = vmatpush1.msra.mxu0 %v7211
      %7252 = vmatprep.subr.mxu0 0.0
      %7253 = vmatpush1.msra.mxu0 %v7210
      %7254 = vmatprep.subr.mxu0 0.0
      %7255 = vmatpush2.msra.mxu0 0.0
      %7256 = vmatprep.subr.mxu0 0.0
      %7257 = vmatpush2.msra.mxu0 0.0
      %7258 = vmatprep.subr.mxu0 0.0
      %7259 = vmatpush2.msra.mxu0 0.0
      %7260 = vmatprep.subr.mxu0 0.0
      %7261 = vmatpush2.msra.mxu0 0.0
      %7262 = vmatprep.subr.mxu0 0.0
      %7263 = vmatpush2.msra.mxu0 0.0
      %7264 = vmatprep.subr.mxu0 0.0
      %7265 = vmatpush2.msra.mxu0 0.0
      %7266 = vmatprep.subr.mxu0 0.0
      %7267 = vmatpush2.msra.mxu0 0.0
      %7268 = vmatprep.subr.mxu0 0.0
      %7269 = vmatpush2.msra.mxu0 0.0
      %7270 = vmatprep.subr.mxu0 0.0
      %7271 = vmatpush2.msra.mxu0 0.0
      %7272 = vmatprep.subr.mxu0 0.0
      %7273 = vmatpush2.msra.mxu0 0.0
      %7274 = vmatprep.subr.mxu0 0.0
      %7275 = vmatpush2.msra.mxu0 0.0
      %7276 = vmatprep.subr.mxu0 0.0
      %7277 = vmatpush2.msra.mxu0 0.0
      %7278 = vmatprep.subr.mxu0 0.0
      %7279 = vmatpush2.msra.mxu0 0.0
      %7280 = vmatprep.subr.mxu0 0.0
      %7281 = vmatpush2.msra.mxu0 0.0
      %7282 = vmatprep.subr.mxu0 0.0
      %7283 = vmatpush2.msra.mxu0 0.0
      %7284 = vmatprep.subr.mxu0 0.0
      %7285 = vmatpush2.msra.mxu0 0.0
      %7286 = vmatprep.mubr.f32.mxu0 0.0
      %7287 = vmatmul.mubr.f32.gmra.mxu0 %v6134
      %v7288 = vpop.f32.mrf.mxu0
      %v7289 = vadd.f32 %v7220, %v7288
      %v7290 = vpop.f32.mrf.mxu0
      %7291 = vmatprep.mubr.f32.mxu0 0.0
      %7292 = vmatmul.mubr.f32.gmra.mxu0 %v6137
      %v7293 = vpop.f32.mrf.mxu0
      %v7294 = vadd.f32 %v7220, %v7293
      %v7295 = vpop.f32.mrf.mxu0
      %7296 = vdwg.mxu0
      %v7298 = vsel %vm6300, %v7118, 0
      %v7301 = vsel %vm6300, %v7201, 0
      %v7304 = vsel %vm6300, %v7206, 0
      %7306 = vmatprep.subr.mxu0 0.0
      %7307 = vmatpush1.xpose.msra.mxu0 0.0
      %7308 = vmatprep.subr.mxu0 0.0
      %7309 = vmatpush1.xpose.msra.mxu0 0.0
      %7310 = vmatprep.subr.mxu0 0.0
      %7311 = vmatpush1.xpose.msra.mxu0 0.0
      %7312 = vmatprep.subr.mxu0 0.0
      %7313 = vmatpush1.xpose.msra.mxu0 0.0
      %7314 = vmatprep.subr.mxu0 0.0
      %7315 = vmatpush1.xpose.msra.mxu0 0.0
      %7316 = vmatprep.subr.mxu0 0.0
      %7317 = vmatpush1.xpose.msra.mxu0 0.0
      %7318 = vmatprep.subr.mxu0 0.0
      %7319 = vmatpush1.xpose.msra.mxu0 0.0
      %7320 = vmatprep.subr.mxu0 0.0
      %7321 = vmatpush1.xpose.msra.mxu0 0.0
      %7322 = vmatprep.subr.mxu0 0.0
      %7323 = vmatpush1.xpose.msra.mxu0 0.0
      %7324 = vmatprep.subr.mxu0 0.0
      %7325 = vmatpush1.xpose.msra.mxu0 0.0
      %7326 = vmatprep.subr.mxu0 0.0
      %7327 = vmatpush1.xpose.msra.mxu0 0.0
      %7328 = vmatprep.subr.mxu0 0.0
      %7329 = vmatpush1.xpose.msra.mxu0 0.0
      %7330 = vmatprep.subr.mxu0 0.0
      %7331 = vmatpush1.xpose.msra.mxu0 0.0
      %7332 = vmatprep.subr.mxu0 0.0
      %7333 = vmatpush1.xpose.msra.mxu0 0.0
      %7334 = vmatprep.subr.mxu0 0.0
      %7335 = vmatpush1.xpose.msra.mxu0 %v7304
      %7336 = vmatprep.subr.mxu0 0.0
      %7337 = vmatpush1.xpose.msra.mxu0 %v7301
      %7338 = vmatprep.subr.mxu0 0.0
      %7339 = vmatpush2.xpose.msra.mxu0 0.0
      %7340 = vmatprep.subr.mxu0 0.0
      %7341 = vmatpush2.xpose.msra.mxu0 0.0
      %7342 = vmatprep.subr.mxu0 0.0
      %7343 = vmatpush2.xpose.msra.mxu0 0.0
      %7344 = vmatprep.subr.mxu0 0.0
      %7345 = vmatpush2.xpose.msra.mxu0 0.0
      %7346 = vmatprep.subr.mxu0 0.0
      %7347 = vmatpush2.xpose.msra.mxu0 0.0
      %7348 = vmatprep.subr.mxu0 0.0
      %7349 = vmatpush2.xpose.msra.mxu0 0.0
      %7350 = vmatprep.subr.mxu0 0.0
      %7351 = vmatpush2.xpose.msra.mxu0 0.0
      %7352 = vmatprep.subr.mxu0 0.0
      %7353 = vmatpush2.xpose.msra.mxu0 0.0
      %7354 = vmatprep.subr.mxu0 0.0
      %7355 = vmatpush2.xpose.msra.mxu0 0.0
      %7356 = vmatprep.subr.mxu0 0.0
      %7357 = vmatpush2.xpose.msra.mxu0 0.0
      %7358 = vmatprep.subr.mxu0 0.0
      %7359 = vmatpush2.xpose.msra.mxu0 0.0
      %7360 = vmatprep.subr.mxu0 0.0
      %7361 = vmatpush2.xpose.msra.mxu0 0.0
      %7362 = vmatprep.subr.mxu0 0.0
      %7363 = vmatpush2.xpose.msra.mxu0 0.0
      %7364 = vmatprep.subr.mxu0 0.0
      %7365 = vmatpush2.xpose.msra.mxu0 0.0
      %7366 = vmatprep.subr.mxu0 0.0
      %7367 = vmatpush2.xpose.msra.mxu0 0.0
      %7368 = vmatprep.subr.mxu0 0.0
      %7369 = vmatpush2.xpose.msra.mxu0 0.0
      %7370 = vmatprep.mubr.f32.mxu0 0.0
      %7371 = vmatmul.mubr.f32.gmra.mxu0 %v7298
      %v7372 = vpop.f32.mrf.mxu0
      %v7373 = vadd.f32 0.0, %v7372
      %v7374 = vpop.f32.mrf.mxu0
      %7375 = vdwg.mxu0
      %v7376 = vmul.f32 %v7373, 0.35355338
      %v7377 = vsel %vm6381, %v7376, -inf
      %7378 = vmax.xlane.f32.xlu0 %v7377
      %v7379 = vpop.xlane.xlu0 %7378
      %v7380 = vsub.f32 %v7376, %v7379
      %v7381 = vmul.f32 %v7380, 1.442695
      %v7382 = vpow.pop %v7381
      %v7383 = vsel %vm6381, %v7382, 0.0
      %7384 = vadd.xlane.f32.xlu0 %v7383
      %v7385 = vpop.xlane.xlu0 %7384
      %v7386 = vrcp.pop %v7385
      %v7387 = vmul.f32 %v7382, %v7386
      %v7389 = vsel %vm6381, %v7387, 0
      %7391 = vmatprep.subr.mxu0 0.0
      %7392 = vmatpush1.msra.mxu0 0.0
      %7393 = vmatprep.subr.mxu0 0.0
      %7394 = vmatpush1.msra.mxu0 0.0
      %7395 = vmatprep.subr.mxu0 0.0
      %7396 = vmatpush1.msra.mxu0 0.0
      %7397 = vmatprep.subr.mxu0 0.0
      %7398 = vmatpush1.msra.mxu0 0.0
      %7399 = vmatprep.subr.mxu0 0.0
      %7400 = vmatpush1.msra.mxu0 0.0
      %7401 = vmatprep.subr.mxu0 0.0
      %7402 = vmatpush1.msra.mxu0 0.0
      %7403 = vmatprep.subr.mxu0 0.0
      %7404 = vmatpush1.msra.mxu0 0.0
      %7405 = vmatprep.subr.mxu0 0.0
      %7406 = vmatpush1.msra.mxu0 0.0
      %7407 = vmatprep.subr.mxu0 0.0
      %7408 = vmatpush1.msra.mxu0 0.0
      %7409 = vmatprep.subr.mxu0 0.0
      %7410 = vmatpush1.msra.mxu0 0.0
      %7411 = vmatprep.subr.mxu0 0.0
      %7412 = vmatpush1.msra.mxu0 0.0
      %7413 = vmatprep.subr.mxu0 0.0
      %7414 = vmatpush1.msra.mxu0 0.0
      %7415 = vmatprep.subr.mxu0 0.0
      %7416 = vmatpush1.msra.mxu0 0.0
      %7417 = vmatprep.subr.mxu0 0.0
      %7418 = vmatpush1.msra.mxu0 0.0
      %7419 = vmatprep.subr.mxu0 0.0
      %7420 = vmatpush1.msra.mxu0 %v7294
      %7421 = vmatprep.subr.mxu0 0.0
      %7422 = vmatpush1.msra.mxu0 %v7289
      %7423 = vmatprep.subr.mxu0 0.0
      %7424 = vmatpush2.msra.mxu0 0.0
      %7425 = vmatprep.subr.mxu0 0.0
      %7426 = vmatpush2.msra.mxu0 0.0
      %7427 = vmatprep.subr.mxu0 0.0
      %7428 = vmatpush2.msra.mxu0 0.0
      %7429 = vmatprep.subr.mxu0 0.0
      %7430 = vmatpush2.msra.mxu0 0.0
      %7431 = vmatprep.subr.mxu0 0.0
      %7432 = vmatpush2.msra.mxu0 0.0
      %7433 = vmatprep.subr.mxu0 0.0
      %7434 = vmatpush2.msra.mxu0 0.0
      %7435 = vmatprep.subr.mxu0 0.0
      %7436 = vmatpush2.msra.mxu0 0.0
      %7437 = vmatprep.subr.mxu0 0.0
      %7438 = vmatpush2.msra.mxu0 0.0
      %7439 = vmatprep.subr.mxu0 0.0
      %7440 = vmatpush2.msra.mxu0 0.0
      %7441 = vmatprep.subr.mxu0 0.0
      %7442 = vmatpush2.msra.mxu0 0.0
      %7443 = vmatprep.subr.mxu0 0.0
      %7444 = vmatpush2.msra.mxu0 0.0
      %7445 = vmatprep.subr.mxu0 0.0
      %7446 = vmatpush2.msra.mxu0 0.0
      %7447 = vmatprep.subr.mxu0 0.0
      %7448 = vmatpush2.msra.mxu0 0.0
      %7449 = vmatprep.subr.mxu0 0.0
      %7450 = vmatpush2.msra.mxu0 0.0
      %7451 = vmatprep.subr.mxu0 0.0
      %7452 = vmatpush2.msra.mxu0 0.0
      %7453 = vmatprep.subr.mxu0 0.0
      %7454 = vmatpush2.msra.mxu0 0.0
      %7455 = vmatprep.mubr.f32.mxu0 0.0
      %7456 = vmatmul.mubr.f32.gmra.mxu0 %v7389
      %v7457 = vpop.f32.mrf.mxu0
      %v7458 = vadd.f32 0.0, %v7457
      %v7459 = vpop.f32.mrf.mxu0
      %7460 = vdwg.mxu0
      %s7461 = scalar_lea.vmem %s61, 16
      %v7462 = vld [vmem:[%s7461] sm:$0xff]
      %v7464 = vsel %vm6300, %v7458, 0
      %7466 = vmatprep.subr.mxu0 0.0
      %7467 = vmatpush1.msra.mxu0 0.0
      %7468 = vmatprep.subr.mxu0 0.0
      %7469 = vmatpush1.msra.mxu0 0.0
      %7470 = vmatprep.subr.mxu0 0.0
      %7471 = vmatpush1.msra.mxu0 0.0
      %7472 = vmatprep.subr.mxu0 0.0
      %7473 = vmatpush1.msra.mxu0 0.0
      %7474 = vmatprep.subr.mxu0 0.0
      %7475 = vmatpush1.msra.mxu0 0.0
      %7476 = vmatprep.subr.mxu0 0.0
      %7477 = vmatpush1.msra.mxu0 0.0
      %7478 = vmatprep.subr.mxu0 0.0
      %7479 = vmatpush1.msra.mxu0 0.0
      %7480 = vmatprep.subr.mxu0 0.0
      %7481 = vmatpush1.msra.mxu0 0.0
      %7482 = vmatprep.subr.mxu0 0.0
      %7483 = vmatpush1.msra.mxu0 0.0
      %7484 = vmatprep.subr.mxu0 0.0
      %7485 = vmatpush1.msra.mxu0 0.0
      %7486 = vmatprep.subr.mxu0 0.0
      %7487 = vmatpush1.msra.mxu0 0.0
      %7488 = vmatprep.subr.mxu0 0.0
      %7489 = vmatpush1.msra.mxu0 0.0
      %7490 = vmatprep.subr.mxu0 0.0
      %7491 = vmatpush1.msra.mxu0 0.0
      %7492 = vmatprep.subr.mxu0 0.0
      %7493 = vmatpush1.msra.mxu0 0.0
      %7494 = vmatprep.subr.mxu0 0.0
      %7495 = vmatpush1.msra.mxu0 0.0
      %7496 = vmatprep.subr.mxu0 0.0
      %7497 = vmatpush1.msra.mxu0 %v7462
      %7498 = vmatprep.subr.mxu0 0.0
      %7499 = vmatpush2.msra.mxu0 0.0
      %7500 = vmatprep.subr.mxu0 0.0
      %7501 = vmatpush2.msra.mxu0 0.0
      %7502 = vmatprep.subr.mxu0 0.0
      %7503 = vmatpush2.msra.mxu0 0.0
      %7504 = vmatprep.subr.mxu0 0.0
      %7505 = vmatpush2.msra.mxu0 0.0
      %7506 = vmatprep.subr.mxu0 0.0
      %7507 = vmatpush2.msra.mxu0 0.0
      %7508 = vmatprep.subr.mxu0 0.0
      %7509 = vmatpush2.msra.mxu0 0.0
      %7510 = vmatprep.subr.mxu0 0.0
      %7511 = vmatpush2.msra.mxu0 0.0
      %7512 = vmatprep.subr.mxu0 0.0
      %7513 = vmatpush2.msra.mxu0 0.0
      %7514 = vmatprep.subr.mxu0 0.0
      %7515 = vmatpush2.msra.mxu0 0.0
      %7516 = vmatprep.subr.mxu0 0.0
      %7517 = vmatpush2.msra.mxu0 0.0
      %7518 = vmatprep.subr.mxu0 0.0
      %7519 = vmatpush2.msra.mxu0 0.0
      %7520 = vmatprep.subr.mxu0 0.0
      %7521 = vmatpush2.msra.mxu0 0.0
      %7522 = vmatprep.subr.mxu0 0.0
      %7523 = vmatpush2.msra.mxu0 0.0
      %7524 = vmatprep.subr.mxu0 0.0
      %7525 = vmatpush2.msra.mxu0 0.0
      %7526 = vmatprep.subr.mxu0 0.0
      %7527 = vmatpush2.msra.mxu0 0.0
      %7528 = vmatprep.subr.mxu0 0.0
      %7529 = vmatpush2.msra.mxu0 0.0
      %7530 = vmatprep.mubr.f32.mxu0 0.0
      %7531 = vmatmul.mubr.f32.gmra.mxu0 %v7464
      %v7532 = vpop.f32.mrf.mxu0
      %v7533 = vadd.f32 0.0, %v7532
      %v7534 = vpop.f32.mrf.mxu0
      %7535 = vdwg.mxu0
      %v7536 = vadd.f32 %v7035, %v7533
      %s7537 = scalar_lea.vmem %s63, 96
      %v7538 = vld [vmem:[%s7537] sm:$0xff]
      %v7539 = vld [vmem:[%s7537 + $0x8] sm:$0xff]
      %v7540 = vld [vmem:[%s7537 + $0x10] sm:$0xff]
      %v7541 = vld [vmem:[%s7537 + $0x18] sm:$0xff]
      %s7542 = scalar_lea.vmem %s55, 3
      %v7543 = vld [vmem:[%s7542] sm:$0x1]
      %v7545 = vlaneseq
      %v7546 = vshrl.u32 %v7545, 7
      %v7547 = vsub.s32 0, %v7546
      %v7548 = vrot.slane %v7543, %v7547
      %7550 = vmatprep.subr.mxu0 0.0
      %7551 = vmatpush1.msra.mxu0 0.0
      %7552 = vmatprep.subr.mxu0 0.0
      %7553 = vmatpush1.msra.mxu0 0.0
      %7554 = vmatprep.subr.mxu0 0.0
      %7555 = vmatpush1.msra.mxu0 0.0
      %7556 = vmatprep.subr.mxu0 0.0
      %7557 = vmatpush1.msra.mxu0 0.0
      %7558 = vmatprep.subr.mxu0 0.0
      %7559 = vmatpush1.msra.mxu0 0.0
      %7560 = vmatprep.subr.mxu0 0.0
      %7561 = vmatpush1.msra.mxu0 0.0
      %7562 = vmatprep.subr.mxu0 0.0
      %7563 = vmatpush1.msra.mxu0 0.0
      %7564 = vmatprep.subr.mxu0 0.0
      %7565 = vmatpush1.msra.mxu0 0.0
      %7566 = vmatprep.subr.mxu0 0.0
      %7567 = vmatpush1.msra.mxu0 0.0
      %7568 = vmatprep.subr.mxu0 0.0
      %7569 = vmatpush1.msra.mxu0 0.0
      %7570 = vmatprep.subr.mxu0 0.0
      %7571 = vmatpush1.msra.mxu0 0.0
      %7572 = vmatprep.subr.mxu0 0.0
      %7573 = vmatpush1.msra.mxu0 0.0
      %7574 = vmatprep.subr.mxu0 0.0
      %7575 = vmatpush1.msra.mxu0 %v7541
      %7576 = vmatprep.subr.mxu0 0.0
      %7577 = vmatpush1.msra.mxu0 %v7540
      %7578 = vmatprep.subr.mxu0 0.0
      %7579 = vmatpush1.msra.mxu0 %v7539
      %7580 = vmatprep.subr.mxu0 0.0
      %7581 = vmatpush1.msra.mxu0 %v7538
      %7582 = vmatprep.subr.mxu0 0.0
      %7583 = vmatpush2.msra.mxu0 0.0
      %7584 = vmatprep.subr.mxu0 0.0
      %7585 = vmatpush2.msra.mxu0 0.0
      %7586 = vmatprep.subr.mxu0 0.0
      %7587 = vmatpush2.msra.mxu0 0.0
      %7588 = vmatprep.subr.mxu0 0.0
      %7589 = vmatpush2.msra.mxu0 0.0
      %7590 = vmatprep.subr.mxu0 0.0
      %7591 = vmatpush2.msra.mxu0 0.0
      %7592 = vmatprep.subr.mxu0 0.0
      %7593 = vmatpush2.msra.mxu0 0.0
      %7594 = vmatprep.subr.mxu0 0.0
      %7595 = vmatpush2.msra.mxu0 0.0
      %7596 = vmatprep.subr.mxu0 0.0
      %7597 = vmatpush2.msra.mxu0 0.0
      %7598 = vmatprep.subr.mxu0 0.0
      %7599 = vmatpush2.msra.mxu0 0.0
      %7600 = vmatprep.subr.mxu0 0.0
      %7601 = vmatpush2.msra.mxu0 0.0
      %7602 = vmatprep.subr.mxu0 0.0
      %7603 = vmatpush2.msra.mxu0 0.0
      %7604 = vmatprep.subr.mxu0 0.0
      %7605 = vmatpush2.msra.mxu0 0.0
      %7606 = vmatprep.subr.mxu0 0.0
      %7607 = vmatpush2.msra.mxu0 0.0
      %7608 = vmatprep.subr.mxu0 0.0
      %7609 = vmatpush2.msra.mxu0 0.0
      %7610 = vmatprep.subr.mxu0 0.0
      %7611 = vmatpush2.msra.mxu0 0.0
      %7612 = vmatprep.subr.mxu0 0.0
      %7613 = vmatpush2.msra.mxu0 0.0
      %7614 = vmatprep.mubr.f32.mxu0 0.0
      %7615 = vmatmul.mubr.f32.gmra.mxu0 %v6050
      %v7616 = vpop.f32.mrf.mxu0
      %v7617 = vadd.f32 %v7548, %v7616
      %v7618 = vpop.f32.mrf.mxu0
      %7619 = vdwg.mxu0
      %s7620 = scalar_lea.vmem %s59, 96
      %v7621 = vld [vmem:[%s7620] sm:$0xff]
      %v7622 = vld [vmem:[%s7620 + $0x8] sm:$0xff]
      %v7623 = vld [vmem:[%s7620 + $0x10] sm:$0xff]
      %v7624 = vld [vmem:[%s7620 + $0x18] sm:$0xff]
      %s7625 = scalar_lea.vmem %s51, 3
      %v7626 = vld [vmem:[%s7625] sm:$0x1]
      %v7628 = vlaneseq
      %v7629 = vshrl.u32 %v7628, 7
      %v7630 = vsub.s32 0, %v7629
      %v7631 = vrot.slane %v7626, %v7630
      %7633 = vmatprep.subr.mxu0 0.0
      %7634 = vmatpush1.msra.mxu0 0.0
      %7635 = vmatprep.subr.mxu0 0.0
      %7636 = vmatpush1.msra.mxu0 0.0
      %7637 = vmatprep.subr.mxu0 0.0
      %7638 = vmatpush1.msra.mxu0 0.0
      %7639 = vmatprep.subr.mxu0 0.0
      %7640 = vmatpush1.msra.mxu0 0.0
      %7641 = vmatprep.subr.mxu0 0.0
      %7642 = vmatpush1.msra.mxu0 0.0
      %7643 = vmatprep.subr.mxu0 0.0
      %7644 = vmatpush1.msra.mxu0 0.0
      %7645 = vmatprep.subr.mxu0 0.0
      %7646 = vmatpush1.msra.mxu0 0.0
      %7647 = vmatprep.subr.mxu0 0.0
      %7648 = vmatpush1.msra.mxu0 0.0
      %7649 = vmatprep.subr.mxu0 0.0
      %7650 = vmatpush1.msra.mxu0 0.0
      %7651 = vmatprep.subr.mxu0 0.0
      %7652 = vmatpush1.msra.mxu0 0.0
      %7653 = vmatprep.subr.mxu0 0.0
      %7654 = vmatpush1.msra.mxu0 0.0
      %7655 = vmatprep.subr.mxu0 0.0
      %7656 = vmatpush1.msra.mxu0 0.0
      %7657 = vmatprep.subr.mxu0 0.0
      %7658 = vmatpush1.msra.mxu0 %v7624
      %7659 = vmatprep.subr.mxu0 0.0
      %7660 = vmatpush1.msra.mxu0 %v7623
      %7661 = vmatprep.subr.mxu0 0.0
      %7662 = vmatpush1.msra.mxu0 %v7622
      %7663 = vmatprep.subr.mxu0 0.0
      %7664 = vmatpush1.msra.mxu0 %v7621
      %7665 = vmatprep.subr.mxu0 0.0
      %7666 = vmatpush2.msra.mxu0 0.0
      %7667 = vmatprep.subr.mxu0 0.0
      %7668 = vmatpush2.msra.mxu0 0.0
      %7669 = vmatprep.subr.mxu0 0.0
      %7670 = vmatpush2.msra.mxu0 0.0
      %7671 = vmatprep.subr.mxu0 0.0
      %7672 = vmatpush2.msra.mxu0 0.0
      %7673 = vmatprep.subr.mxu0 0.0
      %7674 = vmatpush2.msra.mxu0 0.0
      %7675 = vmatprep.subr.mxu0 0.0
      %7676 = vmatpush2.msra.mxu0 0.0
      %7677 = vmatprep.subr.mxu0 0.0
      %7678 = vmatpush2.msra.mxu0 0.0
      %7679 = vmatprep.subr.mxu0 0.0
      %7680 = vmatpush2.msra.mxu0 0.0
      %7681 = vmatprep.subr.mxu0 0.0
      %7682 = vmatpush2.msra.mxu0 0.0
      %7683 = vmatprep.subr.mxu0 0.0
      %7684 = vmatpush2.msra.mxu0 0.0
      %7685 = vmatprep.subr.mxu0 0.0
      %7686 = vmatpush2.msra.mxu0 0.0
      %7687 = vmatprep.subr.mxu0 0.0
      %7688 = vmatpush2.msra.mxu0 0.0
      %7689 = vmatprep.subr.mxu0 0.0
      %7690 = vmatpush2.msra.mxu0 0.0
      %7691 = vmatprep.subr.mxu0 0.0
      %7692 = vmatpush2.msra.mxu0 0.0
      %7693 = vmatprep.subr.mxu0 0.0
      %7694 = vmatpush2.msra.mxu0 0.0
      %7695 = vmatprep.subr.mxu0 0.0
      %7696 = vmatpush2.msra.mxu0 0.0
      %7697 = vmatprep.mubr.f32.mxu0 0.0
      %7698 = vmatmul.mubr.f32.gmra.mxu0 %v6134
      %v7699 = vpop.f32.mrf.mxu0
      %v7700 = vadd.f32 %v7631, %v7699
      %v7701 = vpop.f32.mrf.mxu0
      %7702 = vmatprep.mubr.f32.mxu0 0.0
      %7703 = vmatmul.mubr.f32.gmra.mxu0 %v6137
      %v7704 = vpop.f32.mrf.mxu0
      %v7705 = vadd.f32 %v7631, %v7704
      %v7706 = vpop.f32.mrf.mxu0
      %7707 = vdwg.mxu0
      %s7708 = scalar_lea.vmem %s65, 96
      %v7709 = vld [vmem:[%s7708] sm:$0xff]
      %v7710 = vld [vmem:[%s7708 + $0x8] sm:$0xff]
      %v7711 = vld [vmem:[%s7708 + $0x10] sm:$0xff]
      %v7712 = vld [vmem:[%s7708 + $0x18] sm:$0xff]
      %s7713 = scalar_lea.vmem %s57, 3
      %v7714 = vld [vmem:[%s7713] sm:$0x1]
      %v7716 = vlaneseq
      %v7717 = vshrl.u32 %v7716, 7
      %v7718 = vsub.s32 0, %v7717
      %v7719 = vrot.slane %v7714, %v7718
      %7721 = vmatprep.subr.mxu0 0.0
      %7722 = vmatpush1.msra.mxu0 0.0
      %7723 = vmatprep.subr.mxu0 0.0
      %7724 = vmatpush1.msra.mxu0 0.0
      %7725 = vmatprep.subr.mxu0 0.0
      %7726 = vmatpush1.msra.mxu0 0.0
      %7727 = vmatprep.subr.mxu0 0.0
      %7728 = vmatpush1.msra.mxu0 0.0
      %7729 = vmatprep.subr.mxu0 0.0
      %7730 = vmatpush1.msra.mxu0 0.0
      %7731 = vmatprep.subr.mxu0 0.0
      %7732 = vmatpush1.msra.mxu0 0.0
      %7733 = vmatprep.subr.mxu0 0.0
      %7734 = vmatpush1.msra.mxu0 0.0
      %7735 = vmatprep.subr.mxu0 0.0
      %7736 = vmatpush1.msra.mxu0 0.0
      %7737 = vmatprep.subr.mxu0 0.0
      %7738 = vmatpush1.msra.mxu0 0.0
      %7739 = vmatprep.subr.mxu0 0.0
      %7740 = vmatpush1.msra.mxu0 0.0
      %7741 = vmatprep.subr.mxu0 0.0
      %7742 = vmatpush1.msra.mxu0 0.0
      %7743 = vmatprep.subr.mxu0 0.0
      %7744 = vmatpush1.msra.mxu0 0.0
      %7745 = vmatprep.subr.mxu0 0.0
      %7746 = vmatpush1.msra.mxu0 %v7712
      %7747 = vmatprep.subr.mxu0 0.0
      %7748 = vmatpush1.msra.mxu0 %v7711
      %7749 = vmatprep.subr.mxu0 0.0
      %7750 = vmatpush1.msra.mxu0 %v7710
      %7751 = vmatprep.subr.mxu0 0.0
      %7752 = vmatpush1.msra.mxu0 %v7709
      %7753 = vmatprep.subr.mxu0 0.0
      %7754 = vmatpush2.msra.mxu0 0.0
      %7755 = vmatprep.subr.mxu0 0.0
      %7756 = vmatpush2.msra.mxu0 0.0
      %7757 = vmatprep.subr.mxu0 0.0
      %7758 = vmatpush2.msra.mxu0 0.0
      %7759 = vmatprep.subr.mxu0 0.0
      %7760 = vmatpush2.msra.mxu0 0.0
      %7761 = vmatprep.subr.mxu0 0.0
      %7762 = vmatpush2.msra.mxu0 0.0
      %7763 = vmatprep.subr.mxu0 0.0
      %7764 = vmatpush2.msra.mxu0 0.0
      %7765 = vmatprep.subr.mxu0 0.0
      %7766 = vmatpush2.msra.mxu0 0.0
      %7767 = vmatprep.subr.mxu0 0.0
      %7768 = vmatpush2.msra.mxu0 0.0
      %7769 = vmatprep.subr.mxu0 0.0
      %7770 = vmatpush2.msra.mxu0 0.0
      %7771 = vmatprep.subr.mxu0 0.0
      %7772 = vmatpush2.msra.mxu0 0.0
      %7773 = vmatprep.subr.mxu0 0.0
      %7774 = vmatpush2.msra.mxu0 0.0
      %7775 = vmatprep.subr.mxu0 0.0
      %7776 = vmatpush2.msra.mxu0 0.0
      %7777 = vmatprep.subr.mxu0 0.0
      %7778 = vmatpush2.msra.mxu0 0.0
      %7779 = vmatprep.subr.mxu0 0.0
      %7780 = vmatpush2.msra.mxu0 0.0
      %7781 = vmatprep.subr.mxu0 0.0
      %7782 = vmatpush2.msra.mxu0 0.0
      %7783 = vmatprep.subr.mxu0 0.0
      %7784 = vmatpush2.msra.mxu0 0.0
      %7785 = vmatprep.mubr.f32.mxu0 0.0
      %7786 = vmatmul.mubr.f32.gmra.mxu0 %v6134
      %v7787 = vpop.f32.mrf.mxu0
      %v7788 = vadd.f32 %v7719, %v7787
      %v7789 = vpop.f32.mrf.mxu0
      %7790 = vmatprep.mubr.f32.mxu0 0.0
      %7791 = vmatmul.mubr.f32.gmra.mxu0 %v6137
      %v7792 = vpop.f32.mrf.mxu0
      %v7793 = vadd.f32 %v7719, %v7792
      %v7794 = vpop.f32.mrf.mxu0
      %7795 = vdwg.mxu0
      %v7797 = vsel %vm6300, %v7617, 0
      %v7800 = vsel %vm6300, %v7700, 0
      %v7803 = vsel %vm6300, %v7705, 0
      %7805 = vmatprep.subr.mxu0 0.0
      %7806 = vmatpush1.xpose.msra.mxu0 0.0
      %7807 = vmatprep.subr.mxu0 0.0
      %7808 = vmatpush1.xpose.msra.mxu0 0.0
      %7809 = vmatprep.subr.mxu0 0.0
      %7810 = vmatpush1.xpose.msra.mxu0 0.0
      %7811 = vmatprep.subr.mxu0 0.0
      %7812 = vmatpush1.xpose.msra.mxu0 0.0
      %7813 = vmatprep.subr.mxu0 0.0
      %7814 = vmatpush1.xpose.msra.mxu0 0.0
      %7815 = vmatprep.subr.mxu0 0.0
      %7816 = vmatpush1.xpose.msra.mxu0 0.0
      %7817 = vmatprep.subr.mxu0 0.0
      %7818 = vmatpush1.xpose.msra.mxu0 0.0
      %7819 = vmatprep.subr.mxu0 0.0
      %7820 = vmatpush1.xpose.msra.mxu0 0.0
      %7821 = vmatprep.subr.mxu0 0.0
      %7822 = vmatpush1.xpose.msra.mxu0 0.0
      %7823 = vmatprep.subr.mxu0 0.0
      %7824 = vmatpush1.xpose.msra.mxu0 0.0
      %7825 = vmatprep.subr.mxu0 0.0
      %7826 = vmatpush1.xpose.msra.mxu0 0.0
      %7827 = vmatprep.subr.mxu0 0.0
      %7828 = vmatpush1.xpose.msra.mxu0 0.0
      %7829 = vmatprep.subr.mxu0 0.0
      %7830 = vmatpush1.xpose.msra.mxu0 0.0
      %7831 = vmatprep.subr.mxu0 0.0
      %7832 = vmatpush1.xpose.msra.mxu0 0.0
      %7833 = vmatprep.subr.mxu0 0.0
      %7834 = vmatpush1.xpose.msra.mxu0 %v7803
      %7835 = vmatprep.subr.mxu0 0.0
      %7836 = vmatpush1.xpose.msra.mxu0 %v7800
      %7837 = vmatprep.subr.mxu0 0.0
      %7838 = vmatpush2.xpose.msra.mxu0 0.0
      %7839 = vmatprep.subr.mxu0 0.0
      %7840 = vmatpush2.xpose.msra.mxu0 0.0
      %7841 = vmatprep.subr.mxu0 0.0
      %7842 = vmatpush2.xpose.msra.mxu0 0.0
      %7843 = vmatprep.subr.mxu0 0.0
      %7844 = vmatpush2.xpose.msra.mxu0 0.0
      %7845 = vmatprep.subr.mxu0 0.0
      %7846 = vmatpush2.xpose.msra.mxu0 0.0
      %7847 = vmatprep.subr.mxu0 0.0
      %7848 = vmatpush2.xpose.msra.mxu0 0.0
      %7849 = vmatprep.subr.mxu0 0.0
      %7850 = vmatpush2.xpose.msra.mxu0 0.0
      %7851 = vmatprep.subr.mxu0 0.0
      %7852 = vmatpush2.xpose.msra.mxu0 0.0
      %7853 = vmatprep.subr.mxu0 0.0
      %7854 = vmatpush2.xpose.msra.mxu0 0.0
      %7855 = vmatprep.subr.mxu0 0.0
      %7856 = vmatpush2.xpose.msra.mxu0 0.0
      %7857 = vmatprep.subr.mxu0 0.0
      %7858 = vmatpush2.xpose.msra.mxu0 0.0
      %7859 = vmatprep.subr.mxu0 0.0
      %7860 = vmatpush2.xpose.msra.mxu0 0.0
      %7861 = vmatprep.subr.mxu0 0.0
      %7862 = vmatpush2.xpose.msra.mxu0 0.0
      %7863 = vmatprep.subr.mxu0 0.0
      %7864 = vmatpush2.xpose.msra.mxu0 0.0
      %7865 = vmatprep.subr.mxu0 0.0
      %7866 = vmatpush2.xpose.msra.mxu0 0.0
      %7867 = vmatprep.subr.mxu0 0.0
      %7868 = vmatpush2.xpose.msra.mxu0 0.0
      %7869 = vmatprep.mubr.f32.mxu0 0.0
      %7870 = vmatmul.mubr.f32.gmra.mxu0 %v7797
      %v7871 = vpop.f32.mrf.mxu0
      %v7872 = vadd.f32 0.0, %v7871
      %v7873 = vpop.f32.mrf.mxu0
      %7874 = vdwg.mxu0
      %v7875 = vmul.f32 %v7872, 0.35355338
      %v7876 = vsel %vm6381, %v7875, -inf
      %7877 = vmax.xlane.f32.xlu0 %v7876
      %v7878 = vpop.xlane.xlu0 %7877
      %v7879 = vsub.f32 %v7875, %v7878
      %v7880 = vmul.f32 %v7879, 1.442695
      %v7881 = vpow.pop %v7880
      %v7882 = vsel %vm6381, %v7881, 0.0
      %7883 = vadd.xlane.f32.xlu0 %v7882
      %v7884 = vpop.xlane.xlu0 %7883
      %v7885 = vrcp.pop %v7884
      %v7886 = vmul.f32 %v7881, %v7885
      %v7888 = vsel %vm6381, %v7886, 0
      %7890 = vmatprep.subr.mxu0 0.0
      %7891 = vmatpush1.msra.mxu0 0.0
      %7892 = vmatprep.subr.mxu0 0.0
      %7893 = vmatpush1.msra.mxu0 0.0
      %7894 = vmatprep.subr.mxu0 0.0
      %7895 = vmatpush1.msra.mxu0 0.0
      %7896 = vmatprep.subr.mxu0 0.0
      %7897 = vmatpush1.msra.mxu0 0.0
      %7898 = vmatprep.subr.mxu0 0.0
      %7899 = vmatpush1.msra.mxu0 0.0
      %7900 = vmatprep.subr.mxu0 0.0
      %7901 = vmatpush1.msra.mxu0 0.0
      %7902 = vmatprep.subr.mxu0 0.0
      %7903 = vmatpush1.msra.mxu0 0.0
      %7904 = vmatprep.subr.mxu0 0.0
      %7905 = vmatpush1.msra.mxu0 0.0
      %7906 = vmatprep.subr.mxu0 0.0
      %7907 = vmatpush1.msra.mxu0 0.0
      %7908 = vmatprep.subr.mxu0 0.0
      %7909 = vmatpush1.msra.mxu0 0.0
      %7910 = vmatprep.subr.mxu0 0.0
      %7911 = vmatpush1.msra.mxu0 0.0
      %7912 = vmatprep.subr.mxu0 0.0
      %7913 = vmatpush1.msra.mxu0 0.0
      %7914 = vmatprep.subr.mxu0 0.0
      %7915 = vmatpush1.msra.mxu0 0.0
      %7916 = vmatprep.subr.mxu0 0.0
      %7917 = vmatpush1.msra.mxu0 0.0
      %7918 = vmatprep.subr.mxu0 0.0
      %7919 = vmatpush1.msra.mxu0 %v7793
      %7920 = vmatprep.subr.mxu0 0.0
      %7921 = vmatpush1.msra.mxu0 %v7788
      %7922 = vmatprep.subr.mxu0 0.0
      %7923 = vmatpush2.msra.mxu0 0.0
      %7924 = vmatprep.subr.mxu0 0.0
      %7925 = vmatpush2.msra.mxu0 0.0
      %7926 = vmatprep.subr.mxu0 0.0
      %7927 = vmatpush2.msra.mxu0 0.0
      %7928 = vmatprep.subr.mxu0 0.0
      %7929 = vmatpush2.msra.mxu0 0.0
      %7930 = vmatprep.subr.mxu0 0.0
      %7931 = vmatpush2.msra.mxu0 0.0
      %7932 = vmatprep.subr.mxu0 0.0
      %7933 = vmatpush2.msra.mxu0 0.0
      %7934 = vmatprep.subr.mxu0 0.0
      %7935 = vmatpush2.msra.mxu0 0.0
      %7936 = vmatprep.subr.mxu0 0.0
      %7937 = vmatpush2.msra.mxu0 0.0
      %7938 = vmatprep.subr.mxu0 0.0
      %7939 = vmatpush2.msra.mxu0 0.0
      %7940 = vmatprep.subr.mxu0 0.0
      %7941 = vmatpush2.msra.mxu0 0.0
      %7942 = vmatprep.subr.mxu0 0.0
      %7943 = vmatpush2.msra.mxu0 0.0
      %7944 = vmatprep.subr.mxu0 0.0
      %7945 = vmatpush2.msra.mxu0 0.0
      %7946 = vmatprep.subr.mxu0 0.0
      %7947 = vmatpush2.msra.mxu0 0.0
      %7948 = vmatprep.subr.mxu0 0.0
      %7949 = vmatpush2.msra.mxu0 0.0
      %7950 = vmatprep.subr.mxu0 0.0
      %7951 = vmatpush2.msra.mxu0 0.0
      %7952 = vmatprep.subr.mxu0 0.0
      %7953 = vmatpush2.msra.mxu0 0.0
      %7954 = vmatprep.mubr.f32.mxu0 0.0
      %7955 = vmatmul.mubr.f32.gmra.mxu0 %v7888
      %v7956 = vpop.f32.mrf.mxu0
      %v7957 = vadd.f32 0.0, %v7956
      %v7958 = vpop.f32.mrf.mxu0
      %7959 = vdwg.mxu0
      %s7960 = scalar_lea.vmem %s61, 24
      %v7961 = vld [vmem:[%s7960] sm:$0xff]
      %v7963 = vsel %vm6300, %v7957, 0
      %7965 = vmatprep.subr.mxu0 0.0
      %7966 = vmatpush1.msra.mxu0 0.0
      %7967 = vmatprep.subr.mxu0 0.0
      %7968 = vmatpush1.msra.mxu0 0.0
      %7969 = vmatprep.subr.mxu0 0.0
      %7970 = vmatpush1.msra.mxu0 0.0
      %7971 = vmatprep.subr.mxu0 0.0
      %7972 = vmatpush1.msra.mxu0 0.0
      %7973 = vmatprep.subr.mxu0 0.0
      %7974 = vmatpush1.msra.mxu0 0.0
      %7975 = vmatprep.subr.mxu0 0.0
      %7976 = vmatpush1.msra.mxu0 0.0
      %7977 = vmatprep.subr.mxu0 0.0
      %7978 = vmatpush1.msra.mxu0 0.0
      %7979 = vmatprep.subr.mxu0 0.0
      %7980 = vmatpush1.msra.mxu0 0.0
      %7981 = vmatprep.subr.mxu0 0.0
      %7982 = vmatpush1.msra.mxu0 0.0
      %7983 = vmatprep.subr.mxu0 0.0
      %7984 = vmatpush1.msra.mxu0 0.0
      %7985 = vmatprep.subr.mxu0 0.0
      %7986 = vmatpush1.msra.mxu0 0.0
      %7987 = vmatprep.subr.mxu0 0.0
      %7988 = vmatpush1.msra.mxu0 0.0
      %7989 = vmatprep.subr.mxu0 0.0
      %7990 = vmatpush1.msra.mxu0 0.0
      %7991 = vmatprep.subr.mxu0 0.0
      %7992 = vmatpush1.msra.mxu0 0.0
      %7993 = vmatprep.subr.mxu0 0.0
      %7994 = vmatpush1.msra.mxu0 0.0
      %7995 = vmatprep.subr.mxu0 0.0
      %7996 = vmatpush1.msra.mxu0 %v7961
      %7997 = vmatprep.subr.mxu0 0.0
      %7998 = vmatpush2.msra.mxu0 0.0
      %7999 = vmatprep.subr.mxu0 0.0
      %8000 = vmatpush2.msra.mxu0 0.0
      %8001 = vmatprep.subr.mxu0 0.0
      %8002 = vmatpush2.msra.mxu0 0.0
      %8003 = vmatprep.subr.mxu0 0.0
      %8004 = vmatpush2.msra.mxu0 0.0
      %8005 = vmatprep.subr.mxu0 0.0
      %8006 = vmatpush2.msra.mxu0 0.0
      %8007 = vmatprep.subr.mxu0 0.0
      %8008 = vmatpush2.msra.mxu0 0.0
      %8009 = vmatprep.subr.mxu0 0.0
      %8010 = vmatpush2.msra.mxu0 0.0
      %8011 = vmatprep.subr.mxu0 0.0
      %8012 = vmatpush2.msra.mxu0 0.0
      %8013 = vmatprep.subr.mxu0 0.0
      %8014 = vmatpush2.msra.mxu0 0.0
      %8015 = vmatprep.subr.mxu0 0.0
      %8016 = vmatpush2.msra.mxu0 0.0
      %8017 = vmatprep.subr.mxu0 0.0
      %8018 = vmatpush2.msra.mxu0 0.0
      %8019 = vmatprep.subr.mxu0 0.0
      %8020 = vmatpush2.msra.mxu0 0.0
      %8021 = vmatprep.subr.mxu0 0.0
      %8022 = vmatpush2.msra.mxu0 0.0
      %8023 = vmatprep.subr.mxu0 0.0
      %8024 = vmatpush2.msra.mxu0 0.0
      %8025 = vmatprep.subr.mxu0 0.0
      %8026 = vmatpush2.msra.mxu0 0.0
      %8027 = vmatprep.subr.mxu0 0.0
      %8028 = vmatpush2.msra.mxu0 0.0
      %8029 = vmatprep.mubr.f32.mxu0 0.0
      %8030 = vmatmul.mubr.f32.gmra.mxu0 %v7963
      %v8031 = vpop.f32.mrf.mxu0
      %v8032 = vadd.f32 0.0, %v8031
      %v8033 = vpop.f32.mrf.mxu0
      %8034 = vdwg.mxu0
      %v8035 = vadd.f32 %v7536, %v8032
      %v8036 = vadd.f32 %v6035, %v8035
      %v8037 = vld [vmem:[%s53] sm:$0x1]
      %v8039 = vlaneseq
      %v8040 = vshrl.u32 %v8039, 7
      %v8041 = vsub.s32 0, %v8040
      %v8042 = vrot.slane %v8037, %v8041
      %v8044 = vadd.f32 %v8036, %v8042
      %v8045 = vld [vmem:[%s69] sm:$0xff]
      %v8046 = vld [vmem:[%s69 + $0x8] sm:$0xff]
      %v8047 = vld [vmem:[%s69 + $0x10] sm:$0xff]
      %v8048 = vld [vmem:[%s69 + $0x18] sm:$0xff]
      %v8049 = vld [vmem:[%s67] sm:$0x1]
      %v8051 = vlaneseq
      %v8052 = vshrl.u32 %v8051, 7
      %v8053 = vsub.s32 0, %v8052
      %v8054 = vrot.slane %v8049, %v8053
      %v8057 = vsel %vm1783, %v8044, 0
      %8059 = vmatprep.subr.mxu0 0.0
      %8060 = vmatpush1.msra.mxu0 0.0
      %8061 = vmatprep.subr.mxu0 0.0
      %8062 = vmatpush1.msra.mxu0 0.0
      %8063 = vmatprep.subr.mxu0 0.0
      %8064 = vmatpush1.msra.mxu0 0.0
      %8065 = vmatprep.subr.mxu0 0.0
      %8066 = vmatpush1.msra.mxu0 0.0
      %8067 = vmatprep.subr.mxu0 0.0
      %8068 = vmatpush1.msra.mxu0 0.0
      %8069 = vmatprep.subr.mxu0 0.0
      %8070 = vmatpush1.msra.mxu0 0.0
      %8071 = vmatprep.subr.mxu0 0.0
      %8072 = vmatpush1.msra.mxu0 0.0
      %8073 = vmatprep.subr.mxu0 0.0
      %8074 = vmatpush1.msra.mxu0 0.0
      %8075 = vmatprep.subr.mxu0 0.0
      %8076 = vmatpush1.msra.mxu0 0.0
      %8077 = vmatprep.subr.mxu0 0.0
      %8078 = vmatpush1.msra.mxu0 0.0
      %8079 = vmatprep.subr.mxu0 0.0
      %8080 = vmatpush1.msra.mxu0 0.0
      %8081 = vmatprep.subr.mxu0 0.0
      %8082 = vmatpush1.msra.mxu0 0.0
      %8083 = vmatprep.subr.mxu0 0.0
      %8084 = vmatpush1.msra.mxu0 %v8048
      %8085 = vmatprep.subr.mxu0 0.0
      %8086 = vmatpush1.msra.mxu0 %v8047
      %8087 = vmatprep.subr.mxu0 0.0
      %8088 = vmatpush1.msra.mxu0 %v8046
      %8089 = vmatprep.subr.mxu0 0.0
      %8090 = vmatpush1.msra.mxu0 %v8045
      %8091 = vmatprep.subr.mxu0 0.0
      %8092 = vmatpush2.msra.mxu0 0.0
      %8093 = vmatprep.subr.mxu0 0.0
      %8094 = vmatpush2.msra.mxu0 0.0
      %8095 = vmatprep.subr.mxu0 0.0
      %8096 = vmatpush2.msra.mxu0 0.0
      %8097 = vmatprep.subr.mxu0 0.0
      %8098 = vmatpush2.msra.mxu0 0.0
      %8099 = vmatprep.subr.mxu0 0.0
      %8100 = vmatpush2.msra.mxu0 0.0
      %8101 = vmatprep.subr.mxu0 0.0
      %8102 = vmatpush2.msra.mxu0 0.0
      %8103 = vmatprep.subr.mxu0 0.0
      %8104 = vmatpush2.msra.mxu0 0.0
      %8105 = vmatprep.subr.mxu0 0.0
      %8106 = vmatpush2.msra.mxu0 0.0
      %8107 = vmatprep.subr.mxu0 0.0
      %8108 = vmatpush2.msra.mxu0 0.0
      %8109 = vmatprep.subr.mxu0 0.0
      %8110 = vmatpush2.msra.mxu0 0.0
      %8111 = vmatprep.subr.mxu0 0.0
      %8112 = vmatpush2.msra.mxu0 0.0
      %8113 = vmatprep.subr.mxu0 0.0
      %8114 = vmatpush2.msra.mxu0 0.0
      %8115 = vmatprep.subr.mxu0 0.0
      %8116 = vmatpush2.msra.mxu0 0.0
      %8117 = vmatprep.subr.mxu0 0.0
      %8118 = vmatpush2.msra.mxu0 0.0
      %8119 = vmatprep.subr.mxu0 0.0
      %8120 = vmatpush2.msra.mxu0 0.0
      %8121 = vmatprep.subr.mxu0 0.0
      %8122 = vmatpush2.msra.mxu0 0.0
      %8123 = vmatprep.mubr.f32.mxu0 0.0
      %8124 = vmatmul.mubr.f32.gmra.mxu0 %v8057
      %v8125 = vpop.f32.mrf.mxu0
      %v8126 = vadd.f32 %v8054, %v8125
      %v8127 = vpop.f32.mrf.mxu0
      %8128 = vdwg.mxu0
      %v8129 = vmax.f32 %v8126, 0.0
      %v8130 = vld [vmem:[%s73] sm:$0xff]
      %v8131 = vld [vmem:[%s73 + $0x8] sm:$0xff]
      %v8132 = vld [vmem:[%s73 + $0x10] sm:$0xff]
      %v8133 = vld [vmem:[%s73 + $0x18] sm:$0xff]
      %v8134 = vld [vmem:[%s71] sm:$0x1]
      %v8136 = vlaneseq
      %v8137 = vshrl.u32 %v8136, 7
      %v8138 = vsub.s32 0, %v8137
      %v8139 = vrot.slane %v8134, %v8138
      %v8142 = vsel %vm1783, %v8129, 0
      %8144 = vmatprep.subr.mxu0 0.0
      %8145 = vmatpush1.msra.mxu0 0.0
      %8146 = vmatprep.subr.mxu0 0.0
      %8147 = vmatpush1.msra.mxu0 0.0
      %8148 = vmatprep.subr.mxu0 0.0
      %8149 = vmatpush1.msra.mxu0 0.0
      %8150 = vmatprep.subr.mxu0 0.0
      %8151 = vmatpush1.msra.mxu0 0.0
      %8152 = vmatprep.subr.mxu0 0.0
      %8153 = vmatpush1.msra.mxu0 0.0
      %8154 = vmatprep.subr.mxu0 0.0
      %8155 = vmatpush1.msra.mxu0 0.0
      %8156 = vmatprep.subr.mxu0 0.0
      %8157 = vmatpush1.msra.mxu0 0.0
      %8158 = vmatprep.subr.mxu0 0.0
      %8159 = vmatpush1.msra.mxu0 0.0
      %8160 = vmatprep.subr.mxu0 0.0
      %8161 = vmatpush1.msra.mxu0 0.0
      %8162 = vmatprep.subr.mxu0 0.0
      %8163 = vmatpush1.msra.mxu0 0.0
      %8164 = vmatprep.subr.mxu0 0.0
      %8165 = vmatpush1.msra.mxu0 0.0
      %8166 = vmatprep.subr.mxu0 0.0
      %8167 = vmatpush1.msra.mxu0 0.0
      %8168 = vmatprep.subr.mxu0 0.0
      %8169 = vmatpush1.msra.mxu0 %v8133
      %8170 = vmatprep.subr.mxu0 0.0
      %8171 = vmatpush1.msra.mxu0 %v8132
      %8172 = vmatprep.subr.mxu0 0.0
      %8173 = vmatpush1.msra.mxu0 %v8131
      %8174 = vmatprep.subr.mxu0 0.0
      %8175 = vmatpush1.msra.mxu0 %v8130
      %8176 = vmatprep.subr.mxu0 0.0
      %8177 = vmatpush2.msra.mxu0 0.0
      %8178 = vmatprep.subr.mxu0 0.0
      %8179 = vmatpush2.msra.mxu0 0.0
      %8180 = vmatprep.subr.mxu0 0.0
      %8181 = vmatpush2.msra.mxu0 0.0
      %8182 = vmatprep.subr.mxu0 0.0
      %8183 = vmatpush2.msra.mxu0 0.0
      %8184 = vmatprep.subr.mxu0 0.0
      %8185 = vmatpush2.msra.mxu0 0.0
      %8186 = vmatprep.subr.mxu0 0.0
      %8187 = vmatpush2.msra.mxu0 0.0
      %8188 = vmatprep.subr.mxu0 0.0
      %8189 = vmatpush2.msra.mxu0 0.0
      %8190 = vmatprep.subr.mxu0 0.0
      %8191 = vmatpush2.msra.mxu0 0.0
      %8192 = vmatprep.subr.mxu0 0.0
      %8193 = vmatpush2.msra.mxu0 0.0
      %8194 = vmatprep.subr.mxu0 0.0
      %8195 = vmatpush2.msra.mxu0 0.0
      %8196 = vmatprep.subr.mxu0 0.0
      %8197 = vmatpush2.msra.mxu0 0.0
      %8198 = vmatprep.subr.mxu0 0.0
      %8199 = vmatpush2.msra.mxu0 0.0
      %8200 = vmatprep.subr.mxu0 0.0
      %8201 = vmatpush2.msra.mxu0 0.0
      %8202 = vmatprep.subr.mxu0 0.0
      %8203 = vmatpush2.msra.mxu0 0.0
      %8204 = vmatprep.subr.mxu0 0.0
      %8205 = vmatpush2.msra.mxu0 0.0
      %8206 = vmatprep.subr.mxu0 0.0
      %8207 = vmatpush2.msra.mxu0 0.0
      %8208 = vmatprep.mubr.f32.mxu0 0.0
      %8209 = vmatmul.mubr.f32.gmra.mxu0 %v8142
      %v8210 = vpop.f32.mrf.mxu0
      %v8211 = vadd.f32 %v8139, %v8210
      %v8212 = vpop.f32.mrf.mxu0
      %8213 = vdwg.mxu0
      %v8214 = vmax.f32 %v8211, 0.0
      %v8215 = vld [vmem:[%s77] sm:$0xff]
      %v8216 = vld [vmem:[%s77 + $0x8] sm:$0xff]
      %v8217 = vld [vmem:[%s77 + $0x10] sm:$0xff]
      %v8218 = vld [vmem:[%s77 + $0x18] sm:$0xff]
      %v8219 = vld [vmem:[%s75] sm:$0x1]
      %v8221 = vlaneseq
      %v8222 = vshrl.u32 %v8221, 7
      %v8223 = vsub.s32 0, %v8222
      %v8224 = vrot.slane %v8219, %v8223
      %v8227 = vsel %vm1783, %v8214, 0
      %8229 = vmatprep.subr.mxu0 0.0
      %8230 = vmatpush1.msra.mxu0 0.0
      %8231 = vmatprep.subr.mxu0 0.0
      %8232 = vmatpush1.msra.mxu0 0.0
      %8233 = vmatprep.subr.mxu0 0.0
      %8234 = vmatpush1.msra.mxu0 0.0
      %8235 = vmatprep.subr.mxu0 0.0
      %8236 = vmatpush1.msra.mxu0 0.0
      %8237 = vmatprep.subr.mxu0 0.0
      %8238 = vmatpush1.msra.mxu0 0.0
      %8239 = vmatprep.subr.mxu0 0.0
      %8240 = vmatpush1.msra.mxu0 0.0
      %8241 = vmatprep.subr.mxu0 0.0
      %8242 = vmatpush1.msra.mxu0 0.0
      %8243 = vmatprep.subr.mxu0 0.0
      %8244 = vmatpush1.msra.mxu0 0.0
      %8245 = vmatprep.subr.mxu0 0.0
      %8246 = vmatpush1.msra.mxu0 0.0
      %8247 = vmatprep.subr.mxu0 0.0
      %8248 = vmatpush1.msra.mxu0 0.0
      %8249 = vmatprep.subr.mxu0 0.0
      %8250 = vmatpush1.msra.mxu0 0.0
      %8251 = vmatprep.subr.mxu0 0.0
      %8252 = vmatpush1.msra.mxu0 0.0
      %8253 = vmatprep.subr.mxu0 0.0
      %8254 = vmatpush1.msra.mxu0 %v8218
      %8255 = vmatprep.subr.mxu0 0.0
      %8256 = vmatpush1.msra.mxu0 %v8217
      %8257 = vmatprep.subr.mxu0 0.0
      %8258 = vmatpush1.msra.mxu0 %v8216
      %8259 = vmatprep.subr.mxu0 0.0
      %8260 = vmatpush1.msra.mxu0 %v8215
      %8261 = vmatprep.subr.mxu0 0.0
      %8262 = vmatpush2.msra.mxu0 0.0
      %8263 = vmatprep.subr.mxu0 0.0
      %8264 = vmatpush2.msra.mxu0 0.0
      %8265 = vmatprep.subr.mxu0 0.0
      %8266 = vmatpush2.msra.mxu0 0.0
      %8267 = vmatprep.subr.mxu0 0.0
      %8268 = vmatpush2.msra.mxu0 0.0
      %8269 = vmatprep.subr.mxu0 0.0
      %8270 = vmatpush2.msra.mxu0 0.0
      %8271 = vmatprep.subr.mxu0 0.0
      %8272 = vmatpush2.msra.mxu0 0.0
      %8273 = vmatprep.subr.mxu0 0.0
      %8274 = vmatpush2.msra.mxu0 0.0
      %8275 = vmatprep.subr.mxu0 0.0
      %8276 = vmatpush2.msra.mxu0 0.0
      %8277 = vmatprep.subr.mxu0 0.0
      %8278 = vmatpush2.msra.mxu0 0.0
      %8279 = vmatprep.subr.mxu0 0.0
      %8280 = vmatpush2.msra.mxu0 0.0
      %8281 = vmatprep.subr.mxu0 0.0
      %8282 = vmatpush2.msra.mxu0 0.0
      %8283 = vmatprep.subr.mxu0 0.0
      %8284 = vmatpush2.msra.mxu0 0.0
      %8285 = vmatprep.subr.mxu0 0.0
      %8286 = vmatpush2.msra.mxu0 0.0
      %8287 = vmatprep.subr.mxu0 0.0
      %8288 = vmatpush2.msra.mxu0 0.0
      %8289 = vmatprep.subr.mxu0 0.0
      %8290 = vmatpush2.msra.mxu0 0.0
      %8291 = vmatprep.subr.mxu0 0.0
      %8292 = vmatpush2.msra.mxu0 0.0
      %8293 = vmatprep.mubr.f32.mxu0 0.0
      %8294 = vmatmul.mubr.f32.gmra.mxu0 %v8227
      %v8295 = vpop.f32.mrf.mxu0
      %v8296 = vadd.f32 %v8224, %v8295
      %v8297 = vpop.f32.mrf.mxu0
      %8298 = vdwg.mxu0
      %vm8299 = vcmask 15360
      %8300 = vst.msk [vmem:[%s1581] sm:$0xff] %vm8299, %v8296
      %p8301 = scmp.lt.s32.totalorder %s116, 1
      %s8302 = scalar_select %p8301, %s116, 1
      %s8303 = smul.addr %s8302, 8
      %s8304 = scalar_lea.vmem %s105, %s8303
      // Predicated region
      $region236: #{tfspos_forward.1} parent=227 // pred_check
        %p8305 = pneg %p1241
      $region237: #{tfspos_forward.1} parent=227 // pred_check_branch
        %8307 = sbr.rel (%p8305) target = $region239
      $region238: #{tfspos_forward.1} parent=227 // pred_region
        _
      $region239: #{tfspos_forward.1} parent=227 // pred_fallthru
        _
    $region228: #{tfspos_forward.1} parent=5 // pred_fallthru
      _
    %p8308 = scmp.le.s32.totalorder 2, %s111
    // Predicated region
    $region240: #{tfspos_forward.1} parent=5 // pred_check
      %p8309 = pneg %p8308
    $region241: #{tfspos_forward.1} parent=5 // pred_check_branch
      %8311 = sbr.rel (%p8309) target = $region243
    $region242: #{tfspos_forward.1} parent=5 // pred_region
      %s8312 = ssub.s32 %s111, 2
      // Predicated region
      $region244: #{tfspos_forward.1} parent=242 // pred_check
        %p8313 = pneg %p1247
      $region245: #{tfspos_forward.1} parent=242 // pred_check_branch
        %8315 = sbr.rel (%p8313) target = $region247
      $region246: #{tfspos_forward.1} parent=242 // pred_region
        %p8316 = scmp.lt.s32.totalorder %s117, 1
        %s8317 = scalar_select %p8316, %s117, 1
        %s8318 = smul.addr %s8317, 8
        %s8319 = scalar_lea.vmem %s105, %s8318
      $region247: #{tfspos_forward.1} parent=242 // pred_fallthru
        _
    $region243: #{tfspos_forward.1} parent=5 // pred_fallthru
      _
  $region6: #{tfspos_forward.1} parent=0 // loop_footer
    %s115 = sadd.s32 1, %s111
  $region7: #{tfspos_forward.1} parent=0 // loop_footer_branch
    %110 = sbr.rel target = $region3
  $region8: #{tfspos_forward.1} parent=0 // loop_exit
    _

</llo_original>
